<compile_context>
chip_gen: v7x
topology: tpu7x:2x2x1
jax: 0.10.0
libtpu: 0.0.40
codegen_flags: <defaults>
</compile_context>

<pallas_src>
import jax
import jax.numpy as jnp
from jax.experimental import pallas as pl
from jax.experimental.pallas import tpu as pltpu


# ----------------------------------------------------------------------------
# Pallas kernels
# ----------------------------------------------------------------------------
def _matmul_bn_relu_kernel(x_ref, w_ref, bnp_ref, o_ref):
    # x: (M, K) f32, w: (K, N) bf16, bnp: (3, N) f32 rows = [bias, gamma, beta]
    y = jnp.dot(x_ref[...].astype(jnp.bfloat16), w_ref[...],
                preferred_element_type=jnp.float32)
    y = y + bnp_ref[0:1, :]                       # linear/conv bias (BN cancels it,
                                                  # kept for literal fidelity)
    # BatchNorm in training mode: batch stats over rows, biased var, eps=1e-5,
    # folded into a single FMA: out = (y - mean) * scale + beta.
    mean = jnp.mean(y, axis=0, keepdims=True)
    d = y - mean
    var = jnp.mean(d * d, axis=0, keepdims=True)
    scale = bnp_ref[1:2, :] * jax.lax.rsqrt(var + 1e-5)
    o_ref[...] = jnp.maximum(d * scale + bnp_ref[2:3, :], 0.0)    # ReLU


def _mlp_heads_kernel(x_ref, w3_ref, bnp3_ref, wh_ref, bh_ref, eps_ref,
                      z_ref, mu_ref, ls_ref):
    # Linear(iels, 1024) + BN1d(1024) + ReLU   (h3 stays in VMEM)
    h = jnp.dot(x_ref[...].astype(jnp.bfloat16), w3_ref[...],
                preferred_element_type=jnp.float32)
    h = h + bnp3_ref[0:1, :]
    mean = jnp.mean(h, axis=0, keepdims=True)
    d = h - mean
    var = jnp.mean(d * d, axis=0, keepdims=True)
    scale = bnp3_ref[1:2, :] * jax.lax.rsqrt(var + 1e-5)
    h = jnp.maximum(d * scale + bnp3_ref[2:3, :], 0.0)

    # Both heads as one matmul: wh = [wmu | wcon] -> (1024, 2*out)
    ml = jnp.dot(h.astype(jnp.bfloat16), wh_ref[...],
                 preferred_element_type=jnp.float32) + bh_ref[...]
    n = mu_ref.shape[1]
    mu = ml[:, :n]
    log_sigma = ml[:, n:]
    sigma = jnp.exp(log_sigma * 0.5)
    z_ref[...] = mu + sigma * eps_ref[...]        # reparameterization trick
    mu_ref[...] = mu
    ls_ref[...] = log_sigma


# ----------------------------------------------------------------------------
# Pallas wrappers (single grid point, full-array blocks — sizes fit VMEM)
# ----------------------------------------------------------------------------
def matmul_bn_relu(x, w, bnp):
    # Zero-pad K up to a multiple of 128 so the contraction is lane-dense
    # (only triggers for conv1 where K = Cin*16 = 16).
    K = x.shape[1]
    Kp = ((K + 127) // 128) * 128
    if Kp != K:
        x = jnp.pad(x, ((0, 0), (0, Kp - K)))
        w = jnp.pad(w, ((0, Kp - K), (0, 0)))
    M, Kp = x.shape
    N = w.shape[1]
    return pl.pallas_call(
        _matmul_bn_relu_kernel,
        out_shape=jax.ShapeDtypeStruct((M, N), jnp.float32),
        grid=(1,),
        in_specs=[pl.BlockSpec((M, Kp), lambda i: (0, 0)),
                  pl.BlockSpec((Kp, N), lambda i: (0, 0)),
                  pl.BlockSpec((3, N), lambda i: (0, 0))],
        out_specs=pl.BlockSpec((M, N), lambda i: (0, 0)),
        compiler_params=pltpu.CompilerParams(
            dimension_semantics=("arbitrary",)),
    )(x, w, bnp)


def mlp_heads(z_flat, w3, bnp3, wh, bh, noise):
    B, K = z_flat.shape
    H = w3.shape[1]          # 1024
    O2 = wh.shape[1]         # 2 * output_channels
    O = O2 // 2
    shp = jax.ShapeDtypeStruct((B, O), jnp.float32)
    return pl.pallas_call(
        _mlp_heads_kernel,
        out_shape=(shp, shp, shp),
        grid=(1,),
        in_specs=[pl.BlockSpec((B, K), lambda i: (0, 0)),
                  pl.BlockSpec((K, H), lambda i: (0, 0)),
                  pl.BlockSpec((3, H), lambda i: (0, 0)),
                  pl.BlockSpec((H, O2), lambda i: (0, 0)),
                  pl.BlockSpec((1, O2), lambda i: (0, 0)),
                  pl.BlockSpec((B, O), lambda i: (0, 0))],
        out_specs=(pl.BlockSpec((B, O), lambda i: (0, 0)),
                   pl.BlockSpec((B, O), lambda i: (0, 0)),
                   pl.BlockSpec((B, O), lambda i: (0, 0))),
        compiler_params=pltpu.CompilerParams(
            dimension_semantics=("arbitrary",),
            vmem_limit_bytes=64 * 1024 * 1024),
    )(z_flat, w3, bnp3, wh, bh, noise)


# ----------------------------------------------------------------------------
# Glue: NHWC patch extraction for a 4x4 / stride-2 / pad-1 conv.
# Output feature ordering is (Cin, kh, kw), matching PyTorch's
# conv_weight.reshape(Cout, -1) column order.
# ----------------------------------------------------------------------------
def extract_patches_nhwc(x_nhwc, k=4, stride=2, pad=1):
    B, H, W, C = x_nhwc.shape
    cols = jax.lax.conv_general_dilated_patches(
        x_nhwc, filter_shape=(k, k), window_strides=(stride, stride),
        padding=((pad, pad), (pad, pad)),
        dimension_numbers=("NHWC", "HWIO", "NHWC"))
    Ho = (H + 2 * pad - k) // stride + 1
    Wo = (W + 2 * pad - k) // stride + 1
    return cols.reshape(B * Ho * Wo, C * k * k), Ho, Wo


# ----------------------------------------------------------------------------
# Full Encoder forward (NHWC internally; NCHW input like PyTorch)
# ----------------------------------------------------------------------------
def encoder_forward(x_nchw, params, noise):
    B = x_nchw.shape[0]
    x = jnp.transpose(x_nchw, (0, 2, 3, 1))                 # single NCHW->NHWC

    # Conv2d(Cin, 64, 4, s=2, p=1) + BN2d(64) + ReLU
    cols1, H1, W1 = extract_patches_nhwc(x)
    h1 = matmul_bn_relu(cols1, params["w1"], params["bnp1"])     # (B*H1*W1, 64)

    # Conv2d(64, 128, 4, s=2, p=1) + BN2d(128) + ReLU   (stay NHWC, no transpose)
    cols2, H2, W2 = extract_patches_nhwc(h1.reshape(B, H1, W1, 64))
    h2 = matmul_bn_relu(cols2, params["w2"], params["bnp2"])     # (B*H2*W2, 128)

    # Reshape(lshape): flatten.  We flatten NHWC; w3's rows were permuted once
    # at init so this equals PyTorch's NCHW x.view(B, -1).
    z_flat = h2.reshape(B, H2 * W2 * 128)

    # Linear(iels,1024)+BN1d+ReLU fused with mu/log_sigma heads + reparam.
    z, mu, log_sigma = mlp_heads(z_flat, params["w3"], params["bnp3"],
                                 params["wh"], params["bh"], noise)
    return z, mu, log_sigma


# ----------------------------------------------------------------------------
# Deterministic synthetic parameters (shapes follow Encoder.__init__).
# Weights are stored pre-transposed / pre-permuted for the NHWC matmul layout
# and cast to bf16 (MXU operands); BN params stay f32.
# ----------------------------------------------------------------------------
def init_params(key, input_channels, output_channels, cshape):
    C, Hc, Wc = cshape
    iels = C * Hc * Wc
    ks = jax.random.split(key, 5)
    scale = 0.05

    def nrm(k, shape):
        return scale * jax.random.normal(k, shape, jnp.float32)

    # conv1: torch (64, Cin, 4, 4) -> (Cin*16, 64); rows ordered (Cin, kh, kw)
    w1 = nrm(ks[0], (64, input_channels, 4, 4)).reshape(64, -1).T.astype(jnp.bfloat16)
    # conv2: torch (128, 64, 4, 4) -> (64*16, 128)
    w2 = nrm(ks[1], (128, 64, 4, 4)).reshape(128, -1).T.astype(jnp.bfloat16)
    # linear: torch (1024, iels) with columns ordered (C,H,W); permute once to
    # (H,W,C) so it multiplies the NHWC-flattened activations.
    w3 = (nrm(ks[2], (1024, C, Hc, Wc))
          .transpose(0, 2, 3, 1).reshape(1024, iels).T.astype(jnp.bfloat16))
    # heads: [mu | con] concatenated -> (1024, 2*out)
    wmu = nrm(ks[3], (output_channels, 1024))
    wcon = nrm(ks[4], (output_channels, 1024))
    wh = jnp.concatenate([wmu, wcon], axis=0).T.astype(jnp.bfloat16)
    bh = jnp.zeros((1, 2 * output_channels), jnp.float32)

    def bnpack(n):  # rows: [linear/conv bias, BN gamma, BN beta]
        return jnp.stack([jnp.zeros((n,), jnp.float32),
                          jnp.ones((n,), jnp.float32),
                          jnp.zeros((n,), jnp.float32)])

    return {"w1": w1, "bnp1": bnpack(64),
            "w2": w2, "bnp2": bnpack(128),
            "w3": w3, "bnp3": bnpack(1024),
            "wh": wh, "bh": bh}


if __name__ == "__main__":
    # 16x16 input -> cshape=(128, 4, 4), iels=2048 (consistent with the module)
    B, Cin, H, W = 2, 1, 16, 16
    out_channels = 32
    cshape = (128, H // 4, W // 4)

    key = jax.random.PRNGKey(0)
    kx, kp, kn = jax.random.split(key, 3)

    x = jax.random.normal(kx, (B, Cin, H, W), jnp.float32)          # NCHW, like PyTorch
    params = init_params(kp, Cin, out_channels, cshape)
    noise = jax.random.normal(kn, (B, out_channels), jnp.float32)   # std_z = randn_like(mu)

    fwd = jax.jit(encoder_forward)
    z, mu, log_sigma = fwd(x, params, noise)
    jax.block_until_ready((z, mu, log_sigma))

    assert z.shape == (B, out_channels)
    assert mu.shape == (B, out_channels)
    assert log_sigma.shape == (B, out_channels)
    print("KERNEL_OK")
</pallas_src>

<mosaic_0001>
module attributes {stable_mosaic.version = 11 : i64} {
  func.func @_matmul_bn_relu_kernel(%arg0: i32, %arg1: memref<128x128xf32, #tpu.memory_space<vmem>>, %arg2: memref<128x64xbf16, #tpu.memory_space<vmem>>, %arg3: memref<3x64xf32, #tpu.memory_space<vmem>>, %arg4: memref<128x64xf32, #tpu.memory_space<vmem>>) attributes {dimension_semantics = [#tpu.dimension_semantics<arbitrary>], iteration_bounds = array<i64: 1>, scalar_prefetch = 0 : i64, scratch_operands = 0 : i64, tpu.core_type = #tpu.core_type<tc>, window_params = [{pipeline_mode = #tpu.pipeline_mode<synchronous>, transform_indices = @transform_0, window_bounds = array<i64: 128, 128>}, {pipeline_mode = #tpu.pipeline_mode<synchronous>, transform_indices = @transform_1, window_bounds = array<i64: 128, 64>}, {pipeline_mode = #tpu.pipeline_mode<synchronous>, transform_indices = @transform_2, window_bounds = array<i64: 3, 64>}, {pipeline_mode = #tpu.pipeline_mode<synchronous>, transform_indices = @transform_3, window_bounds = array<i64: 128, 64>}]} {
    %c0 = arith.constant 0 : index
    %c0_0 = arith.constant 0 : index
    %0 = vector.load %arg1[%c0, %c0_0] : memref<128x128xf32, #tpu.memory_space<vmem>>, vector<128x128xf32>
    %1 = arith.truncf %0 : vector<128x128xf32> to vector<128x128xbf16>
    %c0_1 = arith.constant 0 : index
    %c0_2 = arith.constant 0 : index
    %2 = vector.load %arg2[%c0_1, %c0_2] : memref<128x64xbf16, #tpu.memory_space<vmem>>, vector<128x64xbf16>
    %cst = arith.constant dense<0.000000e+00> : vector<128x64xf32>
    %3 = tpu.matmul %1, %2, %cst {dimension_numbers = #tpu.dot_dimension_numbers<[1], [0], [0], [1], [0, 0, 1, 1], [], []>} : vector<128x128xbf16>, vector<128x64xbf16>, vector<128x64xf32> -> vector<128x64xf32>
    %c0_3 = arith.constant 0 : index
    %c0_4 = arith.constant 0 : index
    %4 = vector.load %arg3[%c0_3, %c0_4] : memref<3x64xf32, #tpu.memory_space<vmem>>, vector<1x64xf32>
    %5 = vector.broadcast %4 : vector<1x64xf32> to vector<128x64xf32>
    %6 = arith.addf %3, %5 : vector<128x64xf32>
    %cst_5 = arith.constant dense<0.000000e+00> : vector<64xf32>
    %7 = vector.multi_reduction <add>, %6, %cst_5 [0] : vector<128x64xf32> to vector<64xf32>
    %8 = vector.shape_cast %7 : vector<64xf32> to vector<1x64xf32>
    %cst_6 = arith.constant 1.280000e+02 : f32
    %9 = vector.broadcast %cst_6 : f32 to vector<1x64xf32>
    %10 = arith.divf %8, %9 : vector<1x64xf32>
    %11 = vector.broadcast %10 : vector<1x64xf32> to vector<128x64xf32>
    %12 = arith.subf %6, %11 : vector<128x64xf32>
    %13 = arith.mulf %12, %12 : vector<128x64xf32>
    %cst_7 = arith.constant dense<0.000000e+00> : vector<64xf32>
    %14 = vector.multi_reduction <add>, %13, %cst_7 [0] : vector<128x64xf32> to vector<64xf32>
    %15 = vector.shape_cast %14 : vector<64xf32> to vector<1x64xf32>
    %cst_8 = arith.constant 1.280000e+02 : f32
    %16 = vector.broadcast %cst_8 : f32 to vector<1x64xf32>
    %17 = arith.divf %15, %16 : vector<1x64xf32>
    %c1 = arith.constant 1 : index
    %c0_9 = arith.constant 0 : index
    %18 = vector.load %arg3[%c1, %c0_9] : memref<3x64xf32, #tpu.memory_space<vmem>>, vector<1x64xf32>
    %cst_10 = arith.constant 9.99999974E-6 : f32
    %19 = vector.broadcast %cst_10 : f32 to vector<1x64xf32>
    %20 = arith.addf %17, %19 : vector<1x64xf32>
    %21 = math.rsqrt %20 : vector<1x64xf32>
    %22 = arith.mulf %18, %21 : vector<1x64xf32>
    %23 = vector.broadcast %22 : vector<1x64xf32> to vector<128x64xf32>
    %24 = arith.mulf %12, %23 : vector<128x64xf32>
    %c2 = arith.constant 2 : index
    %c0_11 = arith.constant 0 : index
    %25 = vector.load %arg3[%c2, %c0_11] : memref<3x64xf32, #tpu.memory_space<vmem>>, vector<1x64xf32>
    %26 = vector.broadcast %25 : vector<1x64xf32> to vector<128x64xf32>
    %27 = arith.addf %24, %26 : vector<128x64xf32>
    %cst_12 = arith.constant 0.000000e+00 : f32
    %28 = vector.broadcast %cst_12 : f32 to vector<128x64xf32>
    %29 = arith.maximumf %27, %28 : vector<128x64xf32>
    %c0_13 = arith.constant 0 : index
    %c0_14 = arith.constant 0 : index
    %30 = vector.load %arg4[%c0_13, %c0_14] : memref<128x64xf32, #tpu.memory_space<vmem>>, vector<128x64xf32>
    tpu.vector_store %arg4[%c0_13, %c0_14], %29 {strides = array<i32>} : memref<128x64xf32, #tpu.memory_space<vmem>>, vector<128x64xf32>,
    return
  }
  func.func @transform_0(%arg0: i32) -> (i32, i32) {
    %c0_i32 = arith.constant 0 : i32
    %c0_i32_0 = arith.constant 0 : i32
    %c0_i32_1 = arith.constant 0 : i32
    return %c0_i32, %c0_i32_0 : i32, i32
  }
  func.func @transform_1(%arg0: i32) -> (i32, i32) {
    %c0_i32 = arith.constant 0 : i32
    %c0_i32_0 = arith.constant 0 : i32
    %c0_i32_1 = arith.constant 0 : i32
    return %c0_i32, %c0_i32_0 : i32, i32
  }
  func.func @transform_2(%arg0: i32) -> (i32, i32) {
    %c0_i32 = arith.constant 0 : i32
    %c0_i32_0 = arith.constant 0 : i32
    %c0_i32_1 = arith.constant 0 : i32
    return %c0_i32, %c0_i32_0 : i32, i32
  }
  func.func @transform_3(%arg0: i32) -> (i32, i32) {
    %c0_i32 = arith.constant 0 : i32
    %c0_i32_0 = arith.constant 0 : i32
    %c0_i32_1 = arith.constant 0 : i32
    return %c0_i32, %c0_i32_0 : i32, i32
  }
}

module attributes {stable_mosaic.version = 11 : i64} {
  func.func @_matmul_bn_relu_kernel(%arg0: i32, %arg1: memref<32x1024xf32, #tpu.memory_space<vmem>>, %arg2: memref<1024x128xbf16, #tpu.memory_space<vmem>>, %arg3: memref<3x128xf32, #tpu.memory_space<vmem>>, %arg4: memref<32x128xf32, #tpu.memory_space<vmem>>) attributes {dimension_semantics = [#tpu.dimension_semantics<arbitrary>], iteration_bounds = array<i64: 1>, scalar_prefetch = 0 : i64, scratch_operands = 0 : i64, tpu.core_type = #tpu.core_type<tc>, window_params = [{pipeline_mode = #tpu.pipeline_mode<synchronous>, transform_indices = @transform_0, window_bounds = array<i64: 32, 1024>}, {pipeline_mode = #tpu.pipeline_mode<synchronous>, transform_indices = @transform_1, window_bounds = array<i64: 1024, 128>}, {pipeline_mode = #tpu.pipeline_mode<synchronous>, transform_indices = @transform_2, window_bounds = array<i64: 3, 128>}, {pipeline_mode = #tpu.pipeline_mode<synchronous>, transform_indices = @transform_3, window_bounds = array<i64: 32, 128>}]} {
    %c0 = arith.constant 0 : index
    %c0_0 = arith.constant 0 : index
    %0 = vector.load %arg1[%c0, %c0_0] : memref<32x1024xf32, #tpu.memory_space<vmem>>, vector<32x1024xf32>
    %1 = arith.truncf %0 : vector<32x1024xf32> to vector<32x1024xbf16>
    %c0_1 = arith.constant 0 : index
    %c0_2 = arith.constant 0 : index
    %2 = vector.load %arg2[%c0_1, %c0_2] : memref<1024x128xbf16, #tpu.memory_space<vmem>>, vector<1024x128xbf16>
    %cst = arith.constant dense<0.000000e+00> : vector<32x128xf32>
    %3 = tpu.matmul %1, %2, %cst {dimension_numbers = #tpu.dot_dimension_numbers<[1], [0], [0], [1], [0, 0, 1, 1], [], []>} : vector<32x1024xbf16>, vector<1024x128xbf16>, vector<32x128xf32> -> vector<32x128xf32>
    %c0_3 = arith.constant 0 : index
    %c0_4 = arith.constant 0 : index
    %4 = vector.load %arg3[%c0_3, %c0_4] : memref<3x128xf32, #tpu.memory_space<vmem>>, vector<1x128xf32>
    %5 = vector.broadcast %4 : vector<1x128xf32> to vector<32x128xf32>
    %6 = arith.addf %3, %5 : vector<32x128xf32>
    %cst_5 = arith.constant dense<0.000000e+00> : vector<128xf32>
    %7 = vector.multi_reduction <add>, %6, %cst_5 [0] : vector<32x128xf32> to vector<128xf32>
    %8 = vector.shape_cast %7 : vector<128xf32> to vector<1x128xf32>
    %cst_6 = arith.constant 3.200000e+01 : f32
    %9 = vector.broadcast %cst_6 : f32 to vector<1x128xf32>
    %10 = arith.divf %8, %9 : vector<1x128xf32>
    %11 = vector.broadcast %10 : vector<1x128xf32> to vector<32x128xf32>
    %12 = arith.subf %6, %11 : vector<32x128xf32>
    %13 = arith.mulf %12, %12 : vector<32x128xf32>
    %cst_7 = arith.constant dense<0.000000e+00> : vector<128xf32>
    %14 = vector.multi_reduction <add>, %13, %cst_7 [0] : vector<32x128xf32> to vector<128xf32>
    %15 = vector.shape_cast %14 : vector<128xf32> to vector<1x128xf32>
    %cst_8 = arith.constant 3.200000e+01 : f32
    %16 = vector.broadcast %cst_8 : f32 to vector<1x128xf32>
    %17 = arith.divf %15, %16 : vector<1x128xf32>
    %c1 = arith.constant 1 : index
    %c0_9 = arith.constant 0 : index
    %18 = vector.load %arg3[%c1, %c0_9] : memref<3x128xf32, #tpu.memory_space<vmem>>, vector<1x128xf32>
    %cst_10 = arith.constant 9.99999974E-6 : f32
    %19 = vector.broadcast %cst_10 : f32 to vector<1x128xf32>
    %20 = arith.addf %17, %19 : vector<1x128xf32>
    %21 = math.rsqrt %20 : vector<1x128xf32>
    %22 = arith.mulf %18, %21 : vector<1x128xf32>
    %23 = vector.broadcast %22 : vector<1x128xf32> to vector<32x128xf32>
    %24 = arith.mulf %12, %23 : vector<32x128xf32>
    %c2 = arith.constant 2 : index
    %c0_11 = arith.constant 0 : index
    %25 = vector.load %arg3[%c2, %c0_11] : memref<3x128xf32, #tpu.memory_space<vmem>>, vector<1x128xf32>
    %26 = vector.broadcast %25 : vector<1x128xf32> to vector<32x128xf32>
    %27 = arith.addf %24, %26 : vector<32x128xf32>
    %cst_12 = arith.constant 0.000000e+00 : f32
    %28 = vector.broadcast %cst_12 : f32 to vector<32x128xf32>
    %29 = arith.maximumf %27, %28 : vector<32x128xf32>
    %c0_13 = arith.constant 0 : index
    %c0_14 = arith.constant 0 : index
    %30 = vector.load %arg4[%c0_13, %c0_14] : memref<32x128xf32, #tpu.memory_space<vmem>>, vector<32x128xf32>
    tpu.vector_store %arg4[%c0_13, %c0_14], %29 {strides = array<i32>} : memref<32x128xf32, #tpu.memory_space<vmem>>, vector<32x128xf32>,
    return
  }
  func.func @transform_0(%arg0: i32) -> (i32, i32) {
    %c0_i32 = arith.constant 0 : i32
    %c0_i32_0 = arith.constant 0 : i32
    %c0_i32_1 = arith.constant 0 : i32
    return %c0_i32, %c0_i32_0 : i32, i32
  }
  func.func @transform_1(%arg0: i32) -> (i32, i32) {
    %c0_i32 = arith.constant 0 : i32
    %c0_i32_0 = arith.constant 0 : i32
    %c0_i32_1 = arith.constant 0 : i32
    return %c0_i32, %c0_i32_0 : i32, i32
  }
  func.func @transform_2(%arg0: i32) -> (i32, i32) {
    %c0_i32 = arith.constant 0 : i32
    %c0_i32_0 = arith.constant 0 : i32
    %c0_i32_1 = arith.constant 0 : i32
    return %c0_i32, %c0_i32_0 : i32, i32
  }
  func.func @transform_3(%arg0: i32) -> (i32, i32) {
    %c0_i32 = arith.constant 0 : i32
    %c0_i32_0 = arith.constant 0 : i32
    %c0_i32_1 = arith.constant 0 : i32
    return %c0_i32, %c0_i32_0 : i32, i32
  }
}

module attributes {stable_mosaic.version = 11 : i64} {
  func.func @_mlp_heads_kernel(%arg0: i32, %arg1: memref<2x2048xf32, #tpu.memory_space<vmem>>, %arg2: memref<2048x1024xbf16, #tpu.memory_space<vmem>>, %arg3: memref<3x1024xf32, #tpu.memory_space<vmem>>, %arg4: memref<1024x64xbf16, #tpu.memory_space<vmem>>, %arg5: memref<1x64xf32, #tpu.memory_space<vmem>>, %arg6: memref<2x32xf32, #tpu.memory_space<vmem>>, %arg7: memref<2x32xf32, #tpu.memory_space<vmem>>, %arg8: memref<2x32xf32, #tpu.memory_space<vmem>>, %arg9: memref<2x32xf32, #tpu.memory_space<vmem>>) attributes {dimension_semantics = [#tpu.dimension_semantics<arbitrary>], iteration_bounds = array<i64: 1>, scalar_prefetch = 0 : i64, scratch_operands = 0 : i64, tpu.core_type = #tpu.core_type<tc>, window_params = [{pipeline_mode = #tpu.pipeline_mode<synchronous>, transform_indices = @transform_0, window_bounds = array<i64: 2, 2048>}, {pipeline_mode = #tpu.pipeline_mode<synchronous>, transform_indices = @transform_1, window_bounds = array<i64: 2048, 1024>}, {pipeline_mode = #tpu.pipeline_mode<synchronous>, transform_indices = @transform_2, window_bounds = array<i64: 3, 1024>}, {pipeline_mode = #tpu.pipeline_mode<synchronous>, transform_indices = @transform_3, window_bounds = array<i64: 1024, 64>}, {pipeline_mode = #tpu.pipeline_mode<synchronous>, transform_indices = @transform_4, window_bounds = array<i64: 1, 64>}, {pipeline_mode = #tpu.pipeline_mode<synchronous>, transform_indices = @transform_5, window_bounds = array<i64: 2, 32>}, {pipeline_mode = #tpu.pipeline_mode<synchronous>, transform_indices = @transform_6, window_bounds = array<i64: 2, 32>}, {pipeline_mode = #tpu.pipeline_mode<synchronous>, transform_indices = @transform_7, window_bounds = array<i64: 2, 32>}, {pipeline_mode = #tpu.pipeline_mode<synchronous>, transform_indices = @transform_8, window_bounds = array<i64: 2, 32>}]} {
    %c0 = arith.constant 0 : index
    %c0_0 = arith.constant 0 : index
    %0 = vector.load %arg1[%c0, %c0_0] : memref<2x2048xf32, #tpu.memory_space<vmem>>, vector<2x2048xf32>
    %1 = arith.truncf %0 : vector<2x2048xf32> to vector<2x2048xbf16>
    %c0_1 = arith.constant 0 : index
    %c0_2 = arith.constant 0 : index
    %2 = vector.load %arg2[%c0_1, %c0_2] : memref<2048x1024xbf16, #tpu.memory_space<vmem>>, vector<2048x1024xbf16>
    %cst = arith.constant dense<0.000000e+00> : vector<2x1024xf32>
    %3 = tpu.matmul %1, %2, %cst {dimension_numbers = #tpu.dot_dimension_numbers<[1], [0], [0], [1], [0, 0, 1, 1], [], []>} : vector<2x2048xbf16>, vector<2048x1024xbf16>, vector<2x1024xf32> -> vector<2x1024xf32>
    %c0_3 = arith.constant 0 : index
    %c0_4 = arith.constant 0 : index
    %4 = vector.load %arg3[%c0_3, %c0_4] : memref<3x1024xf32, #tpu.memory_space<vmem>>, vector<1x1024xf32>
    %5 = vector.broadcast %4 : vector<1x1024xf32> to vector<2x1024xf32>
    %6 = arith.addf %3, %5 : vector<2x1024xf32>
    %cst_5 = arith.constant dense<0.000000e+00> : vector<1024xf32>
    %7 = vector.multi_reduction <add>, %6, %cst_5 [0] : vector<2x1024xf32> to vector<1024xf32>
    %8 = vector.shape_cast %7 : vector<1024xf32> to vector<1x1024xf32>
    %cst_6 = arith.constant 2.000000e+00 : f32
    %9 = vector.broadcast %cst_6 : f32 to vector<1x1024xf32>
    %10 = arith.divf %8, %9 : vector<1x1024xf32>
    %11 = vector.broadcast %10 : vector<1x1024xf32> to vector<2x1024xf32>
    %12 = arith.subf %6, %11 : vector<2x1024xf32>
    %13 = arith.mulf %12, %12 : vector<2x1024xf32>
    %cst_7 = arith.constant dense<0.000000e+00> : vector<1024xf32>
    %14 = vector.multi_reduction <add>, %13, %cst_7 [0] : vector<2x1024xf32> to vector<1024xf32>
    %15 = vector.shape_cast %14 : vector<1024xf32> to vector<1x1024xf32>
    %cst_8 = arith.constant 2.000000e+00 : f32
    %16 = vector.broadcast %cst_8 : f32 to vector<1x1024xf32>
    %17 = arith.divf %15, %16 : vector<1x1024xf32>
    %c1 = arith.constant 1 : index
    %c0_9 = arith.constant 0 : index
    %18 = vector.load %arg3[%c1, %c0_9] : memref<3x1024xf32, #tpu.memory_space<vmem>>, vector<1x1024xf32>
    %cst_10 = arith.constant 9.99999974E-6 : f32
    %19 = vector.broadcast %cst_10 : f32 to vector<1x1024xf32>
    %20 = arith.addf %17, %19 : vector<1x1024xf32>
    %21 = math.rsqrt %20 : vector<1x1024xf32>
    %22 = arith.mulf %18, %21 : vector<1x1024xf32>
    %23 = vector.broadcast %22 : vector<1x1024xf32> to vector<2x1024xf32>
    %24 = arith.mulf %12, %23 : vector<2x1024xf32>
    %c2 = arith.constant 2 : index
    %c0_11 = arith.constant 0 : index
    %25 = vector.load %arg3[%c2, %c0_11] : memref<3x1024xf32, #tpu.memory_space<vmem>>, vector<1x1024xf32>
    %26 = vector.broadcast %25 : vector<1x1024xf32> to vector<2x1024xf32>
    %27 = arith.addf %24, %26 : vector<2x1024xf32>
    %cst_12 = arith.constant 0.000000e+00 : f32
    %28 = vector.broadcast %cst_12 : f32 to vector<2x1024xf32>
    %29 = arith.maximumf %27, %28 : vector<2x1024xf32>
    %30 = arith.truncf %29 : vector<2x1024xf32> to vector<2x1024xbf16>
    %c0_13 = arith.constant 0 : index
    %c0_14 = arith.constant 0 : index
    %31 = vector.load %arg4[%c0_13, %c0_14] : memref<1024x64xbf16, #tpu.memory_space<vmem>>, vector<1024x64xbf16>
    %cst_15 = arith.constant dense<0.000000e+00> : vector<2x64xf32>
    %32 = tpu.matmul %30, %31, %cst_15 {dimension_numbers = #tpu.dot_dimension_numbers<[1], [0], [0], [1], [0, 0, 1, 1], [], []>} : vector<2x1024xbf16>, vector<1024x64xbf16>, vector<2x64xf32> -> vector<2x64xf32>
    %c0_16 = arith.constant 0 : index
    %c0_17 = arith.constant 0 : index
    %33 = vector.load %arg5[%c0_16, %c0_17] : memref<1x64xf32, #tpu.memory_space<vmem>>, vector<1x64xf32>
    %34 = vector.broadcast %33 : vector<1x64xf32> to vector<2x64xf32>
    %35 = arith.addf %32, %34 : vector<2x64xf32>
    %36 = vector.extract_strided_slice %35 {offsets = [0, 0], sizes = [2, 32], strides = [1, 1]} : vector<2x64xf32> to vector<2x32xf32>
    %37 = vector.extract_strided_slice %35 {offsets = [0, 32], sizes = [2, 32], strides = [1, 1]} : vector<2x64xf32> to vector<2x32xf32>
    %cst_18 = arith.constant 5.000000e-01 : f32
    %38 = vector.broadcast %cst_18 : f32 to vector<2x32xf32>
    %39 = arith.mulf %37, %38 : vector<2x32xf32>
    %40 = math.exp %39 : vector<2x32xf32>
    %c0_19 = arith.constant 0 : index
    %c0_20 = arith.constant 0 : index
    %41 = vector.load %arg6[%c0_19, %c0_20] : memref<2x32xf32, #tpu.memory_space<vmem>>, vector<2x32xf32>
    %42 = arith.mulf %40, %41 : vector<2x32xf32>
    %43 = arith.addf %36, %42 : vector<2x32xf32>
    %c0_21 = arith.constant 0 : index
    %c0_22 = arith.constant 0 : index
    %44 = vector.load %arg7[%c0_21, %c0_22] : memref<2x32xf32, #tpu.memory_space<vmem>>, vector<2x32xf32>
    tpu.vector_store %arg7[%c0_21, %c0_22], %43 {strides = array<i32>} : memref<2x32xf32, #tpu.memory_space<vmem>>, vector<2x32xf32>,
    %c0_23 = arith.constant 0 : index
    %c0_24 = arith.constant 0 : index
    %45 = vector.load %arg8[%c0_23, %c0_24] : memref<2x32xf32, #tpu.memory_space<vmem>>, vector<2x32xf32>
    tpu.vector_store %arg8[%c0_23, %c0_24], %36 {strides = array<i32>} : memref<2x32xf32, #tpu.memory_space<vmem>>, vector<2x32xf32>,
    %c0_25 = arith.constant 0 : index
    %c0_26 = arith.constant 0 : index
    %46 = vector.load %arg9[%c0_25, %c0_26] : memref<2x32xf32, #tpu.memory_space<vmem>>, vector<2x32xf32>
    tpu.vector_store %arg9[%c0_25, %c0_26], %37 {strides = array<i32>} : memref<2x32xf32, #tpu.memory_space<vmem>>, vector<2x32xf32>,
    return
  }
  func.func @transform_0(%arg0: i32) -> (i32, i32) {
    %c0_i32 = arith.constant 0 : i32
    %c0_i32_0 = arith.constant 0 : i32
    %c0_i32_1 = arith.constant 0 : i32
    return %c0_i32, %c0_i32_0 : i32, i32
  }
  func.func @transform_1(%arg0: i32) -> (i32, i32) {
    %c0_i32 = arith.constant 0 : i32
    %c0_i32_0 = arith.constant 0 : i32
    %c0_i32_1 = arith.constant 0 : i32
    return %c0_i32, %c0_i32_0 : i32, i32
  }
  func.func @transform_2(%arg0: i32) -> (i32, i32) {
    %c0_i32 = arith.constant 0 : i32
    %c0_i32_0 = arith.constant 0 : i32
    %c0_i32_1 = arith.constant 0 : i32
    return %c0_i32, %c0_i32_0 : i32, i32
  }
  func.func @transform_3(%arg0: i32) -> (i32, i32) {
    %c0_i32 = arith.constant 0 : i32
    %c0_i32_0 = arith.constant 0 : i32
    %c0_i32_1 = arith.constant 0 : i32
    return %c0_i32, %c0_i32_0 : i32, i32
  }
  func.func @transform_4(%arg0: i32) -> (i32, i32) {
    %c0_i32 = arith.constant 0 : i32
    %c0_i32_0 = arith.constant 0 : i32
    %c0_i32_1 = arith.constant 0 : i32
    return %c0_i32, %c0_i32_0 : i32, i32
  }
  func.func @transform_5(%arg0: i32) -> (i32, i32) {
    %c0_i32 = arith.constant 0 : i32
    %c0_i32_0 = arith.constant 0 : i32
    %c0_i32_1 = arith.constant 0 : i32
    return %c0_i32, %c0_i32_0 : i32, i32
  }
  func.func @transform_6(%arg0: i32) -> (i32, i32) {
    %c0_i32 = arith.constant 0 : i32
    %c0_i32_0 = arith.constant 0 : i32
    %c0_i32_1 = arith.constant 0 : i32
    return %c0_i32, %c0_i32_0 : i32, i32
  }
  func.func @transform_7(%arg0: i32) -> (i32, i32) {
    %c0_i32 = arith.constant 0 : i32
    %c0_i32_0 = arith.constant 0 : i32
    %c0_i32_1 = arith.constant 0 : i32
    return %c0_i32, %c0_i32_0 : i32, i32
  }
  func.func @transform_8(%arg0: i32) -> (i32, i32) {
    %c0_i32 = arith.constant 0 : i32
    %c0_i32_0 = arith.constant 0 : i32
    %c0_i32_1 = arith.constant 0 : i32
    return %c0_i32, %c0_i32_0 : i32, i32
  }
}

</mosaic_0001>

<llo_original>
// kernel: encoder_forward.3
$region0: #{encoder_forward.3}
  #allocation0 [shape = 'u32[]', space=smem, size = 0x4, offset = 0x4, fixed_abs, tag = 'smem constant byte address 0x4 - core index']
  #allocation1 [shape = 'u32[144,128]{1,0:T(1,128)}', space=vmem, size = 0x12000, scoped, tag = 'internal scratch']
  %s0 = inlined_call_operand.vmem [shape: f32[128,128], index: 0, kind: input, shape index: {}]
  %s1 = inlined_call_operand.vmem [shape: bf16[128,64], index: 1, kind: input, shape index: {}]
  %s2 = inlined_call_operand.hbm [shape: f32[3,64], index: 2, kind: input, shape index: {}]
  %s3 = inlined_call_operand.vmem [shape: f32[128,64], index: 3, kind: output, shape index: {}]
  %s4 = sld [smem:[#allocation0]]
  $region26: #{encoder_forward.3} parent=0
    _
  %s6 = ssub.s32 1, %s4
  %s7 = scalar_select 0, %s6, %s4
  $region1: #{encoder_forward.3} parent=0
    #allocation2 [shape = 'u8[2048]{0}', space=vmem, size = 0x800, scoped, tag = 'input window, operand 2, single buffered']
    #allocation3 [shape = 's32[1]{0}', space=sflag, size = 0x4, scoped, tag = 'scoped memory for encoder_forward.3']
    %8 = vsyncpa [#allocation3], 0
    // Predicated region
    $region2: #{encoder_forward.3} parent=1 // pred_check
      _
    $region3: #{encoder_forward.3} parent=1 // pred_check_branch
      %10 = sbr.rel (0) target = $region5
    $region4: #{encoder_forward.3} parent=1 // pred_region
      _
    $region5: #{encoder_forward.3} parent=1 // pred_fallthru
      _
    // Predicated region
    $region6: #{encoder_forward.3} parent=1 // pred_check
      _
    $region7: #{encoder_forward.3} parent=1 // pred_check_branch
      %12 = sbr.rel (0) target = $region9
    $region8: #{encoder_forward.3} parent=1 // pred_region
      _
    $region9: #{encoder_forward.3} parent=1 // pred_fallthru
      _
    // Predicated region
    $region10: #{encoder_forward.3} parent=1 // pred_check
      _
    $region11: #{encoder_forward.3} parent=1 // pred_check_branch
      %14 = sbr.rel (0) target = $region13
    $region12: #{encoder_forward.3} parent=1 // pred_region
      %s16 = ssub.s32 64, 64
      %17 = vsyncadd [#allocation3], %s16
      %s19 = sshll.u32 [#allocation2], 4
      %s20 = int_to_ptr.vmem [resolvable:$true] %s19
      %22 = dma.hbm_to_vmem [thread:$0]  %s2, 64, %s20, [#allocation3]
    $region13: #{encoder_forward.3} parent=1 // pred_fallthru
      _
    // Predicated region
    $region14: #{encoder_forward.3} parent=1 // pred_check
      _
    $region15: #{encoder_forward.3} parent=1 // pred_check_branch
      %24 = sbr.rel (0) target = $region17
    $region16: #{encoder_forward.3} parent=1 // pred_region
      %25 = dma.done [#allocation3], 64
    $region17: #{encoder_forward.3} parent=1 // pred_fallthru
      _
    %v27 = vld [vmem:[%s0] sm:$0xff]
    %v28 = vld [vmem:[%s0 + $0x8] sm:$0xff]
    %v29 = vld [vmem:[%s0 + $0x10] sm:$0xff]
    %v30 = vld [vmem:[%s0 + $0x18] sm:$0xff]
    %v31 = vld [vmem:[%s0 + $0x20] sm:$0xff]
    %v32 = vld [vmem:[%s0 + $0x28] sm:$0xff]
    %v33 = vld [vmem:[%s0 + $0x30] sm:$0xff]
    %v34 = vld [vmem:[%s0 + $0x38] sm:$0xff]
    %v35 = vld [vmem:[%s0 + $0x40] sm:$0xff]
    %v36 = vld [vmem:[%s0 + $0x48] sm:$0xff]
    %v37 = vld [vmem:[%s0 + $0x50] sm:$0xff]
    %v38 = vld [vmem:[%s0 + $0x58] sm:$0xff]
    %v39 = vld [vmem:[%s0 + $0x60] sm:$0xff]
    %v40 = vld [vmem:[%s0 + $0x68] sm:$0xff]
    %v41 = vld [vmem:[%s0 + $0x70] sm:$0xff]
    %v42 = vld [vmem:[%s0 + $0x78] sm:$0xff]
    %v43 = vpack.c.bf16 %v28, %v27
    %v44 = vpack.c.bf16 %v30, %v29
    %v45 = vpack.c.bf16 %v32, %v31
    %v46 = vpack.c.bf16 %v34, %v33
    %v47 = vpack.c.bf16 %v36, %v35
    %v48 = vpack.c.bf16 %v38, %v37
    %v49 = vpack.c.bf16 %v40, %v39
    %v50 = vpack.c.bf16 %v42, %v41
    %v51 = vld [vmem:[%s1] sm:$0xf]
    %v52 = vld [vmem:[%s1 + $0x4] sm:$0xf]
    %v53 = vld [vmem:[%s1 + $0x8] sm:$0xf]
    %v54 = vld [vmem:[%s1 + $0xc] sm:$0xf]
    %v55 = vld [vmem:[%s1 + $0x10] sm:$0xf]
    %v56 = vld [vmem:[%s1 + $0x14] sm:$0xf]
    %v57 = vld [vmem:[%s1 + $0x18] sm:$0xf]
    %v58 = vld [vmem:[%s1 + $0x1c] sm:$0xf]
    %v59 = vld [vmem:[%s1 + $0x20] sm:$0xf]
    %v60 = vld [vmem:[%s1 + $0x24] sm:$0xf]
    %v61 = vld [vmem:[%s1 + $0x28] sm:$0xf]
    %v62 = vld [vmem:[%s1 + $0x2c] sm:$0xf]
    %v63 = vld [vmem:[%s1 + $0x30] sm:$0xf]
    %v64 = vld [vmem:[%s1 + $0x34] sm:$0xf]
    %v65 = vld [vmem:[%s1 + $0x38] sm:$0xf]
    %v66 = vld [vmem:[%s1 + $0x3c] sm:$0xf]
    %v67 = vld [vmem:[#allocation2] sm:$0x1]
    %v68 = vlaneseq
    %v69 = vshrl.u32 %v68, 7
    %v70 = vsub.s32 0, %v69
    %v71 = vrot.slane %v67, %v70
    %v88 = vunpack.c.l.b16 %v51
    %v89 = vunpack.c.l.b16 %v52
    %v90 = vunpack.c.l.b16 %v53
    %v91 = vunpack.c.l.b16 %v54
    %v92 = vunpack.c.l.b16 %v55
    %v93 = vunpack.c.l.b16 %v56
    %v94 = vunpack.c.l.b16 %v57
    %v95 = vunpack.c.l.b16 %v58
    %v96 = vunpack.c.l.b16 %v59
    %v97 = vunpack.c.l.b16 %v60
    %v98 = vunpack.c.l.b16 %v61
    %v99 = vunpack.c.l.b16 %v62
    %v100 = vunpack.c.l.b16 %v63
    %v101 = vunpack.c.l.b16 %v64
    %v102 = vunpack.c.l.b16 %v65
    %v103 = vunpack.c.l.b16 %v66
    %v104 = vpack.c.b16 %v89, %v88
    %v105 = vpack.c.b16 %v91, %v90
    %v106 = vpack.c.b16 %v93, %v92
    %v107 = vpack.c.b16 %v95, %v94
    %v108 = vpack.c.b16 %v97, %v96
    %v109 = vpack.c.b16 %v99, %v98
    %v110 = vpack.c.b16 %v101, %v100
    %v111 = vpack.c.b16 %v103, %v102
    %120 = vmatprep.subr.bf16.mxu0 0
    %121 = vmatpush1.bf16.msra.mxu0 %v104
    %122 = vmatprep.subr.bf16.mxu0 0
    %123 = vmatpush1.bf16.msra.mxu0 %v105
    %124 = vmatprep.subr.bf16.mxu0 0
    %125 = vmatpush1.bf16.msra.mxu0 %v106
    %126 = vmatprep.subr.bf16.mxu0 0
    %127 = vmatpush1.bf16.msra.mxu0 %v107
    %128 = vmatprep.subr.bf16.mxu0 0
    %129 = vmatpush1.bf16.msra.mxu0 %v108
    %130 = vmatprep.subr.bf16.mxu0 0
    %131 = vmatpush1.bf16.msra.mxu0 %v109
    %132 = vmatprep.subr.bf16.mxu0 0
    %133 = vmatpush1.bf16.msra.mxu0 %v110
    %134 = vmatprep.subr.bf16.mxu0 0
    %135 = vmatpush1.bf16.msra.mxu0 %v111
    %136 = vmatprep.subr.bf16.mxu0 0
    %137 = vmatpush1.bf16.msra.mxu0 0
    %138 = vmatprep.subr.bf16.mxu0 0
    %139 = vmatpush1.bf16.msra.mxu0 0
    %140 = vmatprep.subr.bf16.mxu0 0
    %141 = vmatpush1.bf16.msra.mxu0 0
    %142 = vmatprep.subr.bf16.mxu0 0
    %143 = vmatpush1.bf16.msra.mxu0 0
    %144 = vmatprep.subr.bf16.mxu0 0
    %145 = vmatpush1.bf16.msra.mxu0 0
    %146 = vmatprep.subr.bf16.mxu0 0
    %147 = vmatpush1.bf16.msra.mxu0 0
    %148 = vmatprep.subr.bf16.mxu0 0
    %149 = vmatpush1.bf16.msra.mxu0 0
    %150 = vmatprep.subr.bf16.mxu0 0
    %151 = vmatpush1.bf16.msra.mxu0 0
    %152 = vmatprep.mubr.bf16.mxu0 0
    %153 = vmatmul.mubr.bf16.gmra.mrb[0].mxu0 %v43
    %v154 = vpop.f32.mrb[0].mxu0
    %v155 = vadd.f32 %v71, %v154
    %v156 = vpop.f32.mrb[0].mxu0
    %v157 = vpop.f32.mrb[0].mxu0
    %v158 = vadd.f32 %v71, %v157
    %v159 = vpop.f32.mrb[0].mxu0
    %160 = vmatprep.mubr.bf16.mxu0 0
    %161 = vmatmul.mubr.bf16.gmra.mrb[0].mxu0 %v44
    %v162 = vpop.f32.mrb[0].mxu0
    %v163 = vadd.f32 %v71, %v162
    %v164 = vpop.f32.mrb[0].mxu0
    %v165 = vpop.f32.mrb[0].mxu0
    %v166 = vadd.f32 %v71, %v165
    %v167 = vpop.f32.mrb[0].mxu0
    %168 = vmatprep.mubr.bf16.mxu0 0
    %169 = vmatmul.mubr.bf16.gmra.mrb[0].mxu0 %v45
    %v170 = vpop.f32.mrb[0].mxu0
    %v171 = vadd.f32 %v71, %v170
    %v172 = vpop.f32.mrb[0].mxu0
    %v173 = vpop.f32.mrb[0].mxu0
    %v174 = vadd.f32 %v71, %v173
    %v175 = vpop.f32.mrb[0].mxu0
    %176 = vmatprep.mubr.bf16.mxu0 0
    %177 = vmatmul.mubr.bf16.gmra.mrb[0].mxu0 %v46
    %v178 = vpop.f32.mrb[0].mxu0
    %v179 = vadd.f32 %v71, %v178
    %v180 = vpop.f32.mrb[0].mxu0
    %v181 = vpop.f32.mrb[0].mxu0
    %v182 = vadd.f32 %v71, %v181
    %v183 = vpop.f32.mrb[0].mxu0
    %184 = vmatprep.mubr.bf16.mxu0 0
    %185 = vmatmul.mubr.bf16.gmra.mrb[0].mxu0 %v47
    %v186 = vpop.f32.mrb[0].mxu0
    %v187 = vadd.f32 %v71, %v186
    %v188 = vpop.f32.mrb[0].mxu0
    %v189 = vpop.f32.mrb[0].mxu0
    %v190 = vadd.f32 %v71, %v189
    %v191 = vpop.f32.mrb[0].mxu0
    %192 = vmatprep.mubr.bf16.mxu0 0
    %193 = vmatmul.mubr.bf16.gmra.mrb[0].mxu0 %v48
    %v194 = vpop.f32.mrb[0].mxu0
    %v195 = vadd.f32 %v71, %v194
    %v196 = vpop.f32.mrb[0].mxu0
    %v197 = vpop.f32.mrb[0].mxu0
    %v198 = vadd.f32 %v71, %v197
    %v199 = vpop.f32.mrb[0].mxu0
    %200 = vmatprep.mubr.bf16.mxu0 0
    %201 = vmatmul.mubr.bf16.gmra.mrb[0].mxu0 %v49
    %v202 = vpop.f32.mrb[0].mxu0
    %v203 = vadd.f32 %v71, %v202
    %v204 = vpop.f32.mrb[0].mxu0
    %v205 = vpop.f32.mrb[0].mxu0
    %v206 = vadd.f32 %v71, %v205
    %v207 = vpop.f32.mrb[0].mxu0
    %208 = vmatprep.mubr.bf16.mxu0 0
    %209 = vmatmul.mubr.bf16.gmra.mrb[0].mxu0 %v50
    %v210 = vpop.f32.mrb[0].mxu0
    %v211 = vadd.f32 %v71, %v210
    %v212 = vpop.f32.mrb[0].mxu0
    %v213 = vpop.f32.mrb[0].mxu0
    %v214 = vadd.f32 %v71, %v213
    %v215 = vpop.f32.mrb[0].mxu0
    %216 = vdwg.mxu0
    %vm217 = vcmask 523264
    %v218 = vsel %vm217, %v155, 0.0
    %v219 = vsel %vm217, %v158, 0.0
    %v220 = vadd.f32 %v218, %v219
    %v221 = vsel %vm217, %v163, 0.0
    %v222 = vadd.f32 %v220, %v221
    %v223 = vsel %vm217, %v166, 0.0
    %v224 = vadd.f32 %v222, %v223
    %v225 = vsel %vm217, %v171, 0.0
    %v226 = vadd.f32 %v224, %v225
    %v227 = vsel %vm217, %v174, 0.0
    %v228 = vadd.f32 %v226, %v227
    %v229 = vsel %vm217, %v179, 0.0
    %v230 = vadd.f32 %v228, %v229
    %v231 = vsel %vm217, %v182, 0.0
    %v232 = vadd.f32 %v230, %v231
    %v233 = vsel %vm217, %v187, 0.0
    %v234 = vadd.f32 %v232, %v233
    %v235 = vsel %vm217, %v190, 0.0
    %v236 = vadd.f32 %v234, %v235
    %v237 = vsel %vm217, %v195, 0.0
    %v238 = vadd.f32 %v236, %v237
    %v239 = vsel %vm217, %v198, 0.0
    %v240 = vadd.f32 %v238, %v239
    %v241 = vsel %vm217, %v203, 0.0
    %v242 = vadd.f32 %v240, %v241
    %v243 = vsel %vm217, %v206, 0.0
    %v244 = vadd.f32 %v242, %v243
    %v245 = vsel %vm217, %v211, 0.0
    %v246 = vadd.f32 %v244, %v245
    %v247 = vsel %vm217, %v214, 0.0
    %v248 = vadd.f32 %v246, %v247
    %v249 = vrot.slane %v248, 4
    %v250 = vadd.f32 %v248, %v249
    %v251 = vrot.slane %v250, 2
    %v252 = vadd.f32 %v250, %v251
    %v253 = vrot.slane %v252, 1
    %v254 = vadd.f32 %v252, %v253
    %v255 = vrcp.pop 128.0
    %v256 = vmul.f32 %v254, %v255
    %v257 = vsub.f32 %v155, %v256
    %v258 = vsub.f32 %v158, %v256
    %v259 = vsub.f32 %v163, %v256
    %v260 = vsub.f32 %v166, %v256
    %v261 = vsub.f32 %v171, %v256
    %v262 = vsub.f32 %v174, %v256
    %v263 = vsub.f32 %v179, %v256
    %v264 = vsub.f32 %v182, %v256
    %v265 = vsub.f32 %v187, %v256
    %v266 = vsub.f32 %v190, %v256
    %v267 = vsub.f32 %v195, %v256
    %v268 = vsub.f32 %v198, %v256
    %v269 = vsub.f32 %v203, %v256
    %v270 = vsub.f32 %v206, %v256
    %v271 = vsub.f32 %v211, %v256
    %v272 = vsub.f32 %v214, %v256
    %v273 = vmul.f32 %v257, %v257
    %v274 = vmul.f32 %v258, %v258
    %v275 = vmul.f32 %v259, %v259
    %v276 = vmul.f32 %v260, %v260
    %v277 = vmul.f32 %v261, %v261
    %v278 = vmul.f32 %v262, %v262
    %v279 = vmul.f32 %v263, %v263
    %v280 = vmul.f32 %v264, %v264
    %v281 = vmul.f32 %v265, %v265
    %v282 = vmul.f32 %v266, %v266
    %v283 = vmul.f32 %v267, %v267
    %v284 = vmul.f32 %v268, %v268
    %v285 = vmul.f32 %v269, %v269
    %v286 = vmul.f32 %v270, %v270
    %v287 = vmul.f32 %v271, %v271
    %v288 = vmul.f32 %v272, %v272
    %v289 = vsel %vm217, %v273, 0.0
    %v290 = vsel %vm217, %v274, 0.0
    %v291 = vadd.f32 %v289, %v290
    %v292 = vsel %vm217, %v275, 0.0
    %v293 = vadd.f32 %v291, %v292
    %v294 = vsel %vm217, %v276, 0.0
    %v295 = vadd.f32 %v293, %v294
    %v296 = vsel %vm217, %v277, 0.0
    %v297 = vadd.f32 %v295, %v296
    %v298 = vsel %vm217, %v278, 0.0
    %v299 = vadd.f32 %v297, %v298
    %v300 = vsel %vm217, %v279, 0.0
    %v301 = vadd.f32 %v299, %v300
    %v302 = vsel %vm217, %v280, 0.0
    %v303 = vadd.f32 %v301, %v302
    %v304 = vsel %vm217, %v281, 0.0
    %v305 = vadd.f32 %v303, %v304
    %v306 = vsel %vm217, %v282, 0.0
    %v307 = vadd.f32 %v305, %v306
    %v308 = vsel %vm217, %v283, 0.0
    %v309 = vadd.f32 %v307, %v308
    %v310 = vsel %vm217, %v284, 0.0
    %v311 = vadd.f32 %v309, %v310
    %v312 = vsel %vm217, %v285, 0.0
    %v313 = vadd.f32 %v311, %v312
    %v314 = vsel %vm217, %v286, 0.0
    %v315 = vadd.f32 %v313, %v314
    %v316 = vsel %vm217, %v287, 0.0
    %v317 = vadd.f32 %v315, %v316
    %v318 = vsel %vm217, %v288, 0.0
    %v319 = vadd.f32 %v317, %v318
    %v320 = vrot.slane %v319, 4
    %v321 = vadd.f32 %v319, %v320
    %v322 = vrot.slane %v321, 2
    %v323 = vadd.f32 %v321, %v322
    %v324 = vrot.slane %v323, 1
    %v325 = vadd.f32 %v323, %v324
    %v326 = vmul.f32 %v325, %v255
    %v327 = vld [vmem:[#allocation2 + $0x1] sm:$0x1]
    %v328 = vadd.f32 %v326, 1e-05
    %v329 = vrsqrt.pop %v328
    %v330 = vmul.f32 %v327, %v329
    %v331 = vlaneseq
    %v332 = vshrl.u32 %v331, 7
    %v333 = vsub.s32 0, %v332
    %v334 = vrot.slane %v330, %v333
    %v335 = vmul.f32 %v257, %v334
    %v336 = vmul.f32 %v258, %v334
    %v337 = vmul.f32 %v259, %v334
    %v338 = vmul.f32 %v260, %v334
    %v339 = vmul.f32 %v261, %v334
    %v340 = vmul.f32 %v262, %v334
    %v341 = vmul.f32 %v263, %v334
    %v342 = vmul.f32 %v264, %v334
    %v343 = vmul.f32 %v265, %v334
    %v344 = vmul.f32 %v266, %v334
    %v345 = vmul.f32 %v267, %v334
    %v346 = vmul.f32 %v268, %v334
    %v347 = vmul.f32 %v269, %v334
    %v348 = vmul.f32 %v270, %v334
    %v349 = vmul.f32 %v271, %v334
    %v350 = vmul.f32 %v272, %v334
    %v351 = vld [vmem:[#allocation2 + $0x2] sm:$0x1]
    %v352 = vlaneseq
    %v353 = vshrl.u32 %v352, 7
    %v354 = vsub.s32 0, %v353
    %v355 = vrot.slane %v351, %v354
    %v356 = vadd.f32 %v335, %v355
    %v357 = vadd.f32 %v336, %v355
    %v358 = vadd.f32 %v337, %v355
    %v359 = vadd.f32 %v338, %v355
    %v360 = vadd.f32 %v339, %v355
    %v361 = vadd.f32 %v340, %v355
    %v362 = vadd.f32 %v341, %v355
    %v363 = vadd.f32 %v342, %v355
    %v364 = vadd.f32 %v343, %v355
    %v365 = vadd.f32 %v344, %v355
    %v366 = vadd.f32 %v345, %v355
    %v367 = vadd.f32 %v346, %v355
    %v368 = vadd.f32 %v347, %v355
    %v369 = vadd.f32 %v348, %v355
    %v370 = vadd.f32 %v349, %v355
    %v371 = vadd.f32 %v350, %v355
    %v372 = vmax.f32 %v356, 0.0
    %v373 = vmax.f32 %v357, 0.0
    %v374 = vmax.f32 %v358, 0.0
    %v375 = vmax.f32 %v359, 0.0
    %v376 = vmax.f32 %v360, 0.0
    %v377 = vmax.f32 %v361, 0.0
    %v378 = vmax.f32 %v362, 0.0
    %v379 = vmax.f32 %v363, 0.0
    %v380 = vmax.f32 %v364, 0.0
    %v381 = vmax.f32 %v365, 0.0
    %v382 = vmax.f32 %v366, 0.0
    %v383 = vmax.f32 %v367, 0.0
    %v384 = vmax.f32 %v368, 0.0
    %v385 = vmax.f32 %v369, 0.0
    %v386 = vmax.f32 %v370, 0.0
    %v387 = vmax.f32 %v371, 0.0
    %388 = vst.msk [vmem:[%s3] sm:$0xff] %vm217, %v372
    %389 = vst.msk [vmem:[%s3 + $0x8] sm:$0xff] %vm217, %v373
    %390 = vst.msk [vmem:[%s3 + $0x10] sm:$0xff] %vm217, %v374
    %391 = vst.msk [vmem:[%s3 + $0x18] sm:$0xff] %vm217, %v375
    %392 = vst.msk [vmem:[%s3 + $0x20] sm:$0xff] %vm217, %v376
    %393 = vst.msk [vmem:[%s3 + $0x28] sm:$0xff] %vm217, %v377
    %394 = vst.msk [vmem:[%s3 + $0x30] sm:$0xff] %vm217, %v378
    %395 = vst.msk [vmem:[%s3 + $0x38] sm:$0xff] %vm217, %v379
    %396 = vst.msk [vmem:[%s3 + $0x40] sm:$0xff] %vm217, %v380
    %397 = vst.msk [vmem:[%s3 + $0x48] sm:$0xff] %vm217, %v381
    %398 = vst.msk [vmem:[%s3 + $0x50] sm:$0xff] %vm217, %v382
    %399 = vst.msk [vmem:[%s3 + $0x58] sm:$0xff] %vm217, %v383
    %400 = vst.msk [vmem:[%s3 + $0x60] sm:$0xff] %vm217, %v384
    %401 = vst.msk [vmem:[%s3 + $0x68] sm:$0xff] %vm217, %v385
    %402 = vst.msk [vmem:[%s3 + $0x70] sm:$0xff] %vm217, %v386
    %403 = vst.msk [vmem:[%s3 + $0x78] sm:$0xff] %vm217, %v387
    // Predicated region
    $region18: #{encoder_forward.3} parent=1 // pred_check
      _
    $region19: #{encoder_forward.3} parent=1 // pred_check_branch
      %405 = sbr.rel (0) target = $region21
    $region20: #{encoder_forward.3} parent=1 // pred_region
      _
    $region21: #{encoder_forward.3} parent=1 // pred_fallthru
      _
    // Predicated region
    $region22: #{encoder_forward.3} parent=1 // pred_check
      _
    $region23: #{encoder_forward.3} parent=1 // pred_check_branch
      %407 = sbr.rel (0) target = $region25
    $region24: #{encoder_forward.3} parent=1 // pred_region
      _
    $region25: #{encoder_forward.3} parent=1 // pred_fallthru
      _
    %408 = vsyncpa [#allocation3], 1

// kernel: encoder_forward.4
$region0: #{encoder_forward.4}
  #allocation0 [shape = 'u32[]', space=smem, size = 0x4, offset = 0x4, fixed_abs, tag = 'smem constant byte address 0x4 - core index']
  #allocation1 [shape = 'u32[144,128]{1,0:T(1,128)}', space=vmem, size = 0x12000, scoped, tag = 'internal scratch']
  %s0 = inlined_call_operand.vmem [shape: f32[32,1024], index: 0, kind: input, shape index: {}]
  %s1 = inlined_call_operand.vmem [shape: bf16[1024,128], index: 1, kind: input, shape index: {}]
  %s2 = inlined_call_operand.vmem [shape: f32[3,128], index: 2, kind: input, shape index: {}]
  %s3 = inlined_call_operand.vmem [shape: f32[32,128], index: 3, kind: output, shape index: {}]
  %s4 = sld [smem:[#allocation0]]
  $region22: #{encoder_forward.4} parent=0
    _
  %s6 = ssub.s32 1, %s4
  %s7 = scalar_select 0, %s6, %s4
  // Predicated region
  $region2: #{encoder_forward.4} parent=0 // pred_check
    _
  $region3: #{encoder_forward.4} parent=0 // pred_check_branch
    %9 = sbr.rel (0) target = $region5
  $region4: #{encoder_forward.4} parent=0 // pred_region
    _
  $region5: #{encoder_forward.4} parent=0 // pred_fallthru
    _
  // Predicated region
  $region6: #{encoder_forward.4} parent=0 // pred_check
    _
  $region7: #{encoder_forward.4} parent=0 // pred_check_branch
    %11 = sbr.rel (0) target = $region9
  $region8: #{encoder_forward.4} parent=0 // pred_region
    _
  $region9: #{encoder_forward.4} parent=0 // pred_fallthru
    _
  // Predicated region
  $region10: #{encoder_forward.4} parent=0 // pred_check
    _
  $region11: #{encoder_forward.4} parent=0 // pred_check_branch
    %13 = sbr.rel (0) target = $region13
  $region12: #{encoder_forward.4} parent=0 // pred_region
    _
  $region13: #{encoder_forward.4} parent=0 // pred_fallthru
    _
  %v15 = vld [vmem:[%s0] sm:$0xff]
  %v16 = vld [vmem:[%s0 + $0x8] sm:$0xff]
  %v17 = vld [vmem:[%s0 + $0x10] sm:$0xff]
  %v18 = vld [vmem:[%s0 + $0x18] sm:$0xff]
  %v19 = vld [vmem:[%s0 + $0x20] sm:$0xff]
  %v20 = vld [vmem:[%s0 + $0x28] sm:$0xff]
  %v21 = vld [vmem:[%s0 + $0x30] sm:$0xff]
  %v22 = vld [vmem:[%s0 + $0x38] sm:$0xff]
  %v23 = vld [vmem:[%s0 + $0x40] sm:$0xff]
  %v24 = vld [vmem:[%s0 + $0x48] sm:$0xff]
  %v25 = vld [vmem:[%s0 + $0x50] sm:$0xff]
  %v26 = vld [vmem:[%s0 + $0x58] sm:$0xff]
  %v27 = vld [vmem:[%s0 + $0x60] sm:$0xff]
  %v28 = vld [vmem:[%s0 + $0x68] sm:$0xff]
  %v29 = vld [vmem:[%s0 + $0x70] sm:$0xff]
  %v30 = vld [vmem:[%s0 + $0x78] sm:$0xff]
  %v31 = vld [vmem:[%s0 + $0x80] sm:$0xff]
  %v32 = vld [vmem:[%s0 + $0x88] sm:$0xff]
  %v33 = vld [vmem:[%s0 + $0x90] sm:$0xff]
  %v34 = vld [vmem:[%s0 + $0x98] sm:$0xff]
  %v35 = vld [vmem:[%s0 + $0xa0] sm:$0xff]
  %v36 = vld [vmem:[%s0 + $0xa8] sm:$0xff]
  %v37 = vld [vmem:[%s0 + $0xb0] sm:$0xff]
  %v38 = vld [vmem:[%s0 + $0xb8] sm:$0xff]
  %v39 = vld [vmem:[%s0 + $0xc0] sm:$0xff]
  %v40 = vld [vmem:[%s0 + $0xc8] sm:$0xff]
  %v41 = vld [vmem:[%s0 + $0xd0] sm:$0xff]
  %v42 = vld [vmem:[%s0 + $0xd8] sm:$0xff]
  %v43 = vld [vmem:[%s0 + $0xe0] sm:$0xff]
  %v44 = vld [vmem:[%s0 + $0xe8] sm:$0xff]
  %v45 = vld [vmem:[%s0 + $0xf0] sm:$0xff]
  %v46 = vld [vmem:[%s0 + $0xf8] sm:$0xff]
  %v47 = vpack.c.bf16 %v23, %v15
  %v48 = vpack.c.bf16 %v24, %v16
  %v49 = vpack.c.bf16 %v25, %v17
  %v50 = vpack.c.bf16 %v26, %v18
  %v51 = vpack.c.bf16 %v27, %v19
  %v52 = vpack.c.bf16 %v28, %v20
  %v53 = vpack.c.bf16 %v29, %v21
  %v54 = vpack.c.bf16 %v30, %v22
  %v55 = vpack.c.bf16 %v39, %v31
  %v56 = vpack.c.bf16 %v40, %v32
  %v57 = vpack.c.bf16 %v41, %v33
  %v58 = vpack.c.bf16 %v42, %v34
  %v59 = vpack.c.bf16 %v43, %v35
  %v60 = vpack.c.bf16 %v44, %v36
  %v61 = vpack.c.bf16 %v45, %v37
  %v62 = vpack.c.bf16 %v46, %v38
  %v63 = vld [vmem:[%s1] sm:$0xf]
  %v64 = vld [vmem:[%s1 + $0x4] sm:$0xf]
  %v65 = vld [vmem:[%s1 + $0x8] sm:$0xf]
  %v66 = vld [vmem:[%s1 + $0xc] sm:$0xf]
  %v67 = vld [vmem:[%s1 + $0x10] sm:$0xf]
  %v68 = vld [vmem:[%s1 + $0x14] sm:$0xf]
  %v69 = vld [vmem:[%s1 + $0x18] sm:$0xf]
  %v70 = vld [vmem:[%s1 + $0x1c] sm:$0xf]
  %v71 = vld [vmem:[%s1 + $0x20] sm:$0xf]
  %v72 = vld [vmem:[%s1 + $0x24] sm:$0xf]
  %v73 = vld [vmem:[%s1 + $0x28] sm:$0xf]
  %v74 = vld [vmem:[%s1 + $0x2c] sm:$0xf]
  %v75 = vld [vmem:[%s1 + $0x30] sm:$0xf]
  %v76 = vld [vmem:[%s1 + $0x34] sm:$0xf]
  %v77 = vld [vmem:[%s1 + $0x38] sm:$0xf]
  %v78 = vld [vmem:[%s1 + $0x3c] sm:$0xf]
  %v79 = vld [vmem:[%s1 + $0x40] sm:$0xf]
  %v80 = vld [vmem:[%s1 + $0x44] sm:$0xf]
  %v81 = vld [vmem:[%s1 + $0x48] sm:$0xf]
  %v82 = vld [vmem:[%s1 + $0x4c] sm:$0xf]
  %v83 = vld [vmem:[%s1 + $0x50] sm:$0xf]
  %v84 = vld [vmem:[%s1 + $0x54] sm:$0xf]
  %v85 = vld [vmem:[%s1 + $0x58] sm:$0xf]
  %v86 = vld [vmem:[%s1 + $0x5c] sm:$0xf]
  %v87 = vld [vmem:[%s1 + $0x60] sm:$0xf]
  %v88 = vld [vmem:[%s1 + $0x64] sm:$0xf]
  %v89 = vld [vmem:[%s1 + $0x68] sm:$0xf]
  %v90 = vld [vmem:[%s1 + $0x6c] sm:$0xf]
  %v91 = vld [vmem:[%s1 + $0x70] sm:$0xf]
  %v92 = vld [vmem:[%s1 + $0x74] sm:$0xf]
  %v93 = vld [vmem:[%s1 + $0x78] sm:$0xf]
  %v94 = vld [vmem:[%s1 + $0x7c] sm:$0xf]
  %v95 = vld [vmem:[%s1 + $0x80] sm:$0xf]
  %v96 = vld [vmem:[%s1 + $0x84] sm:$0xf]
  %v97 = vld [vmem:[%s1 + $0x88] sm:$0xf]
  %v98 = vld [vmem:[%s1 + $0x8c] sm:$0xf]
  %v99 = vld [vmem:[%s1 + $0x90] sm:$0xf]
  %v100 = vld [vmem:[%s1 + $0x94] sm:$0xf]
  %v101 = vld [vmem:[%s1 + $0x98] sm:$0xf]
  %v102 = vld [vmem:[%s1 + $0x9c] sm:$0xf]
  %v103 = vld [vmem:[%s1 + $0xa0] sm:$0xf]
  %v104 = vld [vmem:[%s1 + $0xa4] sm:$0xf]
  %v105 = vld [vmem:[%s1 + $0xa8] sm:$0xf]
  %v106 = vld [vmem:[%s1 + $0xac] sm:$0xf]
  %v107 = vld [vmem:[%s1 + $0xb0] sm:$0xf]
  %v108 = vld [vmem:[%s1 + $0xb4] sm:$0xf]
  %v109 = vld [vmem:[%s1 + $0xb8] sm:$0xf]
  %v110 = vld [vmem:[%s1 + $0xbc] sm:$0xf]
  %v111 = vld [vmem:[%s1 + $0xc0] sm:$0xf]
  %v112 = vld [vmem:[%s1 + $0xc4] sm:$0xf]
  %v113 = vld [vmem:[%s1 + $0xc8] sm:$0xf]
  %v114 = vld [vmem:[%s1 + $0xcc] sm:$0xf]
  %v115 = vld [vmem:[%s1 + $0xd0] sm:$0xf]
  %v116 = vld [vmem:[%s1 + $0xd4] sm:$0xf]
  %v117 = vld [vmem:[%s1 + $0xd8] sm:$0xf]
  %v118 = vld [vmem:[%s1 + $0xdc] sm:$0xf]
  %v119 = vld [vmem:[%s1 + $0xe0] sm:$0xf]
  %v120 = vld [vmem:[%s1 + $0xe4] sm:$0xf]
  %v121 = vld [vmem:[%s1 + $0xe8] sm:$0xf]
  %v122 = vld [vmem:[%s1 + $0xec] sm:$0xf]
  %v123 = vld [vmem:[%s1 + $0xf0] sm:$0xf]
  %v124 = vld [vmem:[%s1 + $0xf4] sm:$0xf]
  %v125 = vld [vmem:[%s1 + $0xf8] sm:$0xf]
  %v126 = vld [vmem:[%s1 + $0xfc] sm:$0xf]
  %v127 = vld [vmem:[%s1 + $0x100] sm:$0xf]
  %v128 = vld [vmem:[%s1 + $0x104] sm:$0xf]
  %v129 = vld [vmem:[%s1 + $0x108] sm:$0xf]
  %v130 = vld [vmem:[%s1 + $0x10c] sm:$0xf]
  %v131 = vld [vmem:[%s1 + $0x110] sm:$0xf]
  %v132 = vld [vmem:[%s1 + $0x114] sm:$0xf]
  %v133 = vld [vmem:[%s1 + $0x118] sm:$0xf]
  %v134 = vld [vmem:[%s1 + $0x11c] sm:$0xf]
  %v135 = vld [vmem:[%s1 + $0x120] sm:$0xf]
  %v136 = vld [vmem:[%s1 + $0x124] sm:$0xf]
  %v137 = vld [vmem:[%s1 + $0x128] sm:$0xf]
  %v138 = vld [vmem:[%s1 + $0x12c] sm:$0xf]
  %v139 = vld [vmem:[%s1 + $0x130] sm:$0xf]
  %v140 = vld [vmem:[%s1 + $0x134] sm:$0xf]
  %v141 = vld [vmem:[%s1 + $0x138] sm:$0xf]
  %v142 = vld [vmem:[%s1 + $0x13c] sm:$0xf]
  %v143 = vld [vmem:[%s1 + $0x140] sm:$0xf]
  %v144 = vld [vmem:[%s1 + $0x144] sm:$0xf]
  %v145 = vld [vmem:[%s1 + $0x148] sm:$0xf]
  %v146 = vld [vmem:[%s1 + $0x14c] sm:$0xf]
  %v147 = vld [vmem:[%s1 + $0x150] sm:$0xf]
  %v148 = vld [vmem:[%s1 + $0x154] sm:$0xf]
  %v149 = vld [vmem:[%s1 + $0x158] sm:$0xf]
  %v150 = vld [vmem:[%s1 + $0x15c] sm:$0xf]
  %v151 = vld [vmem:[%s1 + $0x160] sm:$0xf]
  %v152 = vld [vmem:[%s1 + $0x164] sm:$0xf]
  %v153 = vld [vmem:[%s1 + $0x168] sm:$0xf]
  %v154 = vld [vmem:[%s1 + $0x16c] sm:$0xf]
  %v155 = vld [vmem:[%s1 + $0x170] sm:$0xf]
  %v156 = vld [vmem:[%s1 + $0x174] sm:$0xf]
  %v157 = vld [vmem:[%s1 + $0x178] sm:$0xf]
  %v158 = vld [vmem:[%s1 + $0x17c] sm:$0xf]
  %v159 = vld [vmem:[%s1 + $0x180] sm:$0xf]
  %v160 = vld [vmem:[%s1 + $0x184] sm:$0xf]
  %v161 = vld [vmem:[%s1 + $0x188] sm:$0xf]
  %v162 = vld [vmem:[%s1 + $0x18c] sm:$0xf]
  %v163 = vld [vmem:[%s1 + $0x190] sm:$0xf]
  %v164 = vld [vmem:[%s1 + $0x194] sm:$0xf]
  %v165 = vld [vmem:[%s1 + $0x198] sm:$0xf]
  %v166 = vld [vmem:[%s1 + $0x19c] sm:$0xf]
  %v167 = vld [vmem:[%s1 + $0x1a0] sm:$0xf]
  %v168 = vld [vmem:[%s1 + $0x1a4] sm:$0xf]
  %v169 = vld [vmem:[%s1 + $0x1a8] sm:$0xf]
  %v170 = vld [vmem:[%s1 + $0x1ac] sm:$0xf]
  %v171 = vld [vmem:[%s1 + $0x1b0] sm:$0xf]
  %v172 = vld [vmem:[%s1 + $0x1b4] sm:$0xf]
  %v173 = vld [vmem:[%s1 + $0x1b8] sm:$0xf]
  %v174 = vld [vmem:[%s1 + $0x1bc] sm:$0xf]
  %v175 = vld [vmem:[%s1 + $0x1c0] sm:$0xf]
  %v176 = vld [vmem:[%s1 + $0x1c4] sm:$0xf]
  %v177 = vld [vmem:[%s1 + $0x1c8] sm:$0xf]
  %v178 = vld [vmem:[%s1 + $0x1cc] sm:$0xf]
  %v179 = vld [vmem:[%s1 + $0x1d0] sm:$0xf]
  %v180 = vld [vmem:[%s1 + $0x1d4] sm:$0xf]
  %v181 = vld [vmem:[%s1 + $0x1d8] sm:$0xf]
  %v182 = vld [vmem:[%s1 + $0x1dc] sm:$0xf]
  %v183 = vld [vmem:[%s1 + $0x1e0] sm:$0xf]
  %v184 = vld [vmem:[%s1 + $0x1e4] sm:$0xf]
  %v185 = vld [vmem:[%s1 + $0x1e8] sm:$0xf]
  %v186 = vld [vmem:[%s1 + $0x1ec] sm:$0xf]
  %v187 = vld [vmem:[%s1 + $0x1f0] sm:$0xf]
  %v188 = vld [vmem:[%s1 + $0x1f4] sm:$0xf]
  %v189 = vld [vmem:[%s1 + $0x1f8] sm:$0xf]
  %v190 = vld [vmem:[%s1 + $0x1fc] sm:$0xf]
  %v191 = vld [vmem:[%s2] sm:$0x1]
  %v192 = vlaneseq
  %v193 = vshrl.u32 %v192, 7
  %v194 = vsub.s32 0, %v193
  %v195 = vrot.slane %v191, %v194
  %v324 = vunpack.c.l.b16 %v63
  %v325 = vunpack.c.l.b16 %v64
  %v326 = vunpack.c.l.b16 %v65
  %v327 = vunpack.c.l.b16 %v66
  %v328 = vunpack.c.l.b16 %v67
  %v329 = vunpack.c.l.b16 %v68
  %v330 = vunpack.c.l.b16 %v69
  %v331 = vunpack.c.l.b16 %v70
  %v332 = vunpack.c.l.b16 %v71
  %v333 = vunpack.c.l.b16 %v72
  %v334 = vunpack.c.l.b16 %v73
  %v335 = vunpack.c.l.b16 %v74
  %v336 = vunpack.c.l.b16 %v75
  %v337 = vunpack.c.l.b16 %v76
  %v338 = vunpack.c.l.b16 %v77
  %v339 = vunpack.c.l.b16 %v78
  %v340 = vunpack.c.l.b16 %v79
  %v341 = vunpack.c.l.b16 %v80
  %v342 = vunpack.c.l.b16 %v81
  %v343 = vunpack.c.l.b16 %v82
  %v344 = vunpack.c.l.b16 %v83
  %v345 = vunpack.c.l.b16 %v84
  %v346 = vunpack.c.l.b16 %v85
  %v347 = vunpack.c.l.b16 %v86
  %v348 = vunpack.c.l.b16 %v87
  %v349 = vunpack.c.l.b16 %v88
  %v350 = vunpack.c.l.b16 %v89
  %v351 = vunpack.c.l.b16 %v90
  %v352 = vunpack.c.l.b16 %v91
  %v353 = vunpack.c.l.b16 %v92
  %v354 = vunpack.c.l.b16 %v93
  %v355 = vunpack.c.l.b16 %v94
  %v356 = vunpack.c.l.b16 %v95
  %v357 = vunpack.c.l.b16 %v96
  %v358 = vunpack.c.l.b16 %v97
  %v359 = vunpack.c.l.b16 %v98
  %v360 = vunpack.c.l.b16 %v99
  %v361 = vunpack.c.l.b16 %v100
  %v362 = vunpack.c.l.b16 %v101
  %v363 = vunpack.c.l.b16 %v102
  %v364 = vunpack.c.l.b16 %v103
  %v365 = vunpack.c.l.b16 %v104
  %v366 = vunpack.c.l.b16 %v105
  %v367 = vunpack.c.l.b16 %v106
  %v368 = vunpack.c.l.b16 %v107
  %v369 = vunpack.c.l.b16 %v108
  %v370 = vunpack.c.l.b16 %v109
  %v371 = vunpack.c.l.b16 %v110
  %v372 = vunpack.c.l.b16 %v111
  %v373 = vunpack.c.l.b16 %v112
  %v374 = vunpack.c.l.b16 %v113
  %v375 = vunpack.c.l.b16 %v114
  %v376 = vunpack.c.l.b16 %v115
  %v377 = vunpack.c.l.b16 %v116
  %v378 = vunpack.c.l.b16 %v117
  %v379 = vunpack.c.l.b16 %v118
  %v380 = vunpack.c.l.b16 %v119
  %v381 = vunpack.c.l.b16 %v120
  %v382 = vunpack.c.l.b16 %v121
  %v383 = vunpack.c.l.b16 %v122
  %v384 = vunpack.c.l.b16 %v123
  %v385 = vunpack.c.l.b16 %v124
  %v386 = vunpack.c.l.b16 %v125
  %v387 = vunpack.c.l.b16 %v126
  %v388 = vunpack.c.l.b16 %v127
  %v389 = vunpack.c.l.b16 %v128
  %v390 = vunpack.c.l.b16 %v129
  %v391 = vunpack.c.l.b16 %v130
  %v392 = vunpack.c.l.b16 %v131
  %v393 = vunpack.c.l.b16 %v132
  %v394 = vunpack.c.l.b16 %v133
  %v395 = vunpack.c.l.b16 %v134
  %v396 = vunpack.c.l.b16 %v135
  %v397 = vunpack.c.l.b16 %v136
  %v398 = vunpack.c.l.b16 %v137
  %v399 = vunpack.c.l.b16 %v138
  %v400 = vunpack.c.l.b16 %v139
  %v401 = vunpack.c.l.b16 %v140
  %v402 = vunpack.c.l.b16 %v141
  %v403 = vunpack.c.l.b16 %v142
  %v404 = vunpack.c.l.b16 %v143
  %v405 = vunpack.c.l.b16 %v144
  %v406 = vunpack.c.l.b16 %v145
  %v407 = vunpack.c.l.b16 %v146
  %v408 = vunpack.c.l.b16 %v147
  %v409 = vunpack.c.l.b16 %v148
  %v410 = vunpack.c.l.b16 %v149
  %v411 = vunpack.c.l.b16 %v150
  %v412 = vunpack.c.l.b16 %v151
  %v413 = vunpack.c.l.b16 %v152
  %v414 = vunpack.c.l.b16 %v153
  %v415 = vunpack.c.l.b16 %v154
  %v416 = vunpack.c.l.b16 %v155
  %v417 = vunpack.c.l.b16 %v156
  %v418 = vunpack.c.l.b16 %v157
  %v419 = vunpack.c.l.b16 %v158
  %v420 = vunpack.c.l.b16 %v159
  %v421 = vunpack.c.l.b16 %v160
  %v422 = vunpack.c.l.b16 %v161
  %v423 = vunpack.c.l.b16 %v162
  %v424 = vunpack.c.l.b16 %v163
  %v425 = vunpack.c.l.b16 %v164
  %v426 = vunpack.c.l.b16 %v165
  %v427 = vunpack.c.l.b16 %v166
  %v428 = vunpack.c.l.b16 %v167
  %v429 = vunpack.c.l.b16 %v168
  %v430 = vunpack.c.l.b16 %v169
  %v431 = vunpack.c.l.b16 %v170
  %v432 = vunpack.c.l.b16 %v171
  %v433 = vunpack.c.l.b16 %v172
  %v434 = vunpack.c.l.b16 %v173
  %v435 = vunpack.c.l.b16 %v174
  %v436 = vunpack.c.l.b16 %v175
  %v437 = vunpack.c.l.b16 %v176
  %v438 = vunpack.c.l.b16 %v177
  %v439 = vunpack.c.l.b16 %v178
  %v440 = vunpack.c.l.b16 %v179
  %v441 = vunpack.c.l.b16 %v180
  %v442 = vunpack.c.l.b16 %v181
  %v443 = vunpack.c.l.b16 %v182
  %v444 = vunpack.c.l.b16 %v183
  %v445 = vunpack.c.l.b16 %v184
  %v446 = vunpack.c.l.b16 %v185
  %v447 = vunpack.c.l.b16 %v186
  %v448 = vunpack.c.l.b16 %v187
  %v449 = vunpack.c.l.b16 %v188
  %v450 = vunpack.c.l.b16 %v189
  %v451 = vunpack.c.l.b16 %v190
  %v452 = vpack.c.b16 %v325, %v324
  %v453 = vpack.c.b16 %v327, %v326
  %v454 = vpack.c.b16 %v329, %v328
  %v455 = vpack.c.b16 %v331, %v330
  %v456 = vpack.c.b16 %v333, %v332
  %v457 = vpack.c.b16 %v335, %v334
  %v458 = vpack.c.b16 %v337, %v336
  %v459 = vpack.c.b16 %v339, %v338
  %v460 = vpack.c.b16 %v341, %v340
  %v461 = vpack.c.b16 %v343, %v342
  %v462 = vpack.c.b16 %v345, %v344
  %v463 = vpack.c.b16 %v347, %v346
  %v464 = vpack.c.b16 %v349, %v348
  %v465 = vpack.c.b16 %v351, %v350
  %v466 = vpack.c.b16 %v353, %v352
  %v467 = vpack.c.b16 %v355, %v354
  %v468 = vpack.c.b16 %v357, %v356
  %v469 = vpack.c.b16 %v359, %v358
  %v470 = vpack.c.b16 %v361, %v360
  %v471 = vpack.c.b16 %v363, %v362
  %v472 = vpack.c.b16 %v365, %v364
  %v473 = vpack.c.b16 %v367, %v366
  %v474 = vpack.c.b16 %v369, %v368
  %v475 = vpack.c.b16 %v371, %v370
  %v476 = vpack.c.b16 %v373, %v372
  %v477 = vpack.c.b16 %v375, %v374
  %v478 = vpack.c.b16 %v377, %v376
  %v479 = vpack.c.b16 %v379, %v378
  %v480 = vpack.c.b16 %v381, %v380
  %v481 = vpack.c.b16 %v383, %v382
  %v482 = vpack.c.b16 %v385, %v384
  %v483 = vpack.c.b16 %v387, %v386
  %v484 = vpack.c.b16 %v389, %v388
  %v485 = vpack.c.b16 %v391, %v390
  %v486 = vpack.c.b16 %v393, %v392
  %v487 = vpack.c.b16 %v395, %v394
  %v488 = vpack.c.b16 %v397, %v396
  %v489 = vpack.c.b16 %v399, %v398
  %v490 = vpack.c.b16 %v401, %v400
  %v491 = vpack.c.b16 %v403, %v402
  %v492 = vpack.c.b16 %v405, %v404
  %v493 = vpack.c.b16 %v407, %v406
  %v494 = vpack.c.b16 %v409, %v408
  %v495 = vpack.c.b16 %v411, %v410
  %v496 = vpack.c.b16 %v413, %v412
  %v497 = vpack.c.b16 %v415, %v414
  %v498 = vpack.c.b16 %v417, %v416
  %v499 = vpack.c.b16 %v419, %v418
  %v500 = vpack.c.b16 %v421, %v420
  %v501 = vpack.c.b16 %v423, %v422
  %v502 = vpack.c.b16 %v425, %v424
  %v503 = vpack.c.b16 %v427, %v426
  %v504 = vpack.c.b16 %v429, %v428
  %v505 = vpack.c.b16 %v431, %v430
  %v506 = vpack.c.b16 %v433, %v432
  %v507 = vpack.c.b16 %v435, %v434
  %v508 = vpack.c.b16 %v437, %v436
  %v509 = vpack.c.b16 %v439, %v438
  %v510 = vpack.c.b16 %v441, %v440
  %v511 = vpack.c.b16 %v443, %v442
  %v512 = vpack.c.b16 %v445, %v444
  %v513 = vpack.c.b16 %v447, %v446
  %v514 = vpack.c.b16 %v449, %v448
  %v515 = vpack.c.b16 %v451, %v450
  %580 = vmatprep.subr.bf16.mxu0 0
  %581 = vmatpush1.bf16.msra.mxu0 %v452
  %582 = vmatprep.subr.bf16.mxu0 0
  %583 = vmatpush1.bf16.msra.mxu0 %v453
  %584 = vmatprep.subr.bf16.mxu0 0
  %585 = vmatpush1.bf16.msra.mxu0 %v454
  %586 = vmatprep.subr.bf16.mxu0 0
  %587 = vmatpush1.bf16.msra.mxu0 %v455
  %588 = vmatprep.subr.bf16.mxu0 0
  %589 = vmatpush1.bf16.msra.mxu0 %v456
  %590 = vmatprep.subr.bf16.mxu0 0
  %591 = vmatpush1.bf16.msra.mxu0 %v457
  %592 = vmatprep.subr.bf16.mxu0 0
  %593 = vmatpush1.bf16.msra.mxu0 %v458
  %594 = vmatprep.subr.bf16.mxu0 0
  %595 = vmatpush1.bf16.msra.mxu0 %v459
  %596 = vmatprep.subr.bf16.mxu0 0
  %597 = vmatpush1.bf16.msra.mxu0 %v460
  %598 = vmatprep.subr.bf16.mxu0 0
  %599 = vmatpush1.bf16.msra.mxu0 %v461
  %600 = vmatprep.subr.bf16.mxu0 0
  %601 = vmatpush1.bf16.msra.mxu0 %v462
  %602 = vmatprep.subr.bf16.mxu0 0
  %603 = vmatpush1.bf16.msra.mxu0 %v463
  %604 = vmatprep.subr.bf16.mxu0 0
  %605 = vmatpush1.bf16.msra.mxu0 %v464
  %606 = vmatprep.subr.bf16.mxu0 0
  %607 = vmatpush1.bf16.msra.mxu0 %v465
  %608 = vmatprep.subr.bf16.mxu0 0
  %609 = vmatpush1.bf16.msra.mxu0 %v466
  %610 = vmatprep.subr.bf16.mxu0 0
  %611 = vmatpush1.bf16.msra.mxu0 %v467
  %612 = vmatprep.mubr.bf16.mxu0 %v48
  %613 = vmatmul.mubr.bf16.gmra.mrb[0].mxu0 %v47
  %v614 = vpop.f32.mrb[0].mxu0
  %v615 = vadd.f32 %v195, %v614
  %v616 = vpop.f32.mrb[0].mxu0
  %v617 = vpop.f32.mrb[0].mxu0
  %v618 = vadd.f32 %v195, %v617
  %v619 = vpop.f32.mrb[0].mxu0
  %620 = vmatprep.mubr.bf16.mxu0 %v56
  %621 = vmatmul.mubr.bf16.gmra.mrb[0].mxu0 %v55
  %v622 = vpop.f32.mrb[0].mxu0
  %v623 = vadd.f32 %v195, %v622
  %v624 = vpop.f32.mrb[0].mxu0
  %v625 = vpop.f32.mrb[0].mxu0
  %v626 = vadd.f32 %v195, %v625
  %v627 = vpop.f32.mrb[0].mxu0
  %628 = vdwg.mxu0
  %629 = vmatprep.subr.bf16.mxu0 0
  %630 = vmatpush1.bf16.msra.mxu0 %v468
  %631 = vmatprep.subr.bf16.mxu0 0
  %632 = vmatpush1.bf16.msra.mxu0 %v469
  %633 = vmatprep.subr.bf16.mxu0 0
  %634 = vmatpush1.bf16.msra.mxu0 %v470
  %635 = vmatprep.subr.bf16.mxu0 0
  %636 = vmatpush1.bf16.msra.mxu0 %v471
  %637 = vmatprep.subr.bf16.mxu0 0
  %638 = vmatpush1.bf16.msra.mxu0 %v472
  %639 = vmatprep.subr.bf16.mxu0 0
  %640 = vmatpush1.bf16.msra.mxu0 %v473
  %641 = vmatprep.subr.bf16.mxu0 0
  %642 = vmatpush1.bf16.msra.mxu0 %v474
  %643 = vmatprep.subr.bf16.mxu0 0
  %644 = vmatpush1.bf16.msra.mxu0 %v475
  %645 = vmatprep.subr.bf16.mxu0 0
  %646 = vmatpush1.bf16.msra.mxu0 %v476
  %647 = vmatprep.subr.bf16.mxu0 0
  %648 = vmatpush1.bf16.msra.mxu0 %v477
  %649 = vmatprep.subr.bf16.mxu0 0
  %650 = vmatpush1.bf16.msra.mxu0 %v478
  %651 = vmatprep.subr.bf16.mxu0 0
  %652 = vmatpush1.bf16.msra.mxu0 %v479
  %653 = vmatprep.subr.bf16.mxu0 0
  %654 = vmatpush1.bf16.msra.mxu0 %v480
  %655 = vmatprep.subr.bf16.mxu0 0
  %656 = vmatpush1.bf16.msra.mxu0 %v481
  %657 = vmatprep.subr.bf16.mxu0 0
  %658 = vmatpush1.bf16.msra.mxu0 %v482
  %659 = vmatprep.subr.bf16.mxu0 0
  %660 = vmatpush1.bf16.msra.mxu0 %v483
  %661 = vmatprep.mubr.bf16.mxu0 %v50
  %662 = vmatmul.mubr.bf16.gmra.mrb[0].mxu0 %v49
  %v663 = vpop.f32.mrb[0].mxu0
  %v664 = vadd.f32 %v615, %v663
  %v665 = vpop.f32.mrb[0].mxu0
  %v666 = vpop.f32.mrb[0].mxu0
  %v667 = vadd.f32 %v618, %v666
  %v668 = vpop.f32.mrb[0].mxu0
  %669 = vmatprep.mubr.bf16.mxu0 %v58
  %670 = vmatmul.mubr.bf16.gmra.mrb[0].mxu0 %v57
  %v671 = vpop.f32.mrb[0].mxu0
  %v672 = vadd.f32 %v623, %v671
  %v673 = vpop.f32.mrb[0].mxu0
  %v674 = vpop.f32.mrb[0].mxu0
  %v675 = vadd.f32 %v626, %v674
  %v676 = vpop.f32.mrb[0].mxu0
  %677 = vdwg.mxu0
  %678 = vmatprep.subr.bf16.mxu0 0
  %679 = vmatpush1.bf16.msra.mxu0 %v484
  %680 = vmatprep.subr.bf16.mxu0 0
  %681 = vmatpush1.bf16.msra.mxu0 %v485
  %682 = vmatprep.subr.bf16.mxu0 0
  %683 = vmatpush1.bf16.msra.mxu0 %v486
  %684 = vmatprep.subr.bf16.mxu0 0
  %685 = vmatpush1.bf16.msra.mxu0 %v487
  %686 = vmatprep.subr.bf16.mxu0 0
  %687 = vmatpush1.bf16.msra.mxu0 %v488
  %688 = vmatprep.subr.bf16.mxu0 0
  %689 = vmatpush1.bf16.msra.mxu0 %v489
  %690 = vmatprep.subr.bf16.mxu0 0
  %691 = vmatpush1.bf16.msra.mxu0 %v490
  %692 = vmatprep.subr.bf16.mxu0 0
  %693 = vmatpush1.bf16.msra.mxu0 %v491
  %694 = vmatprep.subr.bf16.mxu0 0
  %695 = vmatpush1.bf16.msra.mxu0 %v492
  %696 = vmatprep.subr.bf16.mxu0 0
  %697 = vmatpush1.bf16.msra.mxu0 %v493
  %698 = vmatprep.subr.bf16.mxu0 0
  %699 = vmatpush1.bf16.msra.mxu0 %v494
  %700 = vmatprep.subr.bf16.mxu0 0
  %701 = vmatpush1.bf16.msra.mxu0 %v495
  %702 = vmatprep.subr.bf16.mxu0 0
  %703 = vmatpush1.bf16.msra.mxu0 %v496
  %704 = vmatprep.subr.bf16.mxu0 0
  %705 = vmatpush1.bf16.msra.mxu0 %v497
  %706 = vmatprep.subr.bf16.mxu0 0
  %707 = vmatpush1.bf16.msra.mxu0 %v498
  %708 = vmatprep.subr.bf16.mxu0 0
  %709 = vmatpush1.bf16.msra.mxu0 %v499
  %710 = vmatprep.mubr.bf16.mxu0 %v52
  %711 = vmatmul.mubr.bf16.gmra.mrb[0].mxu0 %v51
  %v712 = vpop.f32.mrb[0].mxu0
  %v713 = vadd.f32 %v664, %v712
  %v714 = vpop.f32.mrb[0].mxu0
  %v715 = vpop.f32.mrb[0].mxu0
  %v716 = vadd.f32 %v667, %v715
  %v717 = vpop.f32.mrb[0].mxu0
  %718 = vmatprep.mubr.bf16.mxu0 %v60
  %719 = vmatmul.mubr.bf16.gmra.mrb[0].mxu0 %v59
  %v720 = vpop.f32.mrb[0].mxu0
  %v721 = vadd.f32 %v672, %v720
  %v722 = vpop.f32.mrb[0].mxu0
  %v723 = vpop.f32.mrb[0].mxu0
  %v724 = vadd.f32 %v675, %v723
  %v725 = vpop.f32.mrb[0].mxu0
  %726 = vdwg.mxu0
  %727 = vmatprep.subr.bf16.mxu0 0
  %728 = vmatpush1.bf16.msra.mxu0 %v500
  %729 = vmatprep.subr.bf16.mxu0 0
  %730 = vmatpush1.bf16.msra.mxu0 %v501
  %731 = vmatprep.subr.bf16.mxu0 0
  %732 = vmatpush1.bf16.msra.mxu0 %v502
  %733 = vmatprep.subr.bf16.mxu0 0
  %734 = vmatpush1.bf16.msra.mxu0 %v503
  %735 = vmatprep.subr.bf16.mxu0 0
  %736 = vmatpush1.bf16.msra.mxu0 %v504
  %737 = vmatprep.subr.bf16.mxu0 0
  %738 = vmatpush1.bf16.msra.mxu0 %v505
  %739 = vmatprep.subr.bf16.mxu0 0
  %740 = vmatpush1.bf16.msra.mxu0 %v506
  %741 = vmatprep.subr.bf16.mxu0 0
  %742 = vmatpush1.bf16.msra.mxu0 %v507
  %743 = vmatprep.subr.bf16.mxu0 0
  %744 = vmatpush1.bf16.msra.mxu0 %v508
  %745 = vmatprep.subr.bf16.mxu0 0
  %746 = vmatpush1.bf16.msra.mxu0 %v509
  %747 = vmatprep.subr.bf16.mxu0 0
  %748 = vmatpush1.bf16.msra.mxu0 %v510
  %749 = vmatprep.subr.bf16.mxu0 0
  %750 = vmatpush1.bf16.msra.mxu0 %v511
  %751 = vmatprep.subr.bf16.mxu0 0
  %752 = vmatpush1.bf16.msra.mxu0 %v512
  %753 = vmatprep.subr.bf16.mxu0 0
  %754 = vmatpush1.bf16.msra.mxu0 %v513
  %755 = vmatprep.subr.bf16.mxu0 0
  %756 = vmatpush1.bf16.msra.mxu0 %v514
  %757 = vmatprep.subr.bf16.mxu0 0
  %758 = vmatpush1.bf16.msra.mxu0 %v515
  %759 = vmatprep.mubr.bf16.mxu0 %v54
  %760 = vmatmul.mubr.bf16.gmra.mrb[0].mxu0 %v53
  %v761 = vpop.f32.mrb[0].mxu0
  %v762 = vadd.f32 %v713, %v761
  %v763 = vpop.f32.mrb[0].mxu0
  %v764 = vpop.f32.mrb[0].mxu0
  %v765 = vadd.f32 %v716, %v764
  %v766 = vpop.f32.mrb[0].mxu0
  %767 = vmatprep.mubr.bf16.mxu0 %v62
  %768 = vmatmul.mubr.bf16.gmra.mrb[0].mxu0 %v61
  %v769 = vpop.f32.mrb[0].mxu0
  %v770 = vadd.f32 %v721, %v769
  %v771 = vpop.f32.mrb[0].mxu0
  %v772 = vpop.f32.mrb[0].mxu0
  %v773 = vadd.f32 %v724, %v772
  %v774 = vpop.f32.mrb[0].mxu0
  %775 = vdwg.mxu0
  %v776 = vadd.f32 %v762, %v765
  %v777 = vadd.f32 %v776, %v770
  %v778 = vadd.f32 %v777, %v773
  %v779 = vrot.slane %v778, 4
  %v780 = vadd.f32 %v778, %v779
  %v781 = vrot.slane %v780, 2
  %v782 = vadd.f32 %v780, %v781
  %v783 = vrot.slane %v782, 1
  %v784 = vadd.f32 %v782, %v783
  %v785 = vrcp.pop 32.0
  %v786 = vmul.f32 %v784, %v785
  %v787 = vsub.f32 %v762, %v786
  %v788 = vsub.f32 %v765, %v786
  %v789 = vsub.f32 %v770, %v786
  %v790 = vsub.f32 %v773, %v786
  %v791 = vmul.f32 %v787, %v787
  %v792 = vmul.f32 %v788, %v788
  %v793 = vmul.f32 %v789, %v789
  %v794 = vmul.f32 %v790, %v790
  %v795 = vadd.f32 %v791, %v792
  %v796 = vadd.f32 %v795, %v793
  %v797 = vadd.f32 %v796, %v794
  %v798 = vrot.slane %v797, 4
  %v799 = vadd.f32 %v797, %v798
  %v800 = vrot.slane %v799, 2
  %v801 = vadd.f32 %v799, %v800
  %v802 = vrot.slane %v801, 1
  %v803 = vadd.f32 %v801, %v802
  %v804 = vmul.f32 %v803, %v785
  %v805 = vld [vmem:[%s2 + $0x1] sm:$0x1]
  %v806 = vadd.f32 %v804, 1e-05
  %v807 = vrsqrt.pop %v806
  %v808 = vmul.f32 %v805, %v807
  %v809 = vlaneseq
  %v810 = vshrl.u32 %v809, 7
  %v811 = vsub.s32 0, %v810
  %v812 = vrot.slane %v808, %v811
  %v813 = vmul.f32 %v787, %v812
  %v814 = vmul.f32 %v788, %v812
  %v815 = vmul.f32 %v789, %v812
  %v816 = vmul.f32 %v790, %v812
  %v817 = vld [vmem:[%s2 + $0x2] sm:$0x1]
  %v818 = vlaneseq
  %v819 = vshrl.u32 %v818, 7
  %v820 = vsub.s32 0, %v819
  %v821 = vrot.slane %v817, %v820
  %v822 = vadd.f32 %v813, %v821
  %v823 = vadd.f32 %v814, %v821
  %v824 = vadd.f32 %v815, %v821
  %v825 = vadd.f32 %v816, %v821
  %v826 = vmax.f32 %v822, 0.0
  %v827 = vmax.f32 %v823, 0.0
  %v828 = vmax.f32 %v824, 0.0
  %v829 = vmax.f32 %v825, 0.0
  %830 = vst [vmem:[%s3] sm:$0xff] %v826
  %831 = vst [vmem:[%s3 + $0x8] sm:$0xff] %v827
  %832 = vst [vmem:[%s3 + $0x10] sm:$0xff] %v828
  %833 = vst [vmem:[%s3 + $0x18] sm:$0xff] %v829
  // Predicated region
  $region14: #{encoder_forward.4} parent=0 // pred_check
    _
  $region15: #{encoder_forward.4} parent=0 // pred_check_branch
    %835 = sbr.rel (0) target = $region17
  $region16: #{encoder_forward.4} parent=0 // pred_region
    _
  $region17: #{encoder_forward.4} parent=0 // pred_fallthru
    _
  // Predicated region
  $region18: #{encoder_forward.4} parent=0 // pred_check
    _
  $region19: #{encoder_forward.4} parent=0 // pred_check_branch
    %837 = sbr.rel (0) target = $region21
  $region20: #{encoder_forward.4} parent=0 // pred_region
    _
  $region21: #{encoder_forward.4} parent=0 // pred_fallthru
    _

// kernel: encoder_forward.5
$region0: #{encoder_forward.5}
  #allocation0 [shape = 'u32[]', space=smem, size = 0x4, offset = 0x4, fixed_abs, tag = 'smem constant byte address 0x4 - core index']
  #allocation1 [shape = 'u32[144,128]{1,0:T(1,128)}', space=vmem, size = 0x12000, scoped, tag = 'internal scratch']
  %s0 = inlined_call_operand.hbm [shape: f32[2,2048], index: 0, kind: input, shape index: {}]
  %s1 = inlined_call_operand.hbm [shape: bf16[2048,1024], index: 1, kind: input, shape index: {}]
  %s2 = inlined_call_operand.hbm [shape: f32[3,1024], index: 2, kind: input, shape index: {}]
  %s3 = inlined_call_operand.hbm [shape: bf16[1024,64], index: 3, kind: input, shape index: {}]
  %s4 = inlined_call_operand.hbm [shape: f32[1,64], index: 4, kind: input, shape index: {}]
  %s5 = inlined_call_operand.hbm [shape: f32[2,32], index: 5, kind: input, shape index: {}]
  %s6 = inlined_call_operand.hbm [shape: f32[2,32], index: 6, kind: output, shape index: {0}]
  %s7 = inlined_call_operand.hbm [shape: f32[2,32], index: 7, kind: output, shape index: {1}]
  %s8 = inlined_call_operand.hbm [shape: f32[2,32], index: 8, kind: output, shape index: {2}]
  %9 = xla_tuple %s6, %s7, %s8
  %s10 = sld [smem:[#allocation0]]
  $region74: #{encoder_forward.5} parent=0
    _
  %s12 = ssub.s32 1, %s10
  %s13 = scalar_select 0, %s12, %s10
  $region1: #{encoder_forward.5} parent=0
    #allocation2 [shape = 'u8[16384]{0}', space=vmem, size = 0x4000, scoped, tag = 'input window, operand 0, single buffered']
    #allocation3 [shape = 's32[1]{0}', space=sflag, size = 0x4, scoped, tag = 'scoped memory for encoder_forward.5']
    #allocation4 [shape = 's32[1]{0}', space=sflag, size = 0x4, scoped, tag = 'scoped memory for encoder_forward.5']
    #allocation5 [shape = 'u8[4194304]{0}', space=vmem, size = 0x400000, scoped, tag = 'input window, operand 1, single buffered']
    #allocation6 [shape = 's32[1]{0}', space=sflag, size = 0x4, scoped, tag = 'scoped memory for encoder_forward.5']
    #allocation7 [shape = 'u8[16384]{0}', space=vmem, size = 0x4000, scoped, tag = 'input window, operand 2, single buffered']
    #allocation8 [shape = 'u8[262144]{0}', space=vmem, size = 0x40000, scoped, tag = 'input window, operand 3, single buffered']
    #allocation9 [shape = 's32[1]{0}', space=sflag, size = 0x4, scoped, tag = 'scoped memory for encoder_forward.5']
    #allocation10 [shape = 'u8[512]{0}', space=vmem, size = 0x400, scoped, tag = 'input window, operand 4, single buffered']
    #allocation11 [shape = 'u8[1024]{0}', space=vmem, size = 0x400, scoped, tag = 'input window, operand 5, single buffered']
    #allocation12 [shape = 's32[1]{0}', space=sflag, size = 0x4, scoped, tag = 'scoped memory for encoder_forward.5']
    #allocation13 [shape = 'u8[1024]{0}', space=vmem, size = 0x400, scoped, tag = 'output window, operand 0, single buffered']
    #allocation14 [shape = 'u8[1024]{0}', space=vmem, size = 0x400, scoped, tag = 'output window, operand 1, single buffered']
    #allocation15 [shape = 's32[1]{0}', space=sflag, size = 0x4, scoped, tag = 'scoped memory for encoder_forward.5']
    #allocation16 [shape = 'u8[1024]{0}', space=vmem, size = 0x400, scoped, tag = 'output window, operand 2, single buffered']
    %14 = vsyncpa [#allocation3], 0
    %15 = vsyncpa [#allocation6], 0
    %16 = vsyncpa [#allocation9], 0
    %17 = vsyncpa [#allocation12], 0
    %18 = vsyncpa [#allocation4], 0
    %19 = vsyncpa [#allocation15], 0
    // Predicated region
    $region2: #{encoder_forward.5} parent=1 // pred_check
      _
    $region3: #{encoder_forward.5} parent=1 // pred_check_branch
      %21 = sbr.rel (0) target = $region5
    $region4: #{encoder_forward.5} parent=1 // pred_region
      %s23 = ssub.s32 512, 512
      %24 = vsyncadd [#allocation3], %s23
      %s26 = sshll.u32 [#allocation2], 4
      %s27 = int_to_ptr.vmem [resolvable:$true] %s26
      %29 = dma.hbm_to_vmem [thread:$0]  %s0, 512, %s27, [#allocation3]
    $region5: #{encoder_forward.5} parent=1 // pred_fallthru
      _
    // Predicated region
    $region6: #{encoder_forward.5} parent=1 // pred_check
      _
    $region7: #{encoder_forward.5} parent=1 // pred_check_branch
      %31 = sbr.rel (0) target = $region9
    $region8: #{encoder_forward.5} parent=1 // pred_region
      %s33 = ssub.s32 131072, 131072
      %34 = vsyncadd [#allocation6], %s33
      %s35 = sshll.u32 [#allocation5], 4
      %s36 = int_to_ptr.vmem [resolvable:$true] %s35
      %41 = dma.hbm_to_vmem [thread:$0]  %s1, 131072, %s36, [#allocation6], 512, 512, 32
    $region9: #{encoder_forward.5} parent=1 // pred_fallthru
      _
    // Predicated region
    $region10: #{encoder_forward.5} parent=1 // pred_check
      _
    $region11: #{encoder_forward.5} parent=1 // pred_check_branch
      %43 = sbr.rel (0) target = $region13
    $region12: #{encoder_forward.5} parent=1 // pred_region
      %s45 = ssub.s32 512, 512
      %46 = vsyncadd [#allocation6], %s45
      %s48 = sshll.u32 [#allocation7], 4
      %s49 = int_to_ptr.vmem [resolvable:$true] %s48
      %51 = dma.hbm_to_vmem [thread:$0]  %s2, 512, %s49, [#allocation6]
    $region13: #{encoder_forward.5} parent=1 // pred_fallthru
      _
    // Predicated region
    $region14: #{encoder_forward.5} parent=1 // pred_check
      _
    $region15: #{encoder_forward.5} parent=1 // pred_check_branch
      %53 = sbr.rel (0) target = $region17
    $region16: #{encoder_forward.5} parent=1 // pred_region
      %s55 = ssub.s32 8192, 8192
      %56 = vsyncadd [#allocation9], %s55
      %s57 = sshll.u32 [#allocation8], 4
      %s58 = int_to_ptr.vmem [resolvable:$true] %s57
      %63 = dma.hbm_to_vmem [thread:$0]  %s3, 8192, %s58, [#allocation9], 64, 64, 4
    $region17: #{encoder_forward.5} parent=1 // pred_fallthru
      _
    // Predicated region
    $region18: #{encoder_forward.5} parent=1 // pred_check
      _
    $region19: #{encoder_forward.5} parent=1 // pred_check_branch
      %65 = sbr.rel (0) target = $region21
    $region20: #{encoder_forward.5} parent=1 // pred_region
      %s67 = ssub.s32 16, 16
      %68 = vsyncadd [#allocation9], %s67
      %s70 = sshll.u32 [#allocation10], 4
      %s71 = int_to_ptr.vmem [resolvable:$true] %s70
      %73 = dma.hbm_to_vmem [thread:$0]  %s4, 16, %s71, [#allocation9]
    $region21: #{encoder_forward.5} parent=1 // pred_fallthru
      _
    // Predicated region
    $region22: #{encoder_forward.5} parent=1 // pred_check
      _
    $region23: #{encoder_forward.5} parent=1 // pred_check_branch
      %75 = sbr.rel (0) target = $region25
    $region24: #{encoder_forward.5} parent=1 // pred_region
      %s77 = ssub.s32 32, 32
      %78 = vsyncadd [#allocation12], %s77
      %s80 = sshll.u32 [#allocation11], 4
      %s81 = int_to_ptr.vmem [resolvable:$true] %s80
      %83 = dma.hbm_to_vmem [thread:$0]  %s5, 32, %s81, [#allocation12]
    $region25: #{encoder_forward.5} parent=1 // pred_fallthru
      _
    // Predicated region
    $region26: #{encoder_forward.5} parent=1 // pred_check
      _
    $region27: #{encoder_forward.5} parent=1 // pred_check_branch
      %85 = sbr.rel (0) target = $region29
    $region28: #{encoder_forward.5} parent=1 // pred_region
      %86 = dma.done [#allocation3], 512
    $region29: #{encoder_forward.5} parent=1 // pred_fallthru
      _
    // Predicated region
    $region30: #{encoder_forward.5} parent=1 // pred_check
      _
    $region31: #{encoder_forward.5} parent=1 // pred_check_branch
      %88 = sbr.rel (0) target = $region33
    $region32: #{encoder_forward.5} parent=1 // pred_region
      %89 = dma.done [#allocation6], 131072
    $region33: #{encoder_forward.5} parent=1 // pred_fallthru
      _
    // Predicated region
    $region34: #{encoder_forward.5} parent=1 // pred_check
      _
    $region35: #{encoder_forward.5} parent=1 // pred_check_branch
      %91 = sbr.rel (0) target = $region37
    $region36: #{encoder_forward.5} parent=1 // pred_region
      %92 = dma.done [#allocation6], 512
    $region37: #{encoder_forward.5} parent=1 // pred_fallthru
      _
    // Predicated region
    $region38: #{encoder_forward.5} parent=1 // pred_check
      _
    $region39: #{encoder_forward.5} parent=1 // pred_check_branch
      %94 = sbr.rel (0) target = $region41
    $region40: #{encoder_forward.5} parent=1 // pred_region
      %95 = dma.done [#allocation9], 8192
    $region41: #{encoder_forward.5} parent=1 // pred_fallthru
      _
    // Predicated region
    $region42: #{encoder_forward.5} parent=1 // pred_check
      _
    $region43: #{encoder_forward.5} parent=1 // pred_check_branch
      %97 = sbr.rel (0) target = $region45
    $region44: #{encoder_forward.5} parent=1 // pred_region
      %98 = dma.done [#allocation9], 16
    $region45: #{encoder_forward.5} parent=1 // pred_fallthru
      _
    // Predicated region
    $region46: #{encoder_forward.5} parent=1 // pred_check
      _
    $region47: #{encoder_forward.5} parent=1 // pred_check_branch
      %100 = sbr.rel (0) target = $region49
    $region48: #{encoder_forward.5} parent=1 // pred_region
      %101 = dma.done [#allocation12], 32
    $region49: #{encoder_forward.5} parent=1 // pred_fallthru
      _
    %v103 = vld [vmem:[#allocation2] sm:$0xff]
    %v104 = vld [vmem:[#allocation2 + $0x8] sm:$0xff]
    %v105 = vld [vmem:[#allocation2 + $0x10] sm:$0xff]
    %v106 = vld [vmem:[#allocation2 + $0x18] sm:$0xff]
    %v111 = vcombine.high %v103, %v103
    %v113 = vunpack.c.l.s4 1983009808
    %v114 = vunpack.c.0.s8 %v113
    %v115 = vlaneseq
    %v116 = vshrl.u32 %v115, 7
    %v117 = vsub.s32 %v114, %v116
    %v118 = vrot.slane %v103, %v117
    %v120 = vunpack.c.l.s4 1983009808
    %v121 = vunpack.c.0.s8 %v120
    %v122 = vlaneseq
    %v123 = vshrl.u32 %v122, 7
    %v124 = vsub.s32 %v121, %v123
    %v125 = vrot.slane %v111, %v124
    %v126 = vcombine.high %v118, %v118
    %v127 = vcombine.high %v125, %v125
    %v128 = vcombine.high %v104, %v104
    %v130 = vunpack.c.l.s4 1983009808
    %v131 = vunpack.c.0.s8 %v130
    %v132 = vlaneseq
    %v133 = vshrl.u32 %v132, 7
    %v134 = vsub.s32 %v131, %v133
    %v135 = vrot.slane %v104, %v134
    %v137 = vunpack.c.l.s4 1983009808
    %v138 = vunpack.c.0.s8 %v137
    %v139 = vlaneseq
    %v140 = vshrl.u32 %v139, 7
    %v141 = vsub.s32 %v138, %v140
    %v142 = vrot.slane %v128, %v141
    %v143 = vcombine.high %v135, %v135
    %v144 = vcombine.high %v142, %v142
    %v145 = vcombine.high %v105, %v105
    %v147 = vunpack.c.l.s4 1983009808
    %v148 = vunpack.c.0.s8 %v147
    %v149 = vlaneseq
    %v150 = vshrl.u32 %v149, 7
    %v151 = vsub.s32 %v148, %v150
    %v152 = vrot.slane %v105, %v151
    %v154 = vunpack.c.l.s4 1983009808
    %v155 = vunpack.c.0.s8 %v154
    %v156 = vlaneseq
    %v157 = vshrl.u32 %v156, 7
    %v158 = vsub.s32 %v155, %v157
    %v159 = vrot.slane %v145, %v158
    %v160 = vcombine.high %v152, %v152
    %v161 = vcombine.high %v159, %v159
    %v162 = vcombine.high %v106, %v106
    %v164 = vunpack.c.l.s4 1983009808
    %v165 = vunpack.c.0.s8 %v164
    %v166 = vlaneseq
    %v167 = vshrl.u32 %v166, 7
    %v168 = vsub.s32 %v165, %v167
    %v169 = vrot.slane %v106, %v168
    %v171 = vunpack.c.l.s4 1983009808
    %v172 = vunpack.c.0.s8 %v171
    %v173 = vlaneseq
    %v174 = vshrl.u32 %v173, 7
    %v175 = vsub.s32 %v172, %v174
    %v176 = vrot.slane %v162, %v175
    %v177 = vcombine.high %v169, %v169
    %v178 = vcombine.high %v176, %v176
    %v195 = vpack.c.bf16 %v118, %v118
    %v196 = vpack.c.bf16 %v126, %v126
    %v197 = vpack.c.bf16 %v125, %v125
    %v198 = vpack.c.bf16 %v127, %v127
    %v199 = vpack.c.bf16 %v135, %v135
    %v200 = vpack.c.bf16 %v143, %v143
    %v201 = vpack.c.bf16 %v142, %v142
    %v202 = vpack.c.bf16 %v144, %v144
    %v203 = vpack.c.bf16 %v152, %v152
    %v204 = vpack.c.bf16 %v160, %v160
    %v205 = vpack.c.bf16 %v159, %v159
    %v206 = vpack.c.bf16 %v161, %v161
    %v207 = vpack.c.bf16 %v169, %v169
    %v208 = vpack.c.bf16 %v177, %v177
    %v209 = vpack.c.bf16 %v176, %v176
    %v210 = vpack.c.bf16 %v178, %v178
    %v211 = vld [vmem:[#allocation5] sm:$0xff]
    %v212 = vld [vmem:[#allocation5 + $0x8] sm:$0xff]
    %v213 = vld [vmem:[#allocation5 + $0x10] sm:$0xff]
    %v214 = vld [vmem:[#allocation5 + $0x18] sm:$0xff]
    %v215 = vld [vmem:[#allocation5 + $0x20] sm:$0xff]
    %v216 = vld [vmem:[#allocation5 + $0x28] sm:$0xff]
    %v217 = vld [vmem:[#allocation5 + $0x30] sm:$0xff]
    %v218 = vld [vmem:[#allocation5 + $0x38] sm:$0xff]
    %v219 = vld [vmem:[#allocation5 + $0x40] sm:$0xff]
    %v220 = vld [vmem:[#allocation5 + $0x48] sm:$0xff]
    %v221 = vld [vmem:[#allocation5 + $0x50] sm:$0xff]
    %v222 = vld [vmem:[#allocation5 + $0x58] sm:$0xff]
    %v223 = vld [vmem:[#allocation5 + $0x60] sm:$0xff]
    %v224 = vld [vmem:[#allocation5 + $0x68] sm:$0xff]
    %v225 = vld [vmem:[#allocation5 + $0x70] sm:$0xff]
    %v226 = vld [vmem:[#allocation5 + $0x78] sm:$0xff]
    %v227 = vld [vmem:[#allocation5 + $0x80] sm:$0xff]
    %v228 = vld [vmem:[#allocation5 + $0x88] sm:$0xff]
    %v229 = vld [vmem:[#allocation5 + $0x90] sm:$0xff]
    %v230 = vld [vmem:[#allocation5 + $0x98] sm:$0xff]
    %v231 = vld [vmem:[#allocation5 + $0xa0] sm:$0xff]
    %v232 = vld [vmem:[#allocation5 + $0xa8] sm:$0xff]
    %v233 = vld [vmem:[#allocation5 + $0xb0] sm:$0xff]
    %v234 = vld [vmem:[#allocation5 + $0xb8] sm:$0xff]
    %v235 = vld [vmem:[#allocation5 + $0xc0] sm:$0xff]
    %v236 = vld [vmem:[#allocation5 + $0xc8] sm:$0xff]
    %v237 = vld [vmem:[#allocation5 + $0xd0] sm:$0xff]
    %v238 = vld [vmem:[#allocation5 + $0xd8] sm:$0xff]
    %v239 = vld [vmem:[#allocation5 + $0xe0] sm:$0xff]
    %v240 = vld [vmem:[#allocation5 + $0xe8] sm:$0xff]
    %v241 = vld [vmem:[#allocation5 + $0xf0] sm:$0xff]
    %v242 = vld [vmem:[#allocation5 + $0xf8] sm:$0xff]
    %v243 = vld [vmem:[#allocation5 + $0x100] sm:$0xff]
    %v244 = vld [vmem:[#allocation5 + $0x108] sm:$0xff]
    %v245 = vld [vmem:[#allocation5 + $0x110] sm:$0xff]
    %v246 = vld [vmem:[#allocation5 + $0x118] sm:$0xff]
    %v247 = vld [vmem:[#allocation5 + $0x120] sm:$0xff]
    %v248 = vld [vmem:[#allocation5 + $0x128] sm:$0xff]
    %v249 = vld [vmem:[#allocation5 + $0x130] sm:$0xff]
    %v250 = vld [vmem:[#allocation5 + $0x138] sm:$0xff]
    %v251 = vld [vmem:[#allocation5 + $0x140] sm:$0xff]
    %v252 = vld [vmem:[#allocation5 + $0x148] sm:$0xff]
    %v253 = vld [vmem:[#allocation5 + $0x150] sm:$0xff]
    %v254 = vld [vmem:[#allocation5 + $0x158] sm:$0xff]
    %v255 = vld [vmem:[#allocation5 + $0x160] sm:$0xff]
    %v256 = vld [vmem:[#allocation5 + $0x168] sm:$0xff]
    %v257 = vld [vmem:[#allocation5 + $0x170] sm:$0xff]
    %v258 = vld [vmem:[#allocation5 + $0x178] sm:$0xff]
    %v259 = vld [vmem:[#allocation5 + $0x180] sm:$0xff]
    %v260 = vld [vmem:[#allocation5 + $0x188] sm:$0xff]
    %v261 = vld [vmem:[#allocation5 + $0x190] sm:$0xff]
    %v262 = vld [vmem:[#allocation5 + $0x198] sm:$0xff]
    %v263 = vld [vmem:[#allocation5 + $0x1a0] sm:$0xff]
    %v264 = vld [vmem:[#allocation5 + $0x1a8] sm:$0xff]
    %v265 = vld [vmem:[#allocation5 + $0x1b0] sm:$0xff]
    %v266 = vld [vmem:[#allocation5 + $0x1b8] sm:$0xff]
    %v267 = vld [vmem:[#allocation5 + $0x1c0] sm:$0xff]
    %v268 = vld [vmem:[#allocation5 + $0x1c8] sm:$0xff]
    %v269 = vld [vmem:[#allocation5 + $0x1d0] sm:$0xff]
    %v270 = vld [vmem:[#allocation5 + $0x1d8] sm:$0xff]
    %v271 = vld [vmem:[#allocation5 + $0x1e0] sm:$0xff]
    %v272 = vld [vmem:[#allocation5 + $0x1e8] sm:$0xff]
    %v273 = vld [vmem:[#allocation5 + $0x1f0] sm:$0xff]
    %v274 = vld [vmem:[#allocation5 + $0x1f8] sm:$0xff]
    %v275 = vld [vmem:[#allocation5 + $0x200] sm:$0xff]
    %v276 = vld [vmem:[#allocation5 + $0x208] sm:$0xff]
    %v277 = vld [vmem:[#allocation5 + $0x210] sm:$0xff]
    %v278 = vld [vmem:[#allocation5 + $0x218] sm:$0xff]
    %v279 = vld [vmem:[#allocation5 + $0x220] sm:$0xff]
    %v280 = vld [vmem:[#allocation5 + $0x228] sm:$0xff]
    %v281 = vld [vmem:[#allocation5 + $0x230] sm:$0xff]
    %v282 = vld [vmem:[#allocation5 + $0x238] sm:$0xff]
    %v283 = vld [vmem:[#allocation5 + $0x240] sm:$0xff]
    %v284 = vld [vmem:[#allocation5 + $0x248] sm:$0xff]
    %v285 = vld [vmem:[#allocation5 + $0x250] sm:$0xff]
    %v286 = vld [vmem:[#allocation5 + $0x258] sm:$0xff]
    %v287 = vld [vmem:[#allocation5 + $0x260] sm:$0xff]
    %v288 = vld [vmem:[#allocation5 + $0x268] sm:$0xff]
    %v289 = vld [vmem:[#allocation5 + $0x270] sm:$0xff]
    %v290 = vld [vmem:[#allocation5 + $0x278] sm:$0xff]
    %v291 = vld [vmem:[#allocation5 + $0x280] sm:$0xff]
    %v292 = vld [vmem:[#allocation5 + $0x288] sm:$0xff]
    %v293 = vld [vmem:[#allocation5 + $0x290] sm:$0xff]
    %v294 = vld [vmem:[#allocation5 + $0x298] sm:$0xff]
    %v295 = vld [vmem:[#allocation5 + $0x2a0] sm:$0xff]
    %v296 = vld [vmem:[#allocation5 + $0x2a8] sm:$0xff]
    %v297 = vld [vmem:[#allocation5 + $0x2b0] sm:$0xff]
    %v298 = vld [vmem:[#allocation5 + $0x2b8] sm:$0xff]
    %v299 = vld [vmem:[#allocation5 + $0x2c0] sm:$0xff]
    %v300 = vld [vmem:[#allocation5 + $0x2c8] sm:$0xff]
    %v301 = vld [vmem:[#allocation5 + $0x2d0] sm:$0xff]
    %v302 = vld [vmem:[#allocation5 + $0x2d8] sm:$0xff]
    %v303 = vld [vmem:[#allocation5 + $0x2e0] sm:$0xff]
    %v304 = vld [vmem:[#allocation5 + $0x2e8] sm:$0xff]
    %v305 = vld [vmem:[#allocation5 + $0x2f0] sm:$0xff]
    %v306 = vld [vmem:[#allocation5 + $0x2f8] sm:$0xff]
    %v307 = vld [vmem:[#allocation5 + $0x300] sm:$0xff]
    %v308 = vld [vmem:[#allocation5 + $0x308] sm:$0xff]
    %v309 = vld [vmem:[#allocation5 + $0x310] sm:$0xff]
    %v310 = vld [vmem:[#allocation5 + $0x318] sm:$0xff]
    %v311 = vld [vmem:[#allocation5 + $0x320] sm:$0xff]
    %v312 = vld [vmem:[#allocation5 + $0x328] sm:$0xff]
    %v313 = vld [vmem:[#allocation5 + $0x330] sm:$0xff]
    %v314 = vld [vmem:[#allocation5 + $0x338] sm:$0xff]
    %v315 = vld [vmem:[#allocation5 + $0x340] sm:$0xff]
    %v316 = vld [vmem:[#allocation5 + $0x348] sm:$0xff]
    %v317 = vld [vmem:[#allocation5 + $0x350] sm:$0xff]
    %v318 = vld [vmem:[#allocation5 + $0x358] sm:$0xff]
    %v319 = vld [vmem:[#allocation5 + $0x360] sm:$0xff]
    %v320 = vld [vmem:[#allocation5 + $0x368] sm:$0xff]
    %v321 = vld [vmem:[#allocation5 + $0x370] sm:$0xff]
    %v322 = vld [vmem:[#allocation5 + $0x378] sm:$0xff]
    %v323 = vld [vmem:[#allocation5 + $0x380] sm:$0xff]
    %v324 = vld [vmem:[#allocation5 + $0x388] sm:$0xff]
    %v325 = vld [vmem:[#allocation5 + $0x390] sm:$0xff]
    %v326 = vld [vmem:[#allocation5 + $0x398] sm:$0xff]
    %v327 = vld [vmem:[#allocation5 + $0x3a0] sm:$0xff]
    %v328 = vld [vmem:[#allocation5 + $0x3a8] sm:$0xff]
    %v329 = vld [vmem:[#allocation5 + $0x3b0] sm:$0xff]
    %v330 = vld [vmem:[#allocation5 + $0x3b8] sm:$0xff]
    %v331 = vld [vmem:[#allocation5 + $0x3c0] sm:$0xff]
    %v332 = vld [vmem:[#allocation5 + $0x3c8] sm:$0xff]
    %v333 = vld [vmem:[#allocation5 + $0x3d0] sm:$0xff]
    %v334 = vld [vmem:[#allocation5 + $0x3d8] sm:$0xff]
    %v335 = vld [vmem:[#allocation5 + $0x3e0] sm:$0xff]
    %v336 = vld [vmem:[#allocation5 + $0x3e8] sm:$0xff]
    %v337 = vld [vmem:[#allocation5 + $0x3f0] sm:$0xff]
    %v338 = vld [vmem:[#allocation5 + $0x3f8] sm:$0xff]
    %v339 = vld [vmem:[#allocation5 + $0x400] sm:$0xff]
    %v340 = vld [vmem:[#allocation5 + $0x408] sm:$0xff]
    %v341 = vld [vmem:[#allocation5 + $0x410] sm:$0xff]
    %v342 = vld [vmem:[#allocation5 + $0x418] sm:$0xff]
    %v343 = vld [vmem:[#allocation5 + $0x420] sm:$0xff]
    %v344 = vld [vmem:[#allocation5 + $0x428] sm:$0xff]
    %v345 = vld [vmem:[#allocation5 + $0x430] sm:$0xff]
    %v346 = vld [vmem:[#allocation5 + $0x438] sm:$0xff]
    %v347 = vld [vmem:[#allocation5 + $0x440] sm:$0xff]
    %v348 = vld [vmem:[#allocation5 + $0x448] sm:$0xff]
    %v349 = vld [vmem:[#allocation5 + $0x450] sm:$0xff]
    %v350 = vld [vmem:[#allocation5 + $0x458] sm:$0xff]
    %v351 = vld [vmem:[#allocation5 + $0x460] sm:$0xff]
    %v352 = vld [vmem:[#allocation5 + $0x468] sm:$0xff]
    %v353 = vld [vmem:[#allocation5 + $0x470] sm:$0xff]
    %v354 = vld [vmem:[#allocation5 + $0x478] sm:$0xff]
    %v355 = vld [vmem:[#allocation5 + $0x480] sm:$0xff]
    %v356 = vld [vmem:[#allocation5 + $0x488] sm:$0xff]
    %v357 = vld [vmem:[#allocation5 + $0x490] sm:$0xff]
    %v358 = vld [vmem:[#allocation5 + $0x498] sm:$0xff]
    %v359 = vld [vmem:[#allocation5 + $0x4a0] sm:$0xff]
    %v360 = vld [vmem:[#allocation5 + $0x4a8] sm:$0xff]
    %v361 = vld [vmem:[#allocation5 + $0x4b0] sm:$0xff]
    %v362 = vld [vmem:[#allocation5 + $0x4b8] sm:$0xff]
    %v363 = vld [vmem:[#allocation5 + $0x4c0] sm:$0xff]
    %v364 = vld [vmem:[#allocation5 + $0x4c8] sm:$0xff]
    %v365 = vld [vmem:[#allocation5 + $0x4d0] sm:$0xff]
    %v366 = vld [vmem:[#allocation5 + $0x4d8] sm:$0xff]
    %v367 = vld [vmem:[#allocation5 + $0x4e0] sm:$0xff]
    %v368 = vld [vmem:[#allocation5 + $0x4e8] sm:$0xff]
    %v369 = vld [vmem:[#allocation5 + $0x4f0] sm:$0xff]
    %v370 = vld [vmem:[#allocation5 + $0x4f8] sm:$0xff]
    %v371 = vld [vmem:[#allocation5 + $0x500] sm:$0xff]
    %v372 = vld [vmem:[#allocation5 + $0x508] sm:$0xff]
    %v373 = vld [vmem:[#allocation5 + $0x510] sm:$0xff]
    %v374 = vld [vmem:[#allocation5 + $0x518] sm:$0xff]
    %v375 = vld [vmem:[#allocation5 + $0x520] sm:$0xff]
    %v376 = vld [vmem:[#allocation5 + $0x528] sm:$0xff]
    %v377 = vld [vmem:[#allocation5 + $0x530] sm:$0xff]
    %v378 = vld [vmem:[#allocation5 + $0x538] sm:$0xff]
    %v379 = vld [vmem:[#allocation5 + $0x540] sm:$0xff]
    %v380 = vld [vmem:[#allocation5 + $0x548] sm:$0xff]
    %v381 = vld [vmem:[#allocation5 + $0x550] sm:$0xff]
    %v382 = vld [vmem:[#allocation5 + $0x558] sm:$0xff]
    %v383 = vld [vmem:[#allocation5 + $0x560] sm:$0xff]
    %v384 = vld [vmem:[#allocation5 + $0x568] sm:$0xff]
    %v385 = vld [vmem:[#allocation5 + $0x570] sm:$0xff]
    %v386 = vld [vmem:[#allocation5 + $0x578] sm:$0xff]
    %v387 = vld [vmem:[#allocation5 + $0x580] sm:$0xff]
    %v388 = vld [vmem:[#allocation5 + $0x588] sm:$0xff]
    %v389 = vld [vmem:[#allocation5 + $0x590] sm:$0xff]
    %v390 = vld [vmem:[#allocation5 + $0x598] sm:$0xff]
    %v391 = vld [vmem:[#allocation5 + $0x5a0] sm:$0xff]
    %v392 = vld [vmem:[#allocation5 + $0x5a8] sm:$0xff]
    %v393 = vld [vmem:[#allocation5 + $0x5b0] sm:$0xff]
    %v394 = vld [vmem:[#allocation5 + $0x5b8] sm:$0xff]
    %v395 = vld [vmem:[#allocation5 + $0x5c0] sm:$0xff]
    %v396 = vld [vmem:[#allocation5 + $0x5c8] sm:$0xff]
    %v397 = vld [vmem:[#allocation5 + $0x5d0] sm:$0xff]
    %v398 = vld [vmem:[#allocation5 + $0x5d8] sm:$0xff]
    %v399 = vld [vmem:[#allocation5 + $0x5e0] sm:$0xff]
    %v400 = vld [vmem:[#allocation5 + $0x5e8] sm:$0xff]
    %v401 = vld [vmem:[#allocation5 + $0x5f0] sm:$0xff]
    %v402 = vld [vmem:[#allocation5 + $0x5f8] sm:$0xff]
    %v403 = vld [vmem:[#allocation5 + $0x600] sm:$0xff]
    %v404 = vld [vmem:[#allocation5 + $0x608] sm:$0xff]
    %v405 = vld [vmem:[#allocation5 + $0x610] sm:$0xff]
    %v406 = vld [vmem:[#allocation5 + $0x618] sm:$0xff]
    %v407 = vld [vmem:[#allocation5 + $0x620] sm:$0xff]
    %v408 = vld [vmem:[#allocation5 + $0x628] sm:$0xff]
    %v409 = vld [vmem:[#allocation5 + $0x630] sm:$0xff]
    %v410 = vld [vmem:[#allocation5 + $0x638] sm:$0xff]
    %v411 = vld [vmem:[#allocation5 + $0x640] sm:$0xff]
    %v412 = vld [vmem:[#allocation5 + $0x648] sm:$0xff]
    %v413 = vld [vmem:[#allocation5 + $0x650] sm:$0xff]
    %v414 = vld [vmem:[#allocation5 + $0x658] sm:$0xff]
    %v415 = vld [vmem:[#allocation5 + $0x660] sm:$0xff]
    %v416 = vld [vmem:[#allocation5 + $0x668] sm:$0xff]
    %v417 = vld [vmem:[#allocation5 + $0x670] sm:$0xff]
    %v418 = vld [vmem:[#allocation5 + $0x678] sm:$0xff]
    %v419 = vld [vmem:[#allocation5 + $0x680] sm:$0xff]
    %v420 = vld [vmem:[#allocation5 + $0x688] sm:$0xff]
    %v421 = vld [vmem:[#allocation5 + $0x690] sm:$0xff]
    %v422 = vld [vmem:[#allocation5 + $0x698] sm:$0xff]
    %v423 = vld [vmem:[#allocation5 + $0x6a0] sm:$0xff]
    %v424 = vld [vmem:[#allocation5 + $0x6a8] sm:$0xff]
    %v425 = vld [vmem:[#allocation5 + $0x6b0] sm:$0xff]
    %v426 = vld [vmem:[#allocation5 + $0x6b8] sm:$0xff]
    %v427 = vld [vmem:[#allocation5 + $0x6c0] sm:$0xff]
    %v428 = vld [vmem:[#allocation5 + $0x6c8] sm:$0xff]
    %v429 = vld [vmem:[#allocation5 + $0x6d0] sm:$0xff]
    %v430 = vld [vmem:[#allocation5 + $0x6d8] sm:$0xff]
    %v431 = vld [vmem:[#allocation5 + $0x6e0] sm:$0xff]
    %v432 = vld [vmem:[#allocation5 + $0x6e8] sm:$0xff]
    %v433 = vld [vmem:[#allocation5 + $0x6f0] sm:$0xff]
    %v434 = vld [vmem:[#allocation5 + $0x6f8] sm:$0xff]
    %v435 = vld [vmem:[#allocation5 + $0x700] sm:$0xff]
    %v436 = vld [vmem:[#allocation5 + $0x708] sm:$0xff]
    %v437 = vld [vmem:[#allocation5 + $0x710] sm:$0xff]
    %v438 = vld [vmem:[#allocation5 + $0x718] sm:$0xff]
    %v439 = vld [vmem:[#allocation5 + $0x720] sm:$0xff]
    %v440 = vld [vmem:[#allocation5 + $0x728] sm:$0xff]
    %v441 = vld [vmem:[#allocation5 + $0x730] sm:$0xff]
    %v442 = vld [vmem:[#allocation5 + $0x738] sm:$0xff]
    %v443 = vld [vmem:[#allocation5 + $0x740] sm:$0xff]
    %v444 = vld [vmem:[#allocation5 + $0x748] sm:$0xff]
    %v445 = vld [vmem:[#allocation5 + $0x750] sm:$0xff]
    %v446 = vld [vmem:[#allocation5 + $0x758] sm:$0xff]
    %v447 = vld [vmem:[#allocation5 + $0x760] sm:$0xff]
    %v448 = vld [vmem:[#allocation5 + $0x768] sm:$0xff]
    %v449 = vld [vmem:[#allocation5 + $0x770] sm:$0xff]
    %v450 = vld [vmem:[#allocation5 + $0x778] sm:$0xff]
    %v451 = vld [vmem:[#allocation5 + $0x780] sm:$0xff]
    %v452 = vld [vmem:[#allocation5 + $0x788] sm:$0xff]
    %v453 = vld [vmem:[#allocation5 + $0x790] sm:$0xff]
    %v454 = vld [vmem:[#allocation5 + $0x798] sm:$0xff]
    %v455 = vld [vmem:[#allocation5 + $0x7a0] sm:$0xff]
    %v456 = vld [vmem:[#allocation5 + $0x7a8] sm:$0xff]
    %v457 = vld [vmem:[#allocation5 + $0x7b0] sm:$0xff]
    %v458 = vld [vmem:[#allocation5 + $0x7b8] sm:$0xff]
    %v459 = vld [vmem:[#allocation5 + $0x7c0] sm:$0xff]
    %v460 = vld [vmem:[#allocation5 + $0x7c8] sm:$0xff]
    %v461 = vld [vmem:[#allocation5 + $0x7d0] sm:$0xff]
    %v462 = vld [vmem:[#allocation5 + $0x7d8] sm:$0xff]
    %v463 = vld [vmem:[#allocation5 + $0x7e0] sm:$0xff]
    %v464 = vld [vmem:[#allocation5 + $0x7e8] sm:$0xff]
    %v465 = vld [vmem:[#allocation5 + $0x7f0] sm:$0xff]
    %v466 = vld [vmem:[#allocation5 + $0x7f8] sm:$0xff]
    %v467 = vld [vmem:[#allocation5 + $0x800] sm:$0xff]
    %v468 = vld [vmem:[#allocation5 + $0x808] sm:$0xff]
    %v469 = vld [vmem:[#allocation5 + $0x810] sm:$0xff]
    %v470 = vld [vmem:[#allocation5 + $0x818] sm:$0xff]
    %v471 = vld [vmem:[#allocation5 + $0x820] sm:$0xff]
    %v472 = vld [vmem:[#allocation5 + $0x828] sm:$0xff]
    %v473 = vld [vmem:[#allocation5 + $0x830] sm:$0xff]
    %v474 = vld [vmem:[#allocation5 + $0x838] sm:$0xff]
    %v475 = vld [vmem:[#allocation5 + $0x840] sm:$0xff]
    %v476 = vld [vmem:[#allocation5 + $0x848] sm:$0xff]
    %v477 = vld [vmem:[#allocation5 + $0x850] sm:$0xff]
    %v478 = vld [vmem:[#allocation5 + $0x858] sm:$0xff]
    %v479 = vld [vmem:[#allocation5 + $0x860] sm:$0xff]
    %v480 = vld [vmem:[#allocation5 + $0x868] sm:$0xff]
    %v481 = vld [vmem:[#allocation5 + $0x870] sm:$0xff]
    %v482 = vld [vmem:[#allocation5 + $0x878] sm:$0xff]
    %v483 = vld [vmem:[#allocation5 + $0x880] sm:$0xff]
    %v484 = vld [vmem:[#allocation5 + $0x888] sm:$0xff]
    %v485 = vld [vmem:[#allocation5 + $0x890] sm:$0xff]
    %v486 = vld [vmem:[#allocation5 + $0x898] sm:$0xff]
    %v487 = vld [vmem:[#allocation5 + $0x8a0] sm:$0xff]
    %v488 = vld [vmem:[#allocation5 + $0x8a8] sm:$0xff]
    %v489 = vld [vmem:[#allocation5 + $0x8b0] sm:$0xff]
    %v490 = vld [vmem:[#allocation5 + $0x8b8] sm:$0xff]
    %v491 = vld [vmem:[#allocation5 + $0x8c0] sm:$0xff]
    %v492 = vld [vmem:[#allocation5 + $0x8c8] sm:$0xff]
    %v493 = vld [vmem:[#allocation5 + $0x8d0] sm:$0xff]
    %v494 = vld [vmem:[#allocation5 + $0x8d8] sm:$0xff]
    %v495 = vld [vmem:[#allocation5 + $0x8e0] sm:$0xff]
    %v496 = vld [vmem:[#allocation5 + $0x8e8] sm:$0xff]
    %v497 = vld [vmem:[#allocation5 + $0x8f0] sm:$0xff]
    %v498 = vld [vmem:[#allocation5 + $0x8f8] sm:$0xff]
    %v499 = vld [vmem:[#allocation5 + $0x900] sm:$0xff]
    %v500 = vld [vmem:[#allocation5 + $0x908] sm:$0xff]
    %v501 = vld [vmem:[#allocation5 + $0x910] sm:$0xff]
    %v502 = vld [vmem:[#allocation5 + $0x918] sm:$0xff]
    %v503 = vld [vmem:[#allocation5 + $0x920] sm:$0xff]
    %v504 = vld [vmem:[#allocation5 + $0x928] sm:$0xff]
    %v505 = vld [vmem:[#allocation5 + $0x930] sm:$0xff]
    %v506 = vld [vmem:[#allocation5 + $0x938] sm:$0xff]
    %v507 = vld [vmem:[#allocation5 + $0x940] sm:$0xff]
    %v508 = vld [vmem:[#allocation5 + $0x948] sm:$0xff]
    %v509 = vld [vmem:[#allocation5 + $0x950] sm:$0xff]
    %v510 = vld [vmem:[#allocation5 + $0x958] sm:$0xff]
    %v511 = vld [vmem:[#allocation5 + $0x960] sm:$0xff]
    %v512 = vld [vmem:[#allocation5 + $0x968] sm:$0xff]
    %v513 = vld [vmem:[#allocation5 + $0x970] sm:$0xff]
    %v514 = vld [vmem:[#allocation5 + $0x978] sm:$0xff]
    %v515 = vld [vmem:[#allocation5 + $0x980] sm:$0xff]
    %v516 = vld [vmem:[#allocation5 + $0x988] sm:$0xff]
    %v517 = vld [vmem:[#allocation5 + $0x990] sm:$0xff]
    %v518 = vld [vmem:[#allocation5 + $0x998] sm:$0xff]
    %v519 = vld [vmem:[#allocation5 + $0x9a0] sm:$0xff]
    %v520 = vld [vmem:[#allocation5 + $0x9a8] sm:$0xff]
    %v521 = vld [vmem:[#allocation5 + $0x9b0] sm:$0xff]
    %v522 = vld [vmem:[#allocation5 + $0x9b8] sm:$0xff]
    %v523 = vld [vmem:[#allocation5 + $0x9c0] sm:$0xff]
    %v524 = vld [vmem:[#allocation5 + $0x9c8] sm:$0xff]
    %v525 = vld [vmem:[#allocation5 + $0x9d0] sm:$0xff]
    %v526 = vld [vmem:[#allocation5 + $0x9d8] sm:$0xff]
    %v527 = vld [vmem:[#allocation5 + $0x9e0] sm:$0xff]
    %v528 = vld [vmem:[#allocation5 + $0x9e8] sm:$0xff]
    %v529 = vld [vmem:[#allocation5 + $0x9f0] sm:$0xff]
    %v530 = vld [vmem:[#allocation5 + $0x9f8] sm:$0xff]
    %v531 = vld [vmem:[#allocation5 + $0xa00] sm:$0xff]
    %v532 = vld [vmem:[#allocation5 + $0xa08] sm:$0xff]
    %v533 = vld [vmem:[#allocation5 + $0xa10] sm:$0xff]
    %v534 = vld [vmem:[#allocation5 + $0xa18] sm:$0xff]
    %v535 = vld [vmem:[#allocation5 + $0xa20] sm:$0xff]
    %v536 = vld [vmem:[#allocation5 + $0xa28] sm:$0xff]
    %v537 = vld [vmem:[#allocation5 + $0xa30] sm:$0xff]
    %v538 = vld [vmem:[#allocation5 + $0xa38] sm:$0xff]
    %v539 = vld [vmem:[#allocation5 + $0xa40] sm:$0xff]
    %v540 = vld [vmem:[#allocation5 + $0xa48] sm:$0xff]
    %v541 = vld [vmem:[#allocation5 + $0xa50] sm:$0xff]
    %v542 = vld [vmem:[#allocation5 + $0xa58] sm:$0xff]
    %v543 = vld [vmem:[#allocation5 + $0xa60] sm:$0xff]
    %v544 = vld [vmem:[#allocation5 + $0xa68] sm:$0xff]
    %v545 = vld [vmem:[#allocation5 + $0xa70] sm:$0xff]
    %v546 = vld [vmem:[#allocation5 + $0xa78] sm:$0xff]
    %v547 = vld [vmem:[#allocation5 + $0xa80] sm:$0xff]
    %v548 = vld [vmem:[#allocation5 + $0xa88] sm:$0xff]
    %v549 = vld [vmem:[#allocation5 + $0xa90] sm:$0xff]
    %v550 = vld [vmem:[#allocation5 + $0xa98] sm:$0xff]
    %v551 = vld [vmem:[#allocation5 + $0xaa0] sm:$0xff]
    %v552 = vld [vmem:[#allocation5 + $0xaa8] sm:$0xff]
    %v553 = vld [vmem:[#allocation5 + $0xab0] sm:$0xff]
    %v554 = vld [vmem:[#allocation5 + $0xab8] sm:$0xff]
    %v555 = vld [vmem:[#allocation5 + $0xac0] sm:$0xff]
    %v556 = vld [vmem:[#allocation5 + $0xac8] sm:$0xff]
    %v557 = vld [vmem:[#allocation5 + $0xad0] sm:$0xff]
    %v558 = vld [vmem:[#allocation5 + $0xad8] sm:$0xff]
    %v559 = vld [vmem:[#allocation5 + $0xae0] sm:$0xff]
    %v560 = vld [vmem:[#allocation5 + $0xae8] sm:$0xff]
    %v561 = vld [vmem:[#allocation5 + $0xaf0] sm:$0xff]
    %v562 = vld [vmem:[#allocation5 + $0xaf8] sm:$0xff]
    %v563 = vld [vmem:[#allocation5 + $0xb00] sm:$0xff]
    %v564 = vld [vmem:[#allocation5 + $0xb08] sm:$0xff]
    %v565 = vld [vmem:[#allocation5 + $0xb10] sm:$0xff]
    %v566 = vld [vmem:[#allocation5 + $0xb18] sm:$0xff]
    %v567 = vld [vmem:[#allocation5 + $0xb20] sm:$0xff]
    %v568 = vld [vmem:[#allocation5 + $0xb28] sm:$0xff]
    %v569 = vld [vmem:[#allocation5 + $0xb30] sm:$0xff]
    %v570 = vld [vmem:[#allocation5 + $0xb38] sm:$0xff]
    %v571 = vld [vmem:[#allocation5 + $0xb40] sm:$0xff]
    %v572 = vld [vmem:[#allocation5 + $0xb48] sm:$0xff]
    %v573 = vld [vmem:[#allocation5 + $0xb50] sm:$0xff]
    %v574 = vld [vmem:[#allocation5 + $0xb58] sm:$0xff]
    %v575 = vld [vmem:[#allocation5 + $0xb60] sm:$0xff]
    %v576 = vld [vmem:[#allocation5 + $0xb68] sm:$0xff]
    %v577 = vld [vmem:[#allocation5 + $0xb70] sm:$0xff]
    %v578 = vld [vmem:[#allocation5 + $0xb78] sm:$0xff]
    %v579 = vld [vmem:[#allocation5 + $0xb80] sm:$0xff]
    %v580 = vld [vmem:[#allocation5 + $0xb88] sm:$0xff]
    %v581 = vld [vmem:[#allocation5 + $0xb90] sm:$0xff]
    %v582 = vld [vmem:[#allocation5 + $0xb98] sm:$0xff]
    %v583 = vld [vmem:[#allocation5 + $0xba0] sm:$0xff]
    %v584 = vld [vmem:[#allocation5 + $0xba8] sm:$0xff]
    %v585 = vld [vmem:[#allocation5 + $0xbb0] sm:$0xff]
    %v586 = vld [vmem:[#allocation5 + $0xbb8] sm:$0xff]
    %v587 = vld [vmem:[#allocation5 + $0xbc0] sm:$0xff]
    %v588 = vld [vmem:[#allocation5 + $0xbc8] sm:$0xff]
    %v589 = vld [vmem:[#allocation5 + $0xbd0] sm:$0xff]
    %v590 = vld [vmem:[#allocation5 + $0xbd8] sm:$0xff]
    %v591 = vld [vmem:[#allocation5 + $0xbe0] sm:$0xff]
    %v592 = vld [vmem:[#allocation5 + $0xbe8] sm:$0xff]
    %v593 = vld [vmem:[#allocation5 + $0xbf0] sm:$0xff]
    %v594 = vld [vmem:[#allocation5 + $0xbf8] sm:$0xff]
    %v595 = vld [vmem:[#allocation5 + $0xc00] sm:$0xff]
    %v596 = vld [vmem:[#allocation5 + $0xc08] sm:$0xff]
    %v597 = vld [vmem:[#allocation5 + $0xc10] sm:$0xff]
    %v598 = vld [vmem:[#allocation5 + $0xc18] sm:$0xff]
    %v599 = vld [vmem:[#allocation5 + $0xc20] sm:$0xff]
    %v600 = vld [vmem:[#allocation5 + $0xc28] sm:$0xff]
    %v601 = vld [vmem:[#allocation5 + $0xc30] sm:$0xff]
    %v602 = vld [vmem:[#allocation5 + $0xc38] sm:$0xff]
    %v603 = vld [vmem:[#allocation5 + $0xc40] sm:$0xff]
    %v604 = vld [vmem:[#allocation5 + $0xc48] sm:$0xff]
    %v605 = vld [vmem:[#allocation5 + $0xc50] sm:$0xff]
    %v606 = vld [vmem:[#allocation5 + $0xc58] sm:$0xff]
    %v607 = vld [vmem:[#allocation5 + $0xc60] sm:$0xff]
    %v608 = vld [vmem:[#allocation5 + $0xc68] sm:$0xff]
    %v609 = vld [vmem:[#allocation5 + $0xc70] sm:$0xff]
    %v610 = vld [vmem:[#allocation5 + $0xc78] sm:$0xff]
    %v611 = vld [vmem:[#allocation5 + $0xc80] sm:$0xff]
    %v612 = vld [vmem:[#allocation5 + $0xc88] sm:$0xff]
    %v613 = vld [vmem:[#allocation5 + $0xc90] sm:$0xff]
    %v614 = vld [vmem:[#allocation5 + $0xc98] sm:$0xff]
    %v615 = vld [vmem:[#allocation5 + $0xca0] sm:$0xff]
    %v616 = vld [vmem:[#allocation5 + $0xca8] sm:$0xff]
    %v617 = vld [vmem:[#allocation5 + $0xcb0] sm:$0xff]
    %v618 = vld [vmem:[#allocation5 + $0xcb8] sm:$0xff]
    %v619 = vld [vmem:[#allocation5 + $0xcc0] sm:$0xff]
    %v620 = vld [vmem:[#allocation5 + $0xcc8] sm:$0xff]
    %v621 = vld [vmem:[#allocation5 + $0xcd0] sm:$0xff]
    %v622 = vld [vmem:[#allocation5 + $0xcd8] sm:$0xff]
    %v623 = vld [vmem:[#allocation5 + $0xce0] sm:$0xff]
    %v624 = vld [vmem:[#allocation5 + $0xce8] sm:$0xff]
    %v625 = vld [vmem:[#allocation5 + $0xcf0] sm:$0xff]
    %v626 = vld [vmem:[#allocation5 + $0xcf8] sm:$0xff]
    %v627 = vld [vmem:[#allocation5 + $0xd00] sm:$0xff]
    %v628 = vld [vmem:[#allocation5 + $0xd08] sm:$0xff]
    %v629 = vld [vmem:[#allocation5 + $0xd10] sm:$0xff]
    %v630 = vld [vmem:[#allocation5 + $0xd18] sm:$0xff]
    %v631 = vld [vmem:[#allocation5 + $0xd20] sm:$0xff]
    %v632 = vld [vmem:[#allocation5 + $0xd28] sm:$0xff]
    %v633 = vld [vmem:[#allocation5 + $0xd30] sm:$0xff]
    %v634 = vld [vmem:[#allocation5 + $0xd38] sm:$0xff]
    %v635 = vld [vmem:[#allocation5 + $0xd40] sm:$0xff]
    %v636 = vld [vmem:[#allocation5 + $0xd48] sm:$0xff]
    %v637 = vld [vmem:[#allocation5 + $0xd50] sm:$0xff]
    %v638 = vld [vmem:[#allocation5 + $0xd58] sm:$0xff]
    %v639 = vld [vmem:[#allocation5 + $0xd60] sm:$0xff]
    %v640 = vld [vmem:[#allocation5 + $0xd68] sm:$0xff]
    %v641 = vld [vmem:[#allocation5 + $0xd70] sm:$0xff]
    %v642 = vld [vmem:[#allocation5 + $0xd78] sm:$0xff]
    %v643 = vld [vmem:[#allocation5 + $0xd80] sm:$0xff]
    %v644 = vld [vmem:[#allocation5 + $0xd88] sm:$0xff]
    %v645 = vld [vmem:[#allocation5 + $0xd90] sm:$0xff]
    %v646 = vld [vmem:[#allocation5 + $0xd98] sm:$0xff]
    %v647 = vld [vmem:[#allocation5 + $0xda0] sm:$0xff]
    %v648 = vld [vmem:[#allocation5 + $0xda8] sm:$0xff]
    %v649 = vld [vmem:[#allocation5 + $0xdb0] sm:$0xff]
    %v650 = vld [vmem:[#allocation5 + $0xdb8] sm:$0xff]
    %v651 = vld [vmem:[#allocation5 + $0xdc0] sm:$0xff]
    %v652 = vld [vmem:[#allocation5 + $0xdc8] sm:$0xff]
    %v653 = vld [vmem:[#allocation5 + $0xdd0] sm:$0xff]
    %v654 = vld [vmem:[#allocation5 + $0xdd8] sm:$0xff]
    %v655 = vld [vmem:[#allocation5 + $0xde0] sm:$0xff]
    %v656 = vld [vmem:[#allocation5 + $0xde8] sm:$0xff]
    %v657 = vld [vmem:[#allocation5 + $0xdf0] sm:$0xff]
    %v658 = vld [vmem:[#allocation5 + $0xdf8] sm:$0xff]
    %v659 = vld [vmem:[#allocation5 + $0xe00] sm:$0xff]
    %v660 = vld [vmem:[#allocation5 + $0xe08] sm:$0xff]
    %v661 = vld [vmem:[#allocation5 + $0xe10] sm:$0xff]
    %v662 = vld [vmem:[#allocation5 + $0xe18] sm:$0xff]
    %v663 = vld [vmem:[#allocation5 + $0xe20] sm:$0xff]
    %v664 = vld [vmem:[#allocation5 + $0xe28] sm:$0xff]
    %v665 = vld [vmem:[#allocation5 + $0xe30] sm:$0xff]
    %v666 = vld [vmem:[#allocation5 + $0xe38] sm:$0xff]
    %v667 = vld [vmem:[#allocation5 + $0xe40] sm:$0xff]
    %v668 = vld [vmem:[#allocation5 + $0xe48] sm:$0xff]
    %v669 = vld [vmem:[#allocation5 + $0xe50] sm:$0xff]
    %v670 = vld [vmem:[#allocation5 + $0xe58] sm:$0xff]
    %v671 = vld [vmem:[#allocation5 + $0xe60] sm:$0xff]
    %v672 = vld [vmem:[#allocation5 + $0xe68] sm:$0xff]
    %v673 = vld [vmem:[#allocation5 + $0xe70] sm:$0xff]
    %v674 = vld [vmem:[#allocation5 + $0xe78] sm:$0xff]
    %v675 = vld [vmem:[#allocation5 + $0xe80] sm:$0xff]
    %v676 = vld [vmem:[#allocation5 + $0xe88] sm:$0xff]
    %v677 = vld [vmem:[#allocation5 + $0xe90] sm:$0xff]
    %v678 = vld [vmem:[#allocation5 + $0xe98] sm:$0xff]
    %v679 = vld [vmem:[#allocation5 + $0xea0] sm:$0xff]
    %v680 = vld [vmem:[#allocation5 + $0xea8] sm:$0xff]
    %v681 = vld [vmem:[#allocation5 + $0xeb0] sm:$0xff]
    %v682 = vld [vmem:[#allocation5 + $0xeb8] sm:$0xff]
    %v683 = vld [vmem:[#allocation5 + $0xec0] sm:$0xff]
    %v684 = vld [vmem:[#allocation5 + $0xec8] sm:$0xff]
    %v685 = vld [vmem:[#allocation5 + $0xed0] sm:$0xff]
    %v686 = vld [vmem:[#allocation5 + $0xed8] sm:$0xff]
    %v687 = vld [vmem:[#allocation5 + $0xee0] sm:$0xff]
    %v688 = vld [vmem:[#allocation5 + $0xee8] sm:$0xff]
    %v689 = vld [vmem:[#allocation5 + $0xef0] sm:$0xff]
    %v690 = vld [vmem:[#allocation5 + $0xef8] sm:$0xff]
    %v691 = vld [vmem:[#allocation5 + $0xf00] sm:$0xff]
    %v692 = vld [vmem:[#allocation5 + $0xf08] sm:$0xff]
    %v693 = vld [vmem:[#allocation5 + $0xf10] sm:$0xff]
    %v694 = vld [vmem:[#allocation5 + $0xf18] sm:$0xff]
    %v695 = vld [vmem:[#allocation5 + $0xf20] sm:$0xff]
    %v696 = vld [vmem:[#allocation5 + $0xf28] sm:$0xff]
    %v697 = vld [vmem:[#allocation5 + $0xf30] sm:$0xff]
    %v698 = vld [vmem:[#allocation5 + $0xf38] sm:$0xff]
    %v699 = vld [vmem:[#allocation5 + $0xf40] sm:$0xff]
    %v700 = vld [vmem:[#allocation5 + $0xf48] sm:$0xff]
    %v701 = vld [vmem:[#allocation5 + $0xf50] sm:$0xff]
    %v702 = vld [vmem:[#allocation5 + $0xf58] sm:$0xff]
    %v703 = vld [vmem:[#allocation5 + $0xf60] sm:$0xff]
    %v704 = vld [vmem:[#allocation5 + $0xf68] sm:$0xff]
    %v705 = vld [vmem:[#allocation5 + $0xf70] sm:$0xff]
    %v706 = vld [vmem:[#allocation5 + $0xf78] sm:$0xff]
    %v707 = vld [vmem:[#allocation5 + $0xf80] sm:$0xff]
    %v708 = vld [vmem:[#allocation5 + $0xf88] sm:$0xff]
    %v709 = vld [vmem:[#allocation5 + $0xf90] sm:$0xff]
    %v710 = vld [vmem:[#allocation5 + $0xf98] sm:$0xff]
    %v711 = vld [vmem:[#allocation5 + $0xfa0] sm:$0xff]
    %v712 = vld [vmem:[#allocation5 + $0xfa8] sm:$0xff]
    %v713 = vld [vmem:[#allocation5 + $0xfb0] sm:$0xff]
    %v714 = vld [vmem:[#allocation5 + $0xfb8] sm:$0xff]
    %v715 = vld [vmem:[#allocation5 + $0xfc0] sm:$0xff]
    %v716 = vld [vmem:[#allocation5 + $0xfc8] sm:$0xff]
    %v717 = vld [vmem:[#allocation5 + $0xfd0] sm:$0xff]
    %v718 = vld [vmem:[#allocation5 + $0xfd8] sm:$0xff]
    %v719 = vld [vmem:[#allocation5 + $0xfe0] sm:$0xff]
    %v720 = vld [vmem:[#allocation5 + $0xfe8] sm:$0xff]
    %v721 = vld [vmem:[#allocation5 + $0xff0] sm:$0xff]
    %v722 = vld [vmem:[#allocation5 + $0xff8] sm:$0xff]
    %v723 = vld [vmem:[#allocation5 + $0x1000] sm:$0xff]
    %v724 = vld [vmem:[#allocation5 + $0x1008] sm:$0xff]
    %v725 = vld [vmem:[#allocation5 + $0x1010] sm:$0xff]
    %v726 = vld [vmem:[#allocation5 + $0x1018] sm:$0xff]
    %v727 = vld [vmem:[#allocation5 + $0x1020] sm:$0xff]
    %v728 = vld [vmem:[#allocation5 + $0x1028] sm:$0xff]
    %v729 = vld [vmem:[#allocation5 + $0x1030] sm:$0xff]
    %v730 = vld [vmem:[#allocation5 + $0x1038] sm:$0xff]
    %v731 = vld [vmem:[#allocation5 + $0x1040] sm:$0xff]
    %v732 = vld [vmem:[#allocation5 + $0x1048] sm:$0xff]
    %v733 = vld [vmem:[#allocation5 + $0x1050] sm:$0xff]
    %v734 = vld [vmem:[#allocation5 + $0x1058] sm:$0xff]
    %v735 = vld [vmem:[#allocation5 + $0x1060] sm:$0xff]
    %v736 = vld [vmem:[#allocation5 + $0x1068] sm:$0xff]
    %v737 = vld [vmem:[#allocation5 + $0x1070] sm:$0xff]
    %v738 = vld [vmem:[#allocation5 + $0x1078] sm:$0xff]
    %v739 = vld [vmem:[#allocation5 + $0x1080] sm:$0xff]
    %v740 = vld [vmem:[#allocation5 + $0x1088] sm:$0xff]
    %v741 = vld [vmem:[#allocation5 + $0x1090] sm:$0xff]
    %v742 = vld [vmem:[#allocation5 + $0x1098] sm:$0xff]
    %v743 = vld [vmem:[#allocation5 + $0x10a0] sm:$0xff]
    %v744 = vld [vmem:[#allocation5 + $0x10a8] sm:$0xff]
    %v745 = vld [vmem:[#allocation5 + $0x10b0] sm:$0xff]
    %v746 = vld [vmem:[#allocation5 + $0x10b8] sm:$0xff]
    %v747 = vld [vmem:[#allocation5 + $0x10c0] sm:$0xff]
    %v748 = vld [vmem:[#allocation5 + $0x10c8] sm:$0xff]
    %v749 = vld [vmem:[#allocation5 + $0x10d0] sm:$0xff]
    %v750 = vld [vmem:[#allocation5 + $0x10d8] sm:$0xff]
    %v751 = vld [vmem:[#allocation5 + $0x10e0] sm:$0xff]
    %v752 = vld [vmem:[#allocation5 + $0x10e8] sm:$0xff]
    %v753 = vld [vmem:[#allocation5 + $0x10f0] sm:$0xff]
    %v754 = vld [vmem:[#allocation5 + $0x10f8] sm:$0xff]
    %v755 = vld [vmem:[#allocation5 + $0x1100] sm:$0xff]
    %v756 = vld [vmem:[#allocation5 + $0x1108] sm:$0xff]
    %v757 = vld [vmem:[#allocation5 + $0x1110] sm:$0xff]
    %v758 = vld [vmem:[#allocation5 + $0x1118] sm:$0xff]
    %v759 = vld [vmem:[#allocation5 + $0x1120] sm:$0xff]
    %v760 = vld [vmem:[#allocation5 + $0x1128] sm:$0xff]
    %v761 = vld [vmem:[#allocation5 + $0x1130] sm:$0xff]
    %v762 = vld [vmem:[#allocation5 + $0x1138] sm:$0xff]
    %v763 = vld [vmem:[#allocation5 + $0x1140] sm:$0xff]
    %v764 = vld [vmem:[#allocation5 + $0x1148] sm:$0xff]
    %v765 = vld [vmem:[#allocation5 + $0x1150] sm:$0xff]
    %v766 = vld [vmem:[#allocation5 + $0x1158] sm:$0xff]
    %v767 = vld [vmem:[#allocation5 + $0x1160] sm:$0xff]
    %v768 = vld [vmem:[#allocation5 + $0x1168] sm:$0xff]
    %v769 = vld [vmem:[#allocation5 + $0x1170] sm:$0xff]
    %v770 = vld [vmem:[#allocation5 + $0x1178] sm:$0xff]
    %v771 = vld [vmem:[#allocation5 + $0x1180] sm:$0xff]
    %v772 = vld [vmem:[#allocation5 + $0x1188] sm:$0xff]
    %v773 = vld [vmem:[#allocation5 + $0x1190] sm:$0xff]
    %v774 = vld [vmem:[#allocation5 + $0x1198] sm:$0xff]
    %v775 = vld [vmem:[#allocation5 + $0x11a0] sm:$0xff]
    %v776 = vld [vmem:[#allocation5 + $0x11a8] sm:$0xff]
    %v777 = vld [vmem:[#allocation5 + $0x11b0] sm:$0xff]
    %v778 = vld [vmem:[#allocation5 + $0x11b8] sm:$0xff]
    %v779 = vld [vmem:[#allocation5 + $0x11c0] sm:$0xff]
    %v780 = vld [vmem:[#allocation5 + $0x11c8] sm:$0xff]
    %v781 = vld [vmem:[#allocation5 + $0x11d0] sm:$0xff]
    %v782 = vld [vmem:[#allocation5 + $0x11d8] sm:$0xff]
    %v783 = vld [vmem:[#allocation5 + $0x11e0] sm:$0xff]
    %v784 = vld [vmem:[#allocation5 + $0x11e8] sm:$0xff]
    %v785 = vld [vmem:[#allocation5 + $0x11f0] sm:$0xff]
    %v786 = vld [vmem:[#allocation5 + $0x11f8] sm:$0xff]
    %v787 = vld [vmem:[#allocation5 + $0x1200] sm:$0xff]
    %v788 = vld [vmem:[#allocation5 + $0x1208] sm:$0xff]
    %v789 = vld [vmem:[#allocation5 + $0x1210] sm:$0xff]
    %v790 = vld [vmem:[#allocation5 + $0x1218] sm:$0xff]
    %v791 = vld [vmem:[#allocation5 + $0x1220] sm:$0xff]
    %v792 = vld [vmem:[#allocation5 + $0x1228] sm:$0xff]
    %v793 = vld [vmem:[#allocation5 + $0x1230] sm:$0xff]
    %v794 = vld [vmem:[#allocation5 + $0x1238] sm:$0xff]
    %v795 = vld [vmem:[#allocation5 + $0x1240] sm:$0xff]
    %v796 = vld [vmem:[#allocation5 + $0x1248] sm:$0xff]
    %v797 = vld [vmem:[#allocation5 + $0x1250] sm:$0xff]
    %v798 = vld [vmem:[#allocation5 + $0x1258] sm:$0xff]
    %v799 = vld [vmem:[#allocation5 + $0x1260] sm:$0xff]
    %v800 = vld [vmem:[#allocation5 + $0x1268] sm:$0xff]
    %v801 = vld [vmem:[#allocation5 + $0x1270] sm:$0xff]
    %v802 = vld [vmem:[#allocation5 + $0x1278] sm:$0xff]
    %v803 = vld [vmem:[#allocation5 + $0x1280] sm:$0xff]
    %v804 = vld [vmem:[#allocation5 + $0x1288] sm:$0xff]
    %v805 = vld [vmem:[#allocation5 + $0x1290] sm:$0xff]
    %v806 = vld [vmem:[#allocation5 + $0x1298] sm:$0xff]
    %v807 = vld [vmem:[#allocation5 + $0x12a0] sm:$0xff]
    %v808 = vld [vmem:[#allocation5 + $0x12a8] sm:$0xff]
    %v809 = vld [vmem:[#allocation5 + $0x12b0] sm:$0xff]
    %v810 = vld [vmem:[#allocation5 + $0x12b8] sm:$0xff]
    %v811 = vld [vmem:[#allocation5 + $0x12c0] sm:$0xff]
    %v812 = vld [vmem:[#allocation5 + $0x12c8] sm:$0xff]
    %v813 = vld [vmem:[#allocation5 + $0x12d0] sm:$0xff]
    %v814 = vld [vmem:[#allocation5 + $0x12d8] sm:$0xff]
    %v815 = vld [vmem:[#allocation5 + $0x12e0] sm:$0xff]
    %v816 = vld [vmem:[#allocation5 + $0x12e8] sm:$0xff]
    %v817 = vld [vmem:[#allocation5 + $0x12f0] sm:$0xff]
    %v818 = vld [vmem:[#allocation5 + $0x12f8] sm:$0xff]
    %v819 = vld [vmem:[#allocation5 + $0x1300] sm:$0xff]
    %v820 = vld [vmem:[#allocation5 + $0x1308] sm:$0xff]
    %v821 = vld [vmem:[#allocation5 + $0x1310] sm:$0xff]
    %v822 = vld [vmem:[#allocation5 + $0x1318] sm:$0xff]
    %v823 = vld [vmem:[#allocation5 + $0x1320] sm:$0xff]
    %v824 = vld [vmem:[#allocation5 + $0x1328] sm:$0xff]
    %v825 = vld [vmem:[#allocation5 + $0x1330] sm:$0xff]
    %v826 = vld [vmem:[#allocation5 + $0x1338] sm:$0xff]
    %v827 = vld [vmem:[#allocation5 + $0x1340] sm:$0xff]
    %v828 = vld [vmem:[#allocation5 + $0x1348] sm:$0xff]
    %v829 = vld [vmem:[#allocation5 + $0x1350] sm:$0xff]
    %v830 = vld [vmem:[#allocation5 + $0x1358] sm:$0xff]
    %v831 = vld [vmem:[#allocation5 + $0x1360] sm:$0xff]
    %v832 = vld [vmem:[#allocation5 + $0x1368] sm:$0xff]
    %v833 = vld [vmem:[#allocation5 + $0x1370] sm:$0xff]
    %v834 = vld [vmem:[#allocation5 + $0x1378] sm:$0xff]
    %v835 = vld [vmem:[#allocation5 + $0x1380] sm:$0xff]
    %v836 = vld [vmem:[#allocation5 + $0x1388] sm:$0xff]
    %v837 = vld [vmem:[#allocation5 + $0x1390] sm:$0xff]
    %v838 = vld [vmem:[#allocation5 + $0x1398] sm:$0xff]
    %v839 = vld [vmem:[#allocation5 + $0x13a0] sm:$0xff]
    %v840 = vld [vmem:[#allocation5 + $0x13a8] sm:$0xff]
    %v841 = vld [vmem:[#allocation5 + $0x13b0] sm:$0xff]
    %v842 = vld [vmem:[#allocation5 + $0x13b8] sm:$0xff]
    %v843 = vld [vmem:[#allocation5 + $0x13c0] sm:$0xff]
    %v844 = vld [vmem:[#allocation5 + $0x13c8] sm:$0xff]
    %v845 = vld [vmem:[#allocation5 + $0x13d0] sm:$0xff]
    %v846 = vld [vmem:[#allocation5 + $0x13d8] sm:$0xff]
    %v847 = vld [vmem:[#allocation5 + $0x13e0] sm:$0xff]
    %v848 = vld [vmem:[#allocation5 + $0x13e8] sm:$0xff]
    %v849 = vld [vmem:[#allocation5 + $0x13f0] sm:$0xff]
    %v850 = vld [vmem:[#allocation5 + $0x13f8] sm:$0xff]
    %v851 = vld [vmem:[#allocation5 + $0x1400] sm:$0xff]
    %v852 = vld [vmem:[#allocation5 + $0x1408] sm:$0xff]
    %v853 = vld [vmem:[#allocation5 + $0x1410] sm:$0xff]
    %v854 = vld [vmem:[#allocation5 + $0x1418] sm:$0xff]
    %v855 = vld [vmem:[#allocation5 + $0x1420] sm:$0xff]
    %v856 = vld [vmem:[#allocation5 + $0x1428] sm:$0xff]
    %v857 = vld [vmem:[#allocation5 + $0x1430] sm:$0xff]
    %v858 = vld [vmem:[#allocation5 + $0x1438] sm:$0xff]
    %v859 = vld [vmem:[#allocation5 + $0x1440] sm:$0xff]
    %v860 = vld [vmem:[#allocation5 + $0x1448] sm:$0xff]
    %v861 = vld [vmem:[#allocation5 + $0x1450] sm:$0xff]
    %v862 = vld [vmem:[#allocation5 + $0x1458] sm:$0xff]
    %v863 = vld [vmem:[#allocation5 + $0x1460] sm:$0xff]
    %v864 = vld [vmem:[#allocation5 + $0x1468] sm:$0xff]
    %v865 = vld [vmem:[#allocation5 + $0x1470] sm:$0xff]
    %v866 = vld [vmem:[#allocation5 + $0x1478] sm:$0xff]
    %v867 = vld [vmem:[#allocation5 + $0x1480] sm:$0xff]
    %v868 = vld [vmem:[#allocation5 + $0x1488] sm:$0xff]
    %v869 = vld [vmem:[#allocation5 + $0x1490] sm:$0xff]
    %v870 = vld [vmem:[#allocation5 + $0x1498] sm:$0xff]
    %v871 = vld [vmem:[#allocation5 + $0x14a0] sm:$0xff]
    %v872 = vld [vmem:[#allocation5 + $0x14a8] sm:$0xff]
    %v873 = vld [vmem:[#allocation5 + $0x14b0] sm:$0xff]
    %v874 = vld [vmem:[#allocation5 + $0x14b8] sm:$0xff]
    %v875 = vld [vmem:[#allocation5 + $0x14c0] sm:$0xff]
    %v876 = vld [vmem:[#allocation5 + $0x14c8] sm:$0xff]
    %v877 = vld [vmem:[#allocation5 + $0x14d0] sm:$0xff]
    %v878 = vld [vmem:[#allocation5 + $0x14d8] sm:$0xff]
    %v879 = vld [vmem:[#allocation5 + $0x14e0] sm:$0xff]
    %v880 = vld [vmem:[#allocation5 + $0x14e8] sm:$0xff]
    %v881 = vld [vmem:[#allocation5 + $0x14f0] sm:$0xff]
    %v882 = vld [vmem:[#allocation5 + $0x14f8] sm:$0xff]
    %v883 = vld [vmem:[#allocation5 + $0x1500] sm:$0xff]
    %v884 = vld [vmem:[#allocation5 + $0x1508] sm:$0xff]
    %v885 = vld [vmem:[#allocation5 + $0x1510] sm:$0xff]
    %v886 = vld [vmem:[#allocation5 + $0x1518] sm:$0xff]
    %v887 = vld [vmem:[#allocation5 + $0x1520] sm:$0xff]
    %v888 = vld [vmem:[#allocation5 + $0x1528] sm:$0xff]
    %v889 = vld [vmem:[#allocation5 + $0x1530] sm:$0xff]
    %v890 = vld [vmem:[#allocation5 + $0x1538] sm:$0xff]
    %v891 = vld [vmem:[#allocation5 + $0x1540] sm:$0xff]
    %v892 = vld [vmem:[#allocation5 + $0x1548] sm:$0xff]
    %v893 = vld [vmem:[#allocation5 + $0x1550] sm:$0xff]
    %v894 = vld [vmem:[#allocation5 + $0x1558] sm:$0xff]
    %v895 = vld [vmem:[#allocation5 + $0x1560] sm:$0xff]
    %v896 = vld [vmem:[#allocation5 + $0x1568] sm:$0xff]
    %v897 = vld [vmem:[#allocation5 + $0x1570] sm:$0xff]
    %v898 = vld [vmem:[#allocation5 + $0x1578] sm:$0xff]
    %v899 = vld [vmem:[#allocation5 + $0x1580] sm:$0xff]
    %v900 = vld [vmem:[#allocation5 + $0x1588] sm:$0xff]
    %v901 = vld [vmem:[#allocation5 + $0x1590] sm:$0xff]
    %v902 = vld [vmem:[#allocation5 + $0x1598] sm:$0xff]
    %v903 = vld [vmem:[#allocation5 + $0x15a0] sm:$0xff]
    %v904 = vld [vmem:[#allocation5 + $0x15a8] sm:$0xff]
    %v905 = vld [vmem:[#allocation5 + $0x15b0] sm:$0xff]
    %v906 = vld [vmem:[#allocation5 + $0x15b8] sm:$0xff]
    %v907 = vld [vmem:[#allocation5 + $0x15c0] sm:$0xff]
    %v908 = vld [vmem:[#allocation5 + $0x15c8] sm:$0xff]
    %v909 = vld [vmem:[#allocation5 + $0x15d0] sm:$0xff]
    %v910 = vld [vmem:[#allocation5 + $0x15d8] sm:$0xff]
    %v911 = vld [vmem:[#allocation5 + $0x15e0] sm:$0xff]
    %v912 = vld [vmem:[#allocation5 + $0x15e8] sm:$0xff]
    %v913 = vld [vmem:[#allocation5 + $0x15f0] sm:$0xff]
    %v914 = vld [vmem:[#allocation5 + $0x15f8] sm:$0xff]
    %v915 = vld [vmem:[#allocation5 + $0x1600] sm:$0xff]
    %v916 = vld [vmem:[#allocation5 + $0x1608] sm:$0xff]
    %v917 = vld [vmem:[#allocation5 + $0x1610] sm:$0xff]
    %v918 = vld [vmem:[#allocation5 + $0x1618] sm:$0xff]
    %v919 = vld [vmem:[#allocation5 + $0x1620] sm:$0xff]
    %v920 = vld [vmem:[#allocation5 + $0x1628] sm:$0xff]
    %v921 = vld [vmem:[#allocation5 + $0x1630] sm:$0xff]
    %v922 = vld [vmem:[#allocation5 + $0x1638] sm:$0xff]
    %v923 = vld [vmem:[#allocation5 + $0x1640] sm:$0xff]
    %v924 = vld [vmem:[#allocation5 + $0x1648] sm:$0xff]
    %v925 = vld [vmem:[#allocation5 + $0x1650] sm:$0xff]
    %v926 = vld [vmem:[#allocation5 + $0x1658] sm:$0xff]
    %v927 = vld [vmem:[#allocation5 + $0x1660] sm:$0xff]
    %v928 = vld [vmem:[#allocation5 + $0x1668] sm:$0xff]
    %v929 = vld [vmem:[#allocation5 + $0x1670] sm:$0xff]
    %v930 = vld [vmem:[#allocation5 + $0x1678] sm:$0xff]
    %v931 = vld [vmem:[#allocation5 + $0x1680] sm:$0xff]
    %v932 = vld [vmem:[#allocation5 + $0x1688] sm:$0xff]
    %v933 = vld [vmem:[#allocation5 + $0x1690] sm:$0xff]
    %v934 = vld [vmem:[#allocation5 + $0x1698] sm:$0xff]
    %v935 = vld [vmem:[#allocation5 + $0x16a0] sm:$0xff]
    %v936 = vld [vmem:[#allocation5 + $0x16a8] sm:$0xff]
    %v937 = vld [vmem:[#allocation5 + $0x16b0] sm:$0xff]
    %v938 = vld [vmem:[#allocation5 + $0x16b8] sm:$0xff]
    %v939 = vld [vmem:[#allocation5 + $0x16c0] sm:$0xff]
    %v940 = vld [vmem:[#allocation5 + $0x16c8] sm:$0xff]
    %v941 = vld [vmem:[#allocation5 + $0x16d0] sm:$0xff]
    %v942 = vld [vmem:[#allocation5 + $0x16d8] sm:$0xff]
    %v943 = vld [vmem:[#allocation5 + $0x16e0] sm:$0xff]
    %v944 = vld [vmem:[#allocation5 + $0x16e8] sm:$0xff]
    %v945 = vld [vmem:[#allocation5 + $0x16f0] sm:$0xff]
    %v946 = vld [vmem:[#allocation5 + $0x16f8] sm:$0xff]
    %v947 = vld [vmem:[#allocation5 + $0x1700] sm:$0xff]
    %v948 = vld [vmem:[#allocation5 + $0x1708] sm:$0xff]
    %v949 = vld [vmem:[#allocation5 + $0x1710] sm:$0xff]
    %v950 = vld [vmem:[#allocation5 + $0x1718] sm:$0xff]
    %v951 = vld [vmem:[#allocation5 + $0x1720] sm:$0xff]
    %v952 = vld [vmem:[#allocation5 + $0x1728] sm:$0xff]
    %v953 = vld [vmem:[#allocation5 + $0x1730] sm:$0xff]
    %v954 = vld [vmem:[#allocation5 + $0x1738] sm:$0xff]
    %v955 = vld [vmem:[#allocation5 + $0x1740] sm:$0xff]
    %v956 = vld [vmem:[#allocation5 + $0x1748] sm:$0xff]
    %v957 = vld [vmem:[#allocation5 + $0x1750] sm:$0xff]
    %v958 = vld [vmem:[#allocation5 + $0x1758] sm:$0xff]
    %v959 = vld [vmem:[#allocation5 + $0x1760] sm:$0xff]
    %v960 = vld [vmem:[#allocation5 + $0x1768] sm:$0xff]
    %v961 = vld [vmem:[#allocation5 + $0x1770] sm:$0xff]
    %v962 = vld [vmem:[#allocation5 + $0x1778] sm:$0xff]
    %v963 = vld [vmem:[#allocation5 + $0x1780] sm:$0xff]
    %v964 = vld [vmem:[#allocation5 + $0x1788] sm:$0xff]
    %v965 = vld [vmem:[#allocation5 + $0x1790] sm:$0xff]
    %v966 = vld [vmem:[#allocation5 + $0x1798] sm:$0xff]
    %v967 = vld [vmem:[#allocation5 + $0x17a0] sm:$0xff]
    %v968 = vld [vmem:[#allocation5 + $0x17a8] sm:$0xff]
    %v969 = vld [vmem:[#allocation5 + $0x17b0] sm:$0xff]
    %v970 = vld [vmem:[#allocation5 + $0x17b8] sm:$0xff]
    %v971 = vld [vmem:[#allocation5 + $0x17c0] sm:$0xff]
    %v972 = vld [vmem:[#allocation5 + $0x17c8] sm:$0xff]
    %v973 = vld [vmem:[#allocation5 + $0x17d0] sm:$0xff]
    %v974 = vld [vmem:[#allocation5 + $0x17d8] sm:$0xff]
    %v975 = vld [vmem:[#allocation5 + $0x17e0] sm:$0xff]
    %v976 = vld [vmem:[#allocation5 + $0x17e8] sm:$0xff]
    %v977 = vld [vmem:[#allocation5 + $0x17f0] sm:$0xff]
    %v978 = vld [vmem:[#allocation5 + $0x17f8] sm:$0xff]
    %v979 = vld [vmem:[#allocation5 + $0x1800] sm:$0xff]
    %v980 = vld [vmem:[#allocation5 + $0x1808] sm:$0xff]
    %v981 = vld [vmem:[#allocation5 + $0x1810] sm:$0xff]
    %v982 = vld [vmem:[#allocation5 + $0x1818] sm:$0xff]
    %v983 = vld [vmem:[#allocation5 + $0x1820] sm:$0xff]
    %v984 = vld [vmem:[#allocation5 + $0x1828] sm:$0xff]
    %v985 = vld [vmem:[#allocation5 + $0x1830] sm:$0xff]
    %v986 = vld [vmem:[#allocation5 + $0x1838] sm:$0xff]
    %v987 = vld [vmem:[#allocation5 + $0x1840] sm:$0xff]
    %v988 = vld [vmem:[#allocation5 + $0x1848] sm:$0xff]
    %v989 = vld [vmem:[#allocation5 + $0x1850] sm:$0xff]
    %v990 = vld [vmem:[#allocation5 + $0x1858] sm:$0xff]
    %v991 = vld [vmem:[#allocation5 + $0x1860] sm:$0xff]
    %v992 = vld [vmem:[#allocation5 + $0x1868] sm:$0xff]
    %v993 = vld [vmem:[#allocation5 + $0x1870] sm:$0xff]
    %v994 = vld [vmem:[#allocation5 + $0x1878] sm:$0xff]
    %v995 = vld [vmem:[#allocation5 + $0x1880] sm:$0xff]
    %v996 = vld [vmem:[#allocation5 + $0x1888] sm:$0xff]
    %v997 = vld [vmem:[#allocation5 + $0x1890] sm:$0xff]
    %v998 = vld [vmem:[#allocation5 + $0x1898] sm:$0xff]
    %v999 = vld [vmem:[#allocation5 + $0x18a0] sm:$0xff]
    %v1000 = vld [vmem:[#allocation5 + $0x18a8] sm:$0xff]
    %v1001 = vld [vmem:[#allocation5 + $0x18b0] sm:$0xff]
    %v1002 = vld [vmem:[#allocation5 + $0x18b8] sm:$0xff]
    %v1003 = vld [vmem:[#allocation5 + $0x18c0] sm:$0xff]
    %v1004 = vld [vmem:[#allocation5 + $0x18c8] sm:$0xff]
    %v1005 = vld [vmem:[#allocation5 + $0x18d0] sm:$0xff]
    %v1006 = vld [vmem:[#allocation5 + $0x18d8] sm:$0xff]
    %v1007 = vld [vmem:[#allocation5 + $0x18e0] sm:$0xff]
    %v1008 = vld [vmem:[#allocation5 + $0x18e8] sm:$0xff]
    %v1009 = vld [vmem:[#allocation5 + $0x18f0] sm:$0xff]
    %v1010 = vld [vmem:[#allocation5 + $0x18f8] sm:$0xff]
    %v1011 = vld [vmem:[#allocation5 + $0x1900] sm:$0xff]
    %v1012 = vld [vmem:[#allocation5 + $0x1908] sm:$0xff]
    %v1013 = vld [vmem:[#allocation5 + $0x1910] sm:$0xff]
    %v1014 = vld [vmem:[#allocation5 + $0x1918] sm:$0xff]
    %v1015 = vld [vmem:[#allocation5 + $0x1920] sm:$0xff]
    %v1016 = vld [vmem:[#allocation5 + $0x1928] sm:$0xff]
    %v1017 = vld [vmem:[#allocation5 + $0x1930] sm:$0xff]
    %v1018 = vld [vmem:[#allocation5 + $0x1938] sm:$0xff]
    %v1019 = vld [vmem:[#allocation5 + $0x1940] sm:$0xff]
    %v1020 = vld [vmem:[#allocation5 + $0x1948] sm:$0xff]
    %v1021 = vld [vmem:[#allocation5 + $0x1950] sm:$0xff]
    %v1022 = vld [vmem:[#allocation5 + $0x1958] sm:$0xff]
    %v1023 = vld [vmem:[#allocation5 + $0x1960] sm:$0xff]
    %v1024 = vld [vmem:[#allocation5 + $0x1968] sm:$0xff]
    %v1025 = vld [vmem:[#allocation5 + $0x1970] sm:$0xff]
    %v1026 = vld [vmem:[#allocation5 + $0x1978] sm:$0xff]
    %v1027 = vld [vmem:[#allocation5 + $0x1980] sm:$0xff]
    %v1028 = vld [vmem:[#allocation5 + $0x1988] sm:$0xff]
    %v1029 = vld [vmem:[#allocation5 + $0x1990] sm:$0xff]
    %v1030 = vld [vmem:[#allocation5 + $0x1998] sm:$0xff]
    %v1031 = vld [vmem:[#allocation5 + $0x19a0] sm:$0xff]
    %v1032 = vld [vmem:[#allocation5 + $0x19a8] sm:$0xff]
    %v1033 = vld [vmem:[#allocation5 + $0x19b0] sm:$0xff]
    %v1034 = vld [vmem:[#allocation5 + $0x19b8] sm:$0xff]
    %v1035 = vld [vmem:[#allocation5 + $0x19c0] sm:$0xff]
    %v1036 = vld [vmem:[#allocation5 + $0x19c8] sm:$0xff]
    %v1037 = vld [vmem:[#allocation5 + $0x19d0] sm:$0xff]
    %v1038 = vld [vmem:[#allocation5 + $0x19d8] sm:$0xff]
    %v1039 = vld [vmem:[#allocation5 + $0x19e0] sm:$0xff]
    %v1040 = vld [vmem:[#allocation5 + $0x19e8] sm:$0xff]
    %v1041 = vld [vmem:[#allocation5 + $0x19f0] sm:$0xff]
    %v1042 = vld [vmem:[#allocation5 + $0x19f8] sm:$0xff]
    %v1043 = vld [vmem:[#allocation5 + $0x1a00] sm:$0xff]
    %v1044 = vld [vmem:[#allocation5 + $0x1a08] sm:$0xff]
    %v1045 = vld [vmem:[#allocation5 + $0x1a10] sm:$0xff]
    %v1046 = vld [vmem:[#allocation5 + $0x1a18] sm:$0xff]
    %v1047 = vld [vmem:[#allocation5 + $0x1a20] sm:$0xff]
    %v1048 = vld [vmem:[#allocation5 + $0x1a28] sm:$0xff]
    %v1049 = vld [vmem:[#allocation5 + $0x1a30] sm:$0xff]
    %v1050 = vld [vmem:[#allocation5 + $0x1a38] sm:$0xff]
    %v1051 = vld [vmem:[#allocation5 + $0x1a40] sm:$0xff]
    %v1052 = vld [vmem:[#allocation5 + $0x1a48] sm:$0xff]
    %v1053 = vld [vmem:[#allocation5 + $0x1a50] sm:$0xff]
    %v1054 = vld [vmem:[#allocation5 + $0x1a58] sm:$0xff]
    %v1055 = vld [vmem:[#allocation5 + $0x1a60] sm:$0xff]
    %v1056 = vld [vmem:[#allocation5 + $0x1a68] sm:$0xff]
    %v1057 = vld [vmem:[#allocation5 + $0x1a70] sm:$0xff]
    %v1058 = vld [vmem:[#allocation5 + $0x1a78] sm:$0xff]
    %v1059 = vld [vmem:[#allocation5 + $0x1a80] sm:$0xff]
    %v1060 = vld [vmem:[#allocation5 + $0x1a88] sm:$0xff]
    %v1061 = vld [vmem:[#allocation5 + $0x1a90] sm:$0xff]
    %v1062 = vld [vmem:[#allocation5 + $0x1a98] sm:$0xff]
    %v1063 = vld [vmem:[#allocation5 + $0x1aa0] sm:$0xff]
    %v1064 = vld [vmem:[#allocation5 + $0x1aa8] sm:$0xff]
    %v1065 = vld [vmem:[#allocation5 + $0x1ab0] sm:$0xff]
    %v1066 = vld [vmem:[#allocation5 + $0x1ab8] sm:$0xff]
    %v1067 = vld [vmem:[#allocation5 + $0x1ac0] sm:$0xff]
    %v1068 = vld [vmem:[#allocation5 + $0x1ac8] sm:$0xff]
    %v1069 = vld [vmem:[#allocation5 + $0x1ad0] sm:$0xff]
    %v1070 = vld [vmem:[#allocation5 + $0x1ad8] sm:$0xff]
    %v1071 = vld [vmem:[#allocation5 + $0x1ae0] sm:$0xff]
    %v1072 = vld [vmem:[#allocation5 + $0x1ae8] sm:$0xff]
    %v1073 = vld [vmem:[#allocation5 + $0x1af0] sm:$0xff]
    %v1074 = vld [vmem:[#allocation5 + $0x1af8] sm:$0xff]
    %v1075 = vld [vmem:[#allocation5 + $0x1b00] sm:$0xff]
    %v1076 = vld [vmem:[#allocation5 + $0x1b08] sm:$0xff]
    %v1077 = vld [vmem:[#allocation5 + $0x1b10] sm:$0xff]
    %v1078 = vld [vmem:[#allocation5 + $0x1b18] sm:$0xff]
    %v1079 = vld [vmem:[#allocation5 + $0x1b20] sm:$0xff]
    %v1080 = vld [vmem:[#allocation5 + $0x1b28] sm:$0xff]
    %v1081 = vld [vmem:[#allocation5 + $0x1b30] sm:$0xff]
    %v1082 = vld [vmem:[#allocation5 + $0x1b38] sm:$0xff]
    %v1083 = vld [vmem:[#allocation5 + $0x1b40] sm:$0xff]
    %v1084 = vld [vmem:[#allocation5 + $0x1b48] sm:$0xff]
    %v1085 = vld [vmem:[#allocation5 + $0x1b50] sm:$0xff]
    %v1086 = vld [vmem:[#allocation5 + $0x1b58] sm:$0xff]
    %v1087 = vld [vmem:[#allocation5 + $0x1b60] sm:$0xff]
    %v1088 = vld [vmem:[#allocation5 + $0x1b68] sm:$0xff]
    %v1089 = vld [vmem:[#allocation5 + $0x1b70] sm:$0xff]
    %v1090 = vld [vmem:[#allocation5 + $0x1b78] sm:$0xff]
    %v1091 = vld [vmem:[#allocation5 + $0x1b80] sm:$0xff]
    %v1092 = vld [vmem:[#allocation5 + $0x1b88] sm:$0xff]
    %v1093 = vld [vmem:[#allocation5 + $0x1b90] sm:$0xff]
    %v1094 = vld [vmem:[#allocation5 + $0x1b98] sm:$0xff]
    %v1095 = vld [vmem:[#allocation5 + $0x1ba0] sm:$0xff]
    %v1096 = vld [vmem:[#allocation5 + $0x1ba8] sm:$0xff]
    %v1097 = vld [vmem:[#allocation5 + $0x1bb0] sm:$0xff]
    %v1098 = vld [vmem:[#allocation5 + $0x1bb8] sm:$0xff]
    %v1099 = vld [vmem:[#allocation5 + $0x1bc0] sm:$0xff]
    %v1100 = vld [vmem:[#allocation5 + $0x1bc8] sm:$0xff]
    %v1101 = vld [vmem:[#allocation5 + $0x1bd0] sm:$0xff]
    %v1102 = vld [vmem:[#allocation5 + $0x1bd8] sm:$0xff]
    %v1103 = vld [vmem:[#allocation5 + $0x1be0] sm:$0xff]
    %v1104 = vld [vmem:[#allocation5 + $0x1be8] sm:$0xff]
    %v1105 = vld [vmem:[#allocation5 + $0x1bf0] sm:$0xff]
    %v1106 = vld [vmem:[#allocation5 + $0x1bf8] sm:$0xff]
    %v1107 = vld [vmem:[#allocation5 + $0x1c00] sm:$0xff]
    %v1108 = vld [vmem:[#allocation5 + $0x1c08] sm:$0xff]
    %v1109 = vld [vmem:[#allocation5 + $0x1c10] sm:$0xff]
    %v1110 = vld [vmem:[#allocation5 + $0x1c18] sm:$0xff]
    %v1111 = vld [vmem:[#allocation5 + $0x1c20] sm:$0xff]
    %v1112 = vld [vmem:[#allocation5 + $0x1c28] sm:$0xff]
    %v1113 = vld [vmem:[#allocation5 + $0x1c30] sm:$0xff]
    %v1114 = vld [vmem:[#allocation5 + $0x1c38] sm:$0xff]
    %v1115 = vld [vmem:[#allocation5 + $0x1c40] sm:$0xff]
    %v1116 = vld [vmem:[#allocation5 + $0x1c48] sm:$0xff]
    %v1117 = vld [vmem:[#allocation5 + $0x1c50] sm:$0xff]
    %v1118 = vld [vmem:[#allocation5 + $0x1c58] sm:$0xff]
    %v1119 = vld [vmem:[#allocation5 + $0x1c60] sm:$0xff]
    %v1120 = vld [vmem:[#allocation5 + $0x1c68] sm:$0xff]
    %v1121 = vld [vmem:[#allocation5 + $0x1c70] sm:$0xff]
    %v1122 = vld [vmem:[#allocation5 + $0x1c78] sm:$0xff]
    %v1123 = vld [vmem:[#allocation5 + $0x1c80] sm:$0xff]
    %v1124 = vld [vmem:[#allocation5 + $0x1c88] sm:$0xff]
    %v1125 = vld [vmem:[#allocation5 + $0x1c90] sm:$0xff]
    %v1126 = vld [vmem:[#allocation5 + $0x1c98] sm:$0xff]
    %v1127 = vld [vmem:[#allocation5 + $0x1ca0] sm:$0xff]
    %v1128 = vld [vmem:[#allocation5 + $0x1ca8] sm:$0xff]
    %v1129 = vld [vmem:[#allocation5 + $0x1cb0] sm:$0xff]
    %v1130 = vld [vmem:[#allocation5 + $0x1cb8] sm:$0xff]
    %v1131 = vld [vmem:[#allocation5 + $0x1cc0] sm:$0xff]
    %v1132 = vld [vmem:[#allocation5 + $0x1cc8] sm:$0xff]
    %v1133 = vld [vmem:[#allocation5 + $0x1cd0] sm:$0xff]
    %v1134 = vld [vmem:[#allocation5 + $0x1cd8] sm:$0xff]
    %v1135 = vld [vmem:[#allocation5 + $0x1ce0] sm:$0xff]
    %v1136 = vld [vmem:[#allocation5 + $0x1ce8] sm:$0xff]
    %v1137 = vld [vmem:[#allocation5 + $0x1cf0] sm:$0xff]
    %v1138 = vld [vmem:[#allocation5 + $0x1cf8] sm:$0xff]
    %v1139 = vld [vmem:[#allocation5 + $0x1d00] sm:$0xff]
    %v1140 = vld [vmem:[#allocation5 + $0x1d08] sm:$0xff]
    %v1141 = vld [vmem:[#allocation5 + $0x1d10] sm:$0xff]
    %v1142 = vld [vmem:[#allocation5 + $0x1d18] sm:$0xff]
    %v1143 = vld [vmem:[#allocation5 + $0x1d20] sm:$0xff]
    %v1144 = vld [vmem:[#allocation5 + $0x1d28] sm:$0xff]
    %v1145 = vld [vmem:[#allocation5 + $0x1d30] sm:$0xff]
    %v1146 = vld [vmem:[#allocation5 + $0x1d38] sm:$0xff]
    %v1147 = vld [vmem:[#allocation5 + $0x1d40] sm:$0xff]
    %v1148 = vld [vmem:[#allocation5 + $0x1d48] sm:$0xff]
    %v1149 = vld [vmem:[#allocation5 + $0x1d50] sm:$0xff]
    %v1150 = vld [vmem:[#allocation5 + $0x1d58] sm:$0xff]
    %v1151 = vld [vmem:[#allocation5 + $0x1d60] sm:$0xff]
    %v1152 = vld [vmem:[#allocation5 + $0x1d68] sm:$0xff]
    %v1153 = vld [vmem:[#allocation5 + $0x1d70] sm:$0xff]
    %v1154 = vld [vmem:[#allocation5 + $0x1d78] sm:$0xff]
    %v1155 = vld [vmem:[#allocation5 + $0x1d80] sm:$0xff]
    %v1156 = vld [vmem:[#allocation5 + $0x1d88] sm:$0xff]
    %v1157 = vld [vmem:[#allocation5 + $0x1d90] sm:$0xff]
    %v1158 = vld [vmem:[#allocation5 + $0x1d98] sm:$0xff]
    %v1159 = vld [vmem:[#allocation5 + $0x1da0] sm:$0xff]
    %v1160 = vld [vmem:[#allocation5 + $0x1da8] sm:$0xff]
    %v1161 = vld [vmem:[#allocation5 + $0x1db0] sm:$0xff]
    %v1162 = vld [vmem:[#allocation5 + $0x1db8] sm:$0xff]
    %v1163 = vld [vmem:[#allocation5 + $0x1dc0] sm:$0xff]
    %v1164 = vld [vmem:[#allocation5 + $0x1dc8] sm:$0xff]
    %v1165 = vld [vmem:[#allocation5 + $0x1dd0] sm:$0xff]
    %v1166 = vld [vmem:[#allocation5 + $0x1dd8] sm:$0xff]
    %v1167 = vld [vmem:[#allocation5 + $0x1de0] sm:$0xff]
    %v1168 = vld [vmem:[#allocation5 + $0x1de8] sm:$0xff]
    %v1169 = vld [vmem:[#allocation5 + $0x1df0] sm:$0xff]
    %v1170 = vld [vmem:[#allocation5 + $0x1df8] sm:$0xff]
    %v1171 = vld [vmem:[#allocation5 + $0x1e00] sm:$0xff]
    %v1172 = vld [vmem:[#allocation5 + $0x1e08] sm:$0xff]
    %v1173 = vld [vmem:[#allocation5 + $0x1e10] sm:$0xff]
    %v1174 = vld [vmem:[#allocation5 + $0x1e18] sm:$0xff]
    %v1175 = vld [vmem:[#allocation5 + $0x1e20] sm:$0xff]
    %v1176 = vld [vmem:[#allocation5 + $0x1e28] sm:$0xff]
    %v1177 = vld [vmem:[#allocation5 + $0x1e30] sm:$0xff]
    %v1178 = vld [vmem:[#allocation5 + $0x1e38] sm:$0xff]
    %v1179 = vld [vmem:[#allocation5 + $0x1e40] sm:$0xff]
    %v1180 = vld [vmem:[#allocation5 + $0x1e48] sm:$0xff]
    %v1181 = vld [vmem:[#allocation5 + $0x1e50] sm:$0xff]
    %v1182 = vld [vmem:[#allocation5 + $0x1e58] sm:$0xff]
    %v1183 = vld [vmem:[#allocation5 + $0x1e60] sm:$0xff]
    %v1184 = vld [vmem:[#allocation5 + $0x1e68] sm:$0xff]
    %v1185 = vld [vmem:[#allocation5 + $0x1e70] sm:$0xff]
    %v1186 = vld [vmem:[#allocation5 + $0x1e78] sm:$0xff]
    %v1187 = vld [vmem:[#allocation5 + $0x1e80] sm:$0xff]
    %v1188 = vld [vmem:[#allocation5 + $0x1e88] sm:$0xff]
    %v1189 = vld [vmem:[#allocation5 + $0x1e90] sm:$0xff]
    %v1190 = vld [vmem:[#allocation5 + $0x1e98] sm:$0xff]
    %v1191 = vld [vmem:[#allocation5 + $0x1ea0] sm:$0xff]
    %v1192 = vld [vmem:[#allocation5 + $0x1ea8] sm:$0xff]
    %v1193 = vld [vmem:[#allocation5 + $0x1eb0] sm:$0xff]
    %v1194 = vld [vmem:[#allocation5 + $0x1eb8] sm:$0xff]
    %v1195 = vld [vmem:[#allocation5 + $0x1ec0] sm:$0xff]
    %v1196 = vld [vmem:[#allocation5 + $0x1ec8] sm:$0xff]
    %v1197 = vld [vmem:[#allocation5 + $0x1ed0] sm:$0xff]
    %v1198 = vld [vmem:[#allocation5 + $0x1ed8] sm:$0xff]
    %v1199 = vld [vmem:[#allocation5 + $0x1ee0] sm:$0xff]
    %v1200 = vld [vmem:[#allocation5 + $0x1ee8] sm:$0xff]
    %v1201 = vld [vmem:[#allocation5 + $0x1ef0] sm:$0xff]
    %v1202 = vld [vmem:[#allocation5 + $0x1ef8] sm:$0xff]
    %v1203 = vld [vmem:[#allocation5 + $0x1f00] sm:$0xff]
    %v1204 = vld [vmem:[#allocation5 + $0x1f08] sm:$0xff]
    %v1205 = vld [vmem:[#allocation5 + $0x1f10] sm:$0xff]
    %v1206 = vld [vmem:[#allocation5 + $0x1f18] sm:$0xff]
    %v1207 = vld [vmem:[#allocation5 + $0x1f20] sm:$0xff]
    %v1208 = vld [vmem:[#allocation5 + $0x1f28] sm:$0xff]
    %v1209 = vld [vmem:[#allocation5 + $0x1f30] sm:$0xff]
    %v1210 = vld [vmem:[#allocation5 + $0x1f38] sm:$0xff]
    %v1211 = vld [vmem:[#allocation5 + $0x1f40] sm:$0xff]
    %v1212 = vld [vmem:[#allocation5 + $0x1f48] sm:$0xff]
    %v1213 = vld [vmem:[#allocation5 + $0x1f50] sm:$0xff]
    %v1214 = vld [vmem:[#allocation5 + $0x1f58] sm:$0xff]
    %v1215 = vld [vmem:[#allocation5 + $0x1f60] sm:$0xff]
    %v1216 = vld [vmem:[#allocation5 + $0x1f68] sm:$0xff]
    %v1217 = vld [vmem:[#allocation5 + $0x1f70] sm:$0xff]
    %v1218 = vld [vmem:[#allocation5 + $0x1f78] sm:$0xff]
    %v1219 = vld [vmem:[#allocation5 + $0x1f80] sm:$0xff]
    %v1220 = vld [vmem:[#allocation5 + $0x1f88] sm:$0xff]
    %v1221 = vld [vmem:[#allocation5 + $0x1f90] sm:$0xff]
    %v1222 = vld [vmem:[#allocation5 + $0x1f98] sm:$0xff]
    %v1223 = vld [vmem:[#allocation5 + $0x1fa0] sm:$0xff]
    %v1224 = vld [vmem:[#allocation5 + $0x1fa8] sm:$0xff]
    %v1225 = vld [vmem:[#allocation5 + $0x1fb0] sm:$0xff]
    %v1226 = vld [vmem:[#allocation5 + $0x1fb8] sm:$0xff]
    %v1227 = vld [vmem:[#allocation5 + $0x1fc0] sm:$0xff]
    %v1228 = vld [vmem:[#allocation5 + $0x1fc8] sm:$0xff]
    %v1229 = vld [vmem:[#allocation5 + $0x1fd0] sm:$0xff]
    %v1230 = vld [vmem:[#allocation5 + $0x1fd8] sm:$0xff]
    %v1231 = vld [vmem:[#allocation5 + $0x1fe0] sm:$0xff]
    %v1232 = vld [vmem:[#allocation5 + $0x1fe8] sm:$0xff]
    %v1233 = vld [vmem:[#allocation5 + $0x1ff0] sm:$0xff]
    %v1234 = vld [vmem:[#allocation5 + $0x1ff8] sm:$0xff]
    %v1235 = vld [vmem:[#allocation7] ss:$4 sm:$0xff]
    %v1237 = vlaneseq
    %v1238 = vshrl.u32 %v1237, 7
    %v1239 = vsub.s32 0, %v1238
    %v1240 = vrot.slane %v1235, %v1239
    %v1241 = vlaneseq
    %v1242 = vshrl.u32 %v1241, 7
    %v1243 = vsub.s32 1, %v1242
    %v1244 = vrot.slane %v1235, %v1243
    %v1245 = vlaneseq
    %v1246 = vshrl.u32 %v1245, 7
    %v1247 = vsub.s32 2, %v1246
    %v1248 = vrot.slane %v1235, %v1247
    %v1249 = vlaneseq
    %v1250 = vshrl.u32 %v1249, 7
    %v1251 = vsub.s32 3, %v1250
    %v1252 = vrot.slane %v1235, %v1251
    %v1253 = vlaneseq
    %v1254 = vshrl.u32 %v1253, 7
    %v1255 = vsub.s32 4, %v1254
    %v1256 = vrot.slane %v1235, %v1255
    %v1257 = vlaneseq
    %v1258 = vshrl.u32 %v1257, 7
    %v1259 = vsub.s32 5, %v1258
    %v1260 = vrot.slane %v1235, %v1259
    %v1261 = vlaneseq
    %v1262 = vshrl.u32 %v1261, 7
    %v1263 = vsub.s32 6, %v1262
    %v1264 = vrot.slane %v1235, %v1263
    %v1265 = vlaneseq
    %v1266 = vshrl.u32 %v1265, 7
    %v1267 = vsub.s32 7, %v1266
    %v1268 = vrot.slane %v1235, %v1267
    %v2301 = vunpack.c.l.b16 %v211
    %v2302 = vunpack.c.h.b16 %v211
    %v2303 = vunpack.c.l.b16 %v212
    %v2304 = vunpack.c.h.b16 %v212
    %v2305 = vunpack.c.l.b16 %v213
    %v2306 = vunpack.c.h.b16 %v213
    %v2307 = vunpack.c.l.b16 %v214
    %v2308 = vunpack.c.h.b16 %v214
    %v2309 = vunpack.c.l.b16 %v215
    %v2310 = vunpack.c.h.b16 %v215
    %v2311 = vunpack.c.l.b16 %v216
    %v2312 = vunpack.c.h.b16 %v216
    %v2313 = vunpack.c.l.b16 %v217
    %v2314 = vunpack.c.h.b16 %v217
    %v2315 = vunpack.c.l.b16 %v218
    %v2316 = vunpack.c.h.b16 %v218
    %v2317 = vunpack.c.l.b16 %v219
    %v2318 = vunpack.c.h.b16 %v219
    %v2319 = vunpack.c.l.b16 %v220
    %v2320 = vunpack.c.h.b16 %v220
    %v2321 = vunpack.c.l.b16 %v221
    %v2322 = vunpack.c.h.b16 %v221
    %v2323 = vunpack.c.l.b16 %v222
    %v2324 = vunpack.c.h.b16 %v222
    %v2325 = vunpack.c.l.b16 %v223
    %v2326 = vunpack.c.h.b16 %v223
    %v2327 = vunpack.c.l.b16 %v224
    %v2328 = vunpack.c.h.b16 %v224
    %v2329 = vunpack.c.l.b16 %v225
    %v2330 = vunpack.c.h.b16 %v225
    %v2331 = vunpack.c.l.b16 %v226
    %v2332 = vunpack.c.h.b16 %v226
    %v2333 = vunpack.c.l.b16 %v227
    %v2334 = vunpack.c.h.b16 %v227
    %v2335 = vunpack.c.l.b16 %v228
    %v2336 = vunpack.c.h.b16 %v228
    %v2337 = vunpack.c.l.b16 %v229
    %v2338 = vunpack.c.h.b16 %v229
    %v2339 = vunpack.c.l.b16 %v230
    %v2340 = vunpack.c.h.b16 %v230
    %v2341 = vunpack.c.l.b16 %v231
    %v2342 = vunpack.c.h.b16 %v231
    %v2343 = vunpack.c.l.b16 %v232
    %v2344 = vunpack.c.h.b16 %v232
    %v2345 = vunpack.c.l.b16 %v233
    %v2346 = vunpack.c.h.b16 %v233
    %v2347 = vunpack.c.l.b16 %v234
    %v2348 = vunpack.c.h.b16 %v234
    %v2349 = vunpack.c.l.b16 %v235
    %v2350 = vunpack.c.h.b16 %v235
    %v2351 = vunpack.c.l.b16 %v236
    %v2352 = vunpack.c.h.b16 %v236
    %v2353 = vunpack.c.l.b16 %v237
    %v2354 = vunpack.c.h.b16 %v237
    %v2355 = vunpack.c.l.b16 %v238
    %v2356 = vunpack.c.h.b16 %v238
    %v2357 = vunpack.c.l.b16 %v239
    %v2358 = vunpack.c.h.b16 %v239
    %v2359 = vunpack.c.l.b16 %v240
    %v2360 = vunpack.c.h.b16 %v240
    %v2361 = vunpack.c.l.b16 %v241
    %v2362 = vunpack.c.h.b16 %v241
    %v2363 = vunpack.c.l.b16 %v242
    %v2364 = vunpack.c.h.b16 %v242
    %v2365 = vunpack.c.l.b16 %v243
    %v2366 = vunpack.c.h.b16 %v243
    %v2367 = vunpack.c.l.b16 %v244
    %v2368 = vunpack.c.h.b16 %v244
    %v2369 = vunpack.c.l.b16 %v245
    %v2370 = vunpack.c.h.b16 %v245
    %v2371 = vunpack.c.l.b16 %v246
    %v2372 = vunpack.c.h.b16 %v246
    %v2373 = vunpack.c.l.b16 %v247
    %v2374 = vunpack.c.h.b16 %v247
    %v2375 = vunpack.c.l.b16 %v248
    %v2376 = vunpack.c.h.b16 %v248
    %v2377 = vunpack.c.l.b16 %v249
    %v2378 = vunpack.c.h.b16 %v249
    %v2379 = vunpack.c.l.b16 %v250
    %v2380 = vunpack.c.h.b16 %v250
    %v2381 = vunpack.c.l.b16 %v251
    %v2382 = vunpack.c.h.b16 %v251
    %v2383 = vunpack.c.l.b16 %v252
    %v2384 = vunpack.c.h.b16 %v252
    %v2385 = vunpack.c.l.b16 %v253
    %v2386 = vunpack.c.h.b16 %v253
    %v2387 = vunpack.c.l.b16 %v254
    %v2388 = vunpack.c.h.b16 %v254
    %v2389 = vunpack.c.l.b16 %v255
    %v2390 = vunpack.c.h.b16 %v255
    %v2391 = vunpack.c.l.b16 %v256
    %v2392 = vunpack.c.h.b16 %v256
    %v2393 = vunpack.c.l.b16 %v257
    %v2394 = vunpack.c.h.b16 %v257
    %v2395 = vunpack.c.l.b16 %v258
    %v2396 = vunpack.c.h.b16 %v258
    %v2397 = vunpack.c.l.b16 %v259
    %v2398 = vunpack.c.h.b16 %v259
    %v2399 = vunpack.c.l.b16 %v260
    %v2400 = vunpack.c.h.b16 %v260
    %v2401 = vunpack.c.l.b16 %v261
    %v2402 = vunpack.c.h.b16 %v261
    %v2403 = vunpack.c.l.b16 %v262
    %v2404 = vunpack.c.h.b16 %v262
    %v2405 = vunpack.c.l.b16 %v263
    %v2406 = vunpack.c.h.b16 %v263
    %v2407 = vunpack.c.l.b16 %v264
    %v2408 = vunpack.c.h.b16 %v264
    %v2409 = vunpack.c.l.b16 %v265
    %v2410 = vunpack.c.h.b16 %v265
    %v2411 = vunpack.c.l.b16 %v266
    %v2412 = vunpack.c.h.b16 %v266
    %v2413 = vunpack.c.l.b16 %v267
    %v2414 = vunpack.c.h.b16 %v267
    %v2415 = vunpack.c.l.b16 %v268
    %v2416 = vunpack.c.h.b16 %v268
    %v2417 = vunpack.c.l.b16 %v269
    %v2418 = vunpack.c.h.b16 %v269
    %v2419 = vunpack.c.l.b16 %v270
    %v2420 = vunpack.c.h.b16 %v270
    %v2421 = vunpack.c.l.b16 %v271
    %v2422 = vunpack.c.h.b16 %v271
    %v2423 = vunpack.c.l.b16 %v272
    %v2424 = vunpack.c.h.b16 %v272
    %v2425 = vunpack.c.l.b16 %v273
    %v2426 = vunpack.c.h.b16 %v273
    %v2427 = vunpack.c.l.b16 %v274
    %v2428 = vunpack.c.h.b16 %v274
    %v2429 = vunpack.c.l.b16 %v275
    %v2430 = vunpack.c.h.b16 %v275
    %v2431 = vunpack.c.l.b16 %v276
    %v2432 = vunpack.c.h.b16 %v276
    %v2433 = vunpack.c.l.b16 %v277
    %v2434 = vunpack.c.h.b16 %v277
    %v2435 = vunpack.c.l.b16 %v278
    %v2436 = vunpack.c.h.b16 %v278
    %v2437 = vunpack.c.l.b16 %v279
    %v2438 = vunpack.c.h.b16 %v279
    %v2439 = vunpack.c.l.b16 %v280
    %v2440 = vunpack.c.h.b16 %v280
    %v2441 = vunpack.c.l.b16 %v281
    %v2442 = vunpack.c.h.b16 %v281
    %v2443 = vunpack.c.l.b16 %v282
    %v2444 = vunpack.c.h.b16 %v282
    %v2445 = vunpack.c.l.b16 %v283
    %v2446 = vunpack.c.h.b16 %v283
    %v2447 = vunpack.c.l.b16 %v284
    %v2448 = vunpack.c.h.b16 %v284
    %v2449 = vunpack.c.l.b16 %v285
    %v2450 = vunpack.c.h.b16 %v285
    %v2451 = vunpack.c.l.b16 %v286
    %v2452 = vunpack.c.h.b16 %v286
    %v2453 = vunpack.c.l.b16 %v287
    %v2454 = vunpack.c.h.b16 %v287
    %v2455 = vunpack.c.l.b16 %v288
    %v2456 = vunpack.c.h.b16 %v288
    %v2457 = vunpack.c.l.b16 %v289
    %v2458 = vunpack.c.h.b16 %v289
    %v2459 = vunpack.c.l.b16 %v290
    %v2460 = vunpack.c.h.b16 %v290
    %v2461 = vunpack.c.l.b16 %v291
    %v2462 = vunpack.c.h.b16 %v291
    %v2463 = vunpack.c.l.b16 %v292
    %v2464 = vunpack.c.h.b16 %v292
    %v2465 = vunpack.c.l.b16 %v293
    %v2466 = vunpack.c.h.b16 %v293
    %v2467 = vunpack.c.l.b16 %v294
    %v2468 = vunpack.c.h.b16 %v294
    %v2469 = vunpack.c.l.b16 %v295
    %v2470 = vunpack.c.h.b16 %v295
    %v2471 = vunpack.c.l.b16 %v296
    %v2472 = vunpack.c.h.b16 %v296
    %v2473 = vunpack.c.l.b16 %v297
    %v2474 = vunpack.c.h.b16 %v297
    %v2475 = vunpack.c.l.b16 %v298
    %v2476 = vunpack.c.h.b16 %v298
    %v2477 = vunpack.c.l.b16 %v299
    %v2478 = vunpack.c.h.b16 %v299
    %v2479 = vunpack.c.l.b16 %v300
    %v2480 = vunpack.c.h.b16 %v300
    %v2481 = vunpack.c.l.b16 %v301
    %v2482 = vunpack.c.h.b16 %v301
    %v2483 = vunpack.c.l.b16 %v302
    %v2484 = vunpack.c.h.b16 %v302
    %v2485 = vunpack.c.l.b16 %v303
    %v2486 = vunpack.c.h.b16 %v303
    %v2487 = vunpack.c.l.b16 %v304
    %v2488 = vunpack.c.h.b16 %v304
    %v2489 = vunpack.c.l.b16 %v305
    %v2490 = vunpack.c.h.b16 %v305
    %v2491 = vunpack.c.l.b16 %v306
    %v2492 = vunpack.c.h.b16 %v306
    %v2493 = vunpack.c.l.b16 %v307
    %v2494 = vunpack.c.h.b16 %v307
    %v2495 = vunpack.c.l.b16 %v308
    %v2496 = vunpack.c.h.b16 %v308
    %v2497 = vunpack.c.l.b16 %v309
    %v2498 = vunpack.c.h.b16 %v309
    %v2499 = vunpack.c.l.b16 %v310
    %v2500 = vunpack.c.h.b16 %v310
    %v2501 = vunpack.c.l.b16 %v311
    %v2502 = vunpack.c.h.b16 %v311
    %v2503 = vunpack.c.l.b16 %v312
    %v2504 = vunpack.c.h.b16 %v312
    %v2505 = vunpack.c.l.b16 %v313
    %v2506 = vunpack.c.h.b16 %v313
    %v2507 = vunpack.c.l.b16 %v314
    %v2508 = vunpack.c.h.b16 %v314
    %v2509 = vunpack.c.l.b16 %v315
    %v2510 = vunpack.c.h.b16 %v315
    %v2511 = vunpack.c.l.b16 %v316
    %v2512 = vunpack.c.h.b16 %v316
    %v2513 = vunpack.c.l.b16 %v317
    %v2514 = vunpack.c.h.b16 %v317
    %v2515 = vunpack.c.l.b16 %v318
    %v2516 = vunpack.c.h.b16 %v318
    %v2517 = vunpack.c.l.b16 %v319
    %v2518 = vunpack.c.h.b16 %v319
    %v2519 = vunpack.c.l.b16 %v320
    %v2520 = vunpack.c.h.b16 %v320
    %v2521 = vunpack.c.l.b16 %v321
    %v2522 = vunpack.c.h.b16 %v321
    %v2523 = vunpack.c.l.b16 %v322
    %v2524 = vunpack.c.h.b16 %v322
    %v2525 = vunpack.c.l.b16 %v323
    %v2526 = vunpack.c.h.b16 %v323
    %v2527 = vunpack.c.l.b16 %v324
    %v2528 = vunpack.c.h.b16 %v324
    %v2529 = vunpack.c.l.b16 %v325
    %v2530 = vunpack.c.h.b16 %v325
    %v2531 = vunpack.c.l.b16 %v326
    %v2532 = vunpack.c.h.b16 %v326
    %v2533 = vunpack.c.l.b16 %v327
    %v2534 = vunpack.c.h.b16 %v327
    %v2535 = vunpack.c.l.b16 %v328
    %v2536 = vunpack.c.h.b16 %v328
    %v2537 = vunpack.c.l.b16 %v329
    %v2538 = vunpack.c.h.b16 %v329
    %v2539 = vunpack.c.l.b16 %v330
    %v2540 = vunpack.c.h.b16 %v330
    %v2541 = vunpack.c.l.b16 %v331
    %v2542 = vunpack.c.h.b16 %v331
    %v2543 = vunpack.c.l.b16 %v332
    %v2544 = vunpack.c.h.b16 %v332
    %v2545 = vunpack.c.l.b16 %v333
    %v2546 = vunpack.c.h.b16 %v333
    %v2547 = vunpack.c.l.b16 %v334
    %v2548 = vunpack.c.h.b16 %v334
    %v2549 = vunpack.c.l.b16 %v335
    %v2550 = vunpack.c.h.b16 %v335
    %v2551 = vunpack.c.l.b16 %v336
    %v2552 = vunpack.c.h.b16 %v336
    %v2553 = vunpack.c.l.b16 %v337
    %v2554 = vunpack.c.h.b16 %v337
    %v2555 = vunpack.c.l.b16 %v338
    %v2556 = vunpack.c.h.b16 %v338
    %v2557 = vunpack.c.l.b16 %v339
    %v2558 = vunpack.c.h.b16 %v339
    %v2559 = vunpack.c.l.b16 %v340
    %v2560 = vunpack.c.h.b16 %v340
    %v2561 = vunpack.c.l.b16 %v341
    %v2562 = vunpack.c.h.b16 %v341
    %v2563 = vunpack.c.l.b16 %v342
    %v2564 = vunpack.c.h.b16 %v342
    %v2565 = vunpack.c.l.b16 %v343
    %v2566 = vunpack.c.h.b16 %v343
    %v2567 = vunpack.c.l.b16 %v344
    %v2568 = vunpack.c.h.b16 %v344
    %v2569 = vunpack.c.l.b16 %v345
    %v2570 = vunpack.c.h.b16 %v345
    %v2571 = vunpack.c.l.b16 %v346
    %v2572 = vunpack.c.h.b16 %v346
    %v2573 = vunpack.c.l.b16 %v347
    %v2574 = vunpack.c.h.b16 %v347
    %v2575 = vunpack.c.l.b16 %v348
    %v2576 = vunpack.c.h.b16 %v348
    %v2577 = vunpack.c.l.b16 %v349
    %v2578 = vunpack.c.h.b16 %v349
    %v2579 = vunpack.c.l.b16 %v350
    %v2580 = vunpack.c.h.b16 %v350
    %v2581 = vunpack.c.l.b16 %v351
    %v2582 = vunpack.c.h.b16 %v351
    %v2583 = vunpack.c.l.b16 %v352
    %v2584 = vunpack.c.h.b16 %v352
    %v2585 = vunpack.c.l.b16 %v353
    %v2586 = vunpack.c.h.b16 %v353
    %v2587 = vunpack.c.l.b16 %v354
    %v2588 = vunpack.c.h.b16 %v354
    %v2589 = vunpack.c.l.b16 %v355
    %v2590 = vunpack.c.h.b16 %v355
    %v2591 = vunpack.c.l.b16 %v356
    %v2592 = vunpack.c.h.b16 %v356
    %v2593 = vunpack.c.l.b16 %v357
    %v2594 = vunpack.c.h.b16 %v357
    %v2595 = vunpack.c.l.b16 %v358
    %v2596 = vunpack.c.h.b16 %v358
    %v2597 = vunpack.c.l.b16 %v359
    %v2598 = vunpack.c.h.b16 %v359
    %v2599 = vunpack.c.l.b16 %v360
    %v2600 = vunpack.c.h.b16 %v360
    %v2601 = vunpack.c.l.b16 %v361
    %v2602 = vunpack.c.h.b16 %v361
    %v2603 = vunpack.c.l.b16 %v362
    %v2604 = vunpack.c.h.b16 %v362
    %v2605 = vunpack.c.l.b16 %v363
    %v2606 = vunpack.c.h.b16 %v363
    %v2607 = vunpack.c.l.b16 %v364
    %v2608 = vunpack.c.h.b16 %v364
    %v2609 = vunpack.c.l.b16 %v365
    %v2610 = vunpack.c.h.b16 %v365
    %v2611 = vunpack.c.l.b16 %v366
    %v2612 = vunpack.c.h.b16 %v366
    %v2613 = vunpack.c.l.b16 %v367
    %v2614 = vunpack.c.h.b16 %v367
    %v2615 = vunpack.c.l.b16 %v368
    %v2616 = vunpack.c.h.b16 %v368
    %v2617 = vunpack.c.l.b16 %v369
    %v2618 = vunpack.c.h.b16 %v369
    %v2619 = vunpack.c.l.b16 %v370
    %v2620 = vunpack.c.h.b16 %v370
    %v2621 = vunpack.c.l.b16 %v371
    %v2622 = vunpack.c.h.b16 %v371
    %v2623 = vunpack.c.l.b16 %v372
    %v2624 = vunpack.c.h.b16 %v372
    %v2625 = vunpack.c.l.b16 %v373
    %v2626 = vunpack.c.h.b16 %v373
    %v2627 = vunpack.c.l.b16 %v374
    %v2628 = vunpack.c.h.b16 %v374
    %v2629 = vunpack.c.l.b16 %v375
    %v2630 = vunpack.c.h.b16 %v375
    %v2631 = vunpack.c.l.b16 %v376
    %v2632 = vunpack.c.h.b16 %v376
    %v2633 = vunpack.c.l.b16 %v377
    %v2634 = vunpack.c.h.b16 %v377
    %v2635 = vunpack.c.l.b16 %v378
    %v2636 = vunpack.c.h.b16 %v378
    %v2637 = vunpack.c.l.b16 %v379
    %v2638 = vunpack.c.h.b16 %v379
    %v2639 = vunpack.c.l.b16 %v380
    %v2640 = vunpack.c.h.b16 %v380
    %v2641 = vunpack.c.l.b16 %v381
    %v2642 = vunpack.c.h.b16 %v381
    %v2643 = vunpack.c.l.b16 %v382
    %v2644 = vunpack.c.h.b16 %v382
    %v2645 = vunpack.c.l.b16 %v383
    %v2646 = vunpack.c.h.b16 %v383
    %v2647 = vunpack.c.l.b16 %v384
    %v2648 = vunpack.c.h.b16 %v384
    %v2649 = vunpack.c.l.b16 %v385
    %v2650 = vunpack.c.h.b16 %v385
    %v2651 = vunpack.c.l.b16 %v386
    %v2652 = vunpack.c.h.b16 %v386
    %v2653 = vunpack.c.l.b16 %v387
    %v2654 = vunpack.c.h.b16 %v387
    %v2655 = vunpack.c.l.b16 %v388
    %v2656 = vunpack.c.h.b16 %v388
    %v2657 = vunpack.c.l.b16 %v389
    %v2658 = vunpack.c.h.b16 %v389
    %v2659 = vunpack.c.l.b16 %v390
    %v2660 = vunpack.c.h.b16 %v390
    %v2661 = vunpack.c.l.b16 %v391
    %v2662 = vunpack.c.h.b16 %v391
    %v2663 = vunpack.c.l.b16 %v392
    %v2664 = vunpack.c.h.b16 %v392
    %v2665 = vunpack.c.l.b16 %v393
    %v2666 = vunpack.c.h.b16 %v393
    %v2667 = vunpack.c.l.b16 %v394
    %v2668 = vunpack.c.h.b16 %v394
    %v2669 = vunpack.c.l.b16 %v395
    %v2670 = vunpack.c.h.b16 %v395
    %v2671 = vunpack.c.l.b16 %v396
    %v2672 = vunpack.c.h.b16 %v396
    %v2673 = vunpack.c.l.b16 %v397
    %v2674 = vunpack.c.h.b16 %v397
    %v2675 = vunpack.c.l.b16 %v398
    %v2676 = vunpack.c.h.b16 %v398
    %v2677 = vunpack.c.l.b16 %v399
    %v2678 = vunpack.c.h.b16 %v399
    %v2679 = vunpack.c.l.b16 %v400
    %v2680 = vunpack.c.h.b16 %v400
    %v2681 = vunpack.c.l.b16 %v401
    %v2682 = vunpack.c.h.b16 %v401
    %v2683 = vunpack.c.l.b16 %v402
    %v2684 = vunpack.c.h.b16 %v402
    %v2685 = vunpack.c.l.b16 %v403
    %v2686 = vunpack.c.h.b16 %v403
    %v2687 = vunpack.c.l.b16 %v404
    %v2688 = vunpack.c.h.b16 %v404
    %v2689 = vunpack.c.l.b16 %v405
    %v2690 = vunpack.c.h.b16 %v405
    %v2691 = vunpack.c.l.b16 %v406
    %v2692 = vunpack.c.h.b16 %v406
    %v2693 = vunpack.c.l.b16 %v407
    %v2694 = vunpack.c.h.b16 %v407
    %v2695 = vunpack.c.l.b16 %v408
    %v2696 = vunpack.c.h.b16 %v408
    %v2697 = vunpack.c.l.b16 %v409
    %v2698 = vunpack.c.h.b16 %v409
    %v2699 = vunpack.c.l.b16 %v410
    %v2700 = vunpack.c.h.b16 %v410
    %v2701 = vunpack.c.l.b16 %v411
    %v2702 = vunpack.c.h.b16 %v411
    %v2703 = vunpack.c.l.b16 %v412
    %v2704 = vunpack.c.h.b16 %v412
    %v2705 = vunpack.c.l.b16 %v413
    %v2706 = vunpack.c.h.b16 %v413
    %v2707 = vunpack.c.l.b16 %v414
    %v2708 = vunpack.c.h.b16 %v414
    %v2709 = vunpack.c.l.b16 %v415
    %v2710 = vunpack.c.h.b16 %v415
    %v2711 = vunpack.c.l.b16 %v416
    %v2712 = vunpack.c.h.b16 %v416
    %v2713 = vunpack.c.l.b16 %v417
    %v2714 = vunpack.c.h.b16 %v417
    %v2715 = vunpack.c.l.b16 %v418
    %v2716 = vunpack.c.h.b16 %v418
    %v2717 = vunpack.c.l.b16 %v419
    %v2718 = vunpack.c.h.b16 %v419
    %v2719 = vunpack.c.l.b16 %v420
    %v2720 = vunpack.c.h.b16 %v420
    %v2721 = vunpack.c.l.b16 %v421
    %v2722 = vunpack.c.h.b16 %v421
    %v2723 = vunpack.c.l.b16 %v422
    %v2724 = vunpack.c.h.b16 %v422
    %v2725 = vunpack.c.l.b16 %v423
    %v2726 = vunpack.c.h.b16 %v423
    %v2727 = vunpack.c.l.b16 %v424
    %v2728 = vunpack.c.h.b16 %v424
    %v2729 = vunpack.c.l.b16 %v425
    %v2730 = vunpack.c.h.b16 %v425
    %v2731 = vunpack.c.l.b16 %v426
    %v2732 = vunpack.c.h.b16 %v426
    %v2733 = vunpack.c.l.b16 %v427
    %v2734 = vunpack.c.h.b16 %v427
    %v2735 = vunpack.c.l.b16 %v428
    %v2736 = vunpack.c.h.b16 %v428
    %v2737 = vunpack.c.l.b16 %v429
    %v2738 = vunpack.c.h.b16 %v429
    %v2739 = vunpack.c.l.b16 %v430
    %v2740 = vunpack.c.h.b16 %v430
    %v2741 = vunpack.c.l.b16 %v431
    %v2742 = vunpack.c.h.b16 %v431
    %v2743 = vunpack.c.l.b16 %v432
    %v2744 = vunpack.c.h.b16 %v432
    %v2745 = vunpack.c.l.b16 %v433
    %v2746 = vunpack.c.h.b16 %v433
    %v2747 = vunpack.c.l.b16 %v434
    %v2748 = vunpack.c.h.b16 %v434
    %v2749 = vunpack.c.l.b16 %v435
    %v2750 = vunpack.c.h.b16 %v435
    %v2751 = vunpack.c.l.b16 %v436
    %v2752 = vunpack.c.h.b16 %v436
    %v2753 = vunpack.c.l.b16 %v437
    %v2754 = vunpack.c.h.b16 %v437
    %v2755 = vunpack.c.l.b16 %v438
    %v2756 = vunpack.c.h.b16 %v438
    %v2757 = vunpack.c.l.b16 %v439
    %v2758 = vunpack.c.h.b16 %v439
    %v2759 = vunpack.c.l.b16 %v440
    %v2760 = vunpack.c.h.b16 %v440
    %v2761 = vunpack.c.l.b16 %v441
    %v2762 = vunpack.c.h.b16 %v441
    %v2763 = vunpack.c.l.b16 %v442
    %v2764 = vunpack.c.h.b16 %v442
    %v2765 = vunpack.c.l.b16 %v443
    %v2766 = vunpack.c.h.b16 %v443
    %v2767 = vunpack.c.l.b16 %v444
    %v2768 = vunpack.c.h.b16 %v444
    %v2769 = vunpack.c.l.b16 %v445
    %v2770 = vunpack.c.h.b16 %v445
    %v2771 = vunpack.c.l.b16 %v446
    %v2772 = vunpack.c.h.b16 %v446
    %v2773 = vunpack.c.l.b16 %v447
    %v2774 = vunpack.c.h.b16 %v447
    %v2775 = vunpack.c.l.b16 %v448
    %v2776 = vunpack.c.h.b16 %v448
    %v2777 = vunpack.c.l.b16 %v449
    %v2778 = vunpack.c.h.b16 %v449
    %v2779 = vunpack.c.l.b16 %v450
    %v2780 = vunpack.c.h.b16 %v450
    %v2781 = vunpack.c.l.b16 %v451
    %v2782 = vunpack.c.h.b16 %v451
    %v2783 = vunpack.c.l.b16 %v452
    %v2784 = vunpack.c.h.b16 %v452
    %v2785 = vunpack.c.l.b16 %v453
    %v2786 = vunpack.c.h.b16 %v453
    %v2787 = vunpack.c.l.b16 %v454
    %v2788 = vunpack.c.h.b16 %v454
    %v2789 = vunpack.c.l.b16 %v455
    %v2790 = vunpack.c.h.b16 %v455
    %v2791 = vunpack.c.l.b16 %v456
    %v2792 = vunpack.c.h.b16 %v456
    %v2793 = vunpack.c.l.b16 %v457
    %v2794 = vunpack.c.h.b16 %v457
    %v2795 = vunpack.c.l.b16 %v458
    %v2796 = vunpack.c.h.b16 %v458
    %v2797 = vunpack.c.l.b16 %v459
    %v2798 = vunpack.c.h.b16 %v459
    %v2799 = vunpack.c.l.b16 %v460
    %v2800 = vunpack.c.h.b16 %v460
    %v2801 = vunpack.c.l.b16 %v461
    %v2802 = vunpack.c.h.b16 %v461
    %v2803 = vunpack.c.l.b16 %v462
    %v2804 = vunpack.c.h.b16 %v462
    %v2805 = vunpack.c.l.b16 %v463
    %v2806 = vunpack.c.h.b16 %v463
    %v2807 = vunpack.c.l.b16 %v464
    %v2808 = vunpack.c.h.b16 %v464
    %v2809 = vunpack.c.l.b16 %v465
    %v2810 = vunpack.c.h.b16 %v465
    %v2811 = vunpack.c.l.b16 %v466
    %v2812 = vunpack.c.h.b16 %v466
    %v2813 = vunpack.c.l.b16 %v467
    %v2814 = vunpack.c.h.b16 %v467
    %v2815 = vunpack.c.l.b16 %v468
    %v2816 = vunpack.c.h.b16 %v468
    %v2817 = vunpack.c.l.b16 %v469
    %v2818 = vunpack.c.h.b16 %v469
    %v2819 = vunpack.c.l.b16 %v470
    %v2820 = vunpack.c.h.b16 %v470
    %v2821 = vunpack.c.l.b16 %v471
    %v2822 = vunpack.c.h.b16 %v471
    %v2823 = vunpack.c.l.b16 %v472
    %v2824 = vunpack.c.h.b16 %v472
    %v2825 = vunpack.c.l.b16 %v473
    %v2826 = vunpack.c.h.b16 %v473
    %v2827 = vunpack.c.l.b16 %v474
    %v2828 = vunpack.c.h.b16 %v474
    %v2829 = vunpack.c.l.b16 %v475
    %v2830 = vunpack.c.h.b16 %v475
    %v2831 = vunpack.c.l.b16 %v476
    %v2832 = vunpack.c.h.b16 %v476
    %v2833 = vunpack.c.l.b16 %v477
    %v2834 = vunpack.c.h.b16 %v477
    %v2835 = vunpack.c.l.b16 %v478
    %v2836 = vunpack.c.h.b16 %v478
    %v2837 = vunpack.c.l.b16 %v479
    %v2838 = vunpack.c.h.b16 %v479
    %v2839 = vunpack.c.l.b16 %v480
    %v2840 = vunpack.c.h.b16 %v480
    %v2841 = vunpack.c.l.b16 %v481
    %v2842 = vunpack.c.h.b16 %v481
    %v2843 = vunpack.c.l.b16 %v482
    %v2844 = vunpack.c.h.b16 %v482
    %v2845 = vunpack.c.l.b16 %v483
    %v2846 = vunpack.c.h.b16 %v483
    %v2847 = vunpack.c.l.b16 %v484
    %v2848 = vunpack.c.h.b16 %v484
    %v2849 = vunpack.c.l.b16 %v485
    %v2850 = vunpack.c.h.b16 %v485
    %v2851 = vunpack.c.l.b16 %v486
    %v2852 = vunpack.c.h.b16 %v486
    %v2853 = vunpack.c.l.b16 %v487
    %v2854 = vunpack.c.h.b16 %v487
    %v2855 = vunpack.c.l.b16 %v488
    %v2856 = vunpack.c.h.b16 %v488
    %v2857 = vunpack.c.l.b16 %v489
    %v2858 = vunpack.c.h.b16 %v489
    %v2859 = vunpack.c.l.b16 %v490
    %v2860 = vunpack.c.h.b16 %v490
    %v2861 = vunpack.c.l.b16 %v491
    %v2862 = vunpack.c.h.b16 %v491
    %v2863 = vunpack.c.l.b16 %v492
    %v2864 = vunpack.c.h.b16 %v492
    %v2865 = vunpack.c.l.b16 %v493
    %v2866 = vunpack.c.h.b16 %v493
    %v2867 = vunpack.c.l.b16 %v494
    %v2868 = vunpack.c.h.b16 %v494
    %v2869 = vunpack.c.l.b16 %v495
    %v2870 = vunpack.c.h.b16 %v495
    %v2871 = vunpack.c.l.b16 %v496
    %v2872 = vunpack.c.h.b16 %v496
    %v2873 = vunpack.c.l.b16 %v497
    %v2874 = vunpack.c.h.b16 %v497
    %v2875 = vunpack.c.l.b16 %v498
    %v2876 = vunpack.c.h.b16 %v498
    %v2877 = vunpack.c.l.b16 %v499
    %v2878 = vunpack.c.h.b16 %v499
    %v2879 = vunpack.c.l.b16 %v500
    %v2880 = vunpack.c.h.b16 %v500
    %v2881 = vunpack.c.l.b16 %v501
    %v2882 = vunpack.c.h.b16 %v501
    %v2883 = vunpack.c.l.b16 %v502
    %v2884 = vunpack.c.h.b16 %v502
    %v2885 = vunpack.c.l.b16 %v503
    %v2886 = vunpack.c.h.b16 %v503
    %v2887 = vunpack.c.l.b16 %v504
    %v2888 = vunpack.c.h.b16 %v504
    %v2889 = vunpack.c.l.b16 %v505
    %v2890 = vunpack.c.h.b16 %v505
    %v2891 = vunpack.c.l.b16 %v506
    %v2892 = vunpack.c.h.b16 %v506
    %v2893 = vunpack.c.l.b16 %v507
    %v2894 = vunpack.c.h.b16 %v507
    %v2895 = vunpack.c.l.b16 %v508
    %v2896 = vunpack.c.h.b16 %v508
    %v2897 = vunpack.c.l.b16 %v509
    %v2898 = vunpack.c.h.b16 %v509
    %v2899 = vunpack.c.l.b16 %v510
    %v2900 = vunpack.c.h.b16 %v510
    %v2901 = vunpack.c.l.b16 %v511
    %v2902 = vunpack.c.h.b16 %v511
    %v2903 = vunpack.c.l.b16 %v512
    %v2904 = vunpack.c.h.b16 %v512
    %v2905 = vunpack.c.l.b16 %v513
    %v2906 = vunpack.c.h.b16 %v513
    %v2907 = vunpack.c.l.b16 %v514
    %v2908 = vunpack.c.h.b16 %v514
    %v2909 = vunpack.c.l.b16 %v515
    %v2910 = vunpack.c.h.b16 %v515
    %v2911 = vunpack.c.l.b16 %v516
    %v2912 = vunpack.c.h.b16 %v516
    %v2913 = vunpack.c.l.b16 %v517
    %v2914 = vunpack.c.h.b16 %v517
    %v2915 = vunpack.c.l.b16 %v518
    %v2916 = vunpack.c.h.b16 %v518
    %v2917 = vunpack.c.l.b16 %v519
    %v2918 = vunpack.c.h.b16 %v519
    %v2919 = vunpack.c.l.b16 %v520
    %v2920 = vunpack.c.h.b16 %v520
    %v2921 = vunpack.c.l.b16 %v521
    %v2922 = vunpack.c.h.b16 %v521
    %v2923 = vunpack.c.l.b16 %v522
    %v2924 = vunpack.c.h.b16 %v522
    %v2925 = vunpack.c.l.b16 %v523
    %v2926 = vunpack.c.h.b16 %v523
    %v2927 = vunpack.c.l.b16 %v524
    %v2928 = vunpack.c.h.b16 %v524
    %v2929 = vunpack.c.l.b16 %v525
    %v2930 = vunpack.c.h.b16 %v525
    %v2931 = vunpack.c.l.b16 %v526
    %v2932 = vunpack.c.h.b16 %v526
    %v2933 = vunpack.c.l.b16 %v527
    %v2934 = vunpack.c.h.b16 %v527
    %v2935 = vunpack.c.l.b16 %v528
    %v2936 = vunpack.c.h.b16 %v528
    %v2937 = vunpack.c.l.b16 %v529
    %v2938 = vunpack.c.h.b16 %v529
    %v2939 = vunpack.c.l.b16 %v530
    %v2940 = vunpack.c.h.b16 %v530
    %v2941 = vunpack.c.l.b16 %v531
    %v2942 = vunpack.c.h.b16 %v531
    %v2943 = vunpack.c.l.b16 %v532
    %v2944 = vunpack.c.h.b16 %v532
    %v2945 = vunpack.c.l.b16 %v533
    %v2946 = vunpack.c.h.b16 %v533
    %v2947 = vunpack.c.l.b16 %v534
    %v2948 = vunpack.c.h.b16 %v534
    %v2949 = vunpack.c.l.b16 %v535
    %v2950 = vunpack.c.h.b16 %v535
    %v2951 = vunpack.c.l.b16 %v536
    %v2952 = vunpack.c.h.b16 %v536
    %v2953 = vunpack.c.l.b16 %v537
    %v2954 = vunpack.c.h.b16 %v537
    %v2955 = vunpack.c.l.b16 %v538
    %v2956 = vunpack.c.h.b16 %v538
    %v2957 = vunpack.c.l.b16 %v539
    %v2958 = vunpack.c.h.b16 %v539
    %v2959 = vunpack.c.l.b16 %v540
    %v2960 = vunpack.c.h.b16 %v540
    %v2961 = vunpack.c.l.b16 %v541
    %v2962 = vunpack.c.h.b16 %v541
    %v2963 = vunpack.c.l.b16 %v542
    %v2964 = vunpack.c.h.b16 %v542
    %v2965 = vunpack.c.l.b16 %v543
    %v2966 = vunpack.c.h.b16 %v543
    %v2967 = vunpack.c.l.b16 %v544
    %v2968 = vunpack.c.h.b16 %v544
    %v2969 = vunpack.c.l.b16 %v545
    %v2970 = vunpack.c.h.b16 %v545
    %v2971 = vunpack.c.l.b16 %v546
    %v2972 = vunpack.c.h.b16 %v546
    %v2973 = vunpack.c.l.b16 %v547
    %v2974 = vunpack.c.h.b16 %v547
    %v2975 = vunpack.c.l.b16 %v548
    %v2976 = vunpack.c.h.b16 %v548
    %v2977 = vunpack.c.l.b16 %v549
    %v2978 = vunpack.c.h.b16 %v549
    %v2979 = vunpack.c.l.b16 %v550
    %v2980 = vunpack.c.h.b16 %v550
    %v2981 = vunpack.c.l.b16 %v551
    %v2982 = vunpack.c.h.b16 %v551
    %v2983 = vunpack.c.l.b16 %v552
    %v2984 = vunpack.c.h.b16 %v552
    %v2985 = vunpack.c.l.b16 %v553
    %v2986 = vunpack.c.h.b16 %v553
    %v2987 = vunpack.c.l.b16 %v554
    %v2988 = vunpack.c.h.b16 %v554
    %v2989 = vunpack.c.l.b16 %v555
    %v2990 = vunpack.c.h.b16 %v555
    %v2991 = vunpack.c.l.b16 %v556
    %v2992 = vunpack.c.h.b16 %v556
    %v2993 = vunpack.c.l.b16 %v557
    %v2994 = vunpack.c.h.b16 %v557
    %v2995 = vunpack.c.l.b16 %v558
    %v2996 = vunpack.c.h.b16 %v558
    %v2997 = vunpack.c.l.b16 %v559
    %v2998 = vunpack.c.h.b16 %v559
    %v2999 = vunpack.c.l.b16 %v560
    %v3000 = vunpack.c.h.b16 %v560
    %v3001 = vunpack.c.l.b16 %v561
    %v3002 = vunpack.c.h.b16 %v561
    %v3003 = vunpack.c.l.b16 %v562
    %v3004 = vunpack.c.h.b16 %v562
    %v3005 = vunpack.c.l.b16 %v563
    %v3006 = vunpack.c.h.b16 %v563
    %v3007 = vunpack.c.l.b16 %v564
    %v3008 = vunpack.c.h.b16 %v564
    %v3009 = vunpack.c.l.b16 %v565
    %v3010 = vunpack.c.h.b16 %v565
    %v3011 = vunpack.c.l.b16 %v566
    %v3012 = vunpack.c.h.b16 %v566
    %v3013 = vunpack.c.l.b16 %v567
    %v3014 = vunpack.c.h.b16 %v567
    %v3015 = vunpack.c.l.b16 %v568
    %v3016 = vunpack.c.h.b16 %v568
    %v3017 = vunpack.c.l.b16 %v569
    %v3018 = vunpack.c.h.b16 %v569
    %v3019 = vunpack.c.l.b16 %v570
    %v3020 = vunpack.c.h.b16 %v570
    %v3021 = vunpack.c.l.b16 %v571
    %v3022 = vunpack.c.h.b16 %v571
    %v3023 = vunpack.c.l.b16 %v572
    %v3024 = vunpack.c.h.b16 %v572
    %v3025 = vunpack.c.l.b16 %v573
    %v3026 = vunpack.c.h.b16 %v573
    %v3027 = vunpack.c.l.b16 %v574
    %v3028 = vunpack.c.h.b16 %v574
    %v3029 = vunpack.c.l.b16 %v575
    %v3030 = vunpack.c.h.b16 %v575
    %v3031 = vunpack.c.l.b16 %v576
    %v3032 = vunpack.c.h.b16 %v576
    %v3033 = vunpack.c.l.b16 %v577
    %v3034 = vunpack.c.h.b16 %v577
    %v3035 = vunpack.c.l.b16 %v578
    %v3036 = vunpack.c.h.b16 %v578
    %v3037 = vunpack.c.l.b16 %v579
    %v3038 = vunpack.c.h.b16 %v579
    %v3039 = vunpack.c.l.b16 %v580
    %v3040 = vunpack.c.h.b16 %v580
    %v3041 = vunpack.c.l.b16 %v581
    %v3042 = vunpack.c.h.b16 %v581
    %v3043 = vunpack.c.l.b16 %v582
    %v3044 = vunpack.c.h.b16 %v582
    %v3045 = vunpack.c.l.b16 %v583
    %v3046 = vunpack.c.h.b16 %v583
    %v3047 = vunpack.c.l.b16 %v584
    %v3048 = vunpack.c.h.b16 %v584
    %v3049 = vunpack.c.l.b16 %v585
    %v3050 = vunpack.c.h.b16 %v585
    %v3051 = vunpack.c.l.b16 %v586
    %v3052 = vunpack.c.h.b16 %v586
    %v3053 = vunpack.c.l.b16 %v587
    %v3054 = vunpack.c.h.b16 %v587
    %v3055 = vunpack.c.l.b16 %v588
    %v3056 = vunpack.c.h.b16 %v588
    %v3057 = vunpack.c.l.b16 %v589
    %v3058 = vunpack.c.h.b16 %v589
    %v3059 = vunpack.c.l.b16 %v590
    %v3060 = vunpack.c.h.b16 %v590
    %v3061 = vunpack.c.l.b16 %v591
    %v3062 = vunpack.c.h.b16 %v591
    %v3063 = vunpack.c.l.b16 %v592
    %v3064 = vunpack.c.h.b16 %v592
    %v3065 = vunpack.c.l.b16 %v593
    %v3066 = vunpack.c.h.b16 %v593
    %v3067 = vunpack.c.l.b16 %v594
    %v3068 = vunpack.c.h.b16 %v594
    %v3069 = vunpack.c.l.b16 %v595
    %v3070 = vunpack.c.h.b16 %v595
    %v3071 = vunpack.c.l.b16 %v596
    %v3072 = vunpack.c.h.b16 %v596
    %v3073 = vunpack.c.l.b16 %v597
    %v3074 = vunpack.c.h.b16 %v597
    %v3075 = vunpack.c.l.b16 %v598
    %v3076 = vunpack.c.h.b16 %v598
    %v3077 = vunpack.c.l.b16 %v599
    %v3078 = vunpack.c.h.b16 %v599
    %v3079 = vunpack.c.l.b16 %v600
    %v3080 = vunpack.c.h.b16 %v600
    %v3081 = vunpack.c.l.b16 %v601
    %v3082 = vunpack.c.h.b16 %v601
    %v3083 = vunpack.c.l.b16 %v602
    %v3084 = vunpack.c.h.b16 %v602
    %v3085 = vunpack.c.l.b16 %v603
    %v3086 = vunpack.c.h.b16 %v603
    %v3087 = vunpack.c.l.b16 %v604
    %v3088 = vunpack.c.h.b16 %v604
    %v3089 = vunpack.c.l.b16 %v605
    %v3090 = vunpack.c.h.b16 %v605
    %v3091 = vunpack.c.l.b16 %v606
    %v3092 = vunpack.c.h.b16 %v606
    %v3093 = vunpack.c.l.b16 %v607
    %v3094 = vunpack.c.h.b16 %v607
    %v3095 = vunpack.c.l.b16 %v608
    %v3096 = vunpack.c.h.b16 %v608
    %v3097 = vunpack.c.l.b16 %v609
    %v3098 = vunpack.c.h.b16 %v609
    %v3099 = vunpack.c.l.b16 %v610
    %v3100 = vunpack.c.h.b16 %v610
    %v3101 = vunpack.c.l.b16 %v611
    %v3102 = vunpack.c.h.b16 %v611
    %v3103 = vunpack.c.l.b16 %v612
    %v3104 = vunpack.c.h.b16 %v612
    %v3105 = vunpack.c.l.b16 %v613
    %v3106 = vunpack.c.h.b16 %v613
    %v3107 = vunpack.c.l.b16 %v614
    %v3108 = vunpack.c.h.b16 %v614
    %v3109 = vunpack.c.l.b16 %v615
    %v3110 = vunpack.c.h.b16 %v615
    %v3111 = vunpack.c.l.b16 %v616
    %v3112 = vunpack.c.h.b16 %v616
    %v3113 = vunpack.c.l.b16 %v617
    %v3114 = vunpack.c.h.b16 %v617
    %v3115 = vunpack.c.l.b16 %v618
    %v3116 = vunpack.c.h.b16 %v618
    %v3117 = vunpack.c.l.b16 %v619
    %v3118 = vunpack.c.h.b16 %v619
    %v3119 = vunpack.c.l.b16 %v620
    %v3120 = vunpack.c.h.b16 %v620
    %v3121 = vunpack.c.l.b16 %v621
    %v3122 = vunpack.c.h.b16 %v621
    %v3123 = vunpack.c.l.b16 %v622
    %v3124 = vunpack.c.h.b16 %v622
    %v3125 = vunpack.c.l.b16 %v623
    %v3126 = vunpack.c.h.b16 %v623
    %v3127 = vunpack.c.l.b16 %v624
    %v3128 = vunpack.c.h.b16 %v624
    %v3129 = vunpack.c.l.b16 %v625
    %v3130 = vunpack.c.h.b16 %v625
    %v3131 = vunpack.c.l.b16 %v626
    %v3132 = vunpack.c.h.b16 %v626
    %v3133 = vunpack.c.l.b16 %v627
    %v3134 = vunpack.c.h.b16 %v627
    %v3135 = vunpack.c.l.b16 %v628
    %v3136 = vunpack.c.h.b16 %v628
    %v3137 = vunpack.c.l.b16 %v629
    %v3138 = vunpack.c.h.b16 %v629
    %v3139 = vunpack.c.l.b16 %v630
    %v3140 = vunpack.c.h.b16 %v630
    %v3141 = vunpack.c.l.b16 %v631
    %v3142 = vunpack.c.h.b16 %v631
    %v3143 = vunpack.c.l.b16 %v632
    %v3144 = vunpack.c.h.b16 %v632
    %v3145 = vunpack.c.l.b16 %v633
    %v3146 = vunpack.c.h.b16 %v633
    %v3147 = vunpack.c.l.b16 %v634
    %v3148 = vunpack.c.h.b16 %v634
    %v3149 = vunpack.c.l.b16 %v635
    %v3150 = vunpack.c.h.b16 %v635
    %v3151 = vunpack.c.l.b16 %v636
    %v3152 = vunpack.c.h.b16 %v636
    %v3153 = vunpack.c.l.b16 %v637
    %v3154 = vunpack.c.h.b16 %v637
    %v3155 = vunpack.c.l.b16 %v638
    %v3156 = vunpack.c.h.b16 %v638
    %v3157 = vunpack.c.l.b16 %v639
    %v3158 = vunpack.c.h.b16 %v639
    %v3159 = vunpack.c.l.b16 %v640
    %v3160 = vunpack.c.h.b16 %v640
    %v3161 = vunpack.c.l.b16 %v641
    %v3162 = vunpack.c.h.b16 %v641
    %v3163 = vunpack.c.l.b16 %v642
    %v3164 = vunpack.c.h.b16 %v642
    %v3165 = vunpack.c.l.b16 %v643
    %v3166 = vunpack.c.h.b16 %v643
    %v3167 = vunpack.c.l.b16 %v644
    %v3168 = vunpack.c.h.b16 %v644
    %v3169 = vunpack.c.l.b16 %v645
    %v3170 = vunpack.c.h.b16 %v645
    %v3171 = vunpack.c.l.b16 %v646
    %v3172 = vunpack.c.h.b16 %v646
    %v3173 = vunpack.c.l.b16 %v647
    %v3174 = vunpack.c.h.b16 %v647
    %v3175 = vunpack.c.l.b16 %v648
    %v3176 = vunpack.c.h.b16 %v648
    %v3177 = vunpack.c.l.b16 %v649
    %v3178 = vunpack.c.h.b16 %v649
    %v3179 = vunpack.c.l.b16 %v650
    %v3180 = vunpack.c.h.b16 %v650
    %v3181 = vunpack.c.l.b16 %v651
    %v3182 = vunpack.c.h.b16 %v651
    %v3183 = vunpack.c.l.b16 %v652
    %v3184 = vunpack.c.h.b16 %v652
    %v3185 = vunpack.c.l.b16 %v653
    %v3186 = vunpack.c.h.b16 %v653
    %v3187 = vunpack.c.l.b16 %v654
    %v3188 = vunpack.c.h.b16 %v654
    %v3189 = vunpack.c.l.b16 %v655
    %v3190 = vunpack.c.h.b16 %v655
    %v3191 = vunpack.c.l.b16 %v656
    %v3192 = vunpack.c.h.b16 %v656
    %v3193 = vunpack.c.l.b16 %v657
    %v3194 = vunpack.c.h.b16 %v657
    %v3195 = vunpack.c.l.b16 %v658
    %v3196 = vunpack.c.h.b16 %v658
    %v3197 = vunpack.c.l.b16 %v659
    %v3198 = vunpack.c.h.b16 %v659
    %v3199 = vunpack.c.l.b16 %v660
    %v3200 = vunpack.c.h.b16 %v660
    %v3201 = vunpack.c.l.b16 %v661
    %v3202 = vunpack.c.h.b16 %v661
    %v3203 = vunpack.c.l.b16 %v662
    %v3204 = vunpack.c.h.b16 %v662
    %v3205 = vunpack.c.l.b16 %v663
    %v3206 = vunpack.c.h.b16 %v663
    %v3207 = vunpack.c.l.b16 %v664
    %v3208 = vunpack.c.h.b16 %v664
    %v3209 = vunpack.c.l.b16 %v665
    %v3210 = vunpack.c.h.b16 %v665
    %v3211 = vunpack.c.l.b16 %v666
    %v3212 = vunpack.c.h.b16 %v666
    %v3213 = vunpack.c.l.b16 %v667
    %v3214 = vunpack.c.h.b16 %v667
    %v3215 = vunpack.c.l.b16 %v668
    %v3216 = vunpack.c.h.b16 %v668
    %v3217 = vunpack.c.l.b16 %v669
    %v3218 = vunpack.c.h.b16 %v669
    %v3219 = vunpack.c.l.b16 %v670
    %v3220 = vunpack.c.h.b16 %v670
    %v3221 = vunpack.c.l.b16 %v671
    %v3222 = vunpack.c.h.b16 %v671
    %v3223 = vunpack.c.l.b16 %v672
    %v3224 = vunpack.c.h.b16 %v672
    %v3225 = vunpack.c.l.b16 %v673
    %v3226 = vunpack.c.h.b16 %v673
    %v3227 = vunpack.c.l.b16 %v674
    %v3228 = vunpack.c.h.b16 %v674
    %v3229 = vunpack.c.l.b16 %v675
    %v3230 = vunpack.c.h.b16 %v675
    %v3231 = vunpack.c.l.b16 %v676
    %v3232 = vunpack.c.h.b16 %v676
    %v3233 = vunpack.c.l.b16 %v677
    %v3234 = vunpack.c.h.b16 %v677
    %v3235 = vunpack.c.l.b16 %v678
    %v3236 = vunpack.c.h.b16 %v678
    %v3237 = vunpack.c.l.b16 %v679
    %v3238 = vunpack.c.h.b16 %v679
    %v3239 = vunpack.c.l.b16 %v680
    %v3240 = vunpack.c.h.b16 %v680
    %v3241 = vunpack.c.l.b16 %v681
    %v3242 = vunpack.c.h.b16 %v681
    %v3243 = vunpack.c.l.b16 %v682
    %v3244 = vunpack.c.h.b16 %v682
    %v3245 = vunpack.c.l.b16 %v683
    %v3246 = vunpack.c.h.b16 %v683
    %v3247 = vunpack.c.l.b16 %v684
    %v3248 = vunpack.c.h.b16 %v684
    %v3249 = vunpack.c.l.b16 %v685
    %v3250 = vunpack.c.h.b16 %v685
    %v3251 = vunpack.c.l.b16 %v686
    %v3252 = vunpack.c.h.b16 %v686
    %v3253 = vunpack.c.l.b16 %v687
    %v3254 = vunpack.c.h.b16 %v687
    %v3255 = vunpack.c.l.b16 %v688
    %v3256 = vunpack.c.h.b16 %v688
    %v3257 = vunpack.c.l.b16 %v689
    %v3258 = vunpack.c.h.b16 %v689
    %v3259 = vunpack.c.l.b16 %v690
    %v3260 = vunpack.c.h.b16 %v690
    %v3261 = vunpack.c.l.b16 %v691
    %v3262 = vunpack.c.h.b16 %v691
    %v3263 = vunpack.c.l.b16 %v692
    %v3264 = vunpack.c.h.b16 %v692
    %v3265 = vunpack.c.l.b16 %v693
    %v3266 = vunpack.c.h.b16 %v693
    %v3267 = vunpack.c.l.b16 %v694
    %v3268 = vunpack.c.h.b16 %v694
    %v3269 = vunpack.c.l.b16 %v695
    %v3270 = vunpack.c.h.b16 %v695
    %v3271 = vunpack.c.l.b16 %v696
    %v3272 = vunpack.c.h.b16 %v696
    %v3273 = vunpack.c.l.b16 %v697
    %v3274 = vunpack.c.h.b16 %v697
    %v3275 = vunpack.c.l.b16 %v698
    %v3276 = vunpack.c.h.b16 %v698
    %v3277 = vunpack.c.l.b16 %v699
    %v3278 = vunpack.c.h.b16 %v699
    %v3279 = vunpack.c.l.b16 %v700
    %v3280 = vunpack.c.h.b16 %v700
    %v3281 = vunpack.c.l.b16 %v701
    %v3282 = vunpack.c.h.b16 %v701
    %v3283 = vunpack.c.l.b16 %v702
    %v3284 = vunpack.c.h.b16 %v702
    %v3285 = vunpack.c.l.b16 %v703
    %v3286 = vunpack.c.h.b16 %v703
    %v3287 = vunpack.c.l.b16 %v704
    %v3288 = vunpack.c.h.b16 %v704
    %v3289 = vunpack.c.l.b16 %v705
    %v3290 = vunpack.c.h.b16 %v705
    %v3291 = vunpack.c.l.b16 %v706
    %v3292 = vunpack.c.h.b16 %v706
    %v3293 = vunpack.c.l.b16 %v707
    %v3294 = vunpack.c.h.b16 %v707
    %v3295 = vunpack.c.l.b16 %v708
    %v3296 = vunpack.c.h.b16 %v708
    %v3297 = vunpack.c.l.b16 %v709
    %v3298 = vunpack.c.h.b16 %v709
    %v3299 = vunpack.c.l.b16 %v710
    %v3300 = vunpack.c.h.b16 %v710
    %v3301 = vunpack.c.l.b16 %v711
    %v3302 = vunpack.c.h.b16 %v711
    %v3303 = vunpack.c.l.b16 %v712
    %v3304 = vunpack.c.h.b16 %v712
    %v3305 = vunpack.c.l.b16 %v713
    %v3306 = vunpack.c.h.b16 %v713
    %v3307 = vunpack.c.l.b16 %v714
    %v3308 = vunpack.c.h.b16 %v714
    %v3309 = vunpack.c.l.b16 %v715
    %v3310 = vunpack.c.h.b16 %v715
    %v3311 = vunpack.c.l.b16 %v716
    %v3312 = vunpack.c.h.b16 %v716
    %v3313 = vunpack.c.l.b16 %v717
    %v3314 = vunpack.c.h.b16 %v717
    %v3315 = vunpack.c.l.b16 %v718
    %v3316 = vunpack.c.h.b16 %v718
    %v3317 = vunpack.c.l.b16 %v719
    %v3318 = vunpack.c.h.b16 %v719
    %v3319 = vunpack.c.l.b16 %v720
    %v3320 = vunpack.c.h.b16 %v720
    %v3321 = vunpack.c.l.b16 %v721
    %v3322 = vunpack.c.h.b16 %v721
    %v3323 = vunpack.c.l.b16 %v722
    %v3324 = vunpack.c.h.b16 %v722
    %v3325 = vunpack.c.l.b16 %v723
    %v3326 = vunpack.c.h.b16 %v723
    %v3327 = vunpack.c.l.b16 %v724
    %v3328 = vunpack.c.h.b16 %v724
    %v3329 = vunpack.c.l.b16 %v725
    %v3330 = vunpack.c.h.b16 %v725
    %v3331 = vunpack.c.l.b16 %v726
    %v3332 = vunpack.c.h.b16 %v726
    %v3333 = vunpack.c.l.b16 %v727
    %v3334 = vunpack.c.h.b16 %v727
    %v3335 = vunpack.c.l.b16 %v728
    %v3336 = vunpack.c.h.b16 %v728
    %v3337 = vunpack.c.l.b16 %v729
    %v3338 = vunpack.c.h.b16 %v729
    %v3339 = vunpack.c.l.b16 %v730
    %v3340 = vunpack.c.h.b16 %v730
    %v3341 = vunpack.c.l.b16 %v731
    %v3342 = vunpack.c.h.b16 %v731
    %v3343 = vunpack.c.l.b16 %v732
    %v3344 = vunpack.c.h.b16 %v732
    %v3345 = vunpack.c.l.b16 %v733
    %v3346 = vunpack.c.h.b16 %v733
    %v3347 = vunpack.c.l.b16 %v734
    %v3348 = vunpack.c.h.b16 %v734
    %v3349 = vunpack.c.l.b16 %v735
    %v3350 = vunpack.c.h.b16 %v735
    %v3351 = vunpack.c.l.b16 %v736
    %v3352 = vunpack.c.h.b16 %v736
    %v3353 = vunpack.c.l.b16 %v737
    %v3354 = vunpack.c.h.b16 %v737
    %v3355 = vunpack.c.l.b16 %v738
    %v3356 = vunpack.c.h.b16 %v738
    %v3357 = vunpack.c.l.b16 %v739
    %v3358 = vunpack.c.h.b16 %v739
    %v3359 = vunpack.c.l.b16 %v740
    %v3360 = vunpack.c.h.b16 %v740
    %v3361 = vunpack.c.l.b16 %v741
    %v3362 = vunpack.c.h.b16 %v741
    %v3363 = vunpack.c.l.b16 %v742
    %v3364 = vunpack.c.h.b16 %v742
    %v3365 = vunpack.c.l.b16 %v743
    %v3366 = vunpack.c.h.b16 %v743
    %v3367 = vunpack.c.l.b16 %v744
    %v3368 = vunpack.c.h.b16 %v744
    %v3369 = vunpack.c.l.b16 %v745
    %v3370 = vunpack.c.h.b16 %v745
    %v3371 = vunpack.c.l.b16 %v746
    %v3372 = vunpack.c.h.b16 %v746
    %v3373 = vunpack.c.l.b16 %v747
    %v3374 = vunpack.c.h.b16 %v747
    %v3375 = vunpack.c.l.b16 %v748
    %v3376 = vunpack.c.h.b16 %v748
    %v3377 = vunpack.c.l.b16 %v749
    %v3378 = vunpack.c.h.b16 %v749
    %v3379 = vunpack.c.l.b16 %v750
    %v3380 = vunpack.c.h.b16 %v750
    %v3381 = vunpack.c.l.b16 %v751
    %v3382 = vunpack.c.h.b16 %v751
    %v3383 = vunpack.c.l.b16 %v752
    %v3384 = vunpack.c.h.b16 %v752
    %v3385 = vunpack.c.l.b16 %v753
    %v3386 = vunpack.c.h.b16 %v753
    %v3387 = vunpack.c.l.b16 %v754
    %v3388 = vunpack.c.h.b16 %v754
    %v3389 = vunpack.c.l.b16 %v755
    %v3390 = vunpack.c.h.b16 %v755
    %v3391 = vunpack.c.l.b16 %v756
    %v3392 = vunpack.c.h.b16 %v756
    %v3393 = vunpack.c.l.b16 %v757
    %v3394 = vunpack.c.h.b16 %v757
    %v3395 = vunpack.c.l.b16 %v758
    %v3396 = vunpack.c.h.b16 %v758
    %v3397 = vunpack.c.l.b16 %v759
    %v3398 = vunpack.c.h.b16 %v759
    %v3399 = vunpack.c.l.b16 %v760
    %v3400 = vunpack.c.h.b16 %v760
    %v3401 = vunpack.c.l.b16 %v761
    %v3402 = vunpack.c.h.b16 %v761
    %v3403 = vunpack.c.l.b16 %v762
    %v3404 = vunpack.c.h.b16 %v762
    %v3405 = vunpack.c.l.b16 %v763
    %v3406 = vunpack.c.h.b16 %v763
    %v3407 = vunpack.c.l.b16 %v764
    %v3408 = vunpack.c.h.b16 %v764
    %v3409 = vunpack.c.l.b16 %v765
    %v3410 = vunpack.c.h.b16 %v765
    %v3411 = vunpack.c.l.b16 %v766
    %v3412 = vunpack.c.h.b16 %v766
    %v3413 = vunpack.c.l.b16 %v767
    %v3414 = vunpack.c.h.b16 %v767
    %v3415 = vunpack.c.l.b16 %v768
    %v3416 = vunpack.c.h.b16 %v768
    %v3417 = vunpack.c.l.b16 %v769
    %v3418 = vunpack.c.h.b16 %v769
    %v3419 = vunpack.c.l.b16 %v770
    %v3420 = vunpack.c.h.b16 %v770
    %v3421 = vunpack.c.l.b16 %v771
    %v3422 = vunpack.c.h.b16 %v771
    %v3423 = vunpack.c.l.b16 %v772
    %v3424 = vunpack.c.h.b16 %v772
    %v3425 = vunpack.c.l.b16 %v773
    %v3426 = vunpack.c.h.b16 %v773
    %v3427 = vunpack.c.l.b16 %v774
    %v3428 = vunpack.c.h.b16 %v774
    %v3429 = vunpack.c.l.b16 %v775
    %v3430 = vunpack.c.h.b16 %v775
    %v3431 = vunpack.c.l.b16 %v776
    %v3432 = vunpack.c.h.b16 %v776
    %v3433 = vunpack.c.l.b16 %v777
    %v3434 = vunpack.c.h.b16 %v777
    %v3435 = vunpack.c.l.b16 %v778
    %v3436 = vunpack.c.h.b16 %v778
    %v3437 = vunpack.c.l.b16 %v779
    %v3438 = vunpack.c.h.b16 %v779
    %v3439 = vunpack.c.l.b16 %v780
    %v3440 = vunpack.c.h.b16 %v780
    %v3441 = vunpack.c.l.b16 %v781
    %v3442 = vunpack.c.h.b16 %v781
    %v3443 = vunpack.c.l.b16 %v782
    %v3444 = vunpack.c.h.b16 %v782
    %v3445 = vunpack.c.l.b16 %v783
    %v3446 = vunpack.c.h.b16 %v783
    %v3447 = vunpack.c.l.b16 %v784
    %v3448 = vunpack.c.h.b16 %v784
    %v3449 = vunpack.c.l.b16 %v785
    %v3450 = vunpack.c.h.b16 %v785
    %v3451 = vunpack.c.l.b16 %v786
    %v3452 = vunpack.c.h.b16 %v786
    %v3453 = vunpack.c.l.b16 %v787
    %v3454 = vunpack.c.h.b16 %v787
    %v3455 = vunpack.c.l.b16 %v788
    %v3456 = vunpack.c.h.b16 %v788
    %v3457 = vunpack.c.l.b16 %v789
    %v3458 = vunpack.c.h.b16 %v789
    %v3459 = vunpack.c.l.b16 %v790
    %v3460 = vunpack.c.h.b16 %v790
    %v3461 = vunpack.c.l.b16 %v791
    %v3462 = vunpack.c.h.b16 %v791
    %v3463 = vunpack.c.l.b16 %v792
    %v3464 = vunpack.c.h.b16 %v792
    %v3465 = vunpack.c.l.b16 %v793
    %v3466 = vunpack.c.h.b16 %v793
    %v3467 = vunpack.c.l.b16 %v794
    %v3468 = vunpack.c.h.b16 %v794
    %v3469 = vunpack.c.l.b16 %v795
    %v3470 = vunpack.c.h.b16 %v795
    %v3471 = vunpack.c.l.b16 %v796
    %v3472 = vunpack.c.h.b16 %v796
    %v3473 = vunpack.c.l.b16 %v797
    %v3474 = vunpack.c.h.b16 %v797
    %v3475 = vunpack.c.l.b16 %v798
    %v3476 = vunpack.c.h.b16 %v798
    %v3477 = vunpack.c.l.b16 %v799
    %v3478 = vunpack.c.h.b16 %v799
    %v3479 = vunpack.c.l.b16 %v800
    %v3480 = vunpack.c.h.b16 %v800
    %v3481 = vunpack.c.l.b16 %v801
    %v3482 = vunpack.c.h.b16 %v801
    %v3483 = vunpack.c.l.b16 %v802
    %v3484 = vunpack.c.h.b16 %v802
    %v3485 = vunpack.c.l.b16 %v803
    %v3486 = vunpack.c.h.b16 %v803
    %v3487 = vunpack.c.l.b16 %v804
    %v3488 = vunpack.c.h.b16 %v804
    %v3489 = vunpack.c.l.b16 %v805
    %v3490 = vunpack.c.h.b16 %v805
    %v3491 = vunpack.c.l.b16 %v806
    %v3492 = vunpack.c.h.b16 %v806
    %v3493 = vunpack.c.l.b16 %v807
    %v3494 = vunpack.c.h.b16 %v807
    %v3495 = vunpack.c.l.b16 %v808
    %v3496 = vunpack.c.h.b16 %v808
    %v3497 = vunpack.c.l.b16 %v809
    %v3498 = vunpack.c.h.b16 %v809
    %v3499 = vunpack.c.l.b16 %v810
    %v3500 = vunpack.c.h.b16 %v810
    %v3501 = vunpack.c.l.b16 %v811
    %v3502 = vunpack.c.h.b16 %v811
    %v3503 = vunpack.c.l.b16 %v812
    %v3504 = vunpack.c.h.b16 %v812
    %v3505 = vunpack.c.l.b16 %v813
    %v3506 = vunpack.c.h.b16 %v813
    %v3507 = vunpack.c.l.b16 %v814
    %v3508 = vunpack.c.h.b16 %v814
    %v3509 = vunpack.c.l.b16 %v815
    %v3510 = vunpack.c.h.b16 %v815
    %v3511 = vunpack.c.l.b16 %v816
    %v3512 = vunpack.c.h.b16 %v816
    %v3513 = vunpack.c.l.b16 %v817
    %v3514 = vunpack.c.h.b16 %v817
    %v3515 = vunpack.c.l.b16 %v818
    %v3516 = vunpack.c.h.b16 %v818
    %v3517 = vunpack.c.l.b16 %v819
    %v3518 = vunpack.c.h.b16 %v819
    %v3519 = vunpack.c.l.b16 %v820
    %v3520 = vunpack.c.h.b16 %v820
    %v3521 = vunpack.c.l.b16 %v821
    %v3522 = vunpack.c.h.b16 %v821
    %v3523 = vunpack.c.l.b16 %v822
    %v3524 = vunpack.c.h.b16 %v822
    %v3525 = vunpack.c.l.b16 %v823
    %v3526 = vunpack.c.h.b16 %v823
    %v3527 = vunpack.c.l.b16 %v824
    %v3528 = vunpack.c.h.b16 %v824
    %v3529 = vunpack.c.l.b16 %v825
    %v3530 = vunpack.c.h.b16 %v825
    %v3531 = vunpack.c.l.b16 %v826
    %v3532 = vunpack.c.h.b16 %v826
    %v3533 = vunpack.c.l.b16 %v827
    %v3534 = vunpack.c.h.b16 %v827
    %v3535 = vunpack.c.l.b16 %v828
    %v3536 = vunpack.c.h.b16 %v828
    %v3537 = vunpack.c.l.b16 %v829
    %v3538 = vunpack.c.h.b16 %v829
    %v3539 = vunpack.c.l.b16 %v830
    %v3540 = vunpack.c.h.b16 %v830
    %v3541 = vunpack.c.l.b16 %v831
    %v3542 = vunpack.c.h.b16 %v831
    %v3543 = vunpack.c.l.b16 %v832
    %v3544 = vunpack.c.h.b16 %v832
    %v3545 = vunpack.c.l.b16 %v833
    %v3546 = vunpack.c.h.b16 %v833
    %v3547 = vunpack.c.l.b16 %v834
    %v3548 = vunpack.c.h.b16 %v834
    %v3549 = vunpack.c.l.b16 %v835
    %v3550 = vunpack.c.h.b16 %v835
    %v3551 = vunpack.c.l.b16 %v836
    %v3552 = vunpack.c.h.b16 %v836
    %v3553 = vunpack.c.l.b16 %v837
    %v3554 = vunpack.c.h.b16 %v837
    %v3555 = vunpack.c.l.b16 %v838
    %v3556 = vunpack.c.h.b16 %v838
    %v3557 = vunpack.c.l.b16 %v839
    %v3558 = vunpack.c.h.b16 %v839
    %v3559 = vunpack.c.l.b16 %v840
    %v3560 = vunpack.c.h.b16 %v840
    %v3561 = vunpack.c.l.b16 %v841
    %v3562 = vunpack.c.h.b16 %v841
    %v3563 = vunpack.c.l.b16 %v842
    %v3564 = vunpack.c.h.b16 %v842
    %v3565 = vunpack.c.l.b16 %v843
    %v3566 = vunpack.c.h.b16 %v843
    %v3567 = vunpack.c.l.b16 %v844
    %v3568 = vunpack.c.h.b16 %v844
    %v3569 = vunpack.c.l.b16 %v845
    %v3570 = vunpack.c.h.b16 %v845
    %v3571 = vunpack.c.l.b16 %v846
    %v3572 = vunpack.c.h.b16 %v846
    %v3573 = vunpack.c.l.b16 %v847
    %v3574 = vunpack.c.h.b16 %v847
    %v3575 = vunpack.c.l.b16 %v848
    %v3576 = vunpack.c.h.b16 %v848
    %v3577 = vunpack.c.l.b16 %v849
    %v3578 = vunpack.c.h.b16 %v849
    %v3579 = vunpack.c.l.b16 %v850
    %v3580 = vunpack.c.h.b16 %v850
    %v3581 = vunpack.c.l.b16 %v851
    %v3582 = vunpack.c.h.b16 %v851
    %v3583 = vunpack.c.l.b16 %v852
    %v3584 = vunpack.c.h.b16 %v852
    %v3585 = vunpack.c.l.b16 %v853
    %v3586 = vunpack.c.h.b16 %v853
    %v3587 = vunpack.c.l.b16 %v854
    %v3588 = vunpack.c.h.b16 %v854
    %v3589 = vunpack.c.l.b16 %v855
    %v3590 = vunpack.c.h.b16 %v855
    %v3591 = vunpack.c.l.b16 %v856
    %v3592 = vunpack.c.h.b16 %v856
    %v3593 = vunpack.c.l.b16 %v857
    %v3594 = vunpack.c.h.b16 %v857
    %v3595 = vunpack.c.l.b16 %v858
    %v3596 = vunpack.c.h.b16 %v858
    %v3597 = vunpack.c.l.b16 %v859
    %v3598 = vunpack.c.h.b16 %v859
    %v3599 = vunpack.c.l.b16 %v860
    %v3600 = vunpack.c.h.b16 %v860
    %v3601 = vunpack.c.l.b16 %v861
    %v3602 = vunpack.c.h.b16 %v861
    %v3603 = vunpack.c.l.b16 %v862
    %v3604 = vunpack.c.h.b16 %v862
    %v3605 = vunpack.c.l.b16 %v863
    %v3606 = vunpack.c.h.b16 %v863
    %v3607 = vunpack.c.l.b16 %v864
    %v3608 = vunpack.c.h.b16 %v864
    %v3609 = vunpack.c.l.b16 %v865
    %v3610 = vunpack.c.h.b16 %v865
    %v3611 = vunpack.c.l.b16 %v866
    %v3612 = vunpack.c.h.b16 %v866
    %v3613 = vunpack.c.l.b16 %v867
    %v3614 = vunpack.c.h.b16 %v867
    %v3615 = vunpack.c.l.b16 %v868
    %v3616 = vunpack.c.h.b16 %v868
    %v3617 = vunpack.c.l.b16 %v869
    %v3618 = vunpack.c.h.b16 %v869
    %v3619 = vunpack.c.l.b16 %v870
    %v3620 = vunpack.c.h.b16 %v870
    %v3621 = vunpack.c.l.b16 %v871
    %v3622 = vunpack.c.h.b16 %v871
    %v3623 = vunpack.c.l.b16 %v872
    %v3624 = vunpack.c.h.b16 %v872
    %v3625 = vunpack.c.l.b16 %v873
    %v3626 = vunpack.c.h.b16 %v873
    %v3627 = vunpack.c.l.b16 %v874
    %v3628 = vunpack.c.h.b16 %v874
    %v3629 = vunpack.c.l.b16 %v875
    %v3630 = vunpack.c.h.b16 %v875
    %v3631 = vunpack.c.l.b16 %v876
    %v3632 = vunpack.c.h.b16 %v876
    %v3633 = vunpack.c.l.b16 %v877
    %v3634 = vunpack.c.h.b16 %v877
    %v3635 = vunpack.c.l.b16 %v878
    %v3636 = vunpack.c.h.b16 %v878
    %v3637 = vunpack.c.l.b16 %v879
    %v3638 = vunpack.c.h.b16 %v879
    %v3639 = vunpack.c.l.b16 %v880
    %v3640 = vunpack.c.h.b16 %v880
    %v3641 = vunpack.c.l.b16 %v881
    %v3642 = vunpack.c.h.b16 %v881
    %v3643 = vunpack.c.l.b16 %v882
    %v3644 = vunpack.c.h.b16 %v882
    %v3645 = vunpack.c.l.b16 %v883
    %v3646 = vunpack.c.h.b16 %v883
    %v3647 = vunpack.c.l.b16 %v884
    %v3648 = vunpack.c.h.b16 %v884
    %v3649 = vunpack.c.l.b16 %v885
    %v3650 = vunpack.c.h.b16 %v885
    %v3651 = vunpack.c.l.b16 %v886
    %v3652 = vunpack.c.h.b16 %v886
    %v3653 = vunpack.c.l.b16 %v887
    %v3654 = vunpack.c.h.b16 %v887
    %v3655 = vunpack.c.l.b16 %v888
    %v3656 = vunpack.c.h.b16 %v888
    %v3657 = vunpack.c.l.b16 %v889
    %v3658 = vunpack.c.h.b16 %v889
    %v3659 = vunpack.c.l.b16 %v890
    %v3660 = vunpack.c.h.b16 %v890
    %v3661 = vunpack.c.l.b16 %v891
    %v3662 = vunpack.c.h.b16 %v891
    %v3663 = vunpack.c.l.b16 %v892
    %v3664 = vunpack.c.h.b16 %v892
    %v3665 = vunpack.c.l.b16 %v893
    %v3666 = vunpack.c.h.b16 %v893
    %v3667 = vunpack.c.l.b16 %v894
    %v3668 = vunpack.c.h.b16 %v894
    %v3669 = vunpack.c.l.b16 %v895
    %v3670 = vunpack.c.h.b16 %v895
    %v3671 = vunpack.c.l.b16 %v896
    %v3672 = vunpack.c.h.b16 %v896
    %v3673 = vunpack.c.l.b16 %v897
    %v3674 = vunpack.c.h.b16 %v897
    %v3675 = vunpack.c.l.b16 %v898
    %v3676 = vunpack.c.h.b16 %v898
    %v3677 = vunpack.c.l.b16 %v899
    %v3678 = vunpack.c.h.b16 %v899
    %v3679 = vunpack.c.l.b16 %v900
    %v3680 = vunpack.c.h.b16 %v900
    %v3681 = vunpack.c.l.b16 %v901
    %v3682 = vunpack.c.h.b16 %v901
    %v3683 = vunpack.c.l.b16 %v902
    %v3684 = vunpack.c.h.b16 %v902
    %v3685 = vunpack.c.l.b16 %v903
    %v3686 = vunpack.c.h.b16 %v903
    %v3687 = vunpack.c.l.b16 %v904
    %v3688 = vunpack.c.h.b16 %v904
    %v3689 = vunpack.c.l.b16 %v905
    %v3690 = vunpack.c.h.b16 %v905
    %v3691 = vunpack.c.l.b16 %v906
    %v3692 = vunpack.c.h.b16 %v906
    %v3693 = vunpack.c.l.b16 %v907
    %v3694 = vunpack.c.h.b16 %v907
    %v3695 = vunpack.c.l.b16 %v908
    %v3696 = vunpack.c.h.b16 %v908
    %v3697 = vunpack.c.l.b16 %v909
    %v3698 = vunpack.c.h.b16 %v909
    %v3699 = vunpack.c.l.b16 %v910
    %v3700 = vunpack.c.h.b16 %v910
    %v3701 = vunpack.c.l.b16 %v911
    %v3702 = vunpack.c.h.b16 %v911
    %v3703 = vunpack.c.l.b16 %v912
    %v3704 = vunpack.c.h.b16 %v912
    %v3705 = vunpack.c.l.b16 %v913
    %v3706 = vunpack.c.h.b16 %v913
    %v3707 = vunpack.c.l.b16 %v914
    %v3708 = vunpack.c.h.b16 %v914
    %v3709 = vunpack.c.l.b16 %v915
    %v3710 = vunpack.c.h.b16 %v915
    %v3711 = vunpack.c.l.b16 %v916
    %v3712 = vunpack.c.h.b16 %v916
    %v3713 = vunpack.c.l.b16 %v917
    %v3714 = vunpack.c.h.b16 %v917
    %v3715 = vunpack.c.l.b16 %v918
    %v3716 = vunpack.c.h.b16 %v918
    %v3717 = vunpack.c.l.b16 %v919
    %v3718 = vunpack.c.h.b16 %v919
    %v3719 = vunpack.c.l.b16 %v920
    %v3720 = vunpack.c.h.b16 %v920
    %v3721 = vunpack.c.l.b16 %v921
    %v3722 = vunpack.c.h.b16 %v921
    %v3723 = vunpack.c.l.b16 %v922
    %v3724 = vunpack.c.h.b16 %v922
    %v3725 = vunpack.c.l.b16 %v923
    %v3726 = vunpack.c.h.b16 %v923
    %v3727 = vunpack.c.l.b16 %v924
    %v3728 = vunpack.c.h.b16 %v924
    %v3729 = vunpack.c.l.b16 %v925
    %v3730 = vunpack.c.h.b16 %v925
    %v3731 = vunpack.c.l.b16 %v926
    %v3732 = vunpack.c.h.b16 %v926
    %v3733 = vunpack.c.l.b16 %v927
    %v3734 = vunpack.c.h.b16 %v927
    %v3735 = vunpack.c.l.b16 %v928
    %v3736 = vunpack.c.h.b16 %v928
    %v3737 = vunpack.c.l.b16 %v929
    %v3738 = vunpack.c.h.b16 %v929
    %v3739 = vunpack.c.l.b16 %v930
    %v3740 = vunpack.c.h.b16 %v930
    %v3741 = vunpack.c.l.b16 %v931
    %v3742 = vunpack.c.h.b16 %v931
    %v3743 = vunpack.c.l.b16 %v932
    %v3744 = vunpack.c.h.b16 %v932
    %v3745 = vunpack.c.l.b16 %v933
    %v3746 = vunpack.c.h.b16 %v933
    %v3747 = vunpack.c.l.b16 %v934
    %v3748 = vunpack.c.h.b16 %v934
    %v3749 = vunpack.c.l.b16 %v935
    %v3750 = vunpack.c.h.b16 %v935
    %v3751 = vunpack.c.l.b16 %v936
    %v3752 = vunpack.c.h.b16 %v936
    %v3753 = vunpack.c.l.b16 %v937
    %v3754 = vunpack.c.h.b16 %v937
    %v3755 = vunpack.c.l.b16 %v938
    %v3756 = vunpack.c.h.b16 %v938
    %v3757 = vunpack.c.l.b16 %v939
    %v3758 = vunpack.c.h.b16 %v939
    %v3759 = vunpack.c.l.b16 %v940
    %v3760 = vunpack.c.h.b16 %v940
    %v3761 = vunpack.c.l.b16 %v941
    %v3762 = vunpack.c.h.b16 %v941
    %v3763 = vunpack.c.l.b16 %v942
    %v3764 = vunpack.c.h.b16 %v942
    %v3765 = vunpack.c.l.b16 %v943
    %v3766 = vunpack.c.h.b16 %v943
    %v3767 = vunpack.c.l.b16 %v944
    %v3768 = vunpack.c.h.b16 %v944
    %v3769 = vunpack.c.l.b16 %v945
    %v3770 = vunpack.c.h.b16 %v945
    %v3771 = vunpack.c.l.b16 %v946
    %v3772 = vunpack.c.h.b16 %v946
    %v3773 = vunpack.c.l.b16 %v947
    %v3774 = vunpack.c.h.b16 %v947
    %v3775 = vunpack.c.l.b16 %v948
    %v3776 = vunpack.c.h.b16 %v948
    %v3777 = vunpack.c.l.b16 %v949
    %v3778 = vunpack.c.h.b16 %v949
    %v3779 = vunpack.c.l.b16 %v950
    %v3780 = vunpack.c.h.b16 %v950
    %v3781 = vunpack.c.l.b16 %v951
    %v3782 = vunpack.c.h.b16 %v951
    %v3783 = vunpack.c.l.b16 %v952
    %v3784 = vunpack.c.h.b16 %v952
    %v3785 = vunpack.c.l.b16 %v953
    %v3786 = vunpack.c.h.b16 %v953
    %v3787 = vunpack.c.l.b16 %v954
    %v3788 = vunpack.c.h.b16 %v954
    %v3789 = vunpack.c.l.b16 %v955
    %v3790 = vunpack.c.h.b16 %v955
    %v3791 = vunpack.c.l.b16 %v956
    %v3792 = vunpack.c.h.b16 %v956
    %v3793 = vunpack.c.l.b16 %v957
    %v3794 = vunpack.c.h.b16 %v957
    %v3795 = vunpack.c.l.b16 %v958
    %v3796 = vunpack.c.h.b16 %v958
    %v3797 = vunpack.c.l.b16 %v959
    %v3798 = vunpack.c.h.b16 %v959
    %v3799 = vunpack.c.l.b16 %v960
    %v3800 = vunpack.c.h.b16 %v960
    %v3801 = vunpack.c.l.b16 %v961
    %v3802 = vunpack.c.h.b16 %v961
    %v3803 = vunpack.c.l.b16 %v962
    %v3804 = vunpack.c.h.b16 %v962
    %v3805 = vunpack.c.l.b16 %v963
    %v3806 = vunpack.c.h.b16 %v963
    %v3807 = vunpack.c.l.b16 %v964
    %v3808 = vunpack.c.h.b16 %v964
    %v3809 = vunpack.c.l.b16 %v965
    %v3810 = vunpack.c.h.b16 %v965
    %v3811 = vunpack.c.l.b16 %v966
    %v3812 = vunpack.c.h.b16 %v966
    %v3813 = vunpack.c.l.b16 %v967
    %v3814 = vunpack.c.h.b16 %v967
    %v3815 = vunpack.c.l.b16 %v968
    %v3816 = vunpack.c.h.b16 %v968
    %v3817 = vunpack.c.l.b16 %v969
    %v3818 = vunpack.c.h.b16 %v969
    %v3819 = vunpack.c.l.b16 %v970
    %v3820 = vunpack.c.h.b16 %v970
    %v3821 = vunpack.c.l.b16 %v971
    %v3822 = vunpack.c.h.b16 %v971
    %v3823 = vunpack.c.l.b16 %v972
    %v3824 = vunpack.c.h.b16 %v972
    %v3825 = vunpack.c.l.b16 %v973
    %v3826 = vunpack.c.h.b16 %v973
    %v3827 = vunpack.c.l.b16 %v974
    %v3828 = vunpack.c.h.b16 %v974
    %v3829 = vunpack.c.l.b16 %v975
    %v3830 = vunpack.c.h.b16 %v975
    %v3831 = vunpack.c.l.b16 %v976
    %v3832 = vunpack.c.h.b16 %v976
    %v3833 = vunpack.c.l.b16 %v977
    %v3834 = vunpack.c.h.b16 %v977
    %v3835 = vunpack.c.l.b16 %v978
    %v3836 = vunpack.c.h.b16 %v978
    %v3837 = vunpack.c.l.b16 %v979
    %v3838 = vunpack.c.h.b16 %v979
    %v3839 = vunpack.c.l.b16 %v980
    %v3840 = vunpack.c.h.b16 %v980
    %v3841 = vunpack.c.l.b16 %v981
    %v3842 = vunpack.c.h.b16 %v981
    %v3843 = vunpack.c.l.b16 %v982
    %v3844 = vunpack.c.h.b16 %v982
    %v3845 = vunpack.c.l.b16 %v983
    %v3846 = vunpack.c.h.b16 %v983
    %v3847 = vunpack.c.l.b16 %v984
    %v3848 = vunpack.c.h.b16 %v984
    %v3849 = vunpack.c.l.b16 %v985
    %v3850 = vunpack.c.h.b16 %v985
    %v3851 = vunpack.c.l.b16 %v986
    %v3852 = vunpack.c.h.b16 %v986
    %v3853 = vunpack.c.l.b16 %v987
    %v3854 = vunpack.c.h.b16 %v987
    %v3855 = vunpack.c.l.b16 %v988
    %v3856 = vunpack.c.h.b16 %v988
    %v3857 = vunpack.c.l.b16 %v989
    %v3858 = vunpack.c.h.b16 %v989
    %v3859 = vunpack.c.l.b16 %v990
    %v3860 = vunpack.c.h.b16 %v990
    %v3861 = vunpack.c.l.b16 %v991
    %v3862 = vunpack.c.h.b16 %v991
    %v3863 = vunpack.c.l.b16 %v992
    %v3864 = vunpack.c.h.b16 %v992
    %v3865 = vunpack.c.l.b16 %v993
    %v3866 = vunpack.c.h.b16 %v993
    %v3867 = vunpack.c.l.b16 %v994
    %v3868 = vunpack.c.h.b16 %v994
    %v3869 = vunpack.c.l.b16 %v995
    %v3870 = vunpack.c.h.b16 %v995
    %v3871 = vunpack.c.l.b16 %v996
    %v3872 = vunpack.c.h.b16 %v996
    %v3873 = vunpack.c.l.b16 %v997
    %v3874 = vunpack.c.h.b16 %v997
    %v3875 = vunpack.c.l.b16 %v998
    %v3876 = vunpack.c.h.b16 %v998
    %v3877 = vunpack.c.l.b16 %v999
    %v3878 = vunpack.c.h.b16 %v999
    %v3879 = vunpack.c.l.b16 %v1000
    %v3880 = vunpack.c.h.b16 %v1000
    %v3881 = vunpack.c.l.b16 %v1001
    %v3882 = vunpack.c.h.b16 %v1001
    %v3883 = vunpack.c.l.b16 %v1002
    %v3884 = vunpack.c.h.b16 %v1002
    %v3885 = vunpack.c.l.b16 %v1003
    %v3886 = vunpack.c.h.b16 %v1003
    %v3887 = vunpack.c.l.b16 %v1004
    %v3888 = vunpack.c.h.b16 %v1004
    %v3889 = vunpack.c.l.b16 %v1005
    %v3890 = vunpack.c.h.b16 %v1005
    %v3891 = vunpack.c.l.b16 %v1006
    %v3892 = vunpack.c.h.b16 %v1006
    %v3893 = vunpack.c.l.b16 %v1007
    %v3894 = vunpack.c.h.b16 %v1007
    %v3895 = vunpack.c.l.b16 %v1008
    %v3896 = vunpack.c.h.b16 %v1008
    %v3897 = vunpack.c.l.b16 %v1009
    %v3898 = vunpack.c.h.b16 %v1009
    %v3899 = vunpack.c.l.b16 %v1010
    %v3900 = vunpack.c.h.b16 %v1010
    %v3901 = vunpack.c.l.b16 %v1011
    %v3902 = vunpack.c.h.b16 %v1011
    %v3903 = vunpack.c.l.b16 %v1012
    %v3904 = vunpack.c.h.b16 %v1012
    %v3905 = vunpack.c.l.b16 %v1013
    %v3906 = vunpack.c.h.b16 %v1013
    %v3907 = vunpack.c.l.b16 %v1014
    %v3908 = vunpack.c.h.b16 %v1014
    %v3909 = vunpack.c.l.b16 %v1015
    %v3910 = vunpack.c.h.b16 %v1015
    %v3911 = vunpack.c.l.b16 %v1016
    %v3912 = vunpack.c.h.b16 %v1016
    %v3913 = vunpack.c.l.b16 %v1017
    %v3914 = vunpack.c.h.b16 %v1017
    %v3915 = vunpack.c.l.b16 %v1018
    %v3916 = vunpack.c.h.b16 %v1018
    %v3917 = vunpack.c.l.b16 %v1019
    %v3918 = vunpack.c.h.b16 %v1019
    %v3919 = vunpack.c.l.b16 %v1020
    %v3920 = vunpack.c.h.b16 %v1020
    %v3921 = vunpack.c.l.b16 %v1021
    %v3922 = vunpack.c.h.b16 %v1021
    %v3923 = vunpack.c.l.b16 %v1022
    %v3924 = vunpack.c.h.b16 %v1022
    %v3925 = vunpack.c.l.b16 %v1023
    %v3926 = vunpack.c.h.b16 %v1023
    %v3927 = vunpack.c.l.b16 %v1024
    %v3928 = vunpack.c.h.b16 %v1024
    %v3929 = vunpack.c.l.b16 %v1025
    %v3930 = vunpack.c.h.b16 %v1025
    %v3931 = vunpack.c.l.b16 %v1026
    %v3932 = vunpack.c.h.b16 %v1026
    %v3933 = vunpack.c.l.b16 %v1027
    %v3934 = vunpack.c.h.b16 %v1027
    %v3935 = vunpack.c.l.b16 %v1028
    %v3936 = vunpack.c.h.b16 %v1028
    %v3937 = vunpack.c.l.b16 %v1029
    %v3938 = vunpack.c.h.b16 %v1029
    %v3939 = vunpack.c.l.b16 %v1030
    %v3940 = vunpack.c.h.b16 %v1030
    %v3941 = vunpack.c.l.b16 %v1031
    %v3942 = vunpack.c.h.b16 %v1031
    %v3943 = vunpack.c.l.b16 %v1032
    %v3944 = vunpack.c.h.b16 %v1032
    %v3945 = vunpack.c.l.b16 %v1033
    %v3946 = vunpack.c.h.b16 %v1033
    %v3947 = vunpack.c.l.b16 %v1034
    %v3948 = vunpack.c.h.b16 %v1034
    %v3949 = vunpack.c.l.b16 %v1035
    %v3950 = vunpack.c.h.b16 %v1035
    %v3951 = vunpack.c.l.b16 %v1036
    %v3952 = vunpack.c.h.b16 %v1036
    %v3953 = vunpack.c.l.b16 %v1037
    %v3954 = vunpack.c.h.b16 %v1037
    %v3955 = vunpack.c.l.b16 %v1038
    %v3956 = vunpack.c.h.b16 %v1038
    %v3957 = vunpack.c.l.b16 %v1039
    %v3958 = vunpack.c.h.b16 %v1039
    %v3959 = vunpack.c.l.b16 %v1040
    %v3960 = vunpack.c.h.b16 %v1040
    %v3961 = vunpack.c.l.b16 %v1041
    %v3962 = vunpack.c.h.b16 %v1041
    %v3963 = vunpack.c.l.b16 %v1042
    %v3964 = vunpack.c.h.b16 %v1042
    %v3965 = vunpack.c.l.b16 %v1043
    %v3966 = vunpack.c.h.b16 %v1043
    %v3967 = vunpack.c.l.b16 %v1044
    %v3968 = vunpack.c.h.b16 %v1044
    %v3969 = vunpack.c.l.b16 %v1045
    %v3970 = vunpack.c.h.b16 %v1045
    %v3971 = vunpack.c.l.b16 %v1046
    %v3972 = vunpack.c.h.b16 %v1046
    %v3973 = vunpack.c.l.b16 %v1047
    %v3974 = vunpack.c.h.b16 %v1047
    %v3975 = vunpack.c.l.b16 %v1048
    %v3976 = vunpack.c.h.b16 %v1048
    %v3977 = vunpack.c.l.b16 %v1049
    %v3978 = vunpack.c.h.b16 %v1049
    %v3979 = vunpack.c.l.b16 %v1050
    %v3980 = vunpack.c.h.b16 %v1050
    %v3981 = vunpack.c.l.b16 %v1051
    %v3982 = vunpack.c.h.b16 %v1051
    %v3983 = vunpack.c.l.b16 %v1052
    %v3984 = vunpack.c.h.b16 %v1052
    %v3985 = vunpack.c.l.b16 %v1053
    %v3986 = vunpack.c.h.b16 %v1053
    %v3987 = vunpack.c.l.b16 %v1054
    %v3988 = vunpack.c.h.b16 %v1054
    %v3989 = vunpack.c.l.b16 %v1055
    %v3990 = vunpack.c.h.b16 %v1055
    %v3991 = vunpack.c.l.b16 %v1056
    %v3992 = vunpack.c.h.b16 %v1056
    %v3993 = vunpack.c.l.b16 %v1057
    %v3994 = vunpack.c.h.b16 %v1057
    %v3995 = vunpack.c.l.b16 %v1058
    %v3996 = vunpack.c.h.b16 %v1058
    %v3997 = vunpack.c.l.b16 %v1059
    %v3998 = vunpack.c.h.b16 %v1059
    %v3999 = vunpack.c.l.b16 %v1060
    %v4000 = vunpack.c.h.b16 %v1060
    %v4001 = vunpack.c.l.b16 %v1061
    %v4002 = vunpack.c.h.b16 %v1061
    %v4003 = vunpack.c.l.b16 %v1062
    %v4004 = vunpack.c.h.b16 %v1062
    %v4005 = vunpack.c.l.b16 %v1063
    %v4006 = vunpack.c.h.b16 %v1063
    %v4007 = vunpack.c.l.b16 %v1064
    %v4008 = vunpack.c.h.b16 %v1064
    %v4009 = vunpack.c.l.b16 %v1065
    %v4010 = vunpack.c.h.b16 %v1065
    %v4011 = vunpack.c.l.b16 %v1066
    %v4012 = vunpack.c.h.b16 %v1066
    %v4013 = vunpack.c.l.b16 %v1067
    %v4014 = vunpack.c.h.b16 %v1067
    %v4015 = vunpack.c.l.b16 %v1068
    %v4016 = vunpack.c.h.b16 %v1068
    %v4017 = vunpack.c.l.b16 %v1069
    %v4018 = vunpack.c.h.b16 %v1069
    %v4019 = vunpack.c.l.b16 %v1070
    %v4020 = vunpack.c.h.b16 %v1070
    %v4021 = vunpack.c.l.b16 %v1071
    %v4022 = vunpack.c.h.b16 %v1071
    %v4023 = vunpack.c.l.b16 %v1072
    %v4024 = vunpack.c.h.b16 %v1072
    %v4025 = vunpack.c.l.b16 %v1073
    %v4026 = vunpack.c.h.b16 %v1073
    %v4027 = vunpack.c.l.b16 %v1074
    %v4028 = vunpack.c.h.b16 %v1074
    %v4029 = vunpack.c.l.b16 %v1075
    %v4030 = vunpack.c.h.b16 %v1075
    %v4031 = vunpack.c.l.b16 %v1076
    %v4032 = vunpack.c.h.b16 %v1076
    %v4033 = vunpack.c.l.b16 %v1077
    %v4034 = vunpack.c.h.b16 %v1077
    %v4035 = vunpack.c.l.b16 %v1078
    %v4036 = vunpack.c.h.b16 %v1078
    %v4037 = vunpack.c.l.b16 %v1079
    %v4038 = vunpack.c.h.b16 %v1079
    %v4039 = vunpack.c.l.b16 %v1080
    %v4040 = vunpack.c.h.b16 %v1080
    %v4041 = vunpack.c.l.b16 %v1081
    %v4042 = vunpack.c.h.b16 %v1081
    %v4043 = vunpack.c.l.b16 %v1082
    %v4044 = vunpack.c.h.b16 %v1082
    %v4045 = vunpack.c.l.b16 %v1083
    %v4046 = vunpack.c.h.b16 %v1083
    %v4047 = vunpack.c.l.b16 %v1084
    %v4048 = vunpack.c.h.b16 %v1084
    %v4049 = vunpack.c.l.b16 %v1085
    %v4050 = vunpack.c.h.b16 %v1085
    %v4051 = vunpack.c.l.b16 %v1086
    %v4052 = vunpack.c.h.b16 %v1086
    %v4053 = vunpack.c.l.b16 %v1087
    %v4054 = vunpack.c.h.b16 %v1087
    %v4055 = vunpack.c.l.b16 %v1088
    %v4056 = vunpack.c.h.b16 %v1088
    %v4057 = vunpack.c.l.b16 %v1089
    %v4058 = vunpack.c.h.b16 %v1089
    %v4059 = vunpack.c.l.b16 %v1090
    %v4060 = vunpack.c.h.b16 %v1090
    %v4061 = vunpack.c.l.b16 %v1091
    %v4062 = vunpack.c.h.b16 %v1091
    %v4063 = vunpack.c.l.b16 %v1092
    %v4064 = vunpack.c.h.b16 %v1092
    %v4065 = vunpack.c.l.b16 %v1093
    %v4066 = vunpack.c.h.b16 %v1093
    %v4067 = vunpack.c.l.b16 %v1094
    %v4068 = vunpack.c.h.b16 %v1094
    %v4069 = vunpack.c.l.b16 %v1095
    %v4070 = vunpack.c.h.b16 %v1095
    %v4071 = vunpack.c.l.b16 %v1096
    %v4072 = vunpack.c.h.b16 %v1096
    %v4073 = vunpack.c.l.b16 %v1097
    %v4074 = vunpack.c.h.b16 %v1097
    %v4075 = vunpack.c.l.b16 %v1098
    %v4076 = vunpack.c.h.b16 %v1098
    %v4077 = vunpack.c.l.b16 %v1099
    %v4078 = vunpack.c.h.b16 %v1099
    %v4079 = vunpack.c.l.b16 %v1100
    %v4080 = vunpack.c.h.b16 %v1100
    %v4081 = vunpack.c.l.b16 %v1101
    %v4082 = vunpack.c.h.b16 %v1101
    %v4083 = vunpack.c.l.b16 %v1102
    %v4084 = vunpack.c.h.b16 %v1102
    %v4085 = vunpack.c.l.b16 %v1103
    %v4086 = vunpack.c.h.b16 %v1103
    %v4087 = vunpack.c.l.b16 %v1104
    %v4088 = vunpack.c.h.b16 %v1104
    %v4089 = vunpack.c.l.b16 %v1105
    %v4090 = vunpack.c.h.b16 %v1105
    %v4091 = vunpack.c.l.b16 %v1106
    %v4092 = vunpack.c.h.b16 %v1106
    %v4093 = vunpack.c.l.b16 %v1107
    %v4094 = vunpack.c.h.b16 %v1107
    %v4095 = vunpack.c.l.b16 %v1108
    %v4096 = vunpack.c.h.b16 %v1108
    %v4097 = vunpack.c.l.b16 %v1109
    %v4098 = vunpack.c.h.b16 %v1109
    %v4099 = vunpack.c.l.b16 %v1110
    %v4100 = vunpack.c.h.b16 %v1110
    %v4101 = vunpack.c.l.b16 %v1111
    %v4102 = vunpack.c.h.b16 %v1111
    %v4103 = vunpack.c.l.b16 %v1112
    %v4104 = vunpack.c.h.b16 %v1112
    %v4105 = vunpack.c.l.b16 %v1113
    %v4106 = vunpack.c.h.b16 %v1113
    %v4107 = vunpack.c.l.b16 %v1114
    %v4108 = vunpack.c.h.b16 %v1114
    %v4109 = vunpack.c.l.b16 %v1115
    %v4110 = vunpack.c.h.b16 %v1115
    %v4111 = vunpack.c.l.b16 %v1116
    %v4112 = vunpack.c.h.b16 %v1116
    %v4113 = vunpack.c.l.b16 %v1117
    %v4114 = vunpack.c.h.b16 %v1117
    %v4115 = vunpack.c.l.b16 %v1118
    %v4116 = vunpack.c.h.b16 %v1118
    %v4117 = vunpack.c.l.b16 %v1119
    %v4118 = vunpack.c.h.b16 %v1119
    %v4119 = vunpack.c.l.b16 %v1120
    %v4120 = vunpack.c.h.b16 %v1120
    %v4121 = vunpack.c.l.b16 %v1121
    %v4122 = vunpack.c.h.b16 %v1121
    %v4123 = vunpack.c.l.b16 %v1122
    %v4124 = vunpack.c.h.b16 %v1122
    %v4125 = vunpack.c.l.b16 %v1123
    %v4126 = vunpack.c.h.b16 %v1123
    %v4127 = vunpack.c.l.b16 %v1124
    %v4128 = vunpack.c.h.b16 %v1124
    %v4129 = vunpack.c.l.b16 %v1125
    %v4130 = vunpack.c.h.b16 %v1125
    %v4131 = vunpack.c.l.b16 %v1126
    %v4132 = vunpack.c.h.b16 %v1126
    %v4133 = vunpack.c.l.b16 %v1127
    %v4134 = vunpack.c.h.b16 %v1127
    %v4135 = vunpack.c.l.b16 %v1128
    %v4136 = vunpack.c.h.b16 %v1128
    %v4137 = vunpack.c.l.b16 %v1129
    %v4138 = vunpack.c.h.b16 %v1129
    %v4139 = vunpack.c.l.b16 %v1130
    %v4140 = vunpack.c.h.b16 %v1130
    %v4141 = vunpack.c.l.b16 %v1131
    %v4142 = vunpack.c.h.b16 %v1131
    %v4143 = vunpack.c.l.b16 %v1132
    %v4144 = vunpack.c.h.b16 %v1132
    %v4145 = vunpack.c.l.b16 %v1133
    %v4146 = vunpack.c.h.b16 %v1133
    %v4147 = vunpack.c.l.b16 %v1134
    %v4148 = vunpack.c.h.b16 %v1134
    %v4149 = vunpack.c.l.b16 %v1135
    %v4150 = vunpack.c.h.b16 %v1135
    %v4151 = vunpack.c.l.b16 %v1136
    %v4152 = vunpack.c.h.b16 %v1136
    %v4153 = vunpack.c.l.b16 %v1137
    %v4154 = vunpack.c.h.b16 %v1137
    %v4155 = vunpack.c.l.b16 %v1138
    %v4156 = vunpack.c.h.b16 %v1138
    %v4157 = vunpack.c.l.b16 %v1139
    %v4158 = vunpack.c.h.b16 %v1139
    %v4159 = vunpack.c.l.b16 %v1140
    %v4160 = vunpack.c.h.b16 %v1140
    %v4161 = vunpack.c.l.b16 %v1141
    %v4162 = vunpack.c.h.b16 %v1141
    %v4163 = vunpack.c.l.b16 %v1142
    %v4164 = vunpack.c.h.b16 %v1142
    %v4165 = vunpack.c.l.b16 %v1143
    %v4166 = vunpack.c.h.b16 %v1143
    %v4167 = vunpack.c.l.b16 %v1144
    %v4168 = vunpack.c.h.b16 %v1144
    %v4169 = vunpack.c.l.b16 %v1145
    %v4170 = vunpack.c.h.b16 %v1145
    %v4171 = vunpack.c.l.b16 %v1146
    %v4172 = vunpack.c.h.b16 %v1146
    %v4173 = vunpack.c.l.b16 %v1147
    %v4174 = vunpack.c.h.b16 %v1147
    %v4175 = vunpack.c.l.b16 %v1148
    %v4176 = vunpack.c.h.b16 %v1148
    %v4177 = vunpack.c.l.b16 %v1149
    %v4178 = vunpack.c.h.b16 %v1149
    %v4179 = vunpack.c.l.b16 %v1150
    %v4180 = vunpack.c.h.b16 %v1150
    %v4181 = vunpack.c.l.b16 %v1151
    %v4182 = vunpack.c.h.b16 %v1151
    %v4183 = vunpack.c.l.b16 %v1152
    %v4184 = vunpack.c.h.b16 %v1152
    %v4185 = vunpack.c.l.b16 %v1153
    %v4186 = vunpack.c.h.b16 %v1153
    %v4187 = vunpack.c.l.b16 %v1154
    %v4188 = vunpack.c.h.b16 %v1154
    %v4189 = vunpack.c.l.b16 %v1155
    %v4190 = vunpack.c.h.b16 %v1155
    %v4191 = vunpack.c.l.b16 %v1156
    %v4192 = vunpack.c.h.b16 %v1156
    %v4193 = vunpack.c.l.b16 %v1157
    %v4194 = vunpack.c.h.b16 %v1157
    %v4195 = vunpack.c.l.b16 %v1158
    %v4196 = vunpack.c.h.b16 %v1158
    %v4197 = vunpack.c.l.b16 %v1159
    %v4198 = vunpack.c.h.b16 %v1159
    %v4199 = vunpack.c.l.b16 %v1160
    %v4200 = vunpack.c.h.b16 %v1160
    %v4201 = vunpack.c.l.b16 %v1161
    %v4202 = vunpack.c.h.b16 %v1161
    %v4203 = vunpack.c.l.b16 %v1162
    %v4204 = vunpack.c.h.b16 %v1162
    %v4205 = vunpack.c.l.b16 %v1163
    %v4206 = vunpack.c.h.b16 %v1163
    %v4207 = vunpack.c.l.b16 %v1164
    %v4208 = vunpack.c.h.b16 %v1164
    %v4209 = vunpack.c.l.b16 %v1165
    %v4210 = vunpack.c.h.b16 %v1165
    %v4211 = vunpack.c.l.b16 %v1166
    %v4212 = vunpack.c.h.b16 %v1166
    %v4213 = vunpack.c.l.b16 %v1167
    %v4214 = vunpack.c.h.b16 %v1167
    %v4215 = vunpack.c.l.b16 %v1168
    %v4216 = vunpack.c.h.b16 %v1168
    %v4217 = vunpack.c.l.b16 %v1169
    %v4218 = vunpack.c.h.b16 %v1169
    %v4219 = vunpack.c.l.b16 %v1170
    %v4220 = vunpack.c.h.b16 %v1170
    %v4221 = vunpack.c.l.b16 %v1171
    %v4222 = vunpack.c.h.b16 %v1171
    %v4223 = vunpack.c.l.b16 %v1172
    %v4224 = vunpack.c.h.b16 %v1172
    %v4225 = vunpack.c.l.b16 %v1173
    %v4226 = vunpack.c.h.b16 %v1173
    %v4227 = vunpack.c.l.b16 %v1174
    %v4228 = vunpack.c.h.b16 %v1174
    %v4229 = vunpack.c.l.b16 %v1175
    %v4230 = vunpack.c.h.b16 %v1175
    %v4231 = vunpack.c.l.b16 %v1176
    %v4232 = vunpack.c.h.b16 %v1176
    %v4233 = vunpack.c.l.b16 %v1177
    %v4234 = vunpack.c.h.b16 %v1177
    %v4235 = vunpack.c.l.b16 %v1178
    %v4236 = vunpack.c.h.b16 %v1178
    %v4237 = vunpack.c.l.b16 %v1179
    %v4238 = vunpack.c.h.b16 %v1179
    %v4239 = vunpack.c.l.b16 %v1180
    %v4240 = vunpack.c.h.b16 %v1180
    %v4241 = vunpack.c.l.b16 %v1181
    %v4242 = vunpack.c.h.b16 %v1181
    %v4243 = vunpack.c.l.b16 %v1182
    %v4244 = vunpack.c.h.b16 %v1182
    %v4245 = vunpack.c.l.b16 %v1183
    %v4246 = vunpack.c.h.b16 %v1183
    %v4247 = vunpack.c.l.b16 %v1184
    %v4248 = vunpack.c.h.b16 %v1184
    %v4249 = vunpack.c.l.b16 %v1185
    %v4250 = vunpack.c.h.b16 %v1185
    %v4251 = vunpack.c.l.b16 %v1186
    %v4252 = vunpack.c.h.b16 %v1186
    %v4253 = vunpack.c.l.b16 %v1187
    %v4254 = vunpack.c.h.b16 %v1187
    %v4255 = vunpack.c.l.b16 %v1188
    %v4256 = vunpack.c.h.b16 %v1188
    %v4257 = vunpack.c.l.b16 %v1189
    %v4258 = vunpack.c.h.b16 %v1189
    %v4259 = vunpack.c.l.b16 %v1190
    %v4260 = vunpack.c.h.b16 %v1190
    %v4261 = vunpack.c.l.b16 %v1191
    %v4262 = vunpack.c.h.b16 %v1191
    %v4263 = vunpack.c.l.b16 %v1192
    %v4264 = vunpack.c.h.b16 %v1192
    %v4265 = vunpack.c.l.b16 %v1193
    %v4266 = vunpack.c.h.b16 %v1193
    %v4267 = vunpack.c.l.b16 %v1194
    %v4268 = vunpack.c.h.b16 %v1194
    %v4269 = vunpack.c.l.b16 %v1195
    %v4270 = vunpack.c.h.b16 %v1195
    %v4271 = vunpack.c.l.b16 %v1196
    %v4272 = vunpack.c.h.b16 %v1196
    %v4273 = vunpack.c.l.b16 %v1197
    %v4274 = vunpack.c.h.b16 %v1197
    %v4275 = vunpack.c.l.b16 %v1198
    %v4276 = vunpack.c.h.b16 %v1198
    %v4277 = vunpack.c.l.b16 %v1199
    %v4278 = vunpack.c.h.b16 %v1199
    %v4279 = vunpack.c.l.b16 %v1200
    %v4280 = vunpack.c.h.b16 %v1200
    %v4281 = vunpack.c.l.b16 %v1201
    %v4282 = vunpack.c.h.b16 %v1201
    %v4283 = vunpack.c.l.b16 %v1202
    %v4284 = vunpack.c.h.b16 %v1202
    %v4285 = vunpack.c.l.b16 %v1203
    %v4286 = vunpack.c.h.b16 %v1203
    %v4287 = vunpack.c.l.b16 %v1204
    %v4288 = vunpack.c.h.b16 %v1204
    %v4289 = vunpack.c.l.b16 %v1205
    %v4290 = vunpack.c.h.b16 %v1205
    %v4291 = vunpack.c.l.b16 %v1206
    %v4292 = vunpack.c.h.b16 %v1206
    %v4293 = vunpack.c.l.b16 %v1207
    %v4294 = vunpack.c.h.b16 %v1207
    %v4295 = vunpack.c.l.b16 %v1208
    %v4296 = vunpack.c.h.b16 %v1208
    %v4297 = vunpack.c.l.b16 %v1209
    %v4298 = vunpack.c.h.b16 %v1209
    %v4299 = vunpack.c.l.b16 %v1210
    %v4300 = vunpack.c.h.b16 %v1210
    %v4301 = vunpack.c.l.b16 %v1211
    %v4302 = vunpack.c.h.b16 %v1211
    %v4303 = vunpack.c.l.b16 %v1212
    %v4304 = vunpack.c.h.b16 %v1212
    %v4305 = vunpack.c.l.b16 %v1213
    %v4306 = vunpack.c.h.b16 %v1213
    %v4307 = vunpack.c.l.b16 %v1214
    %v4308 = vunpack.c.h.b16 %v1214
    %v4309 = vunpack.c.l.b16 %v1215
    %v4310 = vunpack.c.h.b16 %v1215
    %v4311 = vunpack.c.l.b16 %v1216
    %v4312 = vunpack.c.h.b16 %v1216
    %v4313 = vunpack.c.l.b16 %v1217
    %v4314 = vunpack.c.h.b16 %v1217
    %v4315 = vunpack.c.l.b16 %v1218
    %v4316 = vunpack.c.h.b16 %v1218
    %v4317 = vunpack.c.l.b16 %v1219
    %v4318 = vunpack.c.h.b16 %v1219
    %v4319 = vunpack.c.l.b16 %v1220
    %v4320 = vunpack.c.h.b16 %v1220
    %v4321 = vunpack.c.l.b16 %v1221
    %v4322 = vunpack.c.h.b16 %v1221
    %v4323 = vunpack.c.l.b16 %v1222
    %v4324 = vunpack.c.h.b16 %v1222
    %v4325 = vunpack.c.l.b16 %v1223
    %v4326 = vunpack.c.h.b16 %v1223
    %v4327 = vunpack.c.l.b16 %v1224
    %v4328 = vunpack.c.h.b16 %v1224
    %v4329 = vunpack.c.l.b16 %v1225
    %v4330 = vunpack.c.h.b16 %v1225
    %v4331 = vunpack.c.l.b16 %v1226
    %v4332 = vunpack.c.h.b16 %v1226
    %v4333 = vunpack.c.l.b16 %v1227
    %v4334 = vunpack.c.h.b16 %v1227
    %v4335 = vunpack.c.l.b16 %v1228
    %v4336 = vunpack.c.h.b16 %v1228
    %v4337 = vunpack.c.l.b16 %v1229
    %v4338 = vunpack.c.h.b16 %v1229
    %v4339 = vunpack.c.l.b16 %v1230
    %v4340 = vunpack.c.h.b16 %v1230
    %v4341 = vunpack.c.l.b16 %v1231
    %v4342 = vunpack.c.h.b16 %v1231
    %v4343 = vunpack.c.l.b16 %v1232
    %v4344 = vunpack.c.h.b16 %v1232
    %v4345 = vunpack.c.l.b16 %v1233
    %v4346 = vunpack.c.h.b16 %v1233
    %v4347 = vunpack.c.l.b16 %v1234
    %v4348 = vunpack.c.h.b16 %v1234
    %v4349 = vpack.c.b16 %v2309, %v2301
    %v4350 = vpack.c.b16 %v2310, %v2302
    %v4351 = vpack.c.b16 %v2311, %v2303
    %v4352 = vpack.c.b16 %v2312, %v2304
    %v4353 = vpack.c.b16 %v2313, %v2305
    %v4354 = vpack.c.b16 %v2314, %v2306
    %v4355 = vpack.c.b16 %v2315, %v2307
    %v4356 = vpack.c.b16 %v2316, %v2308
    %v4357 = vpack.c.b16 %v2325, %v2317
    %v4358 = vpack.c.b16 %v2326, %v2318
    %v4359 = vpack.c.b16 %v2327, %v2319
    %v4360 = vpack.c.b16 %v2328, %v2320
    %v4361 = vpack.c.b16 %v2329, %v2321
    %v4362 = vpack.c.b16 %v2330, %v2322
    %v4363 = vpack.c.b16 %v2331, %v2323
    %v4364 = vpack.c.b16 %v2332, %v2324
    %v4365 = vpack.c.b16 %v2341, %v2333
    %v4366 = vpack.c.b16 %v2342, %v2334
    %v4367 = vpack.c.b16 %v2343, %v2335
    %v4368 = vpack.c.b16 %v2344, %v2336
    %v4369 = vpack.c.b16 %v2345, %v2337
    %v4370 = vpack.c.b16 %v2346, %v2338
    %v4371 = vpack.c.b16 %v2347, %v2339
    %v4372 = vpack.c.b16 %v2348, %v2340
    %v4373 = vpack.c.b16 %v2357, %v2349
    %v4374 = vpack.c.b16 %v2358, %v2350
    %v4375 = vpack.c.b16 %v2359, %v2351
    %v4376 = vpack.c.b16 %v2360, %v2352
    %v4377 = vpack.c.b16 %v2361, %v2353
    %v4378 = vpack.c.b16 %v2362, %v2354
    %v4379 = vpack.c.b16 %v2363, %v2355
    %v4380 = vpack.c.b16 %v2364, %v2356
    %v4381 = vpack.c.b16 %v2373, %v2365
    %v4382 = vpack.c.b16 %v2374, %v2366
    %v4383 = vpack.c.b16 %v2375, %v2367
    %v4384 = vpack.c.b16 %v2376, %v2368
    %v4385 = vpack.c.b16 %v2377, %v2369
    %v4386 = vpack.c.b16 %v2378, %v2370
    %v4387 = vpack.c.b16 %v2379, %v2371
    %v4388 = vpack.c.b16 %v2380, %v2372
    %v4389 = vpack.c.b16 %v2389, %v2381
    %v4390 = vpack.c.b16 %v2390, %v2382
    %v4391 = vpack.c.b16 %v2391, %v2383
    %v4392 = vpack.c.b16 %v2392, %v2384
    %v4393 = vpack.c.b16 %v2393, %v2385
    %v4394 = vpack.c.b16 %v2394, %v2386
    %v4395 = vpack.c.b16 %v2395, %v2387
    %v4396 = vpack.c.b16 %v2396, %v2388
    %v4397 = vpack.c.b16 %v2405, %v2397
    %v4398 = vpack.c.b16 %v2406, %v2398
    %v4399 = vpack.c.b16 %v2407, %v2399
    %v4400 = vpack.c.b16 %v2408, %v2400
    %v4401 = vpack.c.b16 %v2409, %v2401
    %v4402 = vpack.c.b16 %v2410, %v2402
    %v4403 = vpack.c.b16 %v2411, %v2403
    %v4404 = vpack.c.b16 %v2412, %v2404
    %v4405 = vpack.c.b16 %v2421, %v2413
    %v4406 = vpack.c.b16 %v2422, %v2414
    %v4407 = vpack.c.b16 %v2423, %v2415
    %v4408 = vpack.c.b16 %v2424, %v2416
    %v4409 = vpack.c.b16 %v2425, %v2417
    %v4410 = vpack.c.b16 %v2426, %v2418
    %v4411 = vpack.c.b16 %v2427, %v2419
    %v4412 = vpack.c.b16 %v2428, %v2420
    %v4413 = vpack.c.b16 %v2437, %v2429
    %v4414 = vpack.c.b16 %v2438, %v2430
    %v4415 = vpack.c.b16 %v2439, %v2431
    %v4416 = vpack.c.b16 %v2440, %v2432
    %v4417 = vpack.c.b16 %v2441, %v2433
    %v4418 = vpack.c.b16 %v2442, %v2434
    %v4419 = vpack.c.b16 %v2443, %v2435
    %v4420 = vpack.c.b16 %v2444, %v2436
    %v4421 = vpack.c.b16 %v2453, %v2445
    %v4422 = vpack.c.b16 %v2454, %v2446
    %v4423 = vpack.c.b16 %v2455, %v2447
    %v4424 = vpack.c.b16 %v2456, %v2448
    %v4425 = vpack.c.b16 %v2457, %v2449
    %v4426 = vpack.c.b16 %v2458, %v2450
    %v4427 = vpack.c.b16 %v2459, %v2451
    %v4428 = vpack.c.b16 %v2460, %v2452
    %v4429 = vpack.c.b16 %v2469, %v2461
    %v4430 = vpack.c.b16 %v2470, %v2462
    %v4431 = vpack.c.b16 %v2471, %v2463
    %v4432 = vpack.c.b16 %v2472, %v2464
    %v4433 = vpack.c.b16 %v2473, %v2465
    %v4434 = vpack.c.b16 %v2474, %v2466
    %v4435 = vpack.c.b16 %v2475, %v2467
    %v4436 = vpack.c.b16 %v2476, %v2468
    %v4437 = vpack.c.b16 %v2485, %v2477
    %v4438 = vpack.c.b16 %v2486, %v2478
    %v4439 = vpack.c.b16 %v2487, %v2479
    %v4440 = vpack.c.b16 %v2488, %v2480
    %v4441 = vpack.c.b16 %v2489, %v2481
    %v4442 = vpack.c.b16 %v2490, %v2482
    %v4443 = vpack.c.b16 %v2491, %v2483
    %v4444 = vpack.c.b16 %v2492, %v2484
    %v4445 = vpack.c.b16 %v2501, %v2493
    %v4446 = vpack.c.b16 %v2502, %v2494
    %v4447 = vpack.c.b16 %v2503, %v2495
    %v4448 = vpack.c.b16 %v2504, %v2496
    %v4449 = vpack.c.b16 %v2505, %v2497
    %v4450 = vpack.c.b16 %v2506, %v2498
    %v4451 = vpack.c.b16 %v2507, %v2499
    %v4452 = vpack.c.b16 %v2508, %v2500
    %v4453 = vpack.c.b16 %v2517, %v2509
    %v4454 = vpack.c.b16 %v2518, %v2510
    %v4455 = vpack.c.b16 %v2519, %v2511
    %v4456 = vpack.c.b16 %v2520, %v2512
    %v4457 = vpack.c.b16 %v2521, %v2513
    %v4458 = vpack.c.b16 %v2522, %v2514
    %v4459 = vpack.c.b16 %v2523, %v2515
    %v4460 = vpack.c.b16 %v2524, %v2516
    %v4461 = vpack.c.b16 %v2533, %v2525
    %v4462 = vpack.c.b16 %v2534, %v2526
    %v4463 = vpack.c.b16 %v2535, %v2527
    %v4464 = vpack.c.b16 %v2536, %v2528
    %v4465 = vpack.c.b16 %v2537, %v2529
    %v4466 = vpack.c.b16 %v2538, %v2530
    %v4467 = vpack.c.b16 %v2539, %v2531
    %v4468 = vpack.c.b16 %v2540, %v2532
    %v4469 = vpack.c.b16 %v2549, %v2541
    %v4470 = vpack.c.b16 %v2550, %v2542
    %v4471 = vpack.c.b16 %v2551, %v2543
    %v4472 = vpack.c.b16 %v2552, %v2544
    %v4473 = vpack.c.b16 %v2553, %v2545
    %v4474 = vpack.c.b16 %v2554, %v2546
    %v4475 = vpack.c.b16 %v2555, %v2547
    %v4476 = vpack.c.b16 %v2556, %v2548
    %v4477 = vpack.c.b16 %v2565, %v2557
    %v4478 = vpack.c.b16 %v2566, %v2558
    %v4479 = vpack.c.b16 %v2567, %v2559
    %v4480 = vpack.c.b16 %v2568, %v2560
    %v4481 = vpack.c.b16 %v2569, %v2561
    %v4482 = vpack.c.b16 %v2570, %v2562
    %v4483 = vpack.c.b16 %v2571, %v2563
    %v4484 = vpack.c.b16 %v2572, %v2564
    %v4485 = vpack.c.b16 %v2581, %v2573
    %v4486 = vpack.c.b16 %v2582, %v2574
    %v4487 = vpack.c.b16 %v2583, %v2575
    %v4488 = vpack.c.b16 %v2584, %v2576
    %v4489 = vpack.c.b16 %v2585, %v2577
    %v4490 = vpack.c.b16 %v2586, %v2578
    %v4491 = vpack.c.b16 %v2587, %v2579
    %v4492 = vpack.c.b16 %v2588, %v2580
    %v4493 = vpack.c.b16 %v2597, %v2589
    %v4494 = vpack.c.b16 %v2598, %v2590
    %v4495 = vpack.c.b16 %v2599, %v2591
    %v4496 = vpack.c.b16 %v2600, %v2592
    %v4497 = vpack.c.b16 %v2601, %v2593
    %v4498 = vpack.c.b16 %v2602, %v2594
    %v4499 = vpack.c.b16 %v2603, %v2595
    %v4500 = vpack.c.b16 %v2604, %v2596
    %v4501 = vpack.c.b16 %v2613, %v2605
    %v4502 = vpack.c.b16 %v2614, %v2606
    %v4503 = vpack.c.b16 %v2615, %v2607
    %v4504 = vpack.c.b16 %v2616, %v2608
    %v4505 = vpack.c.b16 %v2617, %v2609
    %v4506 = vpack.c.b16 %v2618, %v2610
    %v4507 = vpack.c.b16 %v2619, %v2611
    %v4508 = vpack.c.b16 %v2620, %v2612
    %v4509 = vpack.c.b16 %v2629, %v2621
    %v4510 = vpack.c.b16 %v2630, %v2622
    %v4511 = vpack.c.b16 %v2631, %v2623
    %v4512 = vpack.c.b16 %v2632, %v2624
    %v4513 = vpack.c.b16 %v2633, %v2625
    %v4514 = vpack.c.b16 %v2634, %v2626
    %v4515 = vpack.c.b16 %v2635, %v2627
    %v4516 = vpack.c.b16 %v2636, %v2628
    %v4517 = vpack.c.b16 %v2645, %v2637
    %v4518 = vpack.c.b16 %v2646, %v2638
    %v4519 = vpack.c.b16 %v2647, %v2639
    %v4520 = vpack.c.b16 %v2648, %v2640
    %v4521 = vpack.c.b16 %v2649, %v2641
    %v4522 = vpack.c.b16 %v2650, %v2642
    %v4523 = vpack.c.b16 %v2651, %v2643
    %v4524 = vpack.c.b16 %v2652, %v2644
    %v4525 = vpack.c.b16 %v2661, %v2653
    %v4526 = vpack.c.b16 %v2662, %v2654
    %v4527 = vpack.c.b16 %v2663, %v2655
    %v4528 = vpack.c.b16 %v2664, %v2656
    %v4529 = vpack.c.b16 %v2665, %v2657
    %v4530 = vpack.c.b16 %v2666, %v2658
    %v4531 = vpack.c.b16 %v2667, %v2659
    %v4532 = vpack.c.b16 %v2668, %v2660
    %v4533 = vpack.c.b16 %v2677, %v2669
    %v4534 = vpack.c.b16 %v2678, %v2670
    %v4535 = vpack.c.b16 %v2679, %v2671
    %v4536 = vpack.c.b16 %v2680, %v2672
    %v4537 = vpack.c.b16 %v2681, %v2673
    %v4538 = vpack.c.b16 %v2682, %v2674
    %v4539 = vpack.c.b16 %v2683, %v2675
    %v4540 = vpack.c.b16 %v2684, %v2676
    %v4541 = vpack.c.b16 %v2693, %v2685
    %v4542 = vpack.c.b16 %v2694, %v2686
    %v4543 = vpack.c.b16 %v2695, %v2687
    %v4544 = vpack.c.b16 %v2696, %v2688
    %v4545 = vpack.c.b16 %v2697, %v2689
    %v4546 = vpack.c.b16 %v2698, %v2690
    %v4547 = vpack.c.b16 %v2699, %v2691
    %v4548 = vpack.c.b16 %v2700, %v2692
    %v4549 = vpack.c.b16 %v2709, %v2701
    %v4550 = vpack.c.b16 %v2710, %v2702
    %v4551 = vpack.c.b16 %v2711, %v2703
    %v4552 = vpack.c.b16 %v2712, %v2704
    %v4553 = vpack.c.b16 %v2713, %v2705
    %v4554 = vpack.c.b16 %v2714, %v2706
    %v4555 = vpack.c.b16 %v2715, %v2707
    %v4556 = vpack.c.b16 %v2716, %v2708
    %v4557 = vpack.c.b16 %v2725, %v2717
    %v4558 = vpack.c.b16 %v2726, %v2718
    %v4559 = vpack.c.b16 %v2727, %v2719
    %v4560 = vpack.c.b16 %v2728, %v2720
    %v4561 = vpack.c.b16 %v2729, %v2721
    %v4562 = vpack.c.b16 %v2730, %v2722
    %v4563 = vpack.c.b16 %v2731, %v2723
    %v4564 = vpack.c.b16 %v2732, %v2724
    %v4565 = vpack.c.b16 %v2741, %v2733
    %v4566 = vpack.c.b16 %v2742, %v2734
    %v4567 = vpack.c.b16 %v2743, %v2735
    %v4568 = vpack.c.b16 %v2744, %v2736
    %v4569 = vpack.c.b16 %v2745, %v2737
    %v4570 = vpack.c.b16 %v2746, %v2738
    %v4571 = vpack.c.b16 %v2747, %v2739
    %v4572 = vpack.c.b16 %v2748, %v2740
    %v4573 = vpack.c.b16 %v2757, %v2749
    %v4574 = vpack.c.b16 %v2758, %v2750
    %v4575 = vpack.c.b16 %v2759, %v2751
    %v4576 = vpack.c.b16 %v2760, %v2752
    %v4577 = vpack.c.b16 %v2761, %v2753
    %v4578 = vpack.c.b16 %v2762, %v2754
    %v4579 = vpack.c.b16 %v2763, %v2755
    %v4580 = vpack.c.b16 %v2764, %v2756
    %v4581 = vpack.c.b16 %v2773, %v2765
    %v4582 = vpack.c.b16 %v2774, %v2766
    %v4583 = vpack.c.b16 %v2775, %v2767
    %v4584 = vpack.c.b16 %v2776, %v2768
    %v4585 = vpack.c.b16 %v2777, %v2769
    %v4586 = vpack.c.b16 %v2778, %v2770
    %v4587 = vpack.c.b16 %v2779, %v2771
    %v4588 = vpack.c.b16 %v2780, %v2772
    %v4589 = vpack.c.b16 %v2789, %v2781
    %v4590 = vpack.c.b16 %v2790, %v2782
    %v4591 = vpack.c.b16 %v2791, %v2783
    %v4592 = vpack.c.b16 %v2792, %v2784
    %v4593 = vpack.c.b16 %v2793, %v2785
    %v4594 = vpack.c.b16 %v2794, %v2786
    %v4595 = vpack.c.b16 %v2795, %v2787
    %v4596 = vpack.c.b16 %v2796, %v2788
    %v4597 = vpack.c.b16 %v2805, %v2797
    %v4598 = vpack.c.b16 %v2806, %v2798
    %v4599 = vpack.c.b16 %v2807, %v2799
    %v4600 = vpack.c.b16 %v2808, %v2800
    %v4601 = vpack.c.b16 %v2809, %v2801
    %v4602 = vpack.c.b16 %v2810, %v2802
    %v4603 = vpack.c.b16 %v2811, %v2803
    %v4604 = vpack.c.b16 %v2812, %v2804
    %v4605 = vpack.c.b16 %v2821, %v2813
    %v4606 = vpack.c.b16 %v2822, %v2814
    %v4607 = vpack.c.b16 %v2823, %v2815
    %v4608 = vpack.c.b16 %v2824, %v2816
    %v4609 = vpack.c.b16 %v2825, %v2817
    %v4610 = vpack.c.b16 %v2826, %v2818
    %v4611 = vpack.c.b16 %v2827, %v2819
    %v4612 = vpack.c.b16 %v2828, %v2820
    %v4613 = vpack.c.b16 %v2837, %v2829
    %v4614 = vpack.c.b16 %v2838, %v2830
    %v4615 = vpack.c.b16 %v2839, %v2831
    %v4616 = vpack.c.b16 %v2840, %v2832
    %v4617 = vpack.c.b16 %v2841, %v2833
    %v4618 = vpack.c.b16 %v2842, %v2834
    %v4619 = vpack.c.b16 %v2843, %v2835
    %v4620 = vpack.c.b16 %v2844, %v2836
    %v4621 = vpack.c.b16 %v2853, %v2845
    %v4622 = vpack.c.b16 %v2854, %v2846
    %v4623 = vpack.c.b16 %v2855, %v2847
    %v4624 = vpack.c.b16 %v2856, %v2848
    %v4625 = vpack.c.b16 %v2857, %v2849
    %v4626 = vpack.c.b16 %v2858, %v2850
    %v4627 = vpack.c.b16 %v2859, %v2851
    %v4628 = vpack.c.b16 %v2860, %v2852
    %v4629 = vpack.c.b16 %v2869, %v2861
    %v4630 = vpack.c.b16 %v2870, %v2862
    %v4631 = vpack.c.b16 %v2871, %v2863
    %v4632 = vpack.c.b16 %v2872, %v2864
    %v4633 = vpack.c.b16 %v2873, %v2865
    %v4634 = vpack.c.b16 %v2874, %v2866
    %v4635 = vpack.c.b16 %v2875, %v2867
    %v4636 = vpack.c.b16 %v2876, %v2868
    %v4637 = vpack.c.b16 %v2885, %v2877
    %v4638 = vpack.c.b16 %v2886, %v2878
    %v4639 = vpack.c.b16 %v2887, %v2879
    %v4640 = vpack.c.b16 %v2888, %v2880
    %v4641 = vpack.c.b16 %v2889, %v2881
    %v4642 = vpack.c.b16 %v2890, %v2882
    %v4643 = vpack.c.b16 %v2891, %v2883
    %v4644 = vpack.c.b16 %v2892, %v2884
    %v4645 = vpack.c.b16 %v2901, %v2893
    %v4646 = vpack.c.b16 %v2902, %v2894
    %v4647 = vpack.c.b16 %v2903, %v2895
    %v4648 = vpack.c.b16 %v2904, %v2896
    %v4649 = vpack.c.b16 %v2905, %v2897
    %v4650 = vpack.c.b16 %v2906, %v2898
    %v4651 = vpack.c.b16 %v2907, %v2899
    %v4652 = vpack.c.b16 %v2908, %v2900
    %v4653 = vpack.c.b16 %v2917, %v2909
    %v4654 = vpack.c.b16 %v2918, %v2910
    %v4655 = vpack.c.b16 %v2919, %v2911
    %v4656 = vpack.c.b16 %v2920, %v2912
    %v4657 = vpack.c.b16 %v2921, %v2913
    %v4658 = vpack.c.b16 %v2922, %v2914
    %v4659 = vpack.c.b16 %v2923, %v2915
    %v4660 = vpack.c.b16 %v2924, %v2916
    %v4661 = vpack.c.b16 %v2933, %v2925
    %v4662 = vpack.c.b16 %v2934, %v2926
    %v4663 = vpack.c.b16 %v2935, %v2927
    %v4664 = vpack.c.b16 %v2936, %v2928
    %v4665 = vpack.c.b16 %v2937, %v2929
    %v4666 = vpack.c.b16 %v2938, %v2930
    %v4667 = vpack.c.b16 %v2939, %v2931
    %v4668 = vpack.c.b16 %v2940, %v2932
    %v4669 = vpack.c.b16 %v2949, %v2941
    %v4670 = vpack.c.b16 %v2950, %v2942
    %v4671 = vpack.c.b16 %v2951, %v2943
    %v4672 = vpack.c.b16 %v2952, %v2944
    %v4673 = vpack.c.b16 %v2953, %v2945
    %v4674 = vpack.c.b16 %v2954, %v2946
    %v4675 = vpack.c.b16 %v2955, %v2947
    %v4676 = vpack.c.b16 %v2956, %v2948
    %v4677 = vpack.c.b16 %v2965, %v2957
    %v4678 = vpack.c.b16 %v2966, %v2958
    %v4679 = vpack.c.b16 %v2967, %v2959
    %v4680 = vpack.c.b16 %v2968, %v2960
    %v4681 = vpack.c.b16 %v2969, %v2961
    %v4682 = vpack.c.b16 %v2970, %v2962
    %v4683 = vpack.c.b16 %v2971, %v2963
    %v4684 = vpack.c.b16 %v2972, %v2964
    %v4685 = vpack.c.b16 %v2981, %v2973
    %v4686 = vpack.c.b16 %v2982, %v2974
    %v4687 = vpack.c.b16 %v2983, %v2975
    %v4688 = vpack.c.b16 %v2984, %v2976
    %v4689 = vpack.c.b16 %v2985, %v2977
    %v4690 = vpack.c.b16 %v2986, %v2978
    %v4691 = vpack.c.b16 %v2987, %v2979
    %v4692 = vpack.c.b16 %v2988, %v2980
    %v4693 = vpack.c.b16 %v2997, %v2989
    %v4694 = vpack.c.b16 %v2998, %v2990
    %v4695 = vpack.c.b16 %v2999, %v2991
    %v4696 = vpack.c.b16 %v3000, %v2992
    %v4697 = vpack.c.b16 %v3001, %v2993
    %v4698 = vpack.c.b16 %v3002, %v2994
    %v4699 = vpack.c.b16 %v3003, %v2995
    %v4700 = vpack.c.b16 %v3004, %v2996
    %v4701 = vpack.c.b16 %v3013, %v3005
    %v4702 = vpack.c.b16 %v3014, %v3006
    %v4703 = vpack.c.b16 %v3015, %v3007
    %v4704 = vpack.c.b16 %v3016, %v3008
    %v4705 = vpack.c.b16 %v3017, %v3009
    %v4706 = vpack.c.b16 %v3018, %v3010
    %v4707 = vpack.c.b16 %v3019, %v3011
    %v4708 = vpack.c.b16 %v3020, %v3012
    %v4709 = vpack.c.b16 %v3029, %v3021
    %v4710 = vpack.c.b16 %v3030, %v3022
    %v4711 = vpack.c.b16 %v3031, %v3023
    %v4712 = vpack.c.b16 %v3032, %v3024
    %v4713 = vpack.c.b16 %v3033, %v3025
    %v4714 = vpack.c.b16 %v3034, %v3026
    %v4715 = vpack.c.b16 %v3035, %v3027
    %v4716 = vpack.c.b16 %v3036, %v3028
    %v4717 = vpack.c.b16 %v3045, %v3037
    %v4718 = vpack.c.b16 %v3046, %v3038
    %v4719 = vpack.c.b16 %v3047, %v3039
    %v4720 = vpack.c.b16 %v3048, %v3040
    %v4721 = vpack.c.b16 %v3049, %v3041
    %v4722 = vpack.c.b16 %v3050, %v3042
    %v4723 = vpack.c.b16 %v3051, %v3043
    %v4724 = vpack.c.b16 %v3052, %v3044
    %v4725 = vpack.c.b16 %v3061, %v3053
    %v4726 = vpack.c.b16 %v3062, %v3054
    %v4727 = vpack.c.b16 %v3063, %v3055
    %v4728 = vpack.c.b16 %v3064, %v3056
    %v4729 = vpack.c.b16 %v3065, %v3057
    %v4730 = vpack.c.b16 %v3066, %v3058
    %v4731 = vpack.c.b16 %v3067, %v3059
    %v4732 = vpack.c.b16 %v3068, %v3060
    %v4733 = vpack.c.b16 %v3077, %v3069
    %v4734 = vpack.c.b16 %v3078, %v3070
    %v4735 = vpack.c.b16 %v3079, %v3071
    %v4736 = vpack.c.b16 %v3080, %v3072
    %v4737 = vpack.c.b16 %v3081, %v3073
    %v4738 = vpack.c.b16 %v3082, %v3074
    %v4739 = vpack.c.b16 %v3083, %v3075
    %v4740 = vpack.c.b16 %v3084, %v3076
    %v4741 = vpack.c.b16 %v3093, %v3085
    %v4742 = vpack.c.b16 %v3094, %v3086
    %v4743 = vpack.c.b16 %v3095, %v3087
    %v4744 = vpack.c.b16 %v3096, %v3088
    %v4745 = vpack.c.b16 %v3097, %v3089
    %v4746 = vpack.c.b16 %v3098, %v3090
    %v4747 = vpack.c.b16 %v3099, %v3091
    %v4748 = vpack.c.b16 %v3100, %v3092
    %v4749 = vpack.c.b16 %v3109, %v3101
    %v4750 = vpack.c.b16 %v3110, %v3102
    %v4751 = vpack.c.b16 %v3111, %v3103
    %v4752 = vpack.c.b16 %v3112, %v3104
    %v4753 = vpack.c.b16 %v3113, %v3105
    %v4754 = vpack.c.b16 %v3114, %v3106
    %v4755 = vpack.c.b16 %v3115, %v3107
    %v4756 = vpack.c.b16 %v3116, %v3108
    %v4757 = vpack.c.b16 %v3125, %v3117
    %v4758 = vpack.c.b16 %v3126, %v3118
    %v4759 = vpack.c.b16 %v3127, %v3119
    %v4760 = vpack.c.b16 %v3128, %v3120
    %v4761 = vpack.c.b16 %v3129, %v3121
    %v4762 = vpack.c.b16 %v3130, %v3122
    %v4763 = vpack.c.b16 %v3131, %v3123
    %v4764 = vpack.c.b16 %v3132, %v3124
    %v4765 = vpack.c.b16 %v3141, %v3133
    %v4766 = vpack.c.b16 %v3142, %v3134
    %v4767 = vpack.c.b16 %v3143, %v3135
    %v4768 = vpack.c.b16 %v3144, %v3136
    %v4769 = vpack.c.b16 %v3145, %v3137
    %v4770 = vpack.c.b16 %v3146, %v3138
    %v4771 = vpack.c.b16 %v3147, %v3139
    %v4772 = vpack.c.b16 %v3148, %v3140
    %v4773 = vpack.c.b16 %v3157, %v3149
    %v4774 = vpack.c.b16 %v3158, %v3150
    %v4775 = vpack.c.b16 %v3159, %v3151
    %v4776 = vpack.c.b16 %v3160, %v3152
    %v4777 = vpack.c.b16 %v3161, %v3153
    %v4778 = vpack.c.b16 %v3162, %v3154
    %v4779 = vpack.c.b16 %v3163, %v3155
    %v4780 = vpack.c.b16 %v3164, %v3156
    %v4781 = vpack.c.b16 %v3173, %v3165
    %v4782 = vpack.c.b16 %v3174, %v3166
    %v4783 = vpack.c.b16 %v3175, %v3167
    %v4784 = vpack.c.b16 %v3176, %v3168
    %v4785 = vpack.c.b16 %v3177, %v3169
    %v4786 = vpack.c.b16 %v3178, %v3170
    %v4787 = vpack.c.b16 %v3179, %v3171
    %v4788 = vpack.c.b16 %v3180, %v3172
    %v4789 = vpack.c.b16 %v3189, %v3181
    %v4790 = vpack.c.b16 %v3190, %v3182
    %v4791 = vpack.c.b16 %v3191, %v3183
    %v4792 = vpack.c.b16 %v3192, %v3184
    %v4793 = vpack.c.b16 %v3193, %v3185
    %v4794 = vpack.c.b16 %v3194, %v3186
    %v4795 = vpack.c.b16 %v3195, %v3187
    %v4796 = vpack.c.b16 %v3196, %v3188
    %v4797 = vpack.c.b16 %v3205, %v3197
    %v4798 = vpack.c.b16 %v3206, %v3198
    %v4799 = vpack.c.b16 %v3207, %v3199
    %v4800 = vpack.c.b16 %v3208, %v3200
    %v4801 = vpack.c.b16 %v3209, %v3201
    %v4802 = vpack.c.b16 %v3210, %v3202
    %v4803 = vpack.c.b16 %v3211, %v3203
    %v4804 = vpack.c.b16 %v3212, %v3204
    %v4805 = vpack.c.b16 %v3221, %v3213
    %v4806 = vpack.c.b16 %v3222, %v3214
    %v4807 = vpack.c.b16 %v3223, %v3215
    %v4808 = vpack.c.b16 %v3224, %v3216
    %v4809 = vpack.c.b16 %v3225, %v3217
    %v4810 = vpack.c.b16 %v3226, %v3218
    %v4811 = vpack.c.b16 %v3227, %v3219
    %v4812 = vpack.c.b16 %v3228, %v3220
    %v4813 = vpack.c.b16 %v3237, %v3229
    %v4814 = vpack.c.b16 %v3238, %v3230
    %v4815 = vpack.c.b16 %v3239, %v3231
    %v4816 = vpack.c.b16 %v3240, %v3232
    %v4817 = vpack.c.b16 %v3241, %v3233
    %v4818 = vpack.c.b16 %v3242, %v3234
    %v4819 = vpack.c.b16 %v3243, %v3235
    %v4820 = vpack.c.b16 %v3244, %v3236
    %v4821 = vpack.c.b16 %v3253, %v3245
    %v4822 = vpack.c.b16 %v3254, %v3246
    %v4823 = vpack.c.b16 %v3255, %v3247
    %v4824 = vpack.c.b16 %v3256, %v3248
    %v4825 = vpack.c.b16 %v3257, %v3249
    %v4826 = vpack.c.b16 %v3258, %v3250
    %v4827 = vpack.c.b16 %v3259, %v3251
    %v4828 = vpack.c.b16 %v3260, %v3252
    %v4829 = vpack.c.b16 %v3269, %v3261
    %v4830 = vpack.c.b16 %v3270, %v3262
    %v4831 = vpack.c.b16 %v3271, %v3263
    %v4832 = vpack.c.b16 %v3272, %v3264
    %v4833 = vpack.c.b16 %v3273, %v3265
    %v4834 = vpack.c.b16 %v3274, %v3266
    %v4835 = vpack.c.b16 %v3275, %v3267
    %v4836 = vpack.c.b16 %v3276, %v3268
    %v4837 = vpack.c.b16 %v3285, %v3277
    %v4838 = vpack.c.b16 %v3286, %v3278
    %v4839 = vpack.c.b16 %v3287, %v3279
    %v4840 = vpack.c.b16 %v3288, %v3280
    %v4841 = vpack.c.b16 %v3289, %v3281
    %v4842 = vpack.c.b16 %v3290, %v3282
    %v4843 = vpack.c.b16 %v3291, %v3283
    %v4844 = vpack.c.b16 %v3292, %v3284
    %v4845 = vpack.c.b16 %v3301, %v3293
    %v4846 = vpack.c.b16 %v3302, %v3294
    %v4847 = vpack.c.b16 %v3303, %v3295
    %v4848 = vpack.c.b16 %v3304, %v3296
    %v4849 = vpack.c.b16 %v3305, %v3297
    %v4850 = vpack.c.b16 %v3306, %v3298
    %v4851 = vpack.c.b16 %v3307, %v3299
    %v4852 = vpack.c.b16 %v3308, %v3300
    %v4853 = vpack.c.b16 %v3317, %v3309
    %v4854 = vpack.c.b16 %v3318, %v3310
    %v4855 = vpack.c.b16 %v3319, %v3311
    %v4856 = vpack.c.b16 %v3320, %v3312
    %v4857 = vpack.c.b16 %v3321, %v3313
    %v4858 = vpack.c.b16 %v3322, %v3314
    %v4859 = vpack.c.b16 %v3323, %v3315
    %v4860 = vpack.c.b16 %v3324, %v3316
    %v4861 = vpack.c.b16 %v3333, %v3325
    %v4862 = vpack.c.b16 %v3334, %v3326
    %v4863 = vpack.c.b16 %v3335, %v3327
    %v4864 = vpack.c.b16 %v3336, %v3328
    %v4865 = vpack.c.b16 %v3337, %v3329
    %v4866 = vpack.c.b16 %v3338, %v3330
    %v4867 = vpack.c.b16 %v3339, %v3331
    %v4868 = vpack.c.b16 %v3340, %v3332
    %v4869 = vpack.c.b16 %v3349, %v3341
    %v4870 = vpack.c.b16 %v3350, %v3342
    %v4871 = vpack.c.b16 %v3351, %v3343
    %v4872 = vpack.c.b16 %v3352, %v3344
    %v4873 = vpack.c.b16 %v3353, %v3345
    %v4874 = vpack.c.b16 %v3354, %v3346
    %v4875 = vpack.c.b16 %v3355, %v3347
    %v4876 = vpack.c.b16 %v3356, %v3348
    %v4877 = vpack.c.b16 %v3365, %v3357
    %v4878 = vpack.c.b16 %v3366, %v3358
    %v4879 = vpack.c.b16 %v3367, %v3359
    %v4880 = vpack.c.b16 %v3368, %v3360
    %v4881 = vpack.c.b16 %v3369, %v3361
    %v4882 = vpack.c.b16 %v3370, %v3362
    %v4883 = vpack.c.b16 %v3371, %v3363
    %v4884 = vpack.c.b16 %v3372, %v3364
    %v4885 = vpack.c.b16 %v3381, %v3373
    %v4886 = vpack.c.b16 %v3382, %v3374
    %v4887 = vpack.c.b16 %v3383, %v3375
    %v4888 = vpack.c.b16 %v3384, %v3376
    %v4889 = vpack.c.b16 %v3385, %v3377
    %v4890 = vpack.c.b16 %v3386, %v3378
    %v4891 = vpack.c.b16 %v3387, %v3379
    %v4892 = vpack.c.b16 %v3388, %v3380
    %v4893 = vpack.c.b16 %v3397, %v3389
    %v4894 = vpack.c.b16 %v3398, %v3390
    %v4895 = vpack.c.b16 %v3399, %v3391
    %v4896 = vpack.c.b16 %v3400, %v3392
    %v4897 = vpack.c.b16 %v3401, %v3393
    %v4898 = vpack.c.b16 %v3402, %v3394
    %v4899 = vpack.c.b16 %v3403, %v3395
    %v4900 = vpack.c.b16 %v3404, %v3396
    %v4901 = vpack.c.b16 %v3413, %v3405
    %v4902 = vpack.c.b16 %v3414, %v3406
    %v4903 = vpack.c.b16 %v3415, %v3407
    %v4904 = vpack.c.b16 %v3416, %v3408
    %v4905 = vpack.c.b16 %v3417, %v3409
    %v4906 = vpack.c.b16 %v3418, %v3410
    %v4907 = vpack.c.b16 %v3419, %v3411
    %v4908 = vpack.c.b16 %v3420, %v3412
    %v4909 = vpack.c.b16 %v3429, %v3421
    %v4910 = vpack.c.b16 %v3430, %v3422
    %v4911 = vpack.c.b16 %v3431, %v3423
    %v4912 = vpack.c.b16 %v3432, %v3424
    %v4913 = vpack.c.b16 %v3433, %v3425
    %v4914 = vpack.c.b16 %v3434, %v3426
    %v4915 = vpack.c.b16 %v3435, %v3427
    %v4916 = vpack.c.b16 %v3436, %v3428
    %v4917 = vpack.c.b16 %v3445, %v3437
    %v4918 = vpack.c.b16 %v3446, %v3438
    %v4919 = vpack.c.b16 %v3447, %v3439
    %v4920 = vpack.c.b16 %v3448, %v3440
    %v4921 = vpack.c.b16 %v3449, %v3441
    %v4922 = vpack.c.b16 %v3450, %v3442
    %v4923 = vpack.c.b16 %v3451, %v3443
    %v4924 = vpack.c.b16 %v3452, %v3444
    %v4925 = vpack.c.b16 %v3461, %v3453
    %v4926 = vpack.c.b16 %v3462, %v3454
    %v4927 = vpack.c.b16 %v3463, %v3455
    %v4928 = vpack.c.b16 %v3464, %v3456
    %v4929 = vpack.c.b16 %v3465, %v3457
    %v4930 = vpack.c.b16 %v3466, %v3458
    %v4931 = vpack.c.b16 %v3467, %v3459
    %v4932 = vpack.c.b16 %v3468, %v3460
    %v4933 = vpack.c.b16 %v3477, %v3469
    %v4934 = vpack.c.b16 %v3478, %v3470
    %v4935 = vpack.c.b16 %v3479, %v3471
    %v4936 = vpack.c.b16 %v3480, %v3472
    %v4937 = vpack.c.b16 %v3481, %v3473
    %v4938 = vpack.c.b16 %v3482, %v3474
    %v4939 = vpack.c.b16 %v3483, %v3475
    %v4940 = vpack.c.b16 %v3484, %v3476
    %v4941 = vpack.c.b16 %v3493, %v3485
    %v4942 = vpack.c.b16 %v3494, %v3486
    %v4943 = vpack.c.b16 %v3495, %v3487
    %v4944 = vpack.c.b16 %v3496, %v3488
    %v4945 = vpack.c.b16 %v3497, %v3489
    %v4946 = vpack.c.b16 %v3498, %v3490
    %v4947 = vpack.c.b16 %v3499, %v3491
    %v4948 = vpack.c.b16 %v3500, %v3492
    %v4949 = vpack.c.b16 %v3509, %v3501
    %v4950 = vpack.c.b16 %v3510, %v3502
    %v4951 = vpack.c.b16 %v3511, %v3503
    %v4952 = vpack.c.b16 %v3512, %v3504
    %v4953 = vpack.c.b16 %v3513, %v3505
    %v4954 = vpack.c.b16 %v3514, %v3506
    %v4955 = vpack.c.b16 %v3515, %v3507
    %v4956 = vpack.c.b16 %v3516, %v3508
    %v4957 = vpack.c.b16 %v3525, %v3517
    %v4958 = vpack.c.b16 %v3526, %v3518
    %v4959 = vpack.c.b16 %v3527, %v3519
    %v4960 = vpack.c.b16 %v3528, %v3520
    %v4961 = vpack.c.b16 %v3529, %v3521
    %v4962 = vpack.c.b16 %v3530, %v3522
    %v4963 = vpack.c.b16 %v3531, %v3523
    %v4964 = vpack.c.b16 %v3532, %v3524
    %v4965 = vpack.c.b16 %v3541, %v3533
    %v4966 = vpack.c.b16 %v3542, %v3534
    %v4967 = vpack.c.b16 %v3543, %v3535
    %v4968 = vpack.c.b16 %v3544, %v3536
    %v4969 = vpack.c.b16 %v3545, %v3537
    %v4970 = vpack.c.b16 %v3546, %v3538
    %v4971 = vpack.c.b16 %v3547, %v3539
    %v4972 = vpack.c.b16 %v3548, %v3540
    %v4973 = vpack.c.b16 %v3557, %v3549
    %v4974 = vpack.c.b16 %v3558, %v3550
    %v4975 = vpack.c.b16 %v3559, %v3551
    %v4976 = vpack.c.b16 %v3560, %v3552
    %v4977 = vpack.c.b16 %v3561, %v3553
    %v4978 = vpack.c.b16 %v3562, %v3554
    %v4979 = vpack.c.b16 %v3563, %v3555
    %v4980 = vpack.c.b16 %v3564, %v3556
    %v4981 = vpack.c.b16 %v3573, %v3565
    %v4982 = vpack.c.b16 %v3574, %v3566
    %v4983 = vpack.c.b16 %v3575, %v3567
    %v4984 = vpack.c.b16 %v3576, %v3568
    %v4985 = vpack.c.b16 %v3577, %v3569
    %v4986 = vpack.c.b16 %v3578, %v3570
    %v4987 = vpack.c.b16 %v3579, %v3571
    %v4988 = vpack.c.b16 %v3580, %v3572
    %v4989 = vpack.c.b16 %v3589, %v3581
    %v4990 = vpack.c.b16 %v3590, %v3582
    %v4991 = vpack.c.b16 %v3591, %v3583
    %v4992 = vpack.c.b16 %v3592, %v3584
    %v4993 = vpack.c.b16 %v3593, %v3585
    %v4994 = vpack.c.b16 %v3594, %v3586
    %v4995 = vpack.c.b16 %v3595, %v3587
    %v4996 = vpack.c.b16 %v3596, %v3588
    %v4997 = vpack.c.b16 %v3605, %v3597
    %v4998 = vpack.c.b16 %v3606, %v3598
    %v4999 = vpack.c.b16 %v3607, %v3599
    %v5000 = vpack.c.b16 %v3608, %v3600
    %v5001 = vpack.c.b16 %v3609, %v3601
    %v5002 = vpack.c.b16 %v3610, %v3602
    %v5003 = vpack.c.b16 %v3611, %v3603
    %v5004 = vpack.c.b16 %v3612, %v3604
    %v5005 = vpack.c.b16 %v3621, %v3613
    %v5006 = vpack.c.b16 %v3622, %v3614
    %v5007 = vpack.c.b16 %v3623, %v3615
    %v5008 = vpack.c.b16 %v3624, %v3616
    %v5009 = vpack.c.b16 %v3625, %v3617
    %v5010 = vpack.c.b16 %v3626, %v3618
    %v5011 = vpack.c.b16 %v3627, %v3619
    %v5012 = vpack.c.b16 %v3628, %v3620
    %v5013 = vpack.c.b16 %v3637, %v3629
    %v5014 = vpack.c.b16 %v3638, %v3630
    %v5015 = vpack.c.b16 %v3639, %v3631
    %v5016 = vpack.c.b16 %v3640, %v3632
    %v5017 = vpack.c.b16 %v3641, %v3633
    %v5018 = vpack.c.b16 %v3642, %v3634
    %v5019 = vpack.c.b16 %v3643, %v3635
    %v5020 = vpack.c.b16 %v3644, %v3636
    %v5021 = vpack.c.b16 %v3653, %v3645
    %v5022 = vpack.c.b16 %v3654, %v3646
    %v5023 = vpack.c.b16 %v3655, %v3647
    %v5024 = vpack.c.b16 %v3656, %v3648
    %v5025 = vpack.c.b16 %v3657, %v3649
    %v5026 = vpack.c.b16 %v3658, %v3650
    %v5027 = vpack.c.b16 %v3659, %v3651
    %v5028 = vpack.c.b16 %v3660, %v3652
    %v5029 = vpack.c.b16 %v3669, %v3661
    %v5030 = vpack.c.b16 %v3670, %v3662
    %v5031 = vpack.c.b16 %v3671, %v3663
    %v5032 = vpack.c.b16 %v3672, %v3664
    %v5033 = vpack.c.b16 %v3673, %v3665
    %v5034 = vpack.c.b16 %v3674, %v3666
    %v5035 = vpack.c.b16 %v3675, %v3667
    %v5036 = vpack.c.b16 %v3676, %v3668
    %v5037 = vpack.c.b16 %v3685, %v3677
    %v5038 = vpack.c.b16 %v3686, %v3678
    %v5039 = vpack.c.b16 %v3687, %v3679
    %v5040 = vpack.c.b16 %v3688, %v3680
    %v5041 = vpack.c.b16 %v3689, %v3681
    %v5042 = vpack.c.b16 %v3690, %v3682
    %v5043 = vpack.c.b16 %v3691, %v3683
    %v5044 = vpack.c.b16 %v3692, %v3684
    %v5045 = vpack.c.b16 %v3701, %v3693
    %v5046 = vpack.c.b16 %v3702, %v3694
    %v5047 = vpack.c.b16 %v3703, %v3695
    %v5048 = vpack.c.b16 %v3704, %v3696
    %v5049 = vpack.c.b16 %v3705, %v3697
    %v5050 = vpack.c.b16 %v3706, %v3698
    %v5051 = vpack.c.b16 %v3707, %v3699
    %v5052 = vpack.c.b16 %v3708, %v3700
    %v5053 = vpack.c.b16 %v3717, %v3709
    %v5054 = vpack.c.b16 %v3718, %v3710
    %v5055 = vpack.c.b16 %v3719, %v3711
    %v5056 = vpack.c.b16 %v3720, %v3712
    %v5057 = vpack.c.b16 %v3721, %v3713
    %v5058 = vpack.c.b16 %v3722, %v3714
    %v5059 = vpack.c.b16 %v3723, %v3715
    %v5060 = vpack.c.b16 %v3724, %v3716
    %v5061 = vpack.c.b16 %v3733, %v3725
    %v5062 = vpack.c.b16 %v3734, %v3726
    %v5063 = vpack.c.b16 %v3735, %v3727
    %v5064 = vpack.c.b16 %v3736, %v3728
    %v5065 = vpack.c.b16 %v3737, %v3729
    %v5066 = vpack.c.b16 %v3738, %v3730
    %v5067 = vpack.c.b16 %v3739, %v3731
    %v5068 = vpack.c.b16 %v3740, %v3732
    %v5069 = vpack.c.b16 %v3749, %v3741
    %v5070 = vpack.c.b16 %v3750, %v3742
    %v5071 = vpack.c.b16 %v3751, %v3743
    %v5072 = vpack.c.b16 %v3752, %v3744
    %v5073 = vpack.c.b16 %v3753, %v3745
    %v5074 = vpack.c.b16 %v3754, %v3746
    %v5075 = vpack.c.b16 %v3755, %v3747
    %v5076 = vpack.c.b16 %v3756, %v3748
    %v5077 = vpack.c.b16 %v3765, %v3757
    %v5078 = vpack.c.b16 %v3766, %v3758
    %v5079 = vpack.c.b16 %v3767, %v3759
    %v5080 = vpack.c.b16 %v3768, %v3760
    %v5081 = vpack.c.b16 %v3769, %v3761
    %v5082 = vpack.c.b16 %v3770, %v3762
    %v5083 = vpack.c.b16 %v3771, %v3763
    %v5084 = vpack.c.b16 %v3772, %v3764
    %v5085 = vpack.c.b16 %v3781, %v3773
    %v5086 = vpack.c.b16 %v3782, %v3774
    %v5087 = vpack.c.b16 %v3783, %v3775
    %v5088 = vpack.c.b16 %v3784, %v3776
    %v5089 = vpack.c.b16 %v3785, %v3777
    %v5090 = vpack.c.b16 %v3786, %v3778
    %v5091 = vpack.c.b16 %v3787, %v3779
    %v5092 = vpack.c.b16 %v3788, %v3780
    %v5093 = vpack.c.b16 %v3797, %v3789
    %v5094 = vpack.c.b16 %v3798, %v3790
    %v5095 = vpack.c.b16 %v3799, %v3791
    %v5096 = vpack.c.b16 %v3800, %v3792
    %v5097 = vpack.c.b16 %v3801, %v3793
    %v5098 = vpack.c.b16 %v3802, %v3794
    %v5099 = vpack.c.b16 %v3803, %v3795
    %v5100 = vpack.c.b16 %v3804, %v3796
    %v5101 = vpack.c.b16 %v3813, %v3805
    %v5102 = vpack.c.b16 %v3814, %v3806
    %v5103 = vpack.c.b16 %v3815, %v3807
    %v5104 = vpack.c.b16 %v3816, %v3808
    %v5105 = vpack.c.b16 %v3817, %v3809
    %v5106 = vpack.c.b16 %v3818, %v3810
    %v5107 = vpack.c.b16 %v3819, %v3811
    %v5108 = vpack.c.b16 %v3820, %v3812
    %v5109 = vpack.c.b16 %v3829, %v3821
    %v5110 = vpack.c.b16 %v3830, %v3822
    %v5111 = vpack.c.b16 %v3831, %v3823
    %v5112 = vpack.c.b16 %v3832, %v3824
    %v5113 = vpack.c.b16 %v3833, %v3825
    %v5114 = vpack.c.b16 %v3834, %v3826
    %v5115 = vpack.c.b16 %v3835, %v3827
    %v5116 = vpack.c.b16 %v3836, %v3828
    %v5117 = vpack.c.b16 %v3845, %v3837
    %v5118 = vpack.c.b16 %v3846, %v3838
    %v5119 = vpack.c.b16 %v3847, %v3839
    %v5120 = vpack.c.b16 %v3848, %v3840
    %v5121 = vpack.c.b16 %v3849, %v3841
    %v5122 = vpack.c.b16 %v3850, %v3842
    %v5123 = vpack.c.b16 %v3851, %v3843
    %v5124 = vpack.c.b16 %v3852, %v3844
    %v5125 = vpack.c.b16 %v3861, %v3853
    %v5126 = vpack.c.b16 %v3862, %v3854
    %v5127 = vpack.c.b16 %v3863, %v3855
    %v5128 = vpack.c.b16 %v3864, %v3856
    %v5129 = vpack.c.b16 %v3865, %v3857
    %v5130 = vpack.c.b16 %v3866, %v3858
    %v5131 = vpack.c.b16 %v3867, %v3859
    %v5132 = vpack.c.b16 %v3868, %v3860
    %v5133 = vpack.c.b16 %v3877, %v3869
    %v5134 = vpack.c.b16 %v3878, %v3870
    %v5135 = vpack.c.b16 %v3879, %v3871
    %v5136 = vpack.c.b16 %v3880, %v3872
    %v5137 = vpack.c.b16 %v3881, %v3873
    %v5138 = vpack.c.b16 %v3882, %v3874
    %v5139 = vpack.c.b16 %v3883, %v3875
    %v5140 = vpack.c.b16 %v3884, %v3876
    %v5141 = vpack.c.b16 %v3893, %v3885
    %v5142 = vpack.c.b16 %v3894, %v3886
    %v5143 = vpack.c.b16 %v3895, %v3887
    %v5144 = vpack.c.b16 %v3896, %v3888
    %v5145 = vpack.c.b16 %v3897, %v3889
    %v5146 = vpack.c.b16 %v3898, %v3890
    %v5147 = vpack.c.b16 %v3899, %v3891
    %v5148 = vpack.c.b16 %v3900, %v3892
    %v5149 = vpack.c.b16 %v3909, %v3901
    %v5150 = vpack.c.b16 %v3910, %v3902
    %v5151 = vpack.c.b16 %v3911, %v3903
    %v5152 = vpack.c.b16 %v3912, %v3904
    %v5153 = vpack.c.b16 %v3913, %v3905
    %v5154 = vpack.c.b16 %v3914, %v3906
    %v5155 = vpack.c.b16 %v3915, %v3907
    %v5156 = vpack.c.b16 %v3916, %v3908
    %v5157 = vpack.c.b16 %v3925, %v3917
    %v5158 = vpack.c.b16 %v3926, %v3918
    %v5159 = vpack.c.b16 %v3927, %v3919
    %v5160 = vpack.c.b16 %v3928, %v3920
    %v5161 = vpack.c.b16 %v3929, %v3921
    %v5162 = vpack.c.b16 %v3930, %v3922
    %v5163 = vpack.c.b16 %v3931, %v3923
    %v5164 = vpack.c.b16 %v3932, %v3924
    %v5165 = vpack.c.b16 %v3941, %v3933
    %v5166 = vpack.c.b16 %v3942, %v3934
    %v5167 = vpack.c.b16 %v3943, %v3935
    %v5168 = vpack.c.b16 %v3944, %v3936
    %v5169 = vpack.c.b16 %v3945, %v3937
    %v5170 = vpack.c.b16 %v3946, %v3938
    %v5171 = vpack.c.b16 %v3947, %v3939
    %v5172 = vpack.c.b16 %v3948, %v3940
    %v5173 = vpack.c.b16 %v3957, %v3949
    %v5174 = vpack.c.b16 %v3958, %v3950
    %v5175 = vpack.c.b16 %v3959, %v3951
    %v5176 = vpack.c.b16 %v3960, %v3952
    %v5177 = vpack.c.b16 %v3961, %v3953
    %v5178 = vpack.c.b16 %v3962, %v3954
    %v5179 = vpack.c.b16 %v3963, %v3955
    %v5180 = vpack.c.b16 %v3964, %v3956
    %v5181 = vpack.c.b16 %v3973, %v3965
    %v5182 = vpack.c.b16 %v3974, %v3966
    %v5183 = vpack.c.b16 %v3975, %v3967
    %v5184 = vpack.c.b16 %v3976, %v3968
    %v5185 = vpack.c.b16 %v3977, %v3969
    %v5186 = vpack.c.b16 %v3978, %v3970
    %v5187 = vpack.c.b16 %v3979, %v3971
    %v5188 = vpack.c.b16 %v3980, %v3972
    %v5189 = vpack.c.b16 %v3989, %v3981
    %v5190 = vpack.c.b16 %v3990, %v3982
    %v5191 = vpack.c.b16 %v3991, %v3983
    %v5192 = vpack.c.b16 %v3992, %v3984
    %v5193 = vpack.c.b16 %v3993, %v3985
    %v5194 = vpack.c.b16 %v3994, %v3986
    %v5195 = vpack.c.b16 %v3995, %v3987
    %v5196 = vpack.c.b16 %v3996, %v3988
    %v5197 = vpack.c.b16 %v4005, %v3997
    %v5198 = vpack.c.b16 %v4006, %v3998
    %v5199 = vpack.c.b16 %v4007, %v3999
    %v5200 = vpack.c.b16 %v4008, %v4000
    %v5201 = vpack.c.b16 %v4009, %v4001
    %v5202 = vpack.c.b16 %v4010, %v4002
    %v5203 = vpack.c.b16 %v4011, %v4003
    %v5204 = vpack.c.b16 %v4012, %v4004
    %v5205 = vpack.c.b16 %v4021, %v4013
    %v5206 = vpack.c.b16 %v4022, %v4014
    %v5207 = vpack.c.b16 %v4023, %v4015
    %v5208 = vpack.c.b16 %v4024, %v4016
    %v5209 = vpack.c.b16 %v4025, %v4017
    %v5210 = vpack.c.b16 %v4026, %v4018
    %v5211 = vpack.c.b16 %v4027, %v4019
    %v5212 = vpack.c.b16 %v4028, %v4020
    %v5213 = vpack.c.b16 %v4037, %v4029
    %v5214 = vpack.c.b16 %v4038, %v4030
    %v5215 = vpack.c.b16 %v4039, %v4031
    %v5216 = vpack.c.b16 %v4040, %v4032
    %v5217 = vpack.c.b16 %v4041, %v4033
    %v5218 = vpack.c.b16 %v4042, %v4034
    %v5219 = vpack.c.b16 %v4043, %v4035
    %v5220 = vpack.c.b16 %v4044, %v4036
    %v5221 = vpack.c.b16 %v4053, %v4045
    %v5222 = vpack.c.b16 %v4054, %v4046
    %v5223 = vpack.c.b16 %v4055, %v4047
    %v5224 = vpack.c.b16 %v4056, %v4048
    %v5225 = vpack.c.b16 %v4057, %v4049
    %v5226 = vpack.c.b16 %v4058, %v4050
    %v5227 = vpack.c.b16 %v4059, %v4051
    %v5228 = vpack.c.b16 %v4060, %v4052
    %v5229 = vpack.c.b16 %v4069, %v4061
    %v5230 = vpack.c.b16 %v4070, %v4062
    %v5231 = vpack.c.b16 %v4071, %v4063
    %v5232 = vpack.c.b16 %v4072, %v4064
    %v5233 = vpack.c.b16 %v4073, %v4065
    %v5234 = vpack.c.b16 %v4074, %v4066
    %v5235 = vpack.c.b16 %v4075, %v4067
    %v5236 = vpack.c.b16 %v4076, %v4068
    %v5237 = vpack.c.b16 %v4085, %v4077
    %v5238 = vpack.c.b16 %v4086, %v4078
    %v5239 = vpack.c.b16 %v4087, %v4079
    %v5240 = vpack.c.b16 %v4088, %v4080
    %v5241 = vpack.c.b16 %v4089, %v4081
    %v5242 = vpack.c.b16 %v4090, %v4082
    %v5243 = vpack.c.b16 %v4091, %v4083
    %v5244 = vpack.c.b16 %v4092, %v4084
    %v5245 = vpack.c.b16 %v4101, %v4093
    %v5246 = vpack.c.b16 %v4102, %v4094
    %v5247 = vpack.c.b16 %v4103, %v4095
    %v5248 = vpack.c.b16 %v4104, %v4096
    %v5249 = vpack.c.b16 %v4105, %v4097
    %v5250 = vpack.c.b16 %v4106, %v4098
    %v5251 = vpack.c.b16 %v4107, %v4099
    %v5252 = vpack.c.b16 %v4108, %v4100
    %v5253 = vpack.c.b16 %v4117, %v4109
    %v5254 = vpack.c.b16 %v4118, %v4110
    %v5255 = vpack.c.b16 %v4119, %v4111
    %v5256 = vpack.c.b16 %v4120, %v4112
    %v5257 = vpack.c.b16 %v4121, %v4113
    %v5258 = vpack.c.b16 %v4122, %v4114
    %v5259 = vpack.c.b16 %v4123, %v4115
    %v5260 = vpack.c.b16 %v4124, %v4116
    %v5261 = vpack.c.b16 %v4133, %v4125
    %v5262 = vpack.c.b16 %v4134, %v4126
    %v5263 = vpack.c.b16 %v4135, %v4127
    %v5264 = vpack.c.b16 %v4136, %v4128
    %v5265 = vpack.c.b16 %v4137, %v4129
    %v5266 = vpack.c.b16 %v4138, %v4130
    %v5267 = vpack.c.b16 %v4139, %v4131
    %v5268 = vpack.c.b16 %v4140, %v4132
    %v5269 = vpack.c.b16 %v4149, %v4141
    %v5270 = vpack.c.b16 %v4150, %v4142
    %v5271 = vpack.c.b16 %v4151, %v4143
    %v5272 = vpack.c.b16 %v4152, %v4144
    %v5273 = vpack.c.b16 %v4153, %v4145
    %v5274 = vpack.c.b16 %v4154, %v4146
    %v5275 = vpack.c.b16 %v4155, %v4147
    %v5276 = vpack.c.b16 %v4156, %v4148
    %v5277 = vpack.c.b16 %v4165, %v4157
    %v5278 = vpack.c.b16 %v4166, %v4158
    %v5279 = vpack.c.b16 %v4167, %v4159
    %v5280 = vpack.c.b16 %v4168, %v4160
    %v5281 = vpack.c.b16 %v4169, %v4161
    %v5282 = vpack.c.b16 %v4170, %v4162
    %v5283 = vpack.c.b16 %v4171, %v4163
    %v5284 = vpack.c.b16 %v4172, %v4164
    %v5285 = vpack.c.b16 %v4181, %v4173
    %v5286 = vpack.c.b16 %v4182, %v4174
    %v5287 = vpack.c.b16 %v4183, %v4175
    %v5288 = vpack.c.b16 %v4184, %v4176
    %v5289 = vpack.c.b16 %v4185, %v4177
    %v5290 = vpack.c.b16 %v4186, %v4178
    %v5291 = vpack.c.b16 %v4187, %v4179
    %v5292 = vpack.c.b16 %v4188, %v4180
    %v5293 = vpack.c.b16 %v4197, %v4189
    %v5294 = vpack.c.b16 %v4198, %v4190
    %v5295 = vpack.c.b16 %v4199, %v4191
    %v5296 = vpack.c.b16 %v4200, %v4192
    %v5297 = vpack.c.b16 %v4201, %v4193
    %v5298 = vpack.c.b16 %v4202, %v4194
    %v5299 = vpack.c.b16 %v4203, %v4195
    %v5300 = vpack.c.b16 %v4204, %v4196
    %v5301 = vpack.c.b16 %v4213, %v4205
    %v5302 = vpack.c.b16 %v4214, %v4206
    %v5303 = vpack.c.b16 %v4215, %v4207
    %v5304 = vpack.c.b16 %v4216, %v4208
    %v5305 = vpack.c.b16 %v4217, %v4209
    %v5306 = vpack.c.b16 %v4218, %v4210
    %v5307 = vpack.c.b16 %v4219, %v4211
    %v5308 = vpack.c.b16 %v4220, %v4212
    %v5309 = vpack.c.b16 %v4229, %v4221
    %v5310 = vpack.c.b16 %v4230, %v4222
    %v5311 = vpack.c.b16 %v4231, %v4223
    %v5312 = vpack.c.b16 %v4232, %v4224
    %v5313 = vpack.c.b16 %v4233, %v4225
    %v5314 = vpack.c.b16 %v4234, %v4226
    %v5315 = vpack.c.b16 %v4235, %v4227
    %v5316 = vpack.c.b16 %v4236, %v4228
    %v5317 = vpack.c.b16 %v4245, %v4237
    %v5318 = vpack.c.b16 %v4246, %v4238
    %v5319 = vpack.c.b16 %v4247, %v4239
    %v5320 = vpack.c.b16 %v4248, %v4240
    %v5321 = vpack.c.b16 %v4249, %v4241
    %v5322 = vpack.c.b16 %v4250, %v4242
    %v5323 = vpack.c.b16 %v4251, %v4243
    %v5324 = vpack.c.b16 %v4252, %v4244
    %v5325 = vpack.c.b16 %v4261, %v4253
    %v5326 = vpack.c.b16 %v4262, %v4254
    %v5327 = vpack.c.b16 %v4263, %v4255
    %v5328 = vpack.c.b16 %v4264, %v4256
    %v5329 = vpack.c.b16 %v4265, %v4257
    %v5330 = vpack.c.b16 %v4266, %v4258
    %v5331 = vpack.c.b16 %v4267, %v4259
    %v5332 = vpack.c.b16 %v4268, %v4260
    %v5333 = vpack.c.b16 %v4277, %v4269
    %v5334 = vpack.c.b16 %v4278, %v4270
    %v5335 = vpack.c.b16 %v4279, %v4271
    %v5336 = vpack.c.b16 %v4280, %v4272
    %v5337 = vpack.c.b16 %v4281, %v4273
    %v5338 = vpack.c.b16 %v4282, %v4274
    %v5339 = vpack.c.b16 %v4283, %v4275
    %v5340 = vpack.c.b16 %v4284, %v4276
    %v5341 = vpack.c.b16 %v4293, %v4285
    %v5342 = vpack.c.b16 %v4294, %v4286
    %v5343 = vpack.c.b16 %v4295, %v4287
    %v5344 = vpack.c.b16 %v4296, %v4288
    %v5345 = vpack.c.b16 %v4297, %v4289
    %v5346 = vpack.c.b16 %v4298, %v4290
    %v5347 = vpack.c.b16 %v4299, %v4291
    %v5348 = vpack.c.b16 %v4300, %v4292
    %v5349 = vpack.c.b16 %v4309, %v4301
    %v5350 = vpack.c.b16 %v4310, %v4302
    %v5351 = vpack.c.b16 %v4311, %v4303
    %v5352 = vpack.c.b16 %v4312, %v4304
    %v5353 = vpack.c.b16 %v4313, %v4305
    %v5354 = vpack.c.b16 %v4314, %v4306
    %v5355 = vpack.c.b16 %v4315, %v4307
    %v5356 = vpack.c.b16 %v4316, %v4308
    %v5357 = vpack.c.b16 %v4325, %v4317
    %v5358 = vpack.c.b16 %v4326, %v4318
    %v5359 = vpack.c.b16 %v4327, %v4319
    %v5360 = vpack.c.b16 %v4328, %v4320
    %v5361 = vpack.c.b16 %v4329, %v4321
    %v5362 = vpack.c.b16 %v4330, %v4322
    %v5363 = vpack.c.b16 %v4331, %v4323
    %v5364 = vpack.c.b16 %v4332, %v4324
    %v5365 = vpack.c.b16 %v4341, %v4333
    %v5366 = vpack.c.b16 %v4342, %v4334
    %v5367 = vpack.c.b16 %v4343, %v4335
    %v5368 = vpack.c.b16 %v4344, %v4336
    %v5369 = vpack.c.b16 %v4345, %v4337
    %v5370 = vpack.c.b16 %v4346, %v4338
    %v5371 = vpack.c.b16 %v4347, %v4339
    %v5372 = vpack.c.b16 %v4348, %v4340
    %6397 = vmatprep.subr.bf16.mxu0 %v4350
    %6398 = vmatpush1.bf16.msra.mxu0 %v4349
    %6399 = vmatprep.subr.bf16.mxu0 %v4358
    %6400 = vmatpush1.bf16.msra.mxu0 %v4357
    %6401 = vmatprep.subr.bf16.mxu0 %v4366
    %6402 = vmatpush1.bf16.msra.mxu0 %v4365
    %6403 = vmatprep.subr.bf16.mxu0 %v4374
    %6404 = vmatpush1.bf16.msra.mxu0 %v4373
    %6405 = vmatprep.subr.bf16.mxu0 %v4382
    %6406 = vmatpush1.bf16.msra.mxu0 %v4381
    %6407 = vmatprep.subr.bf16.mxu0 %v4390
    %6408 = vmatpush1.bf16.msra.mxu0 %v4389
    %6409 = vmatprep.subr.bf16.mxu0 %v4398
    %6410 = vmatpush1.bf16.msra.mxu0 %v4397
    %6411 = vmatprep.subr.bf16.mxu0 %v4406
    %6412 = vmatpush1.bf16.msra.mxu0 %v4405
    %6413 = vmatprep.subr.bf16.mxu0 %v4414
    %6414 = vmatpush1.bf16.msra.mxu0 %v4413
    %6415 = vmatprep.subr.bf16.mxu0 %v4422
    %6416 = vmatpush1.bf16.msra.mxu0 %v4421
    %6417 = vmatprep.subr.bf16.mxu0 %v4430
    %6418 = vmatpush1.bf16.msra.mxu0 %v4429
    %6419 = vmatprep.subr.bf16.mxu0 %v4438
    %6420 = vmatpush1.bf16.msra.mxu0 %v4437
    %6421 = vmatprep.subr.bf16.mxu0 %v4446
    %6422 = vmatpush1.bf16.msra.mxu0 %v4445
    %6423 = vmatprep.subr.bf16.mxu0 %v4454
    %6424 = vmatpush1.bf16.msra.mxu0 %v4453
    %6425 = vmatprep.subr.bf16.mxu0 %v4462
    %6426 = vmatpush1.bf16.msra.mxu0 %v4461
    %6427 = vmatprep.subr.bf16.mxu0 %v4470
    %6428 = vmatpush1.bf16.msra.mxu0 %v4469
    %6429 = vmatprep.mubr.bf16.mxu0 %v196
    %6430 = vmatmul.mubr.bf16.gmra.mrb[0].mxu0 %v195
    %v6431 = vpop.f32.mrb[0].mxu0
    %v6432 = vadd.f32 %v1240, %v6431
    %v6433 = vpop.f32.mrb[0].mxu0
    %v6434 = vadd.f32 %v1244, %v6433
    %v6435 = vpop.f32.mrb[0].mxu0
    %v6436 = vpop.f32.mrb[0].mxu0
    %6437 = vdwg.mxu0
    %6438 = vmatprep.subr.bf16.mxu0 %v4478
    %6439 = vmatpush1.bf16.msra.mxu0 %v4477
    %6440 = vmatprep.subr.bf16.mxu0 %v4486
    %6441 = vmatpush1.bf16.msra.mxu0 %v4485
    %6442 = vmatprep.subr.bf16.mxu0 %v4494
    %6443 = vmatpush1.bf16.msra.mxu0 %v4493
    %6444 = vmatprep.subr.bf16.mxu0 %v4502
    %6445 = vmatpush1.bf16.msra.mxu0 %v4501
    %6446 = vmatprep.subr.bf16.mxu0 %v4510
    %6447 = vmatpush1.bf16.msra.mxu0 %v4509
    %6448 = vmatprep.subr.bf16.mxu0 %v4518
    %6449 = vmatpush1.bf16.msra.mxu0 %v4517
    %6450 = vmatprep.subr.bf16.mxu0 %v4526
    %6451 = vmatpush1.bf16.msra.mxu0 %v4525
    %6452 = vmatprep.subr.bf16.mxu0 %v4534
    %6453 = vmatpush1.bf16.msra.mxu0 %v4533
    %6454 = vmatprep.subr.bf16.mxu0 %v4542
    %6455 = vmatpush1.bf16.msra.mxu0 %v4541
    %6456 = vmatprep.subr.bf16.mxu0 %v4550
    %6457 = vmatpush1.bf16.msra.mxu0 %v4549
    %6458 = vmatprep.subr.bf16.mxu0 %v4558
    %6459 = vmatpush1.bf16.msra.mxu0 %v4557
    %6460 = vmatprep.subr.bf16.mxu0 %v4566
    %6461 = vmatpush1.bf16.msra.mxu0 %v4565
    %6462 = vmatprep.subr.bf16.mxu0 %v4574
    %6463 = vmatpush1.bf16.msra.mxu0 %v4573
    %6464 = vmatprep.subr.bf16.mxu0 %v4582
    %6465 = vmatpush1.bf16.msra.mxu0 %v4581
    %6466 = vmatprep.subr.bf16.mxu0 %v4590
    %6467 = vmatpush1.bf16.msra.mxu0 %v4589
    %6468 = vmatprep.subr.bf16.mxu0 %v4598
    %6469 = vmatpush1.bf16.msra.mxu0 %v4597
    %6470 = vmatprep.mubr.bf16.mxu0 %v198
    %6471 = vmatmul.mubr.bf16.gmra.mrb[0].mxu0 %v197
    %v6472 = vpop.f32.mrb[0].mxu0
    %v6473 = vadd.f32 %v6432, %v6472
    %v6474 = vpop.f32.mrb[0].mxu0
    %v6475 = vadd.f32 %v6434, %v6474
    %v6476 = vpop.f32.mrb[0].mxu0
    %v6477 = vpop.f32.mrb[0].mxu0
    %6478 = vdwg.mxu0
    %6479 = vmatprep.subr.bf16.mxu0 %v4606
    %6480 = vmatpush1.bf16.msra.mxu0 %v4605
    %6481 = vmatprep.subr.bf16.mxu0 %v4614
    %6482 = vmatpush1.bf16.msra.mxu0 %v4613
    %6483 = vmatprep.subr.bf16.mxu0 %v4622
    %6484 = vmatpush1.bf16.msra.mxu0 %v4621
    %6485 = vmatprep.subr.bf16.mxu0 %v4630
    %6486 = vmatpush1.bf16.msra.mxu0 %v4629
    %6487 = vmatprep.subr.bf16.mxu0 %v4638
    %6488 = vmatpush1.bf16.msra.mxu0 %v4637
    %6489 = vmatprep.subr.bf16.mxu0 %v4646
    %6490 = vmatpush1.bf16.msra.mxu0 %v4645
    %6491 = vmatprep.subr.bf16.mxu0 %v4654
    %6492 = vmatpush1.bf16.msra.mxu0 %v4653
    %6493 = vmatprep.subr.bf16.mxu0 %v4662
    %6494 = vmatpush1.bf16.msra.mxu0 %v4661
    %6495 = vmatprep.subr.bf16.mxu0 %v4670
    %6496 = vmatpush1.bf16.msra.mxu0 %v4669
    %6497 = vmatprep.subr.bf16.mxu0 %v4678
    %6498 = vmatpush1.bf16.msra.mxu0 %v4677
    %6499 = vmatprep.subr.bf16.mxu0 %v4686
    %6500 = vmatpush1.bf16.msra.mxu0 %v4685
    %6501 = vmatprep.subr.bf16.mxu0 %v4694
    %6502 = vmatpush1.bf16.msra.mxu0 %v4693
    %6503 = vmatprep.subr.bf16.mxu0 %v4702
    %6504 = vmatpush1.bf16.msra.mxu0 %v4701
    %6505 = vmatprep.subr.bf16.mxu0 %v4710
    %6506 = vmatpush1.bf16.msra.mxu0 %v4709
    %6507 = vmatprep.subr.bf16.mxu0 %v4718
    %6508 = vmatpush1.bf16.msra.mxu0 %v4717
    %6509 = vmatprep.subr.bf16.mxu0 %v4726
    %6510 = vmatpush1.bf16.msra.mxu0 %v4725
    %6511 = vmatprep.mubr.bf16.mxu0 %v200
    %6512 = vmatmul.mubr.bf16.gmra.mrb[0].mxu0 %v199
    %v6513 = vpop.f32.mrb[0].mxu0
    %v6514 = vadd.f32 %v6473, %v6513
    %v6515 = vpop.f32.mrb[0].mxu0
    %v6516 = vadd.f32 %v6475, %v6515
    %v6517 = vpop.f32.mrb[0].mxu0
    %v6518 = vpop.f32.mrb[0].mxu0
    %6519 = vdwg.mxu0
    %6520 = vmatprep.subr.bf16.mxu0 %v4734
    %6521 = vmatpush1.bf16.msra.mxu0 %v4733
    %6522 = vmatprep.subr.bf16.mxu0 %v4742
    %6523 = vmatpush1.bf16.msra.mxu0 %v4741
    %6524 = vmatprep.subr.bf16.mxu0 %v4750
    %6525 = vmatpush1.bf16.msra.mxu0 %v4749
    %6526 = vmatprep.subr.bf16.mxu0 %v4758
    %6527 = vmatpush1.bf16.msra.mxu0 %v4757
    %6528 = vmatprep.subr.bf16.mxu0 %v4766
    %6529 = vmatpush1.bf16.msra.mxu0 %v4765
    %6530 = vmatprep.subr.bf16.mxu0 %v4774
    %6531 = vmatpush1.bf16.msra.mxu0 %v4773
    %6532 = vmatprep.subr.bf16.mxu0 %v4782
    %6533 = vmatpush1.bf16.msra.mxu0 %v4781
    %6534 = vmatprep.subr.bf16.mxu0 %v4790
    %6535 = vmatpush1.bf16.msra.mxu0 %v4789
    %6536 = vmatprep.subr.bf16.mxu0 %v4798
    %6537 = vmatpush1.bf16.msra.mxu0 %v4797
    %6538 = vmatprep.subr.bf16.mxu0 %v4806
    %6539 = vmatpush1.bf16.msra.mxu0 %v4805
    %6540 = vmatprep.subr.bf16.mxu0 %v4814
    %6541 = vmatpush1.bf16.msra.mxu0 %v4813
    %6542 = vmatprep.subr.bf16.mxu0 %v4822
    %6543 = vmatpush1.bf16.msra.mxu0 %v4821
    %6544 = vmatprep.subr.bf16.mxu0 %v4830
    %6545 = vmatpush1.bf16.msra.mxu0 %v4829
    %6546 = vmatprep.subr.bf16.mxu0 %v4838
    %6547 = vmatpush1.bf16.msra.mxu0 %v4837
    %6548 = vmatprep.subr.bf16.mxu0 %v4846
    %6549 = vmatpush1.bf16.msra.mxu0 %v4845
    %6550 = vmatprep.subr.bf16.mxu0 %v4854
    %6551 = vmatpush1.bf16.msra.mxu0 %v4853
    %6552 = vmatprep.mubr.bf16.mxu0 %v202
    %6553 = vmatmul.mubr.bf16.gmra.mrb[0].mxu0 %v201
    %v6554 = vpop.f32.mrb[0].mxu0
    %v6555 = vadd.f32 %v6514, %v6554
    %v6556 = vpop.f32.mrb[0].mxu0
    %v6557 = vadd.f32 %v6516, %v6556
    %v6558 = vpop.f32.mrb[0].mxu0
    %v6559 = vpop.f32.mrb[0].mxu0
    %6560 = vdwg.mxu0
    %6561 = vmatprep.subr.bf16.mxu0 %v4862
    %6562 = vmatpush1.bf16.msra.mxu0 %v4861
    %6563 = vmatprep.subr.bf16.mxu0 %v4870
    %6564 = vmatpush1.bf16.msra.mxu0 %v4869
    %6565 = vmatprep.subr.bf16.mxu0 %v4878
    %6566 = vmatpush1.bf16.msra.mxu0 %v4877
    %6567 = vmatprep.subr.bf16.mxu0 %v4886
    %6568 = vmatpush1.bf16.msra.mxu0 %v4885
    %6569 = vmatprep.subr.bf16.mxu0 %v4894
    %6570 = vmatpush1.bf16.msra.mxu0 %v4893
    %6571 = vmatprep.subr.bf16.mxu0 %v4902
    %6572 = vmatpush1.bf16.msra.mxu0 %v4901
    %6573 = vmatprep.subr.bf16.mxu0 %v4910
    %6574 = vmatpush1.bf16.msra.mxu0 %v4909
    %6575 = vmatprep.subr.bf16.mxu0 %v4918
    %6576 = vmatpush1.bf16.msra.mxu0 %v4917
    %6577 = vmatprep.subr.bf16.mxu0 %v4926
    %6578 = vmatpush1.bf16.msra.mxu0 %v4925
    %6579 = vmatprep.subr.bf16.mxu0 %v4934
    %6580 = vmatpush1.bf16.msra.mxu0 %v4933
    %6581 = vmatprep.subr.bf16.mxu0 %v4942
    %6582 = vmatpush1.bf16.msra.mxu0 %v4941
    %6583 = vmatprep.subr.bf16.mxu0 %v4950
    %6584 = vmatpush1.bf16.msra.mxu0 %v4949
    %6585 = vmatprep.subr.bf16.mxu0 %v4958
    %6586 = vmatpush1.bf16.msra.mxu0 %v4957
    %6587 = vmatprep.subr.bf16.mxu0 %v4966
    %6588 = vmatpush1.bf16.msra.mxu0 %v4965
    %6589 = vmatprep.subr.bf16.mxu0 %v4974
    %6590 = vmatpush1.bf16.msra.mxu0 %v4973
    %6591 = vmatprep.subr.bf16.mxu0 %v4982
    %6592 = vmatpush1.bf16.msra.mxu0 %v4981
    %6593 = vmatprep.mubr.bf16.mxu0 %v204
    %6594 = vmatmul.mubr.bf16.gmra.mrb[0].mxu0 %v203
    %v6595 = vpop.f32.mrb[0].mxu0
    %v6596 = vadd.f32 %v6555, %v6595
    %v6597 = vpop.f32.mrb[0].mxu0
    %v6598 = vadd.f32 %v6557, %v6597
    %v6599 = vpop.f32.mrb[0].mxu0
    %v6600 = vpop.f32.mrb[0].mxu0
    %6601 = vdwg.mxu0
    %6602 = vmatprep.subr.bf16.mxu0 %v4990
    %6603 = vmatpush1.bf16.msra.mxu0 %v4989
    %6604 = vmatprep.subr.bf16.mxu0 %v4998
    %6605 = vmatpush1.bf16.msra.mxu0 %v4997
    %6606 = vmatprep.subr.bf16.mxu0 %v5006
    %6607 = vmatpush1.bf16.msra.mxu0 %v5005
    %6608 = vmatprep.subr.bf16.mxu0 %v5014
    %6609 = vmatpush1.bf16.msra.mxu0 %v5013
    %6610 = vmatprep.subr.bf16.mxu0 %v5022
    %6611 = vmatpush1.bf16.msra.mxu0 %v5021
    %6612 = vmatprep.subr.bf16.mxu0 %v5030
    %6613 = vmatpush1.bf16.msra.mxu0 %v5029
    %6614 = vmatprep.subr.bf16.mxu0 %v5038
    %6615 = vmatpush1.bf16.msra.mxu0 %v5037
    %6616 = vmatprep.subr.bf16.mxu0 %v5046
    %6617 = vmatpush1.bf16.msra.mxu0 %v5045
    %6618 = vmatprep.subr.bf16.mxu0 %v5054
    %6619 = vmatpush1.bf16.msra.mxu0 %v5053
    %6620 = vmatprep.subr.bf16.mxu0 %v5062
    %6621 = vmatpush1.bf16.msra.mxu0 %v5061
    %6622 = vmatprep.subr.bf16.mxu0 %v5070
    %6623 = vmatpush1.bf16.msra.mxu0 %v5069
    %6624 = vmatprep.subr.bf16.mxu0 %v5078
    %6625 = vmatpush1.bf16.msra.mxu0 %v5077
    %6626 = vmatprep.subr.bf16.mxu0 %v5086
    %6627 = vmatpush1.bf16.msra.mxu0 %v5085
    %6628 = vmatprep.subr.bf16.mxu0 %v5094
    %6629 = vmatpush1.bf16.msra.mxu0 %v5093
    %6630 = vmatprep.subr.bf16.mxu0 %v5102
    %6631 = vmatpush1.bf16.msra.mxu0 %v5101
    %6632 = vmatprep.subr.bf16.mxu0 %v5110
    %6633 = vmatpush1.bf16.msra.mxu0 %v5109
    %6634 = vmatprep.mubr.bf16.mxu0 %v206
    %6635 = vmatmul.mubr.bf16.gmra.mrb[0].mxu0 %v205
    %v6636 = vpop.f32.mrb[0].mxu0
    %v6637 = vadd.f32 %v6596, %v6636
    %v6638 = vpop.f32.mrb[0].mxu0
    %v6639 = vadd.f32 %v6598, %v6638
    %v6640 = vpop.f32.mrb[0].mxu0
    %v6641 = vpop.f32.mrb[0].mxu0
    %6642 = vdwg.mxu0
    %6643 = vmatprep.subr.bf16.mxu0 %v5118
    %6644 = vmatpush1.bf16.msra.mxu0 %v5117
    %6645 = vmatprep.subr.bf16.mxu0 %v5126
    %6646 = vmatpush1.bf16.msra.mxu0 %v5125
    %6647 = vmatprep.subr.bf16.mxu0 %v5134
    %6648 = vmatpush1.bf16.msra.mxu0 %v5133
    %6649 = vmatprep.subr.bf16.mxu0 %v5142
    %6650 = vmatpush1.bf16.msra.mxu0 %v5141
    %6651 = vmatprep.subr.bf16.mxu0 %v5150
    %6652 = vmatpush1.bf16.msra.mxu0 %v5149
    %6653 = vmatprep.subr.bf16.mxu0 %v5158
    %6654 = vmatpush1.bf16.msra.mxu0 %v5157
    %6655 = vmatprep.subr.bf16.mxu0 %v5166
    %6656 = vmatpush1.bf16.msra.mxu0 %v5165
    %6657 = vmatprep.subr.bf16.mxu0 %v5174
    %6658 = vmatpush1.bf16.msra.mxu0 %v5173
    %6659 = vmatprep.subr.bf16.mxu0 %v5182
    %6660 = vmatpush1.bf16.msra.mxu0 %v5181
    %6661 = vmatprep.subr.bf16.mxu0 %v5190
    %6662 = vmatpush1.bf16.msra.mxu0 %v5189
    %6663 = vmatprep.subr.bf16.mxu0 %v5198
    %6664 = vmatpush1.bf16.msra.mxu0 %v5197
    %6665 = vmatprep.subr.bf16.mxu0 %v5206
    %6666 = vmatpush1.bf16.msra.mxu0 %v5205
    %6667 = vmatprep.subr.bf16.mxu0 %v5214
    %6668 = vmatpush1.bf16.msra.mxu0 %v5213
    %6669 = vmatprep.subr.bf16.mxu0 %v5222
    %6670 = vmatpush1.bf16.msra.mxu0 %v5221
    %6671 = vmatprep.subr.bf16.mxu0 %v5230
    %6672 = vmatpush1.bf16.msra.mxu0 %v5229
    %6673 = vmatprep.subr.bf16.mxu0 %v5238
    %6674 = vmatpush1.bf16.msra.mxu0 %v5237
    %6675 = vmatprep.mubr.bf16.mxu0 %v208
    %6676 = vmatmul.mubr.bf16.gmra.mrb[0].mxu0 %v207
    %v6677 = vpop.f32.mrb[0].mxu0
    %v6678 = vadd.f32 %v6637, %v6677
    %v6679 = vpop.f32.mrb[0].mxu0
    %v6680 = vadd.f32 %v6639, %v6679
    %v6681 = vpop.f32.mrb[0].mxu0
    %v6682 = vpop.f32.mrb[0].mxu0
    %6683 = vdwg.mxu0
    %6684 = vmatprep.subr.bf16.mxu0 %v5246
    %6685 = vmatpush1.bf16.msra.mxu0 %v5245
    %6686 = vmatprep.subr.bf16.mxu0 %v5254
    %6687 = vmatpush1.bf16.msra.mxu0 %v5253
    %6688 = vmatprep.subr.bf16.mxu0 %v5262
    %6689 = vmatpush1.bf16.msra.mxu0 %v5261
    %6690 = vmatprep.subr.bf16.mxu0 %v5270
    %6691 = vmatpush1.bf16.msra.mxu0 %v5269
    %6692 = vmatprep.subr.bf16.mxu0 %v5278
    %6693 = vmatpush1.bf16.msra.mxu0 %v5277
    %6694 = vmatprep.subr.bf16.mxu0 %v5286
    %6695 = vmatpush1.bf16.msra.mxu0 %v5285
    %6696 = vmatprep.subr.bf16.mxu0 %v5294
    %6697 = vmatpush1.bf16.msra.mxu0 %v5293
    %6698 = vmatprep.subr.bf16.mxu0 %v5302
    %6699 = vmatpush1.bf16.msra.mxu0 %v5301
    %6700 = vmatprep.subr.bf16.mxu0 %v5310
    %6701 = vmatpush1.bf16.msra.mxu0 %v5309
    %6702 = vmatprep.subr.bf16.mxu0 %v5318
    %6703 = vmatpush1.bf16.msra.mxu0 %v5317
    %6704 = vmatprep.subr.bf16.mxu0 %v5326
    %6705 = vmatpush1.bf16.msra.mxu0 %v5325
    %6706 = vmatprep.subr.bf16.mxu0 %v5334
    %6707 = vmatpush1.bf16.msra.mxu0 %v5333
    %6708 = vmatprep.subr.bf16.mxu0 %v5342
    %6709 = vmatpush1.bf16.msra.mxu0 %v5341
    %6710 = vmatprep.subr.bf16.mxu0 %v5350
    %6711 = vmatpush1.bf16.msra.mxu0 %v5349
    %6712 = vmatprep.subr.bf16.mxu0 %v5358
    %6713 = vmatpush1.bf16.msra.mxu0 %v5357
    %6714 = vmatprep.subr.bf16.mxu0 %v5366
    %6715 = vmatpush1.bf16.msra.mxu0 %v5365
    %6716 = vmatprep.mubr.bf16.mxu0 %v210
    %6717 = vmatmul.mubr.bf16.gmra.mrb[0].mxu0 %v209
    %v6718 = vpop.f32.mrb[0].mxu0
    %v6719 = vadd.f32 %v6678, %v6718
    %v6720 = vpop.f32.mrb[0].mxu0
    %v6721 = vadd.f32 %v6680, %v6720
    %v6722 = vpop.f32.mrb[0].mxu0
    %v6723 = vpop.f32.mrb[0].mxu0
    %6724 = vdwg.mxu0
    %6725 = vmatprep.subr.bf16.mxu0 %v4352
    %6726 = vmatpush1.bf16.msra.mxu0 %v4351
    %6727 = vmatprep.subr.bf16.mxu0 %v4360
    %6728 = vmatpush1.bf16.msra.mxu0 %v4359
    %6729 = vmatprep.subr.bf16.mxu0 %v4368
    %6730 = vmatpush1.bf16.msra.mxu0 %v4367
    %6731 = vmatprep.subr.bf16.mxu0 %v4376
    %6732 = vmatpush1.bf16.msra.mxu0 %v4375
    %6733 = vmatprep.subr.bf16.mxu0 %v4384
    %6734 = vmatpush1.bf16.msra.mxu0 %v4383
    %6735 = vmatprep.subr.bf16.mxu0 %v4392
    %6736 = vmatpush1.bf16.msra.mxu0 %v4391
    %6737 = vmatprep.subr.bf16.mxu0 %v4400
    %6738 = vmatpush1.bf16.msra.mxu0 %v4399
    %6739 = vmatprep.subr.bf16.mxu0 %v4408
    %6740 = vmatpush1.bf16.msra.mxu0 %v4407
    %6741 = vmatprep.subr.bf16.mxu0 %v4416
    %6742 = vmatpush1.bf16.msra.mxu0 %v4415
    %6743 = vmatprep.subr.bf16.mxu0 %v4424
    %6744 = vmatpush1.bf16.msra.mxu0 %v4423
    %6745 = vmatprep.subr.bf16.mxu0 %v4432
    %6746 = vmatpush1.bf16.msra.mxu0 %v4431
    %6747 = vmatprep.subr.bf16.mxu0 %v4440
    %6748 = vmatpush1.bf16.msra.mxu0 %v4439
    %6749 = vmatprep.subr.bf16.mxu0 %v4448
    %6750 = vmatpush1.bf16.msra.mxu0 %v4447
    %6751 = vmatprep.subr.bf16.mxu0 %v4456
    %6752 = vmatpush1.bf16.msra.mxu0 %v4455
    %6753 = vmatprep.subr.bf16.mxu0 %v4464
    %6754 = vmatpush1.bf16.msra.mxu0 %v4463
    %6755 = vmatprep.subr.bf16.mxu0 %v4472
    %6756 = vmatpush1.bf16.msra.mxu0 %v4471
    %6757 = vmatprep.mubr.bf16.mxu0 %v196
    %6758 = vmatmul.mubr.bf16.gmra.mrb[0].mxu0 %v195
    %v6759 = vpop.f32.mrb[0].mxu0
    %v6760 = vadd.f32 %v1248, %v6759
    %v6761 = vpop.f32.mrb[0].mxu0
    %v6762 = vadd.f32 %v1252, %v6761
    %v6763 = vpop.f32.mrb[0].mxu0
    %v6764 = vpop.f32.mrb[0].mxu0
    %6765 = vdwg.mxu0
    %6766 = vmatprep.subr.bf16.mxu0 %v4480
    %6767 = vmatpush1.bf16.msra.mxu0 %v4479
    %6768 = vmatprep.subr.bf16.mxu0 %v4488
    %6769 = vmatpush1.bf16.msra.mxu0 %v4487
    %6770 = vmatprep.subr.bf16.mxu0 %v4496
    %6771 = vmatpush1.bf16.msra.mxu0 %v4495
    %6772 = vmatprep.subr.bf16.mxu0 %v4504
    %6773 = vmatpush1.bf16.msra.mxu0 %v4503
    %6774 = vmatprep.subr.bf16.mxu0 %v4512
    %6775 = vmatpush1.bf16.msra.mxu0 %v4511
    %6776 = vmatprep.subr.bf16.mxu0 %v4520
    %6777 = vmatpush1.bf16.msra.mxu0 %v4519
    %6778 = vmatprep.subr.bf16.mxu0 %v4528
    %6779 = vmatpush1.bf16.msra.mxu0 %v4527
    %6780 = vmatprep.subr.bf16.mxu0 %v4536
    %6781 = vmatpush1.bf16.msra.mxu0 %v4535
    %6782 = vmatprep.subr.bf16.mxu0 %v4544
    %6783 = vmatpush1.bf16.msra.mxu0 %v4543
    %6784 = vmatprep.subr.bf16.mxu0 %v4552
    %6785 = vmatpush1.bf16.msra.mxu0 %v4551
    %6786 = vmatprep.subr.bf16.mxu0 %v4560
    %6787 = vmatpush1.bf16.msra.mxu0 %v4559
    %6788 = vmatprep.subr.bf16.mxu0 %v4568
    %6789 = vmatpush1.bf16.msra.mxu0 %v4567
    %6790 = vmatprep.subr.bf16.mxu0 %v4576
    %6791 = vmatpush1.bf16.msra.mxu0 %v4575
    %6792 = vmatprep.subr.bf16.mxu0 %v4584
    %6793 = vmatpush1.bf16.msra.mxu0 %v4583
    %6794 = vmatprep.subr.bf16.mxu0 %v4592
    %6795 = vmatpush1.bf16.msra.mxu0 %v4591
    %6796 = vmatprep.subr.bf16.mxu0 %v4600
    %6797 = vmatpush1.bf16.msra.mxu0 %v4599
    %6798 = vmatprep.mubr.bf16.mxu0 %v198
    %6799 = vmatmul.mubr.bf16.gmra.mrb[0].mxu0 %v197
    %v6800 = vpop.f32.mrb[0].mxu0
    %v6801 = vadd.f32 %v6760, %v6800
    %v6802 = vpop.f32.mrb[0].mxu0
    %v6803 = vadd.f32 %v6762, %v6802
    %v6804 = vpop.f32.mrb[0].mxu0
    %v6805 = vpop.f32.mrb[0].mxu0
    %6806 = vdwg.mxu0
    %6807 = vmatprep.subr.bf16.mxu0 %v4608
    %6808 = vmatpush1.bf16.msra.mxu0 %v4607
    %6809 = vmatprep.subr.bf16.mxu0 %v4616
    %6810 = vmatpush1.bf16.msra.mxu0 %v4615
    %6811 = vmatprep.subr.bf16.mxu0 %v4624
    %6812 = vmatpush1.bf16.msra.mxu0 %v4623
    %6813 = vmatprep.subr.bf16.mxu0 %v4632
    %6814 = vmatpush1.bf16.msra.mxu0 %v4631
    %6815 = vmatprep.subr.bf16.mxu0 %v4640
    %6816 = vmatpush1.bf16.msra.mxu0 %v4639
    %6817 = vmatprep.subr.bf16.mxu0 %v4648
    %6818 = vmatpush1.bf16.msra.mxu0 %v4647
    %6819 = vmatprep.subr.bf16.mxu0 %v4656
    %6820 = vmatpush1.bf16.msra.mxu0 %v4655
    %6821 = vmatprep.subr.bf16.mxu0 %v4664
    %6822 = vmatpush1.bf16.msra.mxu0 %v4663
    %6823 = vmatprep.subr.bf16.mxu0 %v4672
    %6824 = vmatpush1.bf16.msra.mxu0 %v4671
    %6825 = vmatprep.subr.bf16.mxu0 %v4680
    %6826 = vmatpush1.bf16.msra.mxu0 %v4679
    %6827 = vmatprep.subr.bf16.mxu0 %v4688
    %6828 = vmatpush1.bf16.msra.mxu0 %v4687
    %6829 = vmatprep.subr.bf16.mxu0 %v4696
    %6830 = vmatpush1.bf16.msra.mxu0 %v4695
    %6831 = vmatprep.subr.bf16.mxu0 %v4704
    %6832 = vmatpush1.bf16.msra.mxu0 %v4703
    %6833 = vmatprep.subr.bf16.mxu0 %v4712
    %6834 = vmatpush1.bf16.msra.mxu0 %v4711
    %6835 = vmatprep.subr.bf16.mxu0 %v4720
    %6836 = vmatpush1.bf16.msra.mxu0 %v4719
    %6837 = vmatprep.subr.bf16.mxu0 %v4728
    %6838 = vmatpush1.bf16.msra.mxu0 %v4727
    %6839 = vmatprep.mubr.bf16.mxu0 %v200
    %6840 = vmatmul.mubr.bf16.gmra.mrb[0].mxu0 %v199
    %v6841 = vpop.f32.mrb[0].mxu0
    %v6842 = vadd.f32 %v6801, %v6841
    %v6843 = vpop.f32.mrb[0].mxu0
    %v6844 = vadd.f32 %v6803, %v6843
    %v6845 = vpop.f32.mrb[0].mxu0
    %v6846 = vpop.f32.mrb[0].mxu0
    %6847 = vdwg.mxu0
    %6848 = vmatprep.subr.bf16.mxu0 %v4736
    %6849 = vmatpush1.bf16.msra.mxu0 %v4735
    %6850 = vmatprep.subr.bf16.mxu0 %v4744
    %6851 = vmatpush1.bf16.msra.mxu0 %v4743
    %6852 = vmatprep.subr.bf16.mxu0 %v4752
    %6853 = vmatpush1.bf16.msra.mxu0 %v4751
    %6854 = vmatprep.subr.bf16.mxu0 %v4760
    %6855 = vmatpush1.bf16.msra.mxu0 %v4759
    %6856 = vmatprep.subr.bf16.mxu0 %v4768
    %6857 = vmatpush1.bf16.msra.mxu0 %v4767
    %6858 = vmatprep.subr.bf16.mxu0 %v4776
    %6859 = vmatpush1.bf16.msra.mxu0 %v4775
    %6860 = vmatprep.subr.bf16.mxu0 %v4784
    %6861 = vmatpush1.bf16.msra.mxu0 %v4783
    %6862 = vmatprep.subr.bf16.mxu0 %v4792
    %6863 = vmatpush1.bf16.msra.mxu0 %v4791
    %6864 = vmatprep.subr.bf16.mxu0 %v4800
    %6865 = vmatpush1.bf16.msra.mxu0 %v4799
    %6866 = vmatprep.subr.bf16.mxu0 %v4808
    %6867 = vmatpush1.bf16.msra.mxu0 %v4807
    %6868 = vmatprep.subr.bf16.mxu0 %v4816
    %6869 = vmatpush1.bf16.msra.mxu0 %v4815
    %6870 = vmatprep.subr.bf16.mxu0 %v4824
    %6871 = vmatpush1.bf16.msra.mxu0 %v4823
    %6872 = vmatprep.subr.bf16.mxu0 %v4832
    %6873 = vmatpush1.bf16.msra.mxu0 %v4831
    %6874 = vmatprep.subr.bf16.mxu0 %v4840
    %6875 = vmatpush1.bf16.msra.mxu0 %v4839
    %6876 = vmatprep.subr.bf16.mxu0 %v4848
    %6877 = vmatpush1.bf16.msra.mxu0 %v4847
    %6878 = vmatprep.subr.bf16.mxu0 %v4856
    %6879 = vmatpush1.bf16.msra.mxu0 %v4855
    %6880 = vmatprep.mubr.bf16.mxu0 %v202
    %6881 = vmatmul.mubr.bf16.gmra.mrb[0].mxu0 %v201
    %v6882 = vpop.f32.mrb[0].mxu0
    %v6883 = vadd.f32 %v6842, %v6882
    %v6884 = vpop.f32.mrb[0].mxu0
    %v6885 = vadd.f32 %v6844, %v6884
    %v6886 = vpop.f32.mrb[0].mxu0
    %v6887 = vpop.f32.mrb[0].mxu0
    %6888 = vdwg.mxu0
    %6889 = vmatprep.subr.bf16.mxu0 %v4864
    %6890 = vmatpush1.bf16.msra.mxu0 %v4863
    %6891 = vmatprep.subr.bf16.mxu0 %v4872
    %6892 = vmatpush1.bf16.msra.mxu0 %v4871
    %6893 = vmatprep.subr.bf16.mxu0 %v4880
    %6894 = vmatpush1.bf16.msra.mxu0 %v4879
    %6895 = vmatprep.subr.bf16.mxu0 %v4888
    %6896 = vmatpush1.bf16.msra.mxu0 %v4887
    %6897 = vmatprep.subr.bf16.mxu0 %v4896
    %6898 = vmatpush1.bf16.msra.mxu0 %v4895
    %6899 = vmatprep.subr.bf16.mxu0 %v4904
    %6900 = vmatpush1.bf16.msra.mxu0 %v4903
    %6901 = vmatprep.subr.bf16.mxu0 %v4912
    %6902 = vmatpush1.bf16.msra.mxu0 %v4911
    %6903 = vmatprep.subr.bf16.mxu0 %v4920
    %6904 = vmatpush1.bf16.msra.mxu0 %v4919
    %6905 = vmatprep.subr.bf16.mxu0 %v4928
    %6906 = vmatpush1.bf16.msra.mxu0 %v4927
    %6907 = vmatprep.subr.bf16.mxu0 %v4936
    %6908 = vmatpush1.bf16.msra.mxu0 %v4935
    %6909 = vmatprep.subr.bf16.mxu0 %v4944
    %6910 = vmatpush1.bf16.msra.mxu0 %v4943
    %6911 = vmatprep.subr.bf16.mxu0 %v4952
    %6912 = vmatpush1.bf16.msra.mxu0 %v4951
    %6913 = vmatprep.subr.bf16.mxu0 %v4960
    %6914 = vmatpush1.bf16.msra.mxu0 %v4959
    %6915 = vmatprep.subr.bf16.mxu0 %v4968
    %6916 = vmatpush1.bf16.msra.mxu0 %v4967
    %6917 = vmatprep.subr.bf16.mxu0 %v4976
    %6918 = vmatpush1.bf16.msra.mxu0 %v4975
    %6919 = vmatprep.subr.bf16.mxu0 %v4984
    %6920 = vmatpush1.bf16.msra.mxu0 %v4983
    %6921 = vmatprep.mubr.bf16.mxu0 %v204
    %6922 = vmatmul.mubr.bf16.gmra.mrb[0].mxu0 %v203
    %v6923 = vpop.f32.mrb[0].mxu0
    %v6924 = vadd.f32 %v6883, %v6923
    %v6925 = vpop.f32.mrb[0].mxu0
    %v6926 = vadd.f32 %v6885, %v6925
    %v6927 = vpop.f32.mrb[0].mxu0
    %v6928 = vpop.f32.mrb[0].mxu0
    %6929 = vdwg.mxu0
    %6930 = vmatprep.subr.bf16.mxu0 %v4992
    %6931 = vmatpush1.bf16.msra.mxu0 %v4991
    %6932 = vmatprep.subr.bf16.mxu0 %v5000
    %6933 = vmatpush1.bf16.msra.mxu0 %v4999
    %6934 = vmatprep.subr.bf16.mxu0 %v5008
    %6935 = vmatpush1.bf16.msra.mxu0 %v5007
    %6936 = vmatprep.subr.bf16.mxu0 %v5016
    %6937 = vmatpush1.bf16.msra.mxu0 %v5015
    %6938 = vmatprep.subr.bf16.mxu0 %v5024
    %6939 = vmatpush1.bf16.msra.mxu0 %v5023
    %6940 = vmatprep.subr.bf16.mxu0 %v5032
    %6941 = vmatpush1.bf16.msra.mxu0 %v5031
    %6942 = vmatprep.subr.bf16.mxu0 %v5040
    %6943 = vmatpush1.bf16.msra.mxu0 %v5039
    %6944 = vmatprep.subr.bf16.mxu0 %v5048
    %6945 = vmatpush1.bf16.msra.mxu0 %v5047
    %6946 = vmatprep.subr.bf16.mxu0 %v5056
    %6947 = vmatpush1.bf16.msra.mxu0 %v5055
    %6948 = vmatprep.subr.bf16.mxu0 %v5064
    %6949 = vmatpush1.bf16.msra.mxu0 %v5063
    %6950 = vmatprep.subr.bf16.mxu0 %v5072
    %6951 = vmatpush1.bf16.msra.mxu0 %v5071
    %6952 = vmatprep.subr.bf16.mxu0 %v5080
    %6953 = vmatpush1.bf16.msra.mxu0 %v5079
    %6954 = vmatprep.subr.bf16.mxu0 %v5088
    %6955 = vmatpush1.bf16.msra.mxu0 %v5087
    %6956 = vmatprep.subr.bf16.mxu0 %v5096
    %6957 = vmatpush1.bf16.msra.mxu0 %v5095
    %6958 = vmatprep.subr.bf16.mxu0 %v5104
    %6959 = vmatpush1.bf16.msra.mxu0 %v5103
    %6960 = vmatprep.subr.bf16.mxu0 %v5112
    %6961 = vmatpush1.bf16.msra.mxu0 %v5111
    %6962 = vmatprep.mubr.bf16.mxu0 %v206
    %6963 = vmatmul.mubr.bf16.gmra.mrb[0].mxu0 %v205
    %v6964 = vpop.f32.mrb[0].mxu0
    %v6965 = vadd.f32 %v6924, %v6964
    %v6966 = vpop.f32.mrb[0].mxu0
    %v6967 = vadd.f32 %v6926, %v6966
    %v6968 = vpop.f32.mrb[0].mxu0
    %v6969 = vpop.f32.mrb[0].mxu0
    %6970 = vdwg.mxu0
    %6971 = vmatprep.subr.bf16.mxu0 %v5120
    %6972 = vmatpush1.bf16.msra.mxu0 %v5119
    %6973 = vmatprep.subr.bf16.mxu0 %v5128
    %6974 = vmatpush1.bf16.msra.mxu0 %v5127
    %6975 = vmatprep.subr.bf16.mxu0 %v5136
    %6976 = vmatpush1.bf16.msra.mxu0 %v5135
    %6977 = vmatprep.subr.bf16.mxu0 %v5144
    %6978 = vmatpush1.bf16.msra.mxu0 %v5143
    %6979 = vmatprep.subr.bf16.mxu0 %v5152
    %6980 = vmatpush1.bf16.msra.mxu0 %v5151
    %6981 = vmatprep.subr.bf16.mxu0 %v5160
    %6982 = vmatpush1.bf16.msra.mxu0 %v5159
    %6983 = vmatprep.subr.bf16.mxu0 %v5168
    %6984 = vmatpush1.bf16.msra.mxu0 %v5167
    %6985 = vmatprep.subr.bf16.mxu0 %v5176
    %6986 = vmatpush1.bf16.msra.mxu0 %v5175
    %6987 = vmatprep.subr.bf16.mxu0 %v5184
    %6988 = vmatpush1.bf16.msra.mxu0 %v5183
    %6989 = vmatprep.subr.bf16.mxu0 %v5192
    %6990 = vmatpush1.bf16.msra.mxu0 %v5191
    %6991 = vmatprep.subr.bf16.mxu0 %v5200
    %6992 = vmatpush1.bf16.msra.mxu0 %v5199
    %6993 = vmatprep.subr.bf16.mxu0 %v5208
    %6994 = vmatpush1.bf16.msra.mxu0 %v5207
    %6995 = vmatprep.subr.bf16.mxu0 %v5216
    %6996 = vmatpush1.bf16.msra.mxu0 %v5215
    %6997 = vmatprep.subr.bf16.mxu0 %v5224
    %6998 = vmatpush1.bf16.msra.mxu0 %v5223
    %6999 = vmatprep.subr.bf16.mxu0 %v5232
    %7000 = vmatpush1.bf16.msra.mxu0 %v5231
    %7001 = vmatprep.subr.bf16.mxu0 %v5240
    %7002 = vmatpush1.bf16.msra.mxu0 %v5239
    %7003 = vmatprep.mubr.bf16.mxu0 %v208
    %7004 = vmatmul.mubr.bf16.gmra.mrb[0].mxu0 %v207
    %v7005 = vpop.f32.mrb[0].mxu0
    %v7006 = vadd.f32 %v6965, %v7005
    %v7007 = vpop.f32.mrb[0].mxu0
    %v7008 = vadd.f32 %v6967, %v7007
    %v7009 = vpop.f32.mrb[0].mxu0
    %v7010 = vpop.f32.mrb[0].mxu0
    %7011 = vdwg.mxu0
    %7012 = vmatprep.subr.bf16.mxu0 %v5248
    %7013 = vmatpush1.bf16.msra.mxu0 %v5247
    %7014 = vmatprep.subr.bf16.mxu0 %v5256
    %7015 = vmatpush1.bf16.msra.mxu0 %v5255
    %7016 = vmatprep.subr.bf16.mxu0 %v5264
    %7017 = vmatpush1.bf16.msra.mxu0 %v5263
    %7018 = vmatprep.subr.bf16.mxu0 %v5272
    %7019 = vmatpush1.bf16.msra.mxu0 %v5271
    %7020 = vmatprep.subr.bf16.mxu0 %v5280
    %7021 = vmatpush1.bf16.msra.mxu0 %v5279
    %7022 = vmatprep.subr.bf16.mxu0 %v5288
    %7023 = vmatpush1.bf16.msra.mxu0 %v5287
    %7024 = vmatprep.subr.bf16.mxu0 %v5296
    %7025 = vmatpush1.bf16.msra.mxu0 %v5295
    %7026 = vmatprep.subr.bf16.mxu0 %v5304
    %7027 = vmatpush1.bf16.msra.mxu0 %v5303
    %7028 = vmatprep.subr.bf16.mxu0 %v5312
    %7029 = vmatpush1.bf16.msra.mxu0 %v5311
    %7030 = vmatprep.subr.bf16.mxu0 %v5320
    %7031 = vmatpush1.bf16.msra.mxu0 %v5319
    %7032 = vmatprep.subr.bf16.mxu0 %v5328
    %7033 = vmatpush1.bf16.msra.mxu0 %v5327
    %7034 = vmatprep.subr.bf16.mxu0 %v5336
    %7035 = vmatpush1.bf16.msra.mxu0 %v5335
    %7036 = vmatprep.subr.bf16.mxu0 %v5344
    %7037 = vmatpush1.bf16.msra.mxu0 %v5343
    %7038 = vmatprep.subr.bf16.mxu0 %v5352
    %7039 = vmatpush1.bf16.msra.mxu0 %v5351
    %7040 = vmatprep.subr.bf16.mxu0 %v5360
    %7041 = vmatpush1.bf16.msra.mxu0 %v5359
    %7042 = vmatprep.subr.bf16.mxu0 %v5368
    %7043 = vmatpush1.bf16.msra.mxu0 %v5367
    %7044 = vmatprep.mubr.bf16.mxu0 %v210
    %7045 = vmatmul.mubr.bf16.gmra.mrb[0].mxu0 %v209
    %v7046 = vpop.f32.mrb[0].mxu0
    %v7047 = vadd.f32 %v7006, %v7046
    %v7048 = vpop.f32.mrb[0].mxu0
    %v7049 = vadd.f32 %v7008, %v7048
    %v7050 = vpop.f32.mrb[0].mxu0
    %v7051 = vpop.f32.mrb[0].mxu0
    %7052 = vdwg.mxu0
    %7053 = vmatprep.subr.bf16.mxu0 %v4354
    %7054 = vmatpush1.bf16.msra.mxu0 %v4353
    %7055 = vmatprep.subr.bf16.mxu0 %v4362
    %7056 = vmatpush1.bf16.msra.mxu0 %v4361
    %7057 = vmatprep.subr.bf16.mxu0 %v4370
    %7058 = vmatpush1.bf16.msra.mxu0 %v4369
    %7059 = vmatprep.subr.bf16.mxu0 %v4378
    %7060 = vmatpush1.bf16.msra.mxu0 %v4377
    %7061 = vmatprep.subr.bf16.mxu0 %v4386
    %7062 = vmatpush1.bf16.msra.mxu0 %v4385
    %7063 = vmatprep.subr.bf16.mxu0 %v4394
    %7064 = vmatpush1.bf16.msra.mxu0 %v4393
    %7065 = vmatprep.subr.bf16.mxu0 %v4402
    %7066 = vmatpush1.bf16.msra.mxu0 %v4401
    %7067 = vmatprep.subr.bf16.mxu0 %v4410
    %7068 = vmatpush1.bf16.msra.mxu0 %v4409
    %7069 = vmatprep.subr.bf16.mxu0 %v4418
    %7070 = vmatpush1.bf16.msra.mxu0 %v4417
    %7071 = vmatprep.subr.bf16.mxu0 %v4426
    %7072 = vmatpush1.bf16.msra.mxu0 %v4425
    %7073 = vmatprep.subr.bf16.mxu0 %v4434
    %7074 = vmatpush1.bf16.msra.mxu0 %v4433
    %7075 = vmatprep.subr.bf16.mxu0 %v4442
    %7076 = vmatpush1.bf16.msra.mxu0 %v4441
    %7077 = vmatprep.subr.bf16.mxu0 %v4450
    %7078 = vmatpush1.bf16.msra.mxu0 %v4449
    %7079 = vmatprep.subr.bf16.mxu0 %v4458
    %7080 = vmatpush1.bf16.msra.mxu0 %v4457
    %7081 = vmatprep.subr.bf16.mxu0 %v4466
    %7082 = vmatpush1.bf16.msra.mxu0 %v4465
    %7083 = vmatprep.subr.bf16.mxu0 %v4474
    %7084 = vmatpush1.bf16.msra.mxu0 %v4473
    %7085 = vmatprep.mubr.bf16.mxu0 %v196
    %7086 = vmatmul.mubr.bf16.gmra.mrb[0].mxu0 %v195
    %v7087 = vpop.f32.mrb[0].mxu0
    %v7088 = vadd.f32 %v1256, %v7087
    %v7089 = vpop.f32.mrb[0].mxu0
    %v7090 = vadd.f32 %v1260, %v7089
    %v7091 = vpop.f32.mrb[0].mxu0
    %v7092 = vpop.f32.mrb[0].mxu0
    %7093 = vdwg.mxu0
    %7094 = vmatprep.subr.bf16.mxu0 %v4482
    %7095 = vmatpush1.bf16.msra.mxu0 %v4481
    %7096 = vmatprep.subr.bf16.mxu0 %v4490
    %7097 = vmatpush1.bf16.msra.mxu0 %v4489
    %7098 = vmatprep.subr.bf16.mxu0 %v4498
    %7099 = vmatpush1.bf16.msra.mxu0 %v4497
    %7100 = vmatprep.subr.bf16.mxu0 %v4506
    %7101 = vmatpush1.bf16.msra.mxu0 %v4505
    %7102 = vmatprep.subr.bf16.mxu0 %v4514
    %7103 = vmatpush1.bf16.msra.mxu0 %v4513
    %7104 = vmatprep.subr.bf16.mxu0 %v4522
    %7105 = vmatpush1.bf16.msra.mxu0 %v4521
    %7106 = vmatprep.subr.bf16.mxu0 %v4530
    %7107 = vmatpush1.bf16.msra.mxu0 %v4529
    %7108 = vmatprep.subr.bf16.mxu0 %v4538
    %7109 = vmatpush1.bf16.msra.mxu0 %v4537
    %7110 = vmatprep.subr.bf16.mxu0 %v4546
    %7111 = vmatpush1.bf16.msra.mxu0 %v4545
    %7112 = vmatprep.subr.bf16.mxu0 %v4554
    %7113 = vmatpush1.bf16.msra.mxu0 %v4553
    %7114 = vmatprep.subr.bf16.mxu0 %v4562
    %7115 = vmatpush1.bf16.msra.mxu0 %v4561
    %7116 = vmatprep.subr.bf16.mxu0 %v4570
    %7117 = vmatpush1.bf16.msra.mxu0 %v4569
    %7118 = vmatprep.subr.bf16.mxu0 %v4578
    %7119 = vmatpush1.bf16.msra.mxu0 %v4577
    %7120 = vmatprep.subr.bf16.mxu0 %v4586
    %7121 = vmatpush1.bf16.msra.mxu0 %v4585
    %7122 = vmatprep.subr.bf16.mxu0 %v4594
    %7123 = vmatpush1.bf16.msra.mxu0 %v4593
    %7124 = vmatprep.subr.bf16.mxu0 %v4602
    %7125 = vmatpush1.bf16.msra.mxu0 %v4601
    %7126 = vmatprep.mubr.bf16.mxu0 %v198
    %7127 = vmatmul.mubr.bf16.gmra.mrb[0].mxu0 %v197
    %v7128 = vpop.f32.mrb[0].mxu0
    %v7129 = vadd.f32 %v7088, %v7128
    %v7130 = vpop.f32.mrb[0].mxu0
    %v7131 = vadd.f32 %v7090, %v7130
    %v7132 = vpop.f32.mrb[0].mxu0
    %v7133 = vpop.f32.mrb[0].mxu0
    %7134 = vdwg.mxu0
    %7135 = vmatprep.subr.bf16.mxu0 %v4610
    %7136 = vmatpush1.bf16.msra.mxu0 %v4609
    %7137 = vmatprep.subr.bf16.mxu0 %v4618
    %7138 = vmatpush1.bf16.msra.mxu0 %v4617
    %7139 = vmatprep.subr.bf16.mxu0 %v4626
    %7140 = vmatpush1.bf16.msra.mxu0 %v4625
    %7141 = vmatprep.subr.bf16.mxu0 %v4634
    %7142 = vmatpush1.bf16.msra.mxu0 %v4633
    %7143 = vmatprep.subr.bf16.mxu0 %v4642
    %7144 = vmatpush1.bf16.msra.mxu0 %v4641
    %7145 = vmatprep.subr.bf16.mxu0 %v4650
    %7146 = vmatpush1.bf16.msra.mxu0 %v4649
    %7147 = vmatprep.subr.bf16.mxu0 %v4658
    %7148 = vmatpush1.bf16.msra.mxu0 %v4657
    %7149 = vmatprep.subr.bf16.mxu0 %v4666
    %7150 = vmatpush1.bf16.msra.mxu0 %v4665
    %7151 = vmatprep.subr.bf16.mxu0 %v4674
    %7152 = vmatpush1.bf16.msra.mxu0 %v4673
    %7153 = vmatprep.subr.bf16.mxu0 %v4682
    %7154 = vmatpush1.bf16.msra.mxu0 %v4681
    %7155 = vmatprep.subr.bf16.mxu0 %v4690
    %7156 = vmatpush1.bf16.msra.mxu0 %v4689
    %7157 = vmatprep.subr.bf16.mxu0 %v4698
    %7158 = vmatpush1.bf16.msra.mxu0 %v4697
    %7159 = vmatprep.subr.bf16.mxu0 %v4706
    %7160 = vmatpush1.bf16.msra.mxu0 %v4705
    %7161 = vmatprep.subr.bf16.mxu0 %v4714
    %7162 = vmatpush1.bf16.msra.mxu0 %v4713
    %7163 = vmatprep.subr.bf16.mxu0 %v4722
    %7164 = vmatpush1.bf16.msra.mxu0 %v4721
    %7165 = vmatprep.subr.bf16.mxu0 %v4730
    %7166 = vmatpush1.bf16.msra.mxu0 %v4729
    %7167 = vmatprep.mubr.bf16.mxu0 %v200
    %7168 = vmatmul.mubr.bf16.gmra.mrb[0].mxu0 %v199
    %v7169 = vpop.f32.mrb[0].mxu0
    %v7170 = vadd.f32 %v7129, %v7169
    %v7171 = vpop.f32.mrb[0].mxu0
    %v7172 = vadd.f32 %v7131, %v7171
    %v7173 = vpop.f32.mrb[0].mxu0
    %v7174 = vpop.f32.mrb[0].mxu0
    %7175 = vdwg.mxu0
    %7176 = vmatprep.subr.bf16.mxu0 %v4738
    %7177 = vmatpush1.bf16.msra.mxu0 %v4737
    %7178 = vmatprep.subr.bf16.mxu0 %v4746
    %7179 = vmatpush1.bf16.msra.mxu0 %v4745
    %7180 = vmatprep.subr.bf16.mxu0 %v4754
    %7181 = vmatpush1.bf16.msra.mxu0 %v4753
    %7182 = vmatprep.subr.bf16.mxu0 %v4762
    %7183 = vmatpush1.bf16.msra.mxu0 %v4761
    %7184 = vmatprep.subr.bf16.mxu0 %v4770
    %7185 = vmatpush1.bf16.msra.mxu0 %v4769
    %7186 = vmatprep.subr.bf16.mxu0 %v4778
    %7187 = vmatpush1.bf16.msra.mxu0 %v4777
    %7188 = vmatprep.subr.bf16.mxu0 %v4786
    %7189 = vmatpush1.bf16.msra.mxu0 %v4785
    %7190 = vmatprep.subr.bf16.mxu0 %v4794
    %7191 = vmatpush1.bf16.msra.mxu0 %v4793
    %7192 = vmatprep.subr.bf16.mxu0 %v4802
    %7193 = vmatpush1.bf16.msra.mxu0 %v4801
    %7194 = vmatprep.subr.bf16.mxu0 %v4810
    %7195 = vmatpush1.bf16.msra.mxu0 %v4809
    %7196 = vmatprep.subr.bf16.mxu0 %v4818
    %7197 = vmatpush1.bf16.msra.mxu0 %v4817
    %7198 = vmatprep.subr.bf16.mxu0 %v4826
    %7199 = vmatpush1.bf16.msra.mxu0 %v4825
    %7200 = vmatprep.subr.bf16.mxu0 %v4834
    %7201 = vmatpush1.bf16.msra.mxu0 %v4833
    %7202 = vmatprep.subr.bf16.mxu0 %v4842
    %7203 = vmatpush1.bf16.msra.mxu0 %v4841
    %7204 = vmatprep.subr.bf16.mxu0 %v4850
    %7205 = vmatpush1.bf16.msra.mxu0 %v4849
    %7206 = vmatprep.subr.bf16.mxu0 %v4858
    %7207 = vmatpush1.bf16.msra.mxu0 %v4857
    %7208 = vmatprep.mubr.bf16.mxu0 %v202
    %7209 = vmatmul.mubr.bf16.gmra.mrb[0].mxu0 %v201
    %v7210 = vpop.f32.mrb[0].mxu0
    %v7211 = vadd.f32 %v7170, %v7210
    %v7212 = vpop.f32.mrb[0].mxu0
    %v7213 = vadd.f32 %v7172, %v7212
    %v7214 = vpop.f32.mrb[0].mxu0
    %v7215 = vpop.f32.mrb[0].mxu0
    %7216 = vdwg.mxu0
    %7217 = vmatprep.subr.bf16.mxu0 %v4866
    %7218 = vmatpush1.bf16.msra.mxu0 %v4865
    %7219 = vmatprep.subr.bf16.mxu0 %v4874
    %7220 = vmatpush1.bf16.msra.mxu0 %v4873
    %7221 = vmatprep.subr.bf16.mxu0 %v4882
    %7222 = vmatpush1.bf16.msra.mxu0 %v4881
    %7223 = vmatprep.subr.bf16.mxu0 %v4890
    %7224 = vmatpush1.bf16.msra.mxu0 %v4889
    %7225 = vmatprep.subr.bf16.mxu0 %v4898
    %7226 = vmatpush1.bf16.msra.mxu0 %v4897
    %7227 = vmatprep.subr.bf16.mxu0 %v4906
    %7228 = vmatpush1.bf16.msra.mxu0 %v4905
    %7229 = vmatprep.subr.bf16.mxu0 %v4914
    %7230 = vmatpush1.bf16.msra.mxu0 %v4913
    %7231 = vmatprep.subr.bf16.mxu0 %v4922
    %7232 = vmatpush1.bf16.msra.mxu0 %v4921
    %7233 = vmatprep.subr.bf16.mxu0 %v4930
    %7234 = vmatpush1.bf16.msra.mxu0 %v4929
    %7235 = vmatprep.subr.bf16.mxu0 %v4938
    %7236 = vmatpush1.bf16.msra.mxu0 %v4937
    %7237 = vmatprep.subr.bf16.mxu0 %v4946
    %7238 = vmatpush1.bf16.msra.mxu0 %v4945
    %7239 = vmatprep.subr.bf16.mxu0 %v4954
    %7240 = vmatpush1.bf16.msra.mxu0 %v4953
    %7241 = vmatprep.subr.bf16.mxu0 %v4962
    %7242 = vmatpush1.bf16.msra.mxu0 %v4961
    %7243 = vmatprep.subr.bf16.mxu0 %v4970
    %7244 = vmatpush1.bf16.msra.mxu0 %v4969
    %7245 = vmatprep.subr.bf16.mxu0 %v4978
    %7246 = vmatpush1.bf16.msra.mxu0 %v4977
    %7247 = vmatprep.subr.bf16.mxu0 %v4986
    %7248 = vmatpush1.bf16.msra.mxu0 %v4985
    %7249 = vmatprep.mubr.bf16.mxu0 %v204
    %7250 = vmatmul.mubr.bf16.gmra.mrb[0].mxu0 %v203
    %v7251 = vpop.f32.mrb[0].mxu0
    %v7252 = vadd.f32 %v7211, %v7251
    %v7253 = vpop.f32.mrb[0].mxu0
    %v7254 = vadd.f32 %v7213, %v7253
    %v7255 = vpop.f32.mrb[0].mxu0
    %v7256 = vpop.f32.mrb[0].mxu0
    %7257 = vdwg.mxu0
    %7258 = vmatprep.subr.bf16.mxu0 %v4994
    %7259 = vmatpush1.bf16.msra.mxu0 %v4993
    %7260 = vmatprep.subr.bf16.mxu0 %v5002
    %7261 = vmatpush1.bf16.msra.mxu0 %v5001
    %7262 = vmatprep.subr.bf16.mxu0 %v5010
    %7263 = vmatpush1.bf16.msra.mxu0 %v5009
    %7264 = vmatprep.subr.bf16.mxu0 %v5018
    %7265 = vmatpush1.bf16.msra.mxu0 %v5017
    %7266 = vmatprep.subr.bf16.mxu0 %v5026
    %7267 = vmatpush1.bf16.msra.mxu0 %v5025
    %7268 = vmatprep.subr.bf16.mxu0 %v5034
    %7269 = vmatpush1.bf16.msra.mxu0 %v5033
    %7270 = vmatprep.subr.bf16.mxu0 %v5042
    %7271 = vmatpush1.bf16.msra.mxu0 %v5041
    %7272 = vmatprep.subr.bf16.mxu0 %v5050
    %7273 = vmatpush1.bf16.msra.mxu0 %v5049
    %7274 = vmatprep.subr.bf16.mxu0 %v5058
    %7275 = vmatpush1.bf16.msra.mxu0 %v5057
    %7276 = vmatprep.subr.bf16.mxu0 %v5066
    %7277 = vmatpush1.bf16.msra.mxu0 %v5065
    %7278 = vmatprep.subr.bf16.mxu0 %v5074
    %7279 = vmatpush1.bf16.msra.mxu0 %v5073
    %7280 = vmatprep.subr.bf16.mxu0 %v5082
    %7281 = vmatpush1.bf16.msra.mxu0 %v5081
    %7282 = vmatprep.subr.bf16.mxu0 %v5090
    %7283 = vmatpush1.bf16.msra.mxu0 %v5089
    %7284 = vmatprep.subr.bf16.mxu0 %v5098
    %7285 = vmatpush1.bf16.msra.mxu0 %v5097
    %7286 = vmatprep.subr.bf16.mxu0 %v5106
    %7287 = vmatpush1.bf16.msra.mxu0 %v5105
    %7288 = vmatprep.subr.bf16.mxu0 %v5114
    %7289 = vmatpush1.bf16.msra.mxu0 %v5113
    %7290 = vmatprep.mubr.bf16.mxu0 %v206
    %7291 = vmatmul.mubr.bf16.gmra.mrb[0].mxu0 %v205
    %v7292 = vpop.f32.mrb[0].mxu0
    %v7293 = vadd.f32 %v7252, %v7292
    %v7294 = vpop.f32.mrb[0].mxu0
    %v7295 = vadd.f32 %v7254, %v7294
    %v7296 = vpop.f32.mrb[0].mxu0
    %v7297 = vpop.f32.mrb[0].mxu0
    %7298 = vdwg.mxu0
    %7299 = vmatprep.subr.bf16.mxu0 %v5122
    %7300 = vmatpush1.bf16.msra.mxu0 %v5121
    %7301 = vmatprep.subr.bf16.mxu0 %v5130
    %7302 = vmatpush1.bf16.msra.mxu0 %v5129
    %7303 = vmatprep.subr.bf16.mxu0 %v5138
    %7304 = vmatpush1.bf16.msra.mxu0 %v5137
    %7305 = vmatprep.subr.bf16.mxu0 %v5146
    %7306 = vmatpush1.bf16.msra.mxu0 %v5145
    %7307 = vmatprep.subr.bf16.mxu0 %v5154
    %7308 = vmatpush1.bf16.msra.mxu0 %v5153
    %7309 = vmatprep.subr.bf16.mxu0 %v5162
    %7310 = vmatpush1.bf16.msra.mxu0 %v5161
    %7311 = vmatprep.subr.bf16.mxu0 %v5170
    %7312 = vmatpush1.bf16.msra.mxu0 %v5169
    %7313 = vmatprep.subr.bf16.mxu0 %v5178
    %7314 = vmatpush1.bf16.msra.mxu0 %v5177
    %7315 = vmatprep.subr.bf16.mxu0 %v5186
    %7316 = vmatpush1.bf16.msra.mxu0 %v5185
    %7317 = vmatprep.subr.bf16.mxu0 %v5194
    %7318 = vmatpush1.bf16.msra.mxu0 %v5193
    %7319 = vmatprep.subr.bf16.mxu0 %v5202
    %7320 = vmatpush1.bf16.msra.mxu0 %v5201
    %7321 = vmatprep.subr.bf16.mxu0 %v5210
    %7322 = vmatpush1.bf16.msra.mxu0 %v5209
    %7323 = vmatprep.subr.bf16.mxu0 %v5218
    %7324 = vmatpush1.bf16.msra.mxu0 %v5217
    %7325 = vmatprep.subr.bf16.mxu0 %v5226
    %7326 = vmatpush1.bf16.msra.mxu0 %v5225
    %7327 = vmatprep.subr.bf16.mxu0 %v5234
    %7328 = vmatpush1.bf16.msra.mxu0 %v5233
    %7329 = vmatprep.subr.bf16.mxu0 %v5242
    %7330 = vmatpush1.bf16.msra.mxu0 %v5241
    %7331 = vmatprep.mubr.bf16.mxu0 %v208
    %7332 = vmatmul.mubr.bf16.gmra.mrb[0].mxu0 %v207
    %v7333 = vpop.f32.mrb[0].mxu0
    %v7334 = vadd.f32 %v7293, %v7333
    %v7335 = vpop.f32.mrb[0].mxu0
    %v7336 = vadd.f32 %v7295, %v7335
    %v7337 = vpop.f32.mrb[0].mxu0
    %v7338 = vpop.f32.mrb[0].mxu0
    %7339 = vdwg.mxu0
    %7340 = vmatprep.subr.bf16.mxu0 %v5250
    %7341 = vmatpush1.bf16.msra.mxu0 %v5249
    %7342 = vmatprep.subr.bf16.mxu0 %v5258
    %7343 = vmatpush1.bf16.msra.mxu0 %v5257
    %7344 = vmatprep.subr.bf16.mxu0 %v5266
    %7345 = vmatpush1.bf16.msra.mxu0 %v5265
    %7346 = vmatprep.subr.bf16.mxu0 %v5274
    %7347 = vmatpush1.bf16.msra.mxu0 %v5273
    %7348 = vmatprep.subr.bf16.mxu0 %v5282
    %7349 = vmatpush1.bf16.msra.mxu0 %v5281
    %7350 = vmatprep.subr.bf16.mxu0 %v5290
    %7351 = vmatpush1.bf16.msra.mxu0 %v5289
    %7352 = vmatprep.subr.bf16.mxu0 %v5298
    %7353 = vmatpush1.bf16.msra.mxu0 %v5297
    %7354 = vmatprep.subr.bf16.mxu0 %v5306
    %7355 = vmatpush1.bf16.msra.mxu0 %v5305
    %7356 = vmatprep.subr.bf16.mxu0 %v5314
    %7357 = vmatpush1.bf16.msra.mxu0 %v5313
    %7358 = vmatprep.subr.bf16.mxu0 %v5322
    %7359 = vmatpush1.bf16.msra.mxu0 %v5321
    %7360 = vmatprep.subr.bf16.mxu0 %v5330
    %7361 = vmatpush1.bf16.msra.mxu0 %v5329
    %7362 = vmatprep.subr.bf16.mxu0 %v5338
    %7363 = vmatpush1.bf16.msra.mxu0 %v5337
    %7364 = vmatprep.subr.bf16.mxu0 %v5346
    %7365 = vmatpush1.bf16.msra.mxu0 %v5345
    %7366 = vmatprep.subr.bf16.mxu0 %v5354
    %7367 = vmatpush1.bf16.msra.mxu0 %v5353
    %7368 = vmatprep.subr.bf16.mxu0 %v5362
    %7369 = vmatpush1.bf16.msra.mxu0 %v5361
    %7370 = vmatprep.subr.bf16.mxu0 %v5370
    %7371 = vmatpush1.bf16.msra.mxu0 %v5369
    %7372 = vmatprep.mubr.bf16.mxu0 %v210
    %7373 = vmatmul.mubr.bf16.gmra.mrb[0].mxu0 %v209
    %v7374 = vpop.f32.mrb[0].mxu0
    %v7375 = vadd.f32 %v7334, %v7374
    %v7376 = vpop.f32.mrb[0].mxu0
    %v7377 = vadd.f32 %v7336, %v7376
    %v7378 = vpop.f32.mrb[0].mxu0
    %v7379 = vpop.f32.mrb[0].mxu0
    %7380 = vdwg.mxu0
    %7381 = vmatprep.subr.bf16.mxu0 %v4356
    %7382 = vmatpush1.bf16.msra.mxu0 %v4355
    %7383 = vmatprep.subr.bf16.mxu0 %v4364
    %7384 = vmatpush1.bf16.msra.mxu0 %v4363
    %7385 = vmatprep.subr.bf16.mxu0 %v4372
    %7386 = vmatpush1.bf16.msra.mxu0 %v4371
    %7387 = vmatprep.subr.bf16.mxu0 %v4380
    %7388 = vmatpush1.bf16.msra.mxu0 %v4379
    %7389 = vmatprep.subr.bf16.mxu0 %v4388
    %7390 = vmatpush1.bf16.msra.mxu0 %v4387
    %7391 = vmatprep.subr.bf16.mxu0 %v4396
    %7392 = vmatpush1.bf16.msra.mxu0 %v4395
    %7393 = vmatprep.subr.bf16.mxu0 %v4404
    %7394 = vmatpush1.bf16.msra.mxu0 %v4403
    %7395 = vmatprep.subr.bf16.mxu0 %v4412
    %7396 = vmatpush1.bf16.msra.mxu0 %v4411
    %7397 = vmatprep.subr.bf16.mxu0 %v4420
    %7398 = vmatpush1.bf16.msra.mxu0 %v4419
    %7399 = vmatprep.subr.bf16.mxu0 %v4428
    %7400 = vmatpush1.bf16.msra.mxu0 %v4427
    %7401 = vmatprep.subr.bf16.mxu0 %v4436
    %7402 = vmatpush1.bf16.msra.mxu0 %v4435
    %7403 = vmatprep.subr.bf16.mxu0 %v4444
    %7404 = vmatpush1.bf16.msra.mxu0 %v4443
    %7405 = vmatprep.subr.bf16.mxu0 %v4452
    %7406 = vmatpush1.bf16.msra.mxu0 %v4451
    %7407 = vmatprep.subr.bf16.mxu0 %v4460
    %7408 = vmatpush1.bf16.msra.mxu0 %v4459
    %7409 = vmatprep.subr.bf16.mxu0 %v4468
    %7410 = vmatpush1.bf16.msra.mxu0 %v4467
    %7411 = vmatprep.subr.bf16.mxu0 %v4476
    %7412 = vmatpush1.bf16.msra.mxu0 %v4475
    %7413 = vmatprep.mubr.bf16.mxu0 %v196
    %7414 = vmatmul.mubr.bf16.gmra.mrb[0].mxu0 %v195
    %v7415 = vpop.f32.mrb[0].mxu0
    %v7416 = vadd.f32 %v1264, %v7415
    %v7417 = vpop.f32.mrb[0].mxu0
    %v7418 = vadd.f32 %v1268, %v7417
    %v7419 = vpop.f32.mrb[0].mxu0
    %v7420 = vpop.f32.mrb[0].mxu0
    %7421 = vdwg.mxu0
    %7422 = vmatprep.subr.bf16.mxu0 %v4484
    %7423 = vmatpush1.bf16.msra.mxu0 %v4483
    %7424 = vmatprep.subr.bf16.mxu0 %v4492
    %7425 = vmatpush1.bf16.msra.mxu0 %v4491
    %7426 = vmatprep.subr.bf16.mxu0 %v4500
    %7427 = vmatpush1.bf16.msra.mxu0 %v4499
    %7428 = vmatprep.subr.bf16.mxu0 %v4508
    %7429 = vmatpush1.bf16.msra.mxu0 %v4507
    %7430 = vmatprep.subr.bf16.mxu0 %v4516
    %7431 = vmatpush1.bf16.msra.mxu0 %v4515
    %7432 = vmatprep.subr.bf16.mxu0 %v4524
    %7433 = vmatpush1.bf16.msra.mxu0 %v4523
    %7434 = vmatprep.subr.bf16.mxu0 %v4532
    %7435 = vmatpush1.bf16.msra.mxu0 %v4531
    %7436 = vmatprep.subr.bf16.mxu0 %v4540
    %7437 = vmatpush1.bf16.msra.mxu0 %v4539
    %7438 = vmatprep.subr.bf16.mxu0 %v4548
    %7439 = vmatpush1.bf16.msra.mxu0 %v4547
    %7440 = vmatprep.subr.bf16.mxu0 %v4556
    %7441 = vmatpush1.bf16.msra.mxu0 %v4555
    %7442 = vmatprep.subr.bf16.mxu0 %v4564
    %7443 = vmatpush1.bf16.msra.mxu0 %v4563
    %7444 = vmatprep.subr.bf16.mxu0 %v4572
    %7445 = vmatpush1.bf16.msra.mxu0 %v4571
    %7446 = vmatprep.subr.bf16.mxu0 %v4580
    %7447 = vmatpush1.bf16.msra.mxu0 %v4579
    %7448 = vmatprep.subr.bf16.mxu0 %v4588
    %7449 = vmatpush1.bf16.msra.mxu0 %v4587
    %7450 = vmatprep.subr.bf16.mxu0 %v4596
    %7451 = vmatpush1.bf16.msra.mxu0 %v4595
    %7452 = vmatprep.subr.bf16.mxu0 %v4604
    %7453 = vmatpush1.bf16.msra.mxu0 %v4603
    %7454 = vmatprep.mubr.bf16.mxu0 %v198
    %7455 = vmatmul.mubr.bf16.gmra.mrb[0].mxu0 %v197
    %v7456 = vpop.f32.mrb[0].mxu0
    %v7457 = vadd.f32 %v7416, %v7456
    %v7458 = vpop.f32.mrb[0].mxu0
    %v7459 = vadd.f32 %v7418, %v7458
    %v7460 = vpop.f32.mrb[0].mxu0
    %v7461 = vpop.f32.mrb[0].mxu0
    %7462 = vdwg.mxu0
    %7463 = vmatprep.subr.bf16.mxu0 %v4612
    %7464 = vmatpush1.bf16.msra.mxu0 %v4611
    %7465 = vmatprep.subr.bf16.mxu0 %v4620
    %7466 = vmatpush1.bf16.msra.mxu0 %v4619
    %7467 = vmatprep.subr.bf16.mxu0 %v4628
    %7468 = vmatpush1.bf16.msra.mxu0 %v4627
    %7469 = vmatprep.subr.bf16.mxu0 %v4636
    %7470 = vmatpush1.bf16.msra.mxu0 %v4635
    %7471 = vmatprep.subr.bf16.mxu0 %v4644
    %7472 = vmatpush1.bf16.msra.mxu0 %v4643
    %7473 = vmatprep.subr.bf16.mxu0 %v4652
    %7474 = vmatpush1.bf16.msra.mxu0 %v4651
    %7475 = vmatprep.subr.bf16.mxu0 %v4660
    %7476 = vmatpush1.bf16.msra.mxu0 %v4659
    %7477 = vmatprep.subr.bf16.mxu0 %v4668
    %7478 = vmatpush1.bf16.msra.mxu0 %v4667
    %7479 = vmatprep.subr.bf16.mxu0 %v4676
    %7480 = vmatpush1.bf16.msra.mxu0 %v4675
    %7481 = vmatprep.subr.bf16.mxu0 %v4684
    %7482 = vmatpush1.bf16.msra.mxu0 %v4683
    %7483 = vmatprep.subr.bf16.mxu0 %v4692
    %7484 = vmatpush1.bf16.msra.mxu0 %v4691
    %7485 = vmatprep.subr.bf16.mxu0 %v4700
    %7486 = vmatpush1.bf16.msra.mxu0 %v4699
    %7487 = vmatprep.subr.bf16.mxu0 %v4708
    %7488 = vmatpush1.bf16.msra.mxu0 %v4707
    %7489 = vmatprep.subr.bf16.mxu0 %v4716
    %7490 = vmatpush1.bf16.msra.mxu0 %v4715
    %7491 = vmatprep.subr.bf16.mxu0 %v4724
    %7492 = vmatpush1.bf16.msra.mxu0 %v4723
    %7493 = vmatprep.subr.bf16.mxu0 %v4732
    %7494 = vmatpush1.bf16.msra.mxu0 %v4731
    %7495 = vmatprep.mubr.bf16.mxu0 %v200
    %7496 = vmatmul.mubr.bf16.gmra.mrb[0].mxu0 %v199
    %v7497 = vpop.f32.mrb[0].mxu0
    %v7498 = vadd.f32 %v7457, %v7497
    %v7499 = vpop.f32.mrb[0].mxu0
    %v7500 = vadd.f32 %v7459, %v7499
    %v7501 = vpop.f32.mrb[0].mxu0
    %v7502 = vpop.f32.mrb[0].mxu0
    %7503 = vdwg.mxu0
    %7504 = vmatprep.subr.bf16.mxu0 %v4740
    %7505 = vmatpush1.bf16.msra.mxu0 %v4739
    %7506 = vmatprep.subr.bf16.mxu0 %v4748
    %7507 = vmatpush1.bf16.msra.mxu0 %v4747
    %7508 = vmatprep.subr.bf16.mxu0 %v4756
    %7509 = vmatpush1.bf16.msra.mxu0 %v4755
    %7510 = vmatprep.subr.bf16.mxu0 %v4764
    %7511 = vmatpush1.bf16.msra.mxu0 %v4763
    %7512 = vmatprep.subr.bf16.mxu0 %v4772
    %7513 = vmatpush1.bf16.msra.mxu0 %v4771
    %7514 = vmatprep.subr.bf16.mxu0 %v4780
    %7515 = vmatpush1.bf16.msra.mxu0 %v4779
    %7516 = vmatprep.subr.bf16.mxu0 %v4788
    %7517 = vmatpush1.bf16.msra.mxu0 %v4787
    %7518 = vmatprep.subr.bf16.mxu0 %v4796
    %7519 = vmatpush1.bf16.msra.mxu0 %v4795
    %7520 = vmatprep.subr.bf16.mxu0 %v4804
    %7521 = vmatpush1.bf16.msra.mxu0 %v4803
    %7522 = vmatprep.subr.bf16.mxu0 %v4812
    %7523 = vmatpush1.bf16.msra.mxu0 %v4811
    %7524 = vmatprep.subr.bf16.mxu0 %v4820
    %7525 = vmatpush1.bf16.msra.mxu0 %v4819
    %7526 = vmatprep.subr.bf16.mxu0 %v4828
    %7527 = vmatpush1.bf16.msra.mxu0 %v4827
    %7528 = vmatprep.subr.bf16.mxu0 %v4836
    %7529 = vmatpush1.bf16.msra.mxu0 %v4835
    %7530 = vmatprep.subr.bf16.mxu0 %v4844
    %7531 = vmatpush1.bf16.msra.mxu0 %v4843
    %7532 = vmatprep.subr.bf16.mxu0 %v4852
    %7533 = vmatpush1.bf16.msra.mxu0 %v4851
    %7534 = vmatprep.subr.bf16.mxu0 %v4860
    %7535 = vmatpush1.bf16.msra.mxu0 %v4859
    %7536 = vmatprep.mubr.bf16.mxu0 %v202
    %7537 = vmatmul.mubr.bf16.gmra.mrb[0].mxu0 %v201
    %v7538 = vpop.f32.mrb[0].mxu0
    %v7539 = vadd.f32 %v7498, %v7538
    %v7540 = vpop.f32.mrb[0].mxu0
    %v7541 = vadd.f32 %v7500, %v7540
    %v7542 = vpop.f32.mrb[0].mxu0
    %v7543 = vpop.f32.mrb[0].mxu0
    %7544 = vdwg.mxu0
    %7545 = vmatprep.subr.bf16.mxu0 %v4868
    %7546 = vmatpush1.bf16.msra.mxu0 %v4867
    %7547 = vmatprep.subr.bf16.mxu0 %v4876
    %7548 = vmatpush1.bf16.msra.mxu0 %v4875
    %7549 = vmatprep.subr.bf16.mxu0 %v4884
    %7550 = vmatpush1.bf16.msra.mxu0 %v4883
    %7551 = vmatprep.subr.bf16.mxu0 %v4892
    %7552 = vmatpush1.bf16.msra.mxu0 %v4891
    %7553 = vmatprep.subr.bf16.mxu0 %v4900
    %7554 = vmatpush1.bf16.msra.mxu0 %v4899
    %7555 = vmatprep.subr.bf16.mxu0 %v4908
    %7556 = vmatpush1.bf16.msra.mxu0 %v4907
    %7557 = vmatprep.subr.bf16.mxu0 %v4916
    %7558 = vmatpush1.bf16.msra.mxu0 %v4915
    %7559 = vmatprep.subr.bf16.mxu0 %v4924
    %7560 = vmatpush1.bf16.msra.mxu0 %v4923
    %7561 = vmatprep.subr.bf16.mxu0 %v4932
    %7562 = vmatpush1.bf16.msra.mxu0 %v4931
    %7563 = vmatprep.subr.bf16.mxu0 %v4940
    %7564 = vmatpush1.bf16.msra.mxu0 %v4939
    %7565 = vmatprep.subr.bf16.mxu0 %v4948
    %7566 = vmatpush1.bf16.msra.mxu0 %v4947
    %7567 = vmatprep.subr.bf16.mxu0 %v4956
    %7568 = vmatpush1.bf16.msra.mxu0 %v4955
    %7569 = vmatprep.subr.bf16.mxu0 %v4964
    %7570 = vmatpush1.bf16.msra.mxu0 %v4963
    %7571 = vmatprep.subr.bf16.mxu0 %v4972
    %7572 = vmatpush1.bf16.msra.mxu0 %v4971
    %7573 = vmatprep.subr.bf16.mxu0 %v4980
    %7574 = vmatpush1.bf16.msra.mxu0 %v4979
    %7575 = vmatprep.subr.bf16.mxu0 %v4988
    %7576 = vmatpush1.bf16.msra.mxu0 %v4987
    %7577 = vmatprep.mubr.bf16.mxu0 %v204
    %7578 = vmatmul.mubr.bf16.gmra.mrb[0].mxu0 %v203
    %v7579 = vpop.f32.mrb[0].mxu0
    %v7580 = vadd.f32 %v7539, %v7579
    %v7581 = vpop.f32.mrb[0].mxu0
    %v7582 = vadd.f32 %v7541, %v7581
    %v7583 = vpop.f32.mrb[0].mxu0
    %v7584 = vpop.f32.mrb[0].mxu0
    %7585 = vdwg.mxu0
    %7586 = vmatprep.subr.bf16.mxu0 %v4996
    %7587 = vmatpush1.bf16.msra.mxu0 %v4995
    %7588 = vmatprep.subr.bf16.mxu0 %v5004
    %7589 = vmatpush1.bf16.msra.mxu0 %v5003
    %7590 = vmatprep.subr.bf16.mxu0 %v5012
    %7591 = vmatpush1.bf16.msra.mxu0 %v5011
    %7592 = vmatprep.subr.bf16.mxu0 %v5020
    %7593 = vmatpush1.bf16.msra.mxu0 %v5019
    %7594 = vmatprep.subr.bf16.mxu0 %v5028
    %7595 = vmatpush1.bf16.msra.mxu0 %v5027
    %7596 = vmatprep.subr.bf16.mxu0 %v5036
    %7597 = vmatpush1.bf16.msra.mxu0 %v5035
    %7598 = vmatprep.subr.bf16.mxu0 %v5044
    %7599 = vmatpush1.bf16.msra.mxu0 %v5043
    %7600 = vmatprep.subr.bf16.mxu0 %v5052
    %7601 = vmatpush1.bf16.msra.mxu0 %v5051
    %7602 = vmatprep.subr.bf16.mxu0 %v5060
    %7603 = vmatpush1.bf16.msra.mxu0 %v5059
    %7604 = vmatprep.subr.bf16.mxu0 %v5068
    %7605 = vmatpush1.bf16.msra.mxu0 %v5067
    %7606 = vmatprep.subr.bf16.mxu0 %v5076
    %7607 = vmatpush1.bf16.msra.mxu0 %v5075
    %7608 = vmatprep.subr.bf16.mxu0 %v5084
    %7609 = vmatpush1.bf16.msra.mxu0 %v5083
    %7610 = vmatprep.subr.bf16.mxu0 %v5092
    %7611 = vmatpush1.bf16.msra.mxu0 %v5091
    %7612 = vmatprep.subr.bf16.mxu0 %v5100
    %7613 = vmatpush1.bf16.msra.mxu0 %v5099
    %7614 = vmatprep.subr.bf16.mxu0 %v5108
    %7615 = vmatpush1.bf16.msra.mxu0 %v5107
    %7616 = vmatprep.subr.bf16.mxu0 %v5116
    %7617 = vmatpush1.bf16.msra.mxu0 %v5115
    %7618 = vmatprep.mubr.bf16.mxu0 %v206
    %7619 = vmatmul.mubr.bf16.gmra.mrb[0].mxu0 %v205
    %v7620 = vpop.f32.mrb[0].mxu0
    %v7621 = vadd.f32 %v7580, %v7620
    %v7622 = vpop.f32.mrb[0].mxu0
    %v7623 = vadd.f32 %v7582, %v7622
    %v7624 = vpop.f32.mrb[0].mxu0
    %v7625 = vpop.f32.mrb[0].mxu0
    %7626 = vdwg.mxu0
    %7627 = vmatprep.subr.bf16.mxu0 %v5124
    %7628 = vmatpush1.bf16.msra.mxu0 %v5123
    %7629 = vmatprep.subr.bf16.mxu0 %v5132
    %7630 = vmatpush1.bf16.msra.mxu0 %v5131
    %7631 = vmatprep.subr.bf16.mxu0 %v5140
    %7632 = vmatpush1.bf16.msra.mxu0 %v5139
    %7633 = vmatprep.subr.bf16.mxu0 %v5148
    %7634 = vmatpush1.bf16.msra.mxu0 %v5147
    %7635 = vmatprep.subr.bf16.mxu0 %v5156
    %7636 = vmatpush1.bf16.msra.mxu0 %v5155
    %7637 = vmatprep.subr.bf16.mxu0 %v5164
    %7638 = vmatpush1.bf16.msra.mxu0 %v5163
    %7639 = vmatprep.subr.bf16.mxu0 %v5172
    %7640 = vmatpush1.bf16.msra.mxu0 %v5171
    %7641 = vmatprep.subr.bf16.mxu0 %v5180
    %7642 = vmatpush1.bf16.msra.mxu0 %v5179
    %7643 = vmatprep.subr.bf16.mxu0 %v5188
    %7644 = vmatpush1.bf16.msra.mxu0 %v5187
    %7645 = vmatprep.subr.bf16.mxu0 %v5196
    %7646 = vmatpush1.bf16.msra.mxu0 %v5195
    %7647 = vmatprep.subr.bf16.mxu0 %v5204
    %7648 = vmatpush1.bf16.msra.mxu0 %v5203
    %7649 = vmatprep.subr.bf16.mxu0 %v5212
    %7650 = vmatpush1.bf16.msra.mxu0 %v5211
    %7651 = vmatprep.subr.bf16.mxu0 %v5220
    %7652 = vmatpush1.bf16.msra.mxu0 %v5219
    %7653 = vmatprep.subr.bf16.mxu0 %v5228
    %7654 = vmatpush1.bf16.msra.mxu0 %v5227
    %7655 = vmatprep.subr.bf16.mxu0 %v5236
    %7656 = vmatpush1.bf16.msra.mxu0 %v5235
    %7657 = vmatprep.subr.bf16.mxu0 %v5244
    %7658 = vmatpush1.bf16.msra.mxu0 %v5243
    %7659 = vmatprep.mubr.bf16.mxu0 %v208
    %7660 = vmatmul.mubr.bf16.gmra.mrb[0].mxu0 %v207
    %v7661 = vpop.f32.mrb[0].mxu0
    %v7662 = vadd.f32 %v7621, %v7661
    %v7663 = vpop.f32.mrb[0].mxu0
    %v7664 = vadd.f32 %v7623, %v7663
    %v7665 = vpop.f32.mrb[0].mxu0
    %v7666 = vpop.f32.mrb[0].mxu0
    %7667 = vdwg.mxu0
    %7668 = vmatprep.subr.bf16.mxu0 %v5252
    %7669 = vmatpush1.bf16.msra.mxu0 %v5251
    %7670 = vmatprep.subr.bf16.mxu0 %v5260
    %7671 = vmatpush1.bf16.msra.mxu0 %v5259
    %7672 = vmatprep.subr.bf16.mxu0 %v5268
    %7673 = vmatpush1.bf16.msra.mxu0 %v5267
    %7674 = vmatprep.subr.bf16.mxu0 %v5276
    %7675 = vmatpush1.bf16.msra.mxu0 %v5275
    %7676 = vmatprep.subr.bf16.mxu0 %v5284
    %7677 = vmatpush1.bf16.msra.mxu0 %v5283
    %7678 = vmatprep.subr.bf16.mxu0 %v5292
    %7679 = vmatpush1.bf16.msra.mxu0 %v5291
    %7680 = vmatprep.subr.bf16.mxu0 %v5300
    %7681 = vmatpush1.bf16.msra.mxu0 %v5299
    %7682 = vmatprep.subr.bf16.mxu0 %v5308
    %7683 = vmatpush1.bf16.msra.mxu0 %v5307
    %7684 = vmatprep.subr.bf16.mxu0 %v5316
    %7685 = vmatpush1.bf16.msra.mxu0 %v5315
    %7686 = vmatprep.subr.bf16.mxu0 %v5324
    %7687 = vmatpush1.bf16.msra.mxu0 %v5323
    %7688 = vmatprep.subr.bf16.mxu0 %v5332
    %7689 = vmatpush1.bf16.msra.mxu0 %v5331
    %7690 = vmatprep.subr.bf16.mxu0 %v5340
    %7691 = vmatpush1.bf16.msra.mxu0 %v5339
    %7692 = vmatprep.subr.bf16.mxu0 %v5348
    %7693 = vmatpush1.bf16.msra.mxu0 %v5347
    %7694 = vmatprep.subr.bf16.mxu0 %v5356
    %7695 = vmatpush1.bf16.msra.mxu0 %v5355
    %7696 = vmatprep.subr.bf16.mxu0 %v5364
    %7697 = vmatpush1.bf16.msra.mxu0 %v5363
    %7698 = vmatprep.subr.bf16.mxu0 %v5372
    %7699 = vmatpush1.bf16.msra.mxu0 %v5371
    %7700 = vmatprep.mubr.bf16.mxu0 %v210
    %7701 = vmatmul.mubr.bf16.gmra.mrb[0].mxu0 %v209
    %v7702 = vpop.f32.mrb[0].mxu0
    %v7703 = vadd.f32 %v7662, %v7702
    %v7704 = vpop.f32.mrb[0].mxu0
    %v7705 = vadd.f32 %v7664, %v7704
    %v7706 = vpop.f32.mrb[0].mxu0
    %v7707 = vpop.f32.mrb[0].mxu0
    %7708 = vdwg.mxu0
    %vm7709 = vcmask 1041408
    %v7710 = vsel %vm7709, %v6719, 0.0
    %v7711 = vrot.slane %v7710, 4
    %v7712 = vadd.f32 %v7710, %v7711
    %v7713 = vrot.slane %v7712, 2
    %v7714 = vadd.f32 %v7712, %v7713
    %v7715 = vrot.slane %v7714, 1
    %v7716 = vadd.f32 %v7714, %v7715
    %v7717 = vsel %vm7709, %v6721, 0.0
    %v7718 = vrot.slane %v7717, 4
    %v7719 = vadd.f32 %v7717, %v7718
    %v7720 = vrot.slane %v7719, 2
    %v7721 = vadd.f32 %v7719, %v7720
    %v7722 = vrot.slane %v7721, 1
    %v7723 = vadd.f32 %v7721, %v7722
    %v7724 = vsel %vm7709, %v7047, 0.0
    %v7725 = vrot.slane %v7724, 4
    %v7726 = vadd.f32 %v7724, %v7725
    %v7727 = vrot.slane %v7726, 2
    %v7728 = vadd.f32 %v7726, %v7727
    %v7729 = vrot.slane %v7728, 1
    %v7730 = vadd.f32 %v7728, %v7729
    %v7731 = vsel %vm7709, %v7049, 0.0
    %v7732 = vrot.slane %v7731, 4
    %v7733 = vadd.f32 %v7731, %v7732
    %v7734 = vrot.slane %v7733, 2
    %v7735 = vadd.f32 %v7733, %v7734
    %v7736 = vrot.slane %v7735, 1
    %v7737 = vadd.f32 %v7735, %v7736
    %v7738 = vsel %vm7709, %v7375, 0.0
    %v7739 = vrot.slane %v7738, 4
    %v7740 = vadd.f32 %v7738, %v7739
    %v7741 = vrot.slane %v7740, 2
    %v7742 = vadd.f32 %v7740, %v7741
    %v7743 = vrot.slane %v7742, 1
    %v7744 = vadd.f32 %v7742, %v7743
    %v7745 = vsel %vm7709, %v7377, 0.0
    %v7746 = vrot.slane %v7745, 4
    %v7747 = vadd.f32 %v7745, %v7746
    %v7748 = vrot.slane %v7747, 2
    %v7749 = vadd.f32 %v7747, %v7748
    %v7750 = vrot.slane %v7749, 1
    %v7751 = vadd.f32 %v7749, %v7750
    %v7752 = vsel %vm7709, %v7703, 0.0
    %v7753 = vrot.slane %v7752, 4
    %v7754 = vadd.f32 %v7752, %v7753
    %v7755 = vrot.slane %v7754, 2
    %v7756 = vadd.f32 %v7754, %v7755
    %v7757 = vrot.slane %v7756, 1
    %v7758 = vadd.f32 %v7756, %v7757
    %v7759 = vsel %vm7709, %v7705, 0.0
    %v7760 = vrot.slane %v7759, 4
    %v7761 = vadd.f32 %v7759, %v7760
    %v7762 = vrot.slane %v7761, 2
    %v7763 = vadd.f32 %v7761, %v7762
    %v7764 = vrot.slane %v7763, 1
    %v7765 = vadd.f32 %v7763, %v7764
    %v7766 = vrcp.pop 2.0
    %v7767 = vmul.f32 %v7716, %v7766
    %v7768 = vmul.f32 %v7723, %v7766
    %v7769 = vmul.f32 %v7730, %v7766
    %v7770 = vmul.f32 %v7737, %v7766
    %v7771 = vmul.f32 %v7744, %v7766
    %v7772 = vmul.f32 %v7751, %v7766
    %v7773 = vmul.f32 %v7758, %v7766
    %v7774 = vmul.f32 %v7765, %v7766
    %v7775 = vsub.f32 %v6719, %v7767
    %v7776 = vsub.f32 %v6721, %v7768
    %v7777 = vsub.f32 %v7047, %v7769
    %v7778 = vsub.f32 %v7049, %v7770
    %v7779 = vsub.f32 %v7375, %v7771
    %v7780 = vsub.f32 %v7377, %v7772
    %v7781 = vsub.f32 %v7703, %v7773
    %v7782 = vsub.f32 %v7705, %v7774
    %v7783 = vmul.f32 %v7775, %v7775
    %v7784 = vmul.f32 %v7776, %v7776
    %v7785 = vmul.f32 %v7777, %v7777
    %v7786 = vmul.f32 %v7778, %v7778
    %v7787 = vmul.f32 %v7779, %v7779
    %v7788 = vmul.f32 %v7780, %v7780
    %v7789 = vmul.f32 %v7781, %v7781
    %v7790 = vmul.f32 %v7782, %v7782
    %v7791 = vsel %vm7709, %v7783, 0.0
    %v7792 = vrot.slane %v7791, 4
    %v7793 = vadd.f32 %v7791, %v7792
    %v7794 = vrot.slane %v7793, 2
    %v7795 = vadd.f32 %v7793, %v7794
    %v7796 = vrot.slane %v7795, 1
    %v7797 = vadd.f32 %v7795, %v7796
    %v7798 = vsel %vm7709, %v7784, 0.0
    %v7799 = vrot.slane %v7798, 4
    %v7800 = vadd.f32 %v7798, %v7799
    %v7801 = vrot.slane %v7800, 2
    %v7802 = vadd.f32 %v7800, %v7801
    %v7803 = vrot.slane %v7802, 1
    %v7804 = vadd.f32 %v7802, %v7803
    %v7805 = vsel %vm7709, %v7785, 0.0
    %v7806 = vrot.slane %v7805, 4
    %v7807 = vadd.f32 %v7805, %v7806
    %v7808 = vrot.slane %v7807, 2
    %v7809 = vadd.f32 %v7807, %v7808
    %v7810 = vrot.slane %v7809, 1
    %v7811 = vadd.f32 %v7809, %v7810
    %v7812 = vsel %vm7709, %v7786, 0.0
    %v7813 = vrot.slane %v7812, 4
    %v7814 = vadd.f32 %v7812, %v7813
    %v7815 = vrot.slane %v7814, 2
    %v7816 = vadd.f32 %v7814, %v7815
    %v7817 = vrot.slane %v7816, 1
    %v7818 = vadd.f32 %v7816, %v7817
    %v7819 = vsel %vm7709, %v7787, 0.0
    %v7820 = vrot.slane %v7819, 4
    %v7821 = vadd.f32 %v7819, %v7820
    %v7822 = vrot.slane %v7821, 2
    %v7823 = vadd.f32 %v7821, %v7822
    %v7824 = vrot.slane %v7823, 1
    %v7825 = vadd.f32 %v7823, %v7824
    %v7826 = vsel %vm7709, %v7788, 0.0
    %v7827 = vrot.slane %v7826, 4
    %v7828 = vadd.f32 %v7826, %v7827
    %v7829 = vrot.slane %v7828, 2
    %v7830 = vadd.f32 %v7828, %v7829
    %v7831 = vrot.slane %v7830, 1
    %v7832 = vadd.f32 %v7830, %v7831
    %v7833 = vsel %vm7709, %v7789, 0.0
    %v7834 = vrot.slane %v7833, 4
    %v7835 = vadd.f32 %v7833, %v7834
    %v7836 = vrot.slane %v7835, 2
    %v7837 = vadd.f32 %v7835, %v7836
    %v7838 = vrot.slane %v7837, 1
    %v7839 = vadd.f32 %v7837, %v7838
    %v7840 = vsel %vm7709, %v7790, 0.0
    %v7841 = vrot.slane %v7840, 4
    %v7842 = vadd.f32 %v7840, %v7841
    %v7843 = vrot.slane %v7842, 2
    %v7844 = vadd.f32 %v7842, %v7843
    %v7845 = vrot.slane %v7844, 1
    %v7846 = vadd.f32 %v7844, %v7845
    %v7847 = vmul.f32 %v7797, %v7766
    %v7848 = vmul.f32 %v7804, %v7766
    %v7849 = vmul.f32 %v7811, %v7766
    %v7850 = vmul.f32 %v7818, %v7766
    %v7851 = vmul.f32 %v7825, %v7766
    %v7852 = vmul.f32 %v7832, %v7766
    %v7853 = vmul.f32 %v7839, %v7766
    %v7854 = vmul.f32 %v7846, %v7766
    %s7855 = scalar_lea.vmem [#allocation7], 1
    %v7856 = vld [vmem:[%s7855] ss:$4 sm:$0xff]
    %v7857 = vadd.f32 %v7847, 1e-05
    %v7858 = vadd.f32 %v7848, 1e-05
    %v7859 = vadd.f32 %v7849, 1e-05
    %v7860 = vadd.f32 %v7850, 1e-05
    %v7861 = vadd.f32 %v7851, 1e-05
    %v7862 = vadd.f32 %v7852, 1e-05
    %v7863 = vadd.f32 %v7853, 1e-05
    %v7864 = vadd.f32 %v7854, 1e-05
    %v7865 = vrsqrt.pop %v7857
    %v7866 = vrsqrt.pop %v7858
    %v7867 = vrsqrt.pop %v7859
    %v7868 = vrsqrt.pop %v7860
    %v7869 = vrsqrt.pop %v7861
    %v7870 = vrsqrt.pop %v7862
    %v7871 = vrsqrt.pop %v7863
    %v7872 = vrsqrt.pop %v7864
    %v7881 = vcombine.low %v7865, %v7866
    %v7882 = vcombine.low %v7867, %v7868
    %v7883 = vcombine.low %v7869, %v7870
    %v7884 = vcombine.low %v7871, %v7872
    %v7886 = vunpack.c.l.s4 1966171168
    %v7887 = vunpack.c.0.s8 %v7886
    %v7888 = vlaneseq
    %v7889 = vshrl.u32 %v7888, 7
    %v7890 = vsub.s32 %v7887, %v7889
    %v7891 = vrot.slane %v7881, %v7890
    %v7893 = vunpack.c.l.s4 1966171168
    %v7894 = vunpack.c.0.s8 %v7893
    %v7895 = vlaneseq
    %v7896 = vshrl.u32 %v7895, 7
    %v7897 = vsub.s32 %v7894, %v7896
    %v7898 = vrot.slane %v7882, %v7897
    %v7900 = vunpack.c.l.s4 1966171168
    %v7901 = vunpack.c.0.s8 %v7900
    %v7902 = vlaneseq
    %v7903 = vshrl.u32 %v7902, 7
    %v7904 = vsub.s32 %v7901, %v7903
    %v7905 = vrot.slane %v7883, %v7904
    %v7907 = vunpack.c.l.s4 1966171168
    %v7908 = vunpack.c.0.s8 %v7907
    %v7909 = vlaneseq
    %v7910 = vshrl.u32 %v7909, 7
    %v7911 = vsub.s32 %v7908, %v7910
    %v7912 = vrot.slane %v7884, %v7911
    %v7913 = vcombine.low %v7891, %v7898
    %v7914 = vcombine.low %v7905, %v7912
    %v7916 = vunpack.c.l.s4 1966171168
    %v7917 = vunpack.c.0.s8 %v7916
    %v7918 = vlaneseq
    %v7919 = vshrl.u32 %v7918, 7
    %v7920 = vsub.s32 %v7917, %v7919
    %v7921 = vrot.slane %v7913, %v7920
    %v7923 = vunpack.c.l.s4 1966171168
    %v7924 = vunpack.c.0.s8 %v7923
    %v7925 = vlaneseq
    %v7926 = vshrl.u32 %v7925, 7
    %v7927 = vsub.s32 %v7924, %v7926
    %v7928 = vrot.slane %v7914, %v7927
    %v7929 = vcombine.low %v7921, %v7928
    %v7931 = vmul.f32 %v7856, %v7929
    %v7933 = vlaneseq
    %v7934 = vshrl.u32 %v7933, 7
    %v7935 = vsub.s32 0, %v7934
    %v7936 = vrot.slane %v7931, %v7935
    %v7937 = vlaneseq
    %v7938 = vshrl.u32 %v7937, 7
    %v7939 = vsub.s32 1, %v7938
    %v7940 = vrot.slane %v7931, %v7939
    %v7941 = vlaneseq
    %v7942 = vshrl.u32 %v7941, 7
    %v7943 = vsub.s32 2, %v7942
    %v7944 = vrot.slane %v7931, %v7943
    %v7945 = vlaneseq
    %v7946 = vshrl.u32 %v7945, 7
    %v7947 = vsub.s32 3, %v7946
    %v7948 = vrot.slane %v7931, %v7947
    %v7949 = vlaneseq
    %v7950 = vshrl.u32 %v7949, 7
    %v7951 = vsub.s32 4, %v7950
    %v7952 = vrot.slane %v7931, %v7951
    %v7953 = vlaneseq
    %v7954 = vshrl.u32 %v7953, 7
    %v7955 = vsub.s32 5, %v7954
    %v7956 = vrot.slane %v7931, %v7955
    %v7957 = vlaneseq
    %v7958 = vshrl.u32 %v7957, 7
    %v7959 = vsub.s32 6, %v7958
    %v7960 = vrot.slane %v7931, %v7959
    %v7961 = vlaneseq
    %v7962 = vshrl.u32 %v7961, 7
    %v7963 = vsub.s32 7, %v7962
    %v7964 = vrot.slane %v7931, %v7963
    %v7973 = vmul.f32 %v7775, %v7936
    %v7974 = vmul.f32 %v7776, %v7940
    %v7975 = vmul.f32 %v7777, %v7944
    %v7976 = vmul.f32 %v7778, %v7948
    %v7977 = vmul.f32 %v7779, %v7952
    %v7978 = vmul.f32 %v7780, %v7956
    %v7979 = vmul.f32 %v7781, %v7960
    %v7980 = vmul.f32 %v7782, %v7964
    %s7981 = scalar_lea.vmem [#allocation7], 2
    %v7982 = vld [vmem:[%s7981] ss:$4 sm:$0xff]
    %v7984 = vlaneseq
    %v7985 = vshrl.u32 %v7984, 7
    %v7986 = vsub.s32 0, %v7985
    %v7987 = vrot.slane %v7982, %v7986
    %v7988 = vlaneseq
    %v7989 = vshrl.u32 %v7988, 7
    %v7990 = vsub.s32 1, %v7989
    %v7991 = vrot.slane %v7982, %v7990
    %v7992 = vlaneseq
    %v7993 = vshrl.u32 %v7992, 7
    %v7994 = vsub.s32 2, %v7993
    %v7995 = vrot.slane %v7982, %v7994
    %v7996 = vlaneseq
    %v7997 = vshrl.u32 %v7996, 7
    %v7998 = vsub.s32 3, %v7997
    %v7999 = vrot.slane %v7982, %v7998
    %v8000 = vlaneseq
    %v8001 = vshrl.u32 %v8000, 7
    %v8002 = vsub.s32 4, %v8001
    %v8003 = vrot.slane %v7982, %v8002
    %v8004 = vlaneseq
    %v8005 = vshrl.u32 %v8004, 7
    %v8006 = vsub.s32 5, %v8005
    %v8007 = vrot.slane %v7982, %v8006
    %v8008 = vlaneseq
    %v8009 = vshrl.u32 %v8008, 7
    %v8010 = vsub.s32 6, %v8009
    %v8011 = vrot.slane %v7982, %v8010
    %v8012 = vlaneseq
    %v8013 = vshrl.u32 %v8012, 7
    %v8014 = vsub.s32 7, %v8013
    %v8015 = vrot.slane %v7982, %v8014
    %v8024 = vadd.f32 %v7973, %v7987
    %v8025 = vadd.f32 %v7974, %v7991
    %v8026 = vadd.f32 %v7975, %v7995
    %v8027 = vadd.f32 %v7976, %v7999
    %v8028 = vadd.f32 %v7977, %v8003
    %v8029 = vadd.f32 %v7978, %v8007
    %v8030 = vadd.f32 %v7979, %v8011
    %v8031 = vadd.f32 %v7980, %v8015
    %v8032 = vmax.f32 %v8024, 0.0
    %v8033 = vmax.f32 %v8025, 0.0
    %v8034 = vmax.f32 %v8026, 0.0
    %v8035 = vmax.f32 %v8027, 0.0
    %v8036 = vmax.f32 %v8028, 0.0
    %v8037 = vmax.f32 %v8029, 0.0
    %v8038 = vmax.f32 %v8030, 0.0
    %v8039 = vmax.f32 %v8031, 0.0
    %v8040 = vpack.c.bf16 %v8032, %v8032
    %v8041 = vpack.c.bf16 %v8033, %v8033
    %v8042 = vpack.c.bf16 %v8034, %v8034
    %v8043 = vpack.c.bf16 %v8035, %v8035
    %v8044 = vpack.c.bf16 %v8036, %v8036
    %v8045 = vpack.c.bf16 %v8037, %v8037
    %v8046 = vpack.c.bf16 %v8038, %v8038
    %v8047 = vpack.c.bf16 %v8039, %v8039
    %v8048 = vld [vmem:[#allocation8] sm:$0xf]
    %v8049 = vld [vmem:[#allocation8 + $0x4] sm:$0xf]
    %v8050 = vld [vmem:[#allocation8 + $0x8] sm:$0xf]
    %v8051 = vld [vmem:[#allocation8 + $0xc] sm:$0xf]
    %v8052 = vld [vmem:[#allocation8 + $0x10] sm:$0xf]
    %v8053 = vld [vmem:[#allocation8 + $0x14] sm:$0xf]
    %v8054 = vld [vmem:[#allocation8 + $0x18] sm:$0xf]
    %v8055 = vld [vmem:[#allocation8 + $0x1c] sm:$0xf]
    %v8056 = vld [vmem:[#allocation8 + $0x20] sm:$0xf]
    %v8057 = vld [vmem:[#allocation8 + $0x24] sm:$0xf]
    %v8058 = vld [vmem:[#allocation8 + $0x28] sm:$0xf]
    %v8059 = vld [vmem:[#allocation8 + $0x2c] sm:$0xf]
    %v8060 = vld [vmem:[#allocation8 + $0x30] sm:$0xf]
    %v8061 = vld [vmem:[#allocation8 + $0x34] sm:$0xf]
    %v8062 = vld [vmem:[#allocation8 + $0x38] sm:$0xf]
    %v8063 = vld [vmem:[#allocation8 + $0x3c] sm:$0xf]
    %v8064 = vld [vmem:[#allocation8 + $0x40] sm:$0xf]
    %v8065 = vld [vmem:[#allocation8 + $0x44] sm:$0xf]
    %v8066 = vld [vmem:[#allocation8 + $0x48] sm:$0xf]
    %v8067 = vld [vmem:[#allocation8 + $0x4c] sm:$0xf]
    %v8068 = vld [vmem:[#allocation8 + $0x50] sm:$0xf]
    %v8069 = vld [vmem:[#allocation8 + $0x54] sm:$0xf]
    %v8070 = vld [vmem:[#allocation8 + $0x58] sm:$0xf]
    %v8071 = vld [vmem:[#allocation8 + $0x5c] sm:$0xf]
    %v8072 = vld [vmem:[#allocation8 + $0x60] sm:$0xf]
    %v8073 = vld [vmem:[#allocation8 + $0x64] sm:$0xf]
    %v8074 = vld [vmem:[#allocation8 + $0x68] sm:$0xf]
    %v8075 = vld [vmem:[#allocation8 + $0x6c] sm:$0xf]
    %v8076 = vld [vmem:[#allocation8 + $0x70] sm:$0xf]
    %v8077 = vld [vmem:[#allocation8 + $0x74] sm:$0xf]
    %v8078 = vld [vmem:[#allocation8 + $0x78] sm:$0xf]
    %v8079 = vld [vmem:[#allocation8 + $0x7c] sm:$0xf]
    %v8080 = vld [vmem:[#allocation8 + $0x80] sm:$0xf]
    %v8081 = vld [vmem:[#allocation8 + $0x84] sm:$0xf]
    %v8082 = vld [vmem:[#allocation8 + $0x88] sm:$0xf]
    %v8083 = vld [vmem:[#allocation8 + $0x8c] sm:$0xf]
    %v8084 = vld [vmem:[#allocation8 + $0x90] sm:$0xf]
    %v8085 = vld [vmem:[#allocation8 + $0x94] sm:$0xf]
    %v8086 = vld [vmem:[#allocation8 + $0x98] sm:$0xf]
    %v8087 = vld [vmem:[#allocation8 + $0x9c] sm:$0xf]
    %v8088 = vld [vmem:[#allocation8 + $0xa0] sm:$0xf]
    %v8089 = vld [vmem:[#allocation8 + $0xa4] sm:$0xf]
    %v8090 = vld [vmem:[#allocation8 + $0xa8] sm:$0xf]
    %v8091 = vld [vmem:[#allocation8 + $0xac] sm:$0xf]
    %v8092 = vld [vmem:[#allocation8 + $0xb0] sm:$0xf]
    %v8093 = vld [vmem:[#allocation8 + $0xb4] sm:$0xf]
    %v8094 = vld [vmem:[#allocation8 + $0xb8] sm:$0xf]
    %v8095 = vld [vmem:[#allocation8 + $0xbc] sm:$0xf]
    %v8096 = vld [vmem:[#allocation8 + $0xc0] sm:$0xf]
    %v8097 = vld [vmem:[#allocation8 + $0xc4] sm:$0xf]
    %v8098 = vld [vmem:[#allocation8 + $0xc8] sm:$0xf]
    %v8099 = vld [vmem:[#allocation8 + $0xcc] sm:$0xf]
    %v8100 = vld [vmem:[#allocation8 + $0xd0] sm:$0xf]
    %v8101 = vld [vmem:[#allocation8 + $0xd4] sm:$0xf]
    %v8102 = vld [vmem:[#allocation8 + $0xd8] sm:$0xf]
    %v8103 = vld [vmem:[#allocation8 + $0xdc] sm:$0xf]
    %v8104 = vld [vmem:[#allocation8 + $0xe0] sm:$0xf]
    %v8105 = vld [vmem:[#allocation8 + $0xe4] sm:$0xf]
    %v8106 = vld [vmem:[#allocation8 + $0xe8] sm:$0xf]
    %v8107 = vld [vmem:[#allocation8 + $0xec] sm:$0xf]
    %v8108 = vld [vmem:[#allocation8 + $0xf0] sm:$0xf]
    %v8109 = vld [vmem:[#allocation8 + $0xf4] sm:$0xf]
    %v8110 = vld [vmem:[#allocation8 + $0xf8] sm:$0xf]
    %v8111 = vld [vmem:[#allocation8 + $0xfc] sm:$0xf]
    %v8112 = vld [vmem:[#allocation8 + $0x100] sm:$0xf]
    %v8113 = vld [vmem:[#allocation8 + $0x104] sm:$0xf]
    %v8114 = vld [vmem:[#allocation8 + $0x108] sm:$0xf]
    %v8115 = vld [vmem:[#allocation8 + $0x10c] sm:$0xf]
    %v8116 = vld [vmem:[#allocation8 + $0x110] sm:$0xf]
    %v8117 = vld [vmem:[#allocation8 + $0x114] sm:$0xf]
    %v8118 = vld [vmem:[#allocation8 + $0x118] sm:$0xf]
    %v8119 = vld [vmem:[#allocation8 + $0x11c] sm:$0xf]
    %v8120 = vld [vmem:[#allocation8 + $0x120] sm:$0xf]
    %v8121 = vld [vmem:[#allocation8 + $0x124] sm:$0xf]
    %v8122 = vld [vmem:[#allocation8 + $0x128] sm:$0xf]
    %v8123 = vld [vmem:[#allocation8 + $0x12c] sm:$0xf]
    %v8124 = vld [vmem:[#allocation8 + $0x130] sm:$0xf]
    %v8125 = vld [vmem:[#allocation8 + $0x134] sm:$0xf]
    %v8126 = vld [vmem:[#allocation8 + $0x138] sm:$0xf]
    %v8127 = vld [vmem:[#allocation8 + $0x13c] sm:$0xf]
    %v8128 = vld [vmem:[#allocation8 + $0x140] sm:$0xf]
    %v8129 = vld [vmem:[#allocation8 + $0x144] sm:$0xf]
    %v8130 = vld [vmem:[#allocation8 + $0x148] sm:$0xf]
    %v8131 = vld [vmem:[#allocation8 + $0x14c] sm:$0xf]
    %v8132 = vld [vmem:[#allocation8 + $0x150] sm:$0xf]
    %v8133 = vld [vmem:[#allocation8 + $0x154] sm:$0xf]
    %v8134 = vld [vmem:[#allocation8 + $0x158] sm:$0xf]
    %v8135 = vld [vmem:[#allocation8 + $0x15c] sm:$0xf]
    %v8136 = vld [vmem:[#allocation8 + $0x160] sm:$0xf]
    %v8137 = vld [vmem:[#allocation8 + $0x164] sm:$0xf]
    %v8138 = vld [vmem:[#allocation8 + $0x168] sm:$0xf]
    %v8139 = vld [vmem:[#allocation8 + $0x16c] sm:$0xf]
    %v8140 = vld [vmem:[#allocation8 + $0x170] sm:$0xf]
    %v8141 = vld [vmem:[#allocation8 + $0x174] sm:$0xf]
    %v8142 = vld [vmem:[#allocation8 + $0x178] sm:$0xf]
    %v8143 = vld [vmem:[#allocation8 + $0x17c] sm:$0xf]
    %v8144 = vld [vmem:[#allocation8 + $0x180] sm:$0xf]
    %v8145 = vld [vmem:[#allocation8 + $0x184] sm:$0xf]
    %v8146 = vld [vmem:[#allocation8 + $0x188] sm:$0xf]
    %v8147 = vld [vmem:[#allocation8 + $0x18c] sm:$0xf]
    %v8148 = vld [vmem:[#allocation8 + $0x190] sm:$0xf]
    %v8149 = vld [vmem:[#allocation8 + $0x194] sm:$0xf]
    %v8150 = vld [vmem:[#allocation8 + $0x198] sm:$0xf]
    %v8151 = vld [vmem:[#allocation8 + $0x19c] sm:$0xf]
    %v8152 = vld [vmem:[#allocation8 + $0x1a0] sm:$0xf]
    %v8153 = vld [vmem:[#allocation8 + $0x1a4] sm:$0xf]
    %v8154 = vld [vmem:[#allocation8 + $0x1a8] sm:$0xf]
    %v8155 = vld [vmem:[#allocation8 + $0x1ac] sm:$0xf]
    %v8156 = vld [vmem:[#allocation8 + $0x1b0] sm:$0xf]
    %v8157 = vld [vmem:[#allocation8 + $0x1b4] sm:$0xf]
    %v8158 = vld [vmem:[#allocation8 + $0x1b8] sm:$0xf]
    %v8159 = vld [vmem:[#allocation8 + $0x1bc] sm:$0xf]
    %v8160 = vld [vmem:[#allocation8 + $0x1c0] sm:$0xf]
    %v8161 = vld [vmem:[#allocation8 + $0x1c4] sm:$0xf]
    %v8162 = vld [vmem:[#allocation8 + $0x1c8] sm:$0xf]
    %v8163 = vld [vmem:[#allocation8 + $0x1cc] sm:$0xf]
    %v8164 = vld [vmem:[#allocation8 + $0x1d0] sm:$0xf]
    %v8165 = vld [vmem:[#allocation8 + $0x1d4] sm:$0xf]
    %v8166 = vld [vmem:[#allocation8 + $0x1d8] sm:$0xf]
    %v8167 = vld [vmem:[#allocation8 + $0x1dc] sm:$0xf]
    %v8168 = vld [vmem:[#allocation8 + $0x1e0] sm:$0xf]
    %v8169 = vld [vmem:[#allocation8 + $0x1e4] sm:$0xf]
    %v8170 = vld [vmem:[#allocation8 + $0x1e8] sm:$0xf]
    %v8171 = vld [vmem:[#allocation8 + $0x1ec] sm:$0xf]
    %v8172 = vld [vmem:[#allocation8 + $0x1f0] sm:$0xf]
    %v8173 = vld [vmem:[#allocation8 + $0x1f4] sm:$0xf]
    %v8174 = vld [vmem:[#allocation8 + $0x1f8] sm:$0xf]
    %v8175 = vld [vmem:[#allocation8 + $0x1fc] sm:$0xf]
    %v8176 = vld [vmem:[#allocation10] sm:$0x1]
    %v8178 = vlaneseq
    %v8179 = vshrl.u32 %v8178, 7
    %v8180 = vsub.s32 0, %v8179
    %v8181 = vrot.slane %v8176, %v8180
    %v8311 = vunpack.c.l.b16 %v8048
    %v8312 = vunpack.c.l.b16 %v8049
    %v8313 = vunpack.c.l.b16 %v8050
    %v8314 = vunpack.c.l.b16 %v8051
    %v8315 = vunpack.c.l.b16 %v8052
    %v8316 = vunpack.c.l.b16 %v8053
    %v8317 = vunpack.c.l.b16 %v8054
    %v8318 = vunpack.c.l.b16 %v8055
    %v8319 = vunpack.c.l.b16 %v8056
    %v8320 = vunpack.c.l.b16 %v8057
    %v8321 = vunpack.c.l.b16 %v8058
    %v8322 = vunpack.c.l.b16 %v8059
    %v8323 = vunpack.c.l.b16 %v8060
    %v8324 = vunpack.c.l.b16 %v8061
    %v8325 = vunpack.c.l.b16 %v8062
    %v8326 = vunpack.c.l.b16 %v8063
    %v8327 = vunpack.c.l.b16 %v8064
    %v8328 = vunpack.c.l.b16 %v8065
    %v8329 = vunpack.c.l.b16 %v8066
    %v8330 = vunpack.c.l.b16 %v8067
    %v8331 = vunpack.c.l.b16 %v8068
    %v8332 = vunpack.c.l.b16 %v8069
    %v8333 = vunpack.c.l.b16 %v8070
    %v8334 = vunpack.c.l.b16 %v8071
    %v8335 = vunpack.c.l.b16 %v8072
    %v8336 = vunpack.c.l.b16 %v8073
    %v8337 = vunpack.c.l.b16 %v8074
    %v8338 = vunpack.c.l.b16 %v8075
    %v8339 = vunpack.c.l.b16 %v8076
    %v8340 = vunpack.c.l.b16 %v8077
    %v8341 = vunpack.c.l.b16 %v8078
    %v8342 = vunpack.c.l.b16 %v8079
    %v8343 = vunpack.c.l.b16 %v8080
    %v8344 = vunpack.c.l.b16 %v8081
    %v8345 = vunpack.c.l.b16 %v8082
    %v8346 = vunpack.c.l.b16 %v8083
    %v8347 = vunpack.c.l.b16 %v8084
    %v8348 = vunpack.c.l.b16 %v8085
    %v8349 = vunpack.c.l.b16 %v8086
    %v8350 = vunpack.c.l.b16 %v8087
    %v8351 = vunpack.c.l.b16 %v8088
    %v8352 = vunpack.c.l.b16 %v8089
    %v8353 = vunpack.c.l.b16 %v8090
    %v8354 = vunpack.c.l.b16 %v8091
    %v8355 = vunpack.c.l.b16 %v8092
    %v8356 = vunpack.c.l.b16 %v8093
    %v8357 = vunpack.c.l.b16 %v8094
    %v8358 = vunpack.c.l.b16 %v8095
    %v8359 = vunpack.c.l.b16 %v8096
    %v8360 = vunpack.c.l.b16 %v8097
    %v8361 = vunpack.c.l.b16 %v8098
    %v8362 = vunpack.c.l.b16 %v8099
    %v8363 = vunpack.c.l.b16 %v8100
    %v8364 = vunpack.c.l.b16 %v8101
    %v8365 = vunpack.c.l.b16 %v8102
    %v8366 = vunpack.c.l.b16 %v8103
    %v8367 = vunpack.c.l.b16 %v8104
    %v8368 = vunpack.c.l.b16 %v8105
    %v8369 = vunpack.c.l.b16 %v8106
    %v8370 = vunpack.c.l.b16 %v8107
    %v8371 = vunpack.c.l.b16 %v8108
    %v8372 = vunpack.c.l.b16 %v8109
    %v8373 = vunpack.c.l.b16 %v8110
    %v8374 = vunpack.c.l.b16 %v8111
    %v8375 = vunpack.c.l.b16 %v8112
    %v8376 = vunpack.c.l.b16 %v8113
    %v8377 = vunpack.c.l.b16 %v8114
    %v8378 = vunpack.c.l.b16 %v8115
    %v8379 = vunpack.c.l.b16 %v8116
    %v8380 = vunpack.c.l.b16 %v8117
    %v8381 = vunpack.c.l.b16 %v8118
    %v8382 = vunpack.c.l.b16 %v8119
    %v8383 = vunpack.c.l.b16 %v8120
    %v8384 = vunpack.c.l.b16 %v8121
    %v8385 = vunpack.c.l.b16 %v8122
    %v8386 = vunpack.c.l.b16 %v8123
    %v8387 = vunpack.c.l.b16 %v8124
    %v8388 = vunpack.c.l.b16 %v8125
    %v8389 = vunpack.c.l.b16 %v8126
    %v8390 = vunpack.c.l.b16 %v8127
    %v8391 = vunpack.c.l.b16 %v8128
    %v8392 = vunpack.c.l.b16 %v8129
    %v8393 = vunpack.c.l.b16 %v8130
    %v8394 = vunpack.c.l.b16 %v8131
    %v8395 = vunpack.c.l.b16 %v8132
    %v8396 = vunpack.c.l.b16 %v8133
    %v8397 = vunpack.c.l.b16 %v8134
    %v8398 = vunpack.c.l.b16 %v8135
    %v8399 = vunpack.c.l.b16 %v8136
    %v8400 = vunpack.c.l.b16 %v8137
    %v8401 = vunpack.c.l.b16 %v8138
    %v8402 = vunpack.c.l.b16 %v8139
    %v8403 = vunpack.c.l.b16 %v8140
    %v8404 = vunpack.c.l.b16 %v8141
    %v8405 = vunpack.c.l.b16 %v8142
    %v8406 = vunpack.c.l.b16 %v8143
    %v8407 = vunpack.c.l.b16 %v8144
    %v8408 = vunpack.c.l.b16 %v8145
    %v8409 = vunpack.c.l.b16 %v8146
    %v8410 = vunpack.c.l.b16 %v8147
    %v8411 = vunpack.c.l.b16 %v8148
    %v8412 = vunpack.c.l.b16 %v8149
    %v8413 = vunpack.c.l.b16 %v8150
    %v8414 = vunpack.c.l.b16 %v8151
    %v8415 = vunpack.c.l.b16 %v8152
    %v8416 = vunpack.c.l.b16 %v8153
    %v8417 = vunpack.c.l.b16 %v8154
    %v8418 = vunpack.c.l.b16 %v8155
    %v8419 = vunpack.c.l.b16 %v8156
    %v8420 = vunpack.c.l.b16 %v8157
    %v8421 = vunpack.c.l.b16 %v8158
    %v8422 = vunpack.c.l.b16 %v8159
    %v8423 = vunpack.c.l.b16 %v8160
    %v8424 = vunpack.c.l.b16 %v8161
    %v8425 = vunpack.c.l.b16 %v8162
    %v8426 = vunpack.c.l.b16 %v8163
    %v8427 = vunpack.c.l.b16 %v8164
    %v8428 = vunpack.c.l.b16 %v8165
    %v8429 = vunpack.c.l.b16 %v8166
    %v8430 = vunpack.c.l.b16 %v8167
    %v8431 = vunpack.c.l.b16 %v8168
    %v8432 = vunpack.c.l.b16 %v8169
    %v8433 = vunpack.c.l.b16 %v8170
    %v8434 = vunpack.c.l.b16 %v8171
    %v8435 = vunpack.c.l.b16 %v8172
    %v8436 = vunpack.c.l.b16 %v8173
    %v8437 = vunpack.c.l.b16 %v8174
    %v8438 = vunpack.c.l.b16 %v8175
    %v8439 = vpack.c.b16 %v8312, %v8311
    %v8440 = vpack.c.b16 %v8314, %v8313
    %v8441 = vpack.c.b16 %v8316, %v8315
    %v8442 = vpack.c.b16 %v8318, %v8317
    %v8443 = vpack.c.b16 %v8320, %v8319
    %v8444 = vpack.c.b16 %v8322, %v8321
    %v8445 = vpack.c.b16 %v8324, %v8323
    %v8446 = vpack.c.b16 %v8326, %v8325
    %v8447 = vpack.c.b16 %v8328, %v8327
    %v8448 = vpack.c.b16 %v8330, %v8329
    %v8449 = vpack.c.b16 %v8332, %v8331
    %v8450 = vpack.c.b16 %v8334, %v8333
    %v8451 = vpack.c.b16 %v8336, %v8335
    %v8452 = vpack.c.b16 %v8338, %v8337
    %v8453 = vpack.c.b16 %v8340, %v8339
    %v8454 = vpack.c.b16 %v8342, %v8341
    %v8455 = vpack.c.b16 %v8344, %v8343
    %v8456 = vpack.c.b16 %v8346, %v8345
    %v8457 = vpack.c.b16 %v8348, %v8347
    %v8458 = vpack.c.b16 %v8350, %v8349
    %v8459 = vpack.c.b16 %v8352, %v8351
    %v8460 = vpack.c.b16 %v8354, %v8353
    %v8461 = vpack.c.b16 %v8356, %v8355
    %v8462 = vpack.c.b16 %v8358, %v8357
    %v8463 = vpack.c.b16 %v8360, %v8359
    %v8464 = vpack.c.b16 %v8362, %v8361
    %v8465 = vpack.c.b16 %v8364, %v8363
    %v8466 = vpack.c.b16 %v8366, %v8365
    %v8467 = vpack.c.b16 %v8368, %v8367
    %v8468 = vpack.c.b16 %v8370, %v8369
    %v8469 = vpack.c.b16 %v8372, %v8371
    %v8470 = vpack.c.b16 %v8374, %v8373
    %v8471 = vpack.c.b16 %v8376, %v8375
    %v8472 = vpack.c.b16 %v8378, %v8377
    %v8473 = vpack.c.b16 %v8380, %v8379
    %v8474 = vpack.c.b16 %v8382, %v8381
    %v8475 = vpack.c.b16 %v8384, %v8383
    %v8476 = vpack.c.b16 %v8386, %v8385
    %v8477 = vpack.c.b16 %v8388, %v8387
    %v8478 = vpack.c.b16 %v8390, %v8389
    %v8479 = vpack.c.b16 %v8392, %v8391
    %v8480 = vpack.c.b16 %v8394, %v8393
    %v8481 = vpack.c.b16 %v8396, %v8395
    %v8482 = vpack.c.b16 %v8398, %v8397
    %v8483 = vpack.c.b16 %v8400, %v8399
    %v8484 = vpack.c.b16 %v8402, %v8401
    %v8485 = vpack.c.b16 %v8404, %v8403
    %v8486 = vpack.c.b16 %v8406, %v8405
    %v8487 = vpack.c.b16 %v8408, %v8407
    %v8488 = vpack.c.b16 %v8410, %v8409
    %v8489 = vpack.c.b16 %v8412, %v8411
    %v8490 = vpack.c.b16 %v8414, %v8413
    %v8491 = vpack.c.b16 %v8416, %v8415
    %v8492 = vpack.c.b16 %v8418, %v8417
    %v8493 = vpack.c.b16 %v8420, %v8419
    %v8494 = vpack.c.b16 %v8422, %v8421
    %v8495 = vpack.c.b16 %v8424, %v8423
    %v8496 = vpack.c.b16 %v8426, %v8425
    %v8497 = vpack.c.b16 %v8428, %v8427
    %v8498 = vpack.c.b16 %v8430, %v8429
    %v8499 = vpack.c.b16 %v8432, %v8431
    %v8500 = vpack.c.b16 %v8434, %v8433
    %v8501 = vpack.c.b16 %v8436, %v8435
    %v8502 = vpack.c.b16 %v8438, %v8437
    %8567 = vmatprep.subr.bf16.mxu0 0
    %8568 = vmatpush1.bf16.msra.mxu0 %v8439
    %8569 = vmatprep.subr.bf16.mxu0 0
    %8570 = vmatpush1.bf16.msra.mxu0 %v8440
    %8571 = vmatprep.subr.bf16.mxu0 0
    %8572 = vmatpush1.bf16.msra.mxu0 %v8441
    %8573 = vmatprep.subr.bf16.mxu0 0
    %8574 = vmatpush1.bf16.msra.mxu0 %v8442
    %8575 = vmatprep.subr.bf16.mxu0 0
    %8576 = vmatpush1.bf16.msra.mxu0 %v8443
    %8577 = vmatprep.subr.bf16.mxu0 0
    %8578 = vmatpush1.bf16.msra.mxu0 %v8444
    %8579 = vmatprep.subr.bf16.mxu0 0
    %8580 = vmatpush1.bf16.msra.mxu0 %v8445
    %8581 = vmatprep.subr.bf16.mxu0 0
    %8582 = vmatpush1.bf16.msra.mxu0 %v8446
    %8583 = vmatprep.subr.bf16.mxu0 0
    %8584 = vmatpush1.bf16.msra.mxu0 %v8447
    %8585 = vmatprep.subr.bf16.mxu0 0
    %8586 = vmatpush1.bf16.msra.mxu0 %v8448
    %8587 = vmatprep.subr.bf16.mxu0 0
    %8588 = vmatpush1.bf16.msra.mxu0 %v8449
    %8589 = vmatprep.subr.bf16.mxu0 0
    %8590 = vmatpush1.bf16.msra.mxu0 %v8450
    %8591 = vmatprep.subr.bf16.mxu0 0
    %8592 = vmatpush1.bf16.msra.mxu0 %v8451
    %8593 = vmatprep.subr.bf16.mxu0 0
    %8594 = vmatpush1.bf16.msra.mxu0 %v8452
    %8595 = vmatprep.subr.bf16.mxu0 0
    %8596 = vmatpush1.bf16.msra.mxu0 %v8453
    %8597 = vmatprep.subr.bf16.mxu0 0
    %8598 = vmatpush1.bf16.msra.mxu0 %v8454
    %8599 = vmatprep.mubr.bf16.mxu0 %v8041
    %8600 = vmatmul.mubr.bf16.gmra.mrb[0].mxu0 %v8040
    %v8601 = vpop.f32.mrb[0].mxu0
    %v8602 = vadd.f32 %v8181, %v8601
    %v8603 = vpop.f32.mrb[0].mxu0
    %v8604 = vpop.f32.mrb[0].mxu0
    %v8605 = vpop.f32.mrb[0].mxu0
    %8606 = vdwg.mxu0
    %8607 = vmatprep.subr.bf16.mxu0 0
    %8608 = vmatpush1.bf16.msra.mxu0 %v8455
    %8609 = vmatprep.subr.bf16.mxu0 0
    %8610 = vmatpush1.bf16.msra.mxu0 %v8456
    %8611 = vmatprep.subr.bf16.mxu0 0
    %8612 = vmatpush1.bf16.msra.mxu0 %v8457
    %8613 = vmatprep.subr.bf16.mxu0 0
    %8614 = vmatpush1.bf16.msra.mxu0 %v8458
    %8615 = vmatprep.subr.bf16.mxu0 0
    %8616 = vmatpush1.bf16.msra.mxu0 %v8459
    %8617 = vmatprep.subr.bf16.mxu0 0
    %8618 = vmatpush1.bf16.msra.mxu0 %v8460
    %8619 = vmatprep.subr.bf16.mxu0 0
    %8620 = vmatpush1.bf16.msra.mxu0 %v8461
    %8621 = vmatprep.subr.bf16.mxu0 0
    %8622 = vmatpush1.bf16.msra.mxu0 %v8462
    %8623 = vmatprep.subr.bf16.mxu0 0
    %8624 = vmatpush1.bf16.msra.mxu0 %v8463
    %8625 = vmatprep.subr.bf16.mxu0 0
    %8626 = vmatpush1.bf16.msra.mxu0 %v8464
    %8627 = vmatprep.subr.bf16.mxu0 0
    %8628 = vmatpush1.bf16.msra.mxu0 %v8465
    %8629 = vmatprep.subr.bf16.mxu0 0
    %8630 = vmatpush1.bf16.msra.mxu0 %v8466
    %8631 = vmatprep.subr.bf16.mxu0 0
    %8632 = vmatpush1.bf16.msra.mxu0 %v8467
    %8633 = vmatprep.subr.bf16.mxu0 0
    %8634 = vmatpush1.bf16.msra.mxu0 %v8468
    %8635 = vmatprep.subr.bf16.mxu0 0
    %8636 = vmatpush1.bf16.msra.mxu0 %v8469
    %8637 = vmatprep.subr.bf16.mxu0 0
    %8638 = vmatpush1.bf16.msra.mxu0 %v8470
    %8639 = vmatprep.mubr.bf16.mxu0 %v8043
    %8640 = vmatmul.mubr.bf16.gmra.mrb[0].mxu0 %v8042
    %v8641 = vpop.f32.mrb[0].mxu0
    %v8642 = vadd.f32 %v8602, %v8641
    %v8643 = vpop.f32.mrb[0].mxu0
    %v8644 = vpop.f32.mrb[0].mxu0
    %v8645 = vpop.f32.mrb[0].mxu0
    %8646 = vdwg.mxu0
    %8647 = vmatprep.subr.bf16.mxu0 0
    %8648 = vmatpush1.bf16.msra.mxu0 %v8471
    %8649 = vmatprep.subr.bf16.mxu0 0
    %8650 = vmatpush1.bf16.msra.mxu0 %v8472
    %8651 = vmatprep.subr.bf16.mxu0 0
    %8652 = vmatpush1.bf16.msra.mxu0 %v8473
    %8653 = vmatprep.subr.bf16.mxu0 0
    %8654 = vmatpush1.bf16.msra.mxu0 %v8474
    %8655 = vmatprep.subr.bf16.mxu0 0
    %8656 = vmatpush1.bf16.msra.mxu0 %v8475
    %8657 = vmatprep.subr.bf16.mxu0 0
    %8658 = vmatpush1.bf16.msra.mxu0 %v8476
    %8659 = vmatprep.subr.bf16.mxu0 0
    %8660 = vmatpush1.bf16.msra.mxu0 %v8477
    %8661 = vmatprep.subr.bf16.mxu0 0
    %8662 = vmatpush1.bf16.msra.mxu0 %v8478
    %8663 = vmatprep.subr.bf16.mxu0 0
    %8664 = vmatpush1.bf16.msra.mxu0 %v8479
    %8665 = vmatprep.subr.bf16.mxu0 0
    %8666 = vmatpush1.bf16.msra.mxu0 %v8480
    %8667 = vmatprep.subr.bf16.mxu0 0
    %8668 = vmatpush1.bf16.msra.mxu0 %v8481
    %8669 = vmatprep.subr.bf16.mxu0 0
    %8670 = vmatpush1.bf16.msra.mxu0 %v8482
    %8671 = vmatprep.subr.bf16.mxu0 0
    %8672 = vmatpush1.bf16.msra.mxu0 %v8483
    %8673 = vmatprep.subr.bf16.mxu0 0
    %8674 = vmatpush1.bf16.msra.mxu0 %v8484
    %8675 = vmatprep.subr.bf16.mxu0 0
    %8676 = vmatpush1.bf16.msra.mxu0 %v8485
    %8677 = vmatprep.subr.bf16.mxu0 0
    %8678 = vmatpush1.bf16.msra.mxu0 %v8486
    %8679 = vmatprep.mubr.bf16.mxu0 %v8045
    %8680 = vmatmul.mubr.bf16.gmra.mrb[0].mxu0 %v8044
    %v8681 = vpop.f32.mrb[0].mxu0
    %v8682 = vadd.f32 %v8642, %v8681
    %v8683 = vpop.f32.mrb[0].mxu0
    %v8684 = vpop.f32.mrb[0].mxu0
    %v8685 = vpop.f32.mrb[0].mxu0
    %8686 = vdwg.mxu0
    %8687 = vmatprep.subr.bf16.mxu0 0
    %8688 = vmatpush1.bf16.msra.mxu0 %v8487
    %8689 = vmatprep.subr.bf16.mxu0 0
    %8690 = vmatpush1.bf16.msra.mxu0 %v8488
    %8691 = vmatprep.subr.bf16.mxu0 0
    %8692 = vmatpush1.bf16.msra.mxu0 %v8489
    %8693 = vmatprep.subr.bf16.mxu0 0
    %8694 = vmatpush1.bf16.msra.mxu0 %v8490
    %8695 = vmatprep.subr.bf16.mxu0 0
    %8696 = vmatpush1.bf16.msra.mxu0 %v8491
    %8697 = vmatprep.subr.bf16.mxu0 0
    %8698 = vmatpush1.bf16.msra.mxu0 %v8492
    %8699 = vmatprep.subr.bf16.mxu0 0
    %8700 = vmatpush1.bf16.msra.mxu0 %v8493
    %8701 = vmatprep.subr.bf16.mxu0 0
    %8702 = vmatpush1.bf16.msra.mxu0 %v8494
    %8703 = vmatprep.subr.bf16.mxu0 0
    %8704 = vmatpush1.bf16.msra.mxu0 %v8495
    %8705 = vmatprep.subr.bf16.mxu0 0
    %8706 = vmatpush1.bf16.msra.mxu0 %v8496
    %8707 = vmatprep.subr.bf16.mxu0 0
    %8708 = vmatpush1.bf16.msra.mxu0 %v8497
    %8709 = vmatprep.subr.bf16.mxu0 0
    %8710 = vmatpush1.bf16.msra.mxu0 %v8498
    %8711 = vmatprep.subr.bf16.mxu0 0
    %8712 = vmatpush1.bf16.msra.mxu0 %v8499
    %8713 = vmatprep.subr.bf16.mxu0 0
    %8714 = vmatpush1.bf16.msra.mxu0 %v8500
    %8715 = vmatprep.subr.bf16.mxu0 0
    %8716 = vmatpush1.bf16.msra.mxu0 %v8501
    %8717 = vmatprep.subr.bf16.mxu0 0
    %8718 = vmatpush1.bf16.msra.mxu0 %v8502
    %8719 = vmatprep.mubr.bf16.mxu0 %v8047
    %8720 = vmatmul.mubr.bf16.gmra.mrb[0].mxu0 %v8046
    %v8721 = vpop.f32.mrb[0].mxu0
    %v8722 = vadd.f32 %v8682, %v8721
    %v8723 = vpop.f32.mrb[0].mxu0
    %v8724 = vpop.f32.mrb[0].mxu0
    %v8725 = vpop.f32.mrb[0].mxu0
    %8726 = vdwg.mxu0
    %v8727 = vmul.f32 %v8722, 0.5
    %v8728 = vmul.f32 %v8727, 1.442695
    %v8729 = vpow.pop %v8728
    %v8730 = vld [vmem:[#allocation11] sm:$0x3]
    %8732 = vrot.lane.b32.xlu0 %v8730, 32
    %v8733 = vpop.permute.xlu0 %8732
    %v8735 = vmul.f32 %v8729, %v8733
    %8737 = vrot.lane.b32.xlu0 %v8735, 96
    %v8738 = vpop.permute.xlu0 %8737
    %v8740 = vadd.f32 %v8722, %v8738
    %vm8741 = vcmask 254976
    %8742 = vst.msk [vmem:[#allocation13] sm:$0x3] %vm8741, %v8740
    %8743 = vst.msk [vmem:[#allocation14] sm:$0x3] %vm8741, %v8722
    %8745 = vrot.lane.b32.xlu0 %v8722, 96
    %v8746 = vpop.permute.xlu0 %8745
    %8748 = vst.msk [vmem:[#allocation16] sm:$0x3] %vm8741, %v8746
    // Predicated region
    $region50: #{encoder_forward.5} parent=1 // pred_check
      _
    $region51: #{encoder_forward.5} parent=1 // pred_check_branch
      %8750 = sbr.rel (0) target = $region53
    $region52: #{encoder_forward.5} parent=1 // pred_region
      %s8752 = ssub.s32 32, 32
      %8753 = vsyncadd [#allocation4], %s8752
      %s8755 = sshll.u32 [#allocation13], 4
      %s8756 = int_to_ptr.vmem [resolvable:$true] %s8755
      %8758 = dma.vmem_to_hbm [thread:$0]  %s8756, 32, %s6, [#allocation4]
    $region53: #{encoder_forward.5} parent=1 // pred_fallthru
      _
    // Predicated region
    $region54: #{encoder_forward.5} parent=1 // pred_check
      _
    $region55: #{encoder_forward.5} parent=1 // pred_check_branch
      %8760 = sbr.rel (0) target = $region57
    $region56: #{encoder_forward.5} parent=1 // pred_region
      %s8762 = ssub.s32 32, 32
      %8763 = vsyncadd [#allocation15], %s8762
      %s8765 = sshll.u32 [#allocation14], 4
      %s8766 = int_to_ptr.vmem [resolvable:$true] %s8765
      %8768 = dma.vmem_to_hbm [thread:$0]  %s8766, 32, %s7, [#allocation15]
    $region57: #{encoder_forward.5} parent=1 // pred_fallthru
      _
    // Predicated region
    $region58: #{encoder_forward.5} parent=1 // pred_check
      _
    $region59: #{encoder_forward.5} parent=1 // pred_check_branch
      %8770 = sbr.rel (0) target = $region61
    $region60: #{encoder_forward.5} parent=1 // pred_region
      %s8772 = ssub.s32 32, 32
      %8773 = vsyncadd [#allocation15], %s8772
      %s8775 = sshll.u32 [#allocation16], 4
      %s8776 = int_to_ptr.vmem [resolvable:$true] %s8775
      %8778 = dma.vmem_to_hbm [thread:$0]  %s8776, 32, %s8, [#allocation15]
    $region61: #{encoder_forward.5} parent=1 // pred_fallthru
      _
    // Predicated region
    $region62: #{encoder_forward.5} parent=1 // pred_check
      _
    $region63: #{encoder_forward.5} parent=1 // pred_check_branch
      %8780 = sbr.rel (0) target = $region65
    $region64: #{encoder_forward.5} parent=1 // pred_region
      %8781 = dma.done [#allocation4], 32
    $region65: #{encoder_forward.5} parent=1 // pred_fallthru
      _
    // Predicated region
    $region66: #{encoder_forward.5} parent=1 // pred_check
      _
    $region67: #{encoder_forward.5} parent=1 // pred_check_branch
      %8783 = sbr.rel (0) target = $region69
    $region68: #{encoder_forward.5} parent=1 // pred_region
      %8784 = dma.done [#allocation15], 32
    $region69: #{encoder_forward.5} parent=1 // pred_fallthru
      _
    // Predicated region
    $region70: #{encoder_forward.5} parent=1 // pred_check
      _
    $region71: #{encoder_forward.5} parent=1 // pred_check_branch
      %8786 = sbr.rel (0) target = $region73
    $region72: #{encoder_forward.5} parent=1 // pred_region
      %8787 = dma.done [#allocation15], 32
    $region73: #{encoder_forward.5} parent=1 // pred_fallthru
      _
    %8788 = vsyncpa [#allocation3], 1
    %8789 = vsyncpa [#allocation6], 1
    %8790 = vsyncpa [#allocation9], 1
    %8791 = vsyncpa [#allocation12], 1
    %8792 = vsyncpa [#allocation4], 1
    %8793 = vsyncpa [#allocation15], 1

</llo_original>
